<compile_context>
chip_gen: v7x
topology: tpu7x:2x2x1
jax: 0.10.0
libtpu: 0.0.40
codegen_flags: <defaults>
</compile_context>

<pallas_src>
import functools

import jax
import jax.numpy as jnp
from jax.experimental import pallas as pl
from jax.experimental.pallas import tpu as pltpu

K7 = 7        # fused kernel size (largest of the three convs)
MAX_PAD = 3   # halo of the 7x7 conv
W_LEFT = 8    # left column halo (>= MAX_PAD), sublane-aligned interior store


def _spatial_conv_kernel(x_ref, w_ref, b_ref, o_ref, xp_ref, *,
                         H, W, TH, Cin, C3, group):
    # x_ref : (1, H, W, Cin)           bf16  -- whole (unpadded) image
    # w_ref : (49*Cin, C3)             bf16  -- fused im2col weight [w7|w5|w3]
    # b_ref : (1, 1, C3)               f32   -- fused bias [b7|b5|b3]
    # o_ref : (1, TH, W, C3)           f32   -- one row tile of the output
    # xp_ref: (H+6, W_LEFT+W+3, Cin)   bf16  -- zero-padded image (VMEM scratch)
    ht = pl.program_id(1)

    # Build the zero-padded image in VMEM once per image (first row tile).
    @pl.when(ht == 0)
    def _():
        xp_ref[...] = jnp.zeros_like(xp_ref)
        xp_ref[MAX_PAD:MAX_PAD + H, W_LEFT:W_LEFT + W, :] = x_ref[0]

    r0 = pl.multiple_of(ht * TH, TH)

    # 7 row-shifted bands of the padded image (one per kernel row kh); the
    # kernel-column shifts are handled by im2col column slices below.
    bands = [xp_ref[pl.ds(r0 + kh, TH), :, :] for kh in range(K7)]

    col0 = W_LEFT - MAX_PAD
    acc = jnp.zeros((TH * W, C3), jnp.float32)

    # Taps grouped so each 2-D dot contracts K = group*Cin (full 7x7 im2col
    # -> K = 49*Cin when channel counts are small).
    for g0 in range(0, K7 * K7, group):
        taps = list(range(g0, min(g0 + group, K7 * K7)))
        cols = [bands[t // K7][:, col0 + (t % K7): col0 + (t % K7) + W, :]
                for t in taps]
        patch = cols[0] if len(cols) == 1 else jnp.concatenate(cols, axis=-1)
        patch = patch.reshape(TH * W, len(taps) * Cin)          # 2-D MXU operand
        w_blk = w_ref[g0 * Cin:(g0 + len(taps)) * Cin, :]
        acc = acc + jnp.dot(patch, w_blk, preferred_element_type=jnp.float32)

    acc = acc + b_ref[0]                                        # (1, C3) broadcast
    out = jnp.maximum(acc, 0.0).reshape(TH, W, C3)              # fused ReLU
    o_ref[0] = out.astype(o_ref.dtype)


def _pick_tile_h(H, W, Cin, C3):
    """Largest divisor of H keeping per-tile intermediates within a few MiB."""
    bytes_per_row = W * (4 * C3 + 2 * K7 * K7 * Cin)   # f32 acc + bf16 im2col patch
    target = max(1, (4 * 1024 * 1024) // max(bytes_per_row, 1))
    best = 1
    for cand in range(1, H + 1):
        if H % cand == 0 and cand <= target:
            best = cand
    return best


def spatial_conv(x_nchw, params, *, tile_h=None, compute_dtype=jnp.bfloat16):
    """Forward pass of SpatialConv. x_nchw: (N, Cin, H, W) f32 -> (N, 3*Cout, H, W)."""
    N, Cin, H, W = x_nchw.shape
    Cout = params["b3"].shape[0]
    C3 = 3 * Cout

    # Host-side layout prep. TODO(synk): accept NHWC activations end-to-end to
    # drop these two transposes (they are full HBM passes around the kernel).
    x_nhwc = jnp.transpose(x_nchw, (0, 2, 3, 1)).astype(compute_dtype)

    # Fuse the three convs: zero-pad w3/w5 into the 7x7 tap grid, output
    # channels ordered [w7 | w5 | w3] to match torch.cat([conv7, conv5, conv3], 1).
    wf = jnp.zeros((K7, K7, Cin, C3), jnp.float32)
    wf = wf.at[:, :, :, 0 * Cout:1 * Cout].set(params["w7"])
    wf = wf.at[1:6, 1:6, :, 1 * Cout:2 * Cout].set(params["w5"])
    wf = wf.at[2:5, 2:5, :, 2 * Cout:3 * Cout].set(params["w3"])
    wf = wf.reshape(K7 * K7 * Cin, C3).astype(compute_dtype)    # im2col weight
    bf = jnp.concatenate([params["b7"], params["b5"], params["b3"]]
                         ).reshape(1, 1, C3).astype(jnp.float32)

    TH = tile_h if tile_h is not None else _pick_tile_h(H, W, Cin, C3)
    if H % TH != 0:
        raise ValueError(f"tile_h={TH} must divide H={H}")
    nH = H // TH

    # Taps per MXU push: full 7x7 im2col while K stays near the MXU depth.
    if K7 * K7 * Cin <= 512:
        group = K7 * K7
    elif K7 * Cin <= 512:
        group = K7
    else:
        group = 1

    Hp = H + 2 * MAX_PAD
    Wp = W_LEFT + W + MAX_PAD

    kernel = functools.partial(_spatial_conv_kernel, H=H, W=W, TH=TH,
                               Cin=Cin, C3=C3, group=group)

    flops = 2 * N * H * W * K7 * K7 * Cin * C3
    bytes_accessed = (N * H * W * Cin * jnp.dtype(compute_dtype).itemsize
                      + wf.size * jnp.dtype(compute_dtype).itemsize
                      + N * H * W * C3 * 4)

    out_nhwc = pl.pallas_call(
        kernel,
        out_shape=jax.ShapeDtypeStruct((N, H, W, C3), x_nchw.dtype),
        grid_spec=pltpu.PrefetchScalarGridSpec(
            num_scalar_prefetch=0,
            grid=(N, nH),
            in_specs=[
                pl.BlockSpec((1, H, W, Cin), lambda n, h: (n, 0, 0, 0)),
                pl.BlockSpec(wf.shape, lambda n, h: (0, 0)),
                pl.BlockSpec(bf.shape, lambda n, h: (0, 0, 0)),
            ],
            out_specs=pl.BlockSpec((1, TH, W, C3), lambda n, h: (n, h, 0, 0)),
            scratch_shapes=[pltpu.VMEM((Hp, Wp, Cin), compute_dtype)],
        ),
        compiler_params=pltpu.CompilerParams(
            dimension_semantics=("parallel", "arbitrary"),
            vmem_limit_bytes=32 * 1024 * 1024),
        cost_estimate=pl.CostEstimate(flops=int(flops), transcendentals=0,
                                      bytes_accessed=int(bytes_accessed)),
    )(x_nhwc, wf, bf)

    # Back to NCHW to match the PyTorch module.
    return jnp.transpose(out_nhwc, (0, 3, 1, 2))


def _reference(x_nchw, params, compute_dtype=jnp.bfloat16):
    """Pure-JAX reference (bf16 inputs, f32 accumulation — same numerics as kernel)."""
    x = jnp.transpose(x_nchw, (0, 2, 3, 1)).astype(compute_dtype)

    def conv(w, b, pad):
        y = jax.lax.conv_general_dilated(
            x, w.astype(compute_dtype), window_strides=(1, 1),
            padding=((pad, pad), (pad, pad)),
            dimension_numbers=("NHWC", "HWIO", "NHWC"),
            preferred_element_type=jnp.float32)
        return y + b.astype(jnp.float32)

    y3 = conv(params["w3"], params["b3"], 1)
    y5 = conv(params["w5"], params["b5"], 2)
    y7 = conv(params["w7"], params["b7"], 3)
    out = jnp.maximum(jnp.concatenate([y7, y5, y3], axis=-1), 0.0)
    return jnp.transpose(out, (0, 3, 1, 2)).astype(x_nchw.dtype)


def init_params(key, in_channel, out_channel):
    ks = jax.random.split(key, 6)

    def w(k, ksize):
        fan_in = in_channel * ksize * ksize
        scale = 1.0 / jnp.sqrt(fan_in)
        return jax.random.uniform(k, (ksize, ksize, in_channel, out_channel),
                                  jnp.float32, -scale, scale)

    def b(k, ksize):
        fan_in = in_channel * ksize * ksize
        scale = 1.0 / jnp.sqrt(fan_in)
        return jax.random.uniform(k, (out_channel,), jnp.float32, -scale, scale)

    return {
        "w3": w(ks[0], 3), "b3": b(ks[1], 3),
        "w5": w(ks[2], 5), "b5": b(ks[3], 5),
        "w7": w(ks[4], 7), "b7": b(ks[5], 7),
    }


if __name__ == "__main__":
    key = jax.random.PRNGKey(0)
    k_x, k_p = jax.random.split(key)

    N, Cin, Cout, H, W = 2, 4, 4, 16, 16
    x = jax.random.normal(k_x, (N, Cin, H, W), jnp.float32)
    params = init_params(k_p, Cin, Cout)

    ref = _reference(x, params)

    # Default (single row tile per image at this small size).
    out = jax.block_until_ready(spatial_conv(x, params))
    # Explicit row tiling to also exercise the multi-tile path (grid = (2, 2)).
    out_tiled = jax.block_until_ready(spatial_conv(x, params, tile_h=8))

    assert out.shape == (N, 3 * Cout, H, W), out.shape
    assert jnp.allclose(out, ref, atol=5e-3, rtol=5e-3), "mismatch vs reference"
    assert jnp.allclose(out_tiled, ref, atol=5e-3, rtol=5e-3), "tiled mismatch vs reference"

    print("KERNEL_OK")
</pallas_src>

<mosaic_0001>
module attributes {stable_mosaic.version = 11 : i64} {
  func.func @_spatial_conv_kernel(%arg0: i32, %arg1: i32, %arg2: memref<1x16x16x4xbf16, #tpu.memory_space<vmem>>, %arg3: memref<196x12xbf16, #tpu.memory_space<vmem>>, %arg4: memref<1x1x12xf32, #tpu.memory_space<vmem>>, %arg5: memref<1x16x16x12xf32, #tpu.memory_space<vmem>>, %arg6: memref<22x27x4xbf16, #tpu.memory_space<vmem>>) attributes {dimension_semantics = [#tpu.dimension_semantics<parallel>, #tpu.dimension_semantics<arbitrary>], iteration_bounds = array<i64: 2, 1>, scalar_prefetch = 0 : i64, scratch_operands = 1 : i64, tpu.core_type = #tpu.core_type<tc>, window_params = [{transform_indices = @transform_0, window_bounds = array<i64: 1, 16, 16, 4>}, {pipeline_mode = #tpu.pipeline_mode<synchronous>, transform_indices = @transform_1, window_bounds = array<i64: 196, 12>}, {pipeline_mode = #tpu.pipeline_mode<synchronous>, transform_indices = @transform_2, window_bounds = array<i64: 1, 1, 12>}, {transform_indices = @transform_3, window_bounds = array<i64: 1, 16, 16, 12>}]} {
    %c0_i32 = arith.constant 0 : i32
    %0 = arith.cmpi eq, %arg1, %c0_i32 : i32
    %1 = arith.extui %0 : i1 to i32
    %c0_i32_0 = arith.constant 0 : i32
    %2 = arith.cmpi ne, %1, %c0_i32_0 : i32
    scf.if %2 {
      %cst_26 = arith.constant 0.000000e+00 : bf16
      %94 = vector.broadcast %cst_26 : bf16 to vector<22x27x4xbf16>
      %c0_27 = arith.constant 0 : index
      %c0_28 = arith.constant 0 : index
      %c0_29 = arith.constant 0 : index
      %95 = vector.load %arg6[%c0_27, %c0_28, %c0_29] : memref<22x27x4xbf16, #tpu.memory_space<vmem>>, vector<22x27x4xbf16>
      tpu.vector_store %arg6[%c0_27, %c0_28, %c0_29], %94 {strides = array<i32>} : memref<22x27x4xbf16, #tpu.memory_space<vmem>>, vector<22x27x4xbf16>,
      %c0_30 = arith.constant 0 : index
      %c0_31 = arith.constant 0 : index
      %c0_32 = arith.constant 0 : index
      %c0_33 = arith.constant 0 : index
      %96 = vector.load %arg2[%c0_30, %c0_31, %c0_32, %c0_33] : memref<1x16x16x4xbf16, #tpu.memory_space<vmem>>, vector<1x16x16x4xbf16>
      %97 = vector.shape_cast %96 : vector<1x16x16x4xbf16> to vector<16x16x4xbf16>
      %c3 = arith.constant 3 : index
      %c8 = arith.constant 8 : index
      %c0_34 = arith.constant 0 : index
      %98 = vector.load %arg6[%c3, %c8, %c0_34] : memref<22x27x4xbf16, #tpu.memory_space<vmem>>, vector<16x16x4xbf16>
      tpu.vector_store %arg6[%c3, %c8, %c0_34], %97 {strides = array<i32>} : memref<22x27x4xbf16, #tpu.memory_space<vmem>>, vector<16x16x4xbf16>,
    } else {
    }
    %c16_i32 = arith.constant 16 : i32
    %3 = arith.muli %arg1, %c16_i32 : i32
    %4 = tpu.assume_multiple %3, 16 : i32
    %c0_i32_1 = arith.constant 0 : i32
    %5 = arith.addi %4, %c0_i32_1 : i32
    %6 = arith.index_cast %5 : i32 to index
    %c0 = arith.constant 0 : index
    %c0_2 = arith.constant 0 : index
    %7 = vector.load %arg6[%6, %c0, %c0_2] : memref<22x27x4xbf16, #tpu.memory_space<vmem>>, vector<16x27x4xbf16>
    %c1_i32 = arith.constant 1 : i32
    %8 = arith.addi %4, %c1_i32 : i32
    %9 = arith.index_cast %8 : i32 to index
    %c0_3 = arith.constant 0 : index
    %c0_4 = arith.constant 0 : index
    %10 = vector.load %arg6[%9, %c0_3, %c0_4] : memref<22x27x4xbf16, #tpu.memory_space<vmem>>, vector<16x27x4xbf16>
    %c2_i32 = arith.constant 2 : i32
    %11 = arith.addi %4, %c2_i32 : i32
    %12 = arith.index_cast %11 : i32 to index
    %c0_5 = arith.constant 0 : index
    %c0_6 = arith.constant 0 : index
    %13 = vector.load %arg6[%12, %c0_5, %c0_6] : memref<22x27x4xbf16, #tpu.memory_space<vmem>>, vector<16x27x4xbf16>
    %c3_i32 = arith.constant 3 : i32
    %14 = arith.addi %4, %c3_i32 : i32
    %15 = arith.index_cast %14 : i32 to index
    %c0_7 = arith.constant 0 : index
    %c0_8 = arith.constant 0 : index
    %16 = vector.load %arg6[%15, %c0_7, %c0_8] : memref<22x27x4xbf16, #tpu.memory_space<vmem>>, vector<16x27x4xbf16>
    %c4_i32 = arith.constant 4 : i32
    %17 = arith.addi %4, %c4_i32 : i32
    %18 = arith.index_cast %17 : i32 to index
    %c0_9 = arith.constant 0 : index
    %c0_10 = arith.constant 0 : index
    %19 = vector.load %arg6[%18, %c0_9, %c0_10] : memref<22x27x4xbf16, #tpu.memory_space<vmem>>, vector<16x27x4xbf16>
    %c5_i32 = arith.constant 5 : i32
    %20 = arith.addi %4, %c5_i32 : i32
    %21 = arith.index_cast %20 : i32 to index
    %c0_11 = arith.constant 0 : index
    %c0_12 = arith.constant 0 : index
    %22 = vector.load %arg6[%21, %c0_11, %c0_12] : memref<22x27x4xbf16, #tpu.memory_space<vmem>>, vector<16x27x4xbf16>
    %c6_i32 = arith.constant 6 : i32
    %23 = arith.addi %4, %c6_i32 : i32
    %24 = arith.index_cast %23 : i32 to index
    %c0_13 = arith.constant 0 : index
    %c0_14 = arith.constant 0 : index
    %25 = vector.load %arg6[%24, %c0_13, %c0_14] : memref<22x27x4xbf16, #tpu.memory_space<vmem>>, vector<16x27x4xbf16>
    %cst = arith.constant 0.000000e+00 : f32
    %26 = vector.broadcast %cst : f32 to vector<256x12xf32>
    %27 = vector.extract_strided_slice %7 {offsets = [0, 5, 0], sizes = [16, 16, 4], strides = [1, 1, 1]} : vector<16x27x4xbf16> to vector<16x16x4xbf16>
    %28 = vector.extract_strided_slice %7 {offsets = [0, 6, 0], sizes = [16, 16, 4], strides = [1, 1, 1]} : vector<16x27x4xbf16> to vector<16x16x4xbf16>
    %29 = vector.extract_strided_slice %7 {offsets = [0, 7, 0], sizes = [16, 16, 4], strides = [1, 1, 1]} : vector<16x27x4xbf16> to vector<16x16x4xbf16>
    %30 = vector.extract_strided_slice %7 {offsets = [0, 8, 0], sizes = [16, 16, 4], strides = [1, 1, 1]} : vector<16x27x4xbf16> to vector<16x16x4xbf16>
    %31 = vector.extract_strided_slice %7 {offsets = [0, 9, 0], sizes = [16, 16, 4], strides = [1, 1, 1]} : vector<16x27x4xbf16> to vector<16x16x4xbf16>
    %32 = vector.extract_strided_slice %7 {offsets = [0, 10, 0], sizes = [16, 16, 4], strides = [1, 1, 1]} : vector<16x27x4xbf16> to vector<16x16x4xbf16>
    %33 = vector.extract_strided_slice %7 {offsets = [0, 11, 0], sizes = [16, 16, 4], strides = [1, 1, 1]} : vector<16x27x4xbf16> to vector<16x16x4xbf16>
    %34 = vector.extract_strided_slice %10 {offsets = [0, 5, 0], sizes = [16, 16, 4], strides = [1, 1, 1]} : vector<16x27x4xbf16> to vector<16x16x4xbf16>
    %35 = vector.extract_strided_slice %10 {offsets = [0, 6, 0], sizes = [16, 16, 4], strides = [1, 1, 1]} : vector<16x27x4xbf16> to vector<16x16x4xbf16>
    %36 = vector.extract_strided_slice %10 {offsets = [0, 7, 0], sizes = [16, 16, 4], strides = [1, 1, 1]} : vector<16x27x4xbf16> to vector<16x16x4xbf16>
    %37 = vector.extract_strided_slice %10 {offsets = [0, 8, 0], sizes = [16, 16, 4], strides = [1, 1, 1]} : vector<16x27x4xbf16> to vector<16x16x4xbf16>
    %38 = vector.extract_strided_slice %10 {offsets = [0, 9, 0], sizes = [16, 16, 4], strides = [1, 1, 1]} : vector<16x27x4xbf16> to vector<16x16x4xbf16>
    %39 = vector.extract_strided_slice %10 {offsets = [0, 10, 0], sizes = [16, 16, 4], strides = [1, 1, 1]} : vector<16x27x4xbf16> to vector<16x16x4xbf16>
    %40 = vector.extract_strided_slice %10 {offsets = [0, 11, 0], sizes = [16, 16, 4], strides = [1, 1, 1]} : vector<16x27x4xbf16> to vector<16x16x4xbf16>
    %41 = vector.extract_strided_slice %13 {offsets = [0, 5, 0], sizes = [16, 16, 4], strides = [1, 1, 1]} : vector<16x27x4xbf16> to vector<16x16x4xbf16>
    %42 = vector.extract_strided_slice %13 {offsets = [0, 6, 0], sizes = [16, 16, 4], strides = [1, 1, 1]} : vector<16x27x4xbf16> to vector<16x16x4xbf16>
    %43 = vector.extract_strided_slice %13 {offsets = [0, 7, 0], sizes = [16, 16, 4], strides = [1, 1, 1]} : vector<16x27x4xbf16> to vector<16x16x4xbf16>
    %44 = vector.extract_strided_slice %13 {offsets = [0, 8, 0], sizes = [16, 16, 4], strides = [1, 1, 1]} : vector<16x27x4xbf16> to vector<16x16x4xbf16>
    %45 = vector.extract_strided_slice %13 {offsets = [0, 9, 0], sizes = [16, 16, 4], strides = [1, 1, 1]} : vector<16x27x4xbf16> to vector<16x16x4xbf16>
    %46 = vector.extract_strided_slice %13 {offsets = [0, 10, 0], sizes = [16, 16, 4], strides = [1, 1, 1]} : vector<16x27x4xbf16> to vector<16x16x4xbf16>
    %47 = vector.extract_strided_slice %13 {offsets = [0, 11, 0], sizes = [16, 16, 4], strides = [1, 1, 1]} : vector<16x27x4xbf16> to vector<16x16x4xbf16>
    %48 = vector.extract_strided_slice %16 {offsets = [0, 5, 0], sizes = [16, 16, 4], strides = [1, 1, 1]} : vector<16x27x4xbf16> to vector<16x16x4xbf16>
    %49 = vector.extract_strided_slice %16 {offsets = [0, 6, 0], sizes = [16, 16, 4], strides = [1, 1, 1]} : vector<16x27x4xbf16> to vector<16x16x4xbf16>
    %50 = vector.extract_strided_slice %16 {offsets = [0, 7, 0], sizes = [16, 16, 4], strides = [1, 1, 1]} : vector<16x27x4xbf16> to vector<16x16x4xbf16>
    %51 = vector.extract_strided_slice %16 {offsets = [0, 8, 0], sizes = [16, 16, 4], strides = [1, 1, 1]} : vector<16x27x4xbf16> to vector<16x16x4xbf16>
    %52 = vector.extract_strided_slice %16 {offsets = [0, 9, 0], sizes = [16, 16, 4], strides = [1, 1, 1]} : vector<16x27x4xbf16> to vector<16x16x4xbf16>
    %53 = vector.extract_strided_slice %16 {offsets = [0, 10, 0], sizes = [16, 16, 4], strides = [1, 1, 1]} : vector<16x27x4xbf16> to vector<16x16x4xbf16>
    %54 = vector.extract_strided_slice %16 {offsets = [0, 11, 0], sizes = [16, 16, 4], strides = [1, 1, 1]} : vector<16x27x4xbf16> to vector<16x16x4xbf16>
    %55 = vector.extract_strided_slice %19 {offsets = [0, 5, 0], sizes = [16, 16, 4], strides = [1, 1, 1]} : vector<16x27x4xbf16> to vector<16x16x4xbf16>
    %56 = vector.extract_strided_slice %19 {offsets = [0, 6, 0], sizes = [16, 16, 4], strides = [1, 1, 1]} : vector<16x27x4xbf16> to vector<16x16x4xbf16>
    %57 = vector.extract_strided_slice %19 {offsets = [0, 7, 0], sizes = [16, 16, 4], strides = [1, 1, 1]} : vector<16x27x4xbf16> to vector<16x16x4xbf16>
    %58 = vector.extract_strided_slice %19 {offsets = [0, 8, 0], sizes = [16, 16, 4], strides = [1, 1, 1]} : vector<16x27x4xbf16> to vector<16x16x4xbf16>
    %59 = vector.extract_strided_slice %19 {offsets = [0, 9, 0], sizes = [16, 16, 4], strides = [1, 1, 1]} : vector<16x27x4xbf16> to vector<16x16x4xbf16>
    %60 = vector.extract_strided_slice %19 {offsets = [0, 10, 0], sizes = [16, 16, 4], strides = [1, 1, 1]} : vector<16x27x4xbf16> to vector<16x16x4xbf16>
    %61 = vector.extract_strided_slice %19 {offsets = [0, 11, 0], sizes = [16, 16, 4], strides = [1, 1, 1]} : vector<16x27x4xbf16> to vector<16x16x4xbf16>
    %62 = vector.extract_strided_slice %22 {offsets = [0, 5, 0], sizes = [16, 16, 4], strides = [1, 1, 1]} : vector<16x27x4xbf16> to vector<16x16x4xbf16>
    %63 = vector.extract_strided_slice %22 {offsets = [0, 6, 0], sizes = [16, 16, 4], strides = [1, 1, 1]} : vector<16x27x4xbf16> to vector<16x16x4xbf16>
    %64 = vector.extract_strided_slice %22 {offsets = [0, 7, 0], sizes = [16, 16, 4], strides = [1, 1, 1]} : vector<16x27x4xbf16> to vector<16x16x4xbf16>
    %65 = vector.extract_strided_slice %22 {offsets = [0, 8, 0], sizes = [16, 16, 4], strides = [1, 1, 1]} : vector<16x27x4xbf16> to vector<16x16x4xbf16>
    %66 = vector.extract_strided_slice %22 {offsets = [0, 9, 0], sizes = [16, 16, 4], strides = [1, 1, 1]} : vector<16x27x4xbf16> to vector<16x16x4xbf16>
    %67 = vector.extract_strided_slice %22 {offsets = [0, 10, 0], sizes = [16, 16, 4], strides = [1, 1, 1]} : vector<16x27x4xbf16> to vector<16x16x4xbf16>
    %68 = vector.extract_strided_slice %22 {offsets = [0, 11, 0], sizes = [16, 16, 4], strides = [1, 1, 1]} : vector<16x27x4xbf16> to vector<16x16x4xbf16>
    %69 = vector.extract_strided_slice %25 {offsets = [0, 5, 0], sizes = [16, 16, 4], strides = [1, 1, 1]} : vector<16x27x4xbf16> to vector<16x16x4xbf16>
    %70 = vector.extract_strided_slice %25 {offsets = [0, 6, 0], sizes = [16, 16, 4], strides = [1, 1, 1]} : vector<16x27x4xbf16> to vector<16x16x4xbf16>
    %71 = vector.extract_strided_slice %25 {offsets = [0, 7, 0], sizes = [16, 16, 4], strides = [1, 1, 1]} : vector<16x27x4xbf16> to vector<16x16x4xbf16>
    %72 = vector.extract_strided_slice %25 {offsets = [0, 8, 0], sizes = [16, 16, 4], strides = [1, 1, 1]} : vector<16x27x4xbf16> to vector<16x16x4xbf16>
    %73 = vector.extract_strided_slice %25 {offsets = [0, 9, 0], sizes = [16, 16, 4], strides = [1, 1, 1]} : vector<16x27x4xbf16> to vector<16x16x4xbf16>
    %74 = vector.extract_strided_slice %25 {offsets = [0, 10, 0], sizes = [16, 16, 4], strides = [1, 1, 1]} : vector<16x27x4xbf16> to vector<16x16x4xbf16>
    %75 = vector.extract_strided_slice %25 {offsets = [0, 11, 0], sizes = [16, 16, 4], strides = [1, 1, 1]} : vector<16x27x4xbf16> to vector<16x16x4xbf16>
    %76 = tpu.concatenate %27, %28, %29, %30, %31, %32, %33, %34, %35, %36, %37, %38, %39, %40, %41, %42 in 2 : vector<16x16x4xbf16>, vector<16x16x4xbf16>, vector<16x16x4xbf16>, vector<16x16x4xbf16>, vector<16x16x4xbf16>, vector<16x16x4xbf16>, vector<16x16x4xbf16>, vector<16x16x4xbf16>, vector<16x16x4xbf16>, vector<16x16x4xbf16>, vector<16x16x4xbf16>, vector<16x16x4xbf16>, vector<16x16x4xbf16>, vector<16x16x4xbf16>, vector<16x16x4xbf16>, vector<16x16x4xbf16> -> vector<16x16x64xbf16>
    %77 = tpu.concatenate %43, %44, %45, %46, %47, %48, %49, %50, %51, %52, %53, %54, %55, %56, %57, %58 in 2 : vector<16x16x4xbf16>, vector<16x16x4xbf16>, vector<16x16x4xbf16>, vector<16x16x4xbf16>, vector<16x16x4xbf16>, vector<16x16x4xbf16>, vector<16x16x4xbf16>, vector<16x16x4xbf16>, vector<16x16x4xbf16>, vector<16x16x4xbf16>, vector<16x16x4xbf16>, vector<16x16x4xbf16>, vector<16x16x4xbf16>, vector<16x16x4xbf16>, vector<16x16x4xbf16>, vector<16x16x4xbf16> -> vector<16x16x64xbf16>
    %78 = tpu.concatenate %59, %60, %61, %62, %63, %64, %65, %66, %67, %68, %69, %70, %71, %72, %73, %74 in 2 : vector<16x16x4xbf16>, vector<16x16x4xbf16>, vector<16x16x4xbf16>, vector<16x16x4xbf16>, vector<16x16x4xbf16>, vector<16x16x4xbf16>, vector<16x16x4xbf16>, vector<16x16x4xbf16>, vector<16x16x4xbf16>, vector<16x16x4xbf16>, vector<16x16x4xbf16>, vector<16x16x4xbf16>, vector<16x16x4xbf16>, vector<16x16x4xbf16>, vector<16x16x4xbf16>, vector<16x16x4xbf16> -> vector<16x16x64xbf16>
    %79 = tpu.concatenate %76, %77, %78, %75 in 2 : vector<16x16x64xbf16>, vector<16x16x64xbf16>, vector<16x16x64xbf16>, vector<16x16x4xbf16> -> vector<16x16x196xbf16>
    %80 = vector.shape_cast %79 : vector<16x16x196xbf16> to vector<256x196xbf16>
    %c0_15 = arith.constant 0 : index
    %c0_16 = arith.constant 0 : index
    %81 = vector.load %arg3[%c0_15, %c0_16] : memref<196x12xbf16, #tpu.memory_space<vmem>>, vector<196x12xbf16>
    %cst_17 = arith.constant dense<0.000000e+00> : vector<256x12xf32>
    %82 = tpu.matmul %80, %81, %cst_17 {dimension_numbers = #tpu.dot_dimension_numbers<[1], [0], [0], [1], [0, 0, 1, 1], [], []>} : vector<256x196xbf16>, vector<196x12xbf16>, vector<256x12xf32> -> vector<256x12xf32>
    %83 = arith.addf %26, %82 : vector<256x12xf32>
    %c0_18 = arith.constant 0 : index
    %c0_19 = arith.constant 0 : index
    %c0_20 = arith.constant 0 : index
    %84 = vector.load %arg4[%c0_18, %c0_19, %c0_20] : memref<1x1x12xf32, #tpu.memory_space<vmem>>, vector<1x1x12xf32>
    %85 = vector.shape_cast %84 : vector<1x1x12xf32> to vector<1x12xf32>
    %86 = vector.broadcast %85 : vector<1x12xf32> to vector<256x12xf32>
    %87 = arith.addf %83, %86 : vector<256x12xf32>
    %cst_21 = arith.constant 0.000000e+00 : f32
    %88 = vector.broadcast %cst_21 : f32 to vector<256x12xf32>
    %89 = arith.maximumf %87, %88 : vector<256x12xf32>
    %90 = vector.shape_cast %89 : vector<256x12xf32> to vector<16x16x12xf32>
    %c0_22 = arith.constant 0 : index
    %c0_23 = arith.constant 0 : index
    %c0_24 = arith.constant 0 : index
    %c0_25 = arith.constant 0 : index
    %91 = vector.load %arg5[%c0_22, %c0_23, %c0_24, %c0_25] : memref<1x16x16x12xf32, #tpu.memory_space<vmem>>, vector<1x16x16x12xf32>
    %92 = vector.shape_cast %91 : vector<1x16x16x12xf32> to vector<16x16x12xf32>
    %93 = vector.shape_cast %90 : vector<16x16x12xf32> to vector<1x16x16x12xf32>
    tpu.vector_store %arg5[%c0_22, %c0_23, %c0_24, %c0_25], %93 {strides = array<i32>} : memref<1x16x16x12xf32, #tpu.memory_space<vmem>>, vector<1x16x16x12xf32>,
    return
  }
  func.func @transform_0(%arg0: i32, %arg1: i32) -> (i32, i32, i32, i32) {
    %c0_i32 = arith.constant 0 : i32
    %c0_i32_0 = arith.constant 0 : i32
    %c0_i32_1 = arith.constant 0 : i32
    %c0_i32_2 = arith.constant 0 : i32
    return %arg0, %c0_i32, %c0_i32_0, %c0_i32_1 : i32, i32, i32, i32
  }
  func.func @transform_1(%arg0: i32, %arg1: i32) -> (i32, i32) {
    %c0_i32 = arith.constant 0 : i32
    %c0_i32_0 = arith.constant 0 : i32
    %c0_i32_1 = arith.constant 0 : i32
    return %c0_i32, %c0_i32_0 : i32, i32
  }
  func.func @transform_2(%arg0: i32, %arg1: i32) -> (i32, i32, i32) {
    %c0_i32 = arith.constant 0 : i32
    %c0_i32_0 = arith.constant 0 : i32
    %c0_i32_1 = arith.constant 0 : i32
    %c0_i32_2 = arith.constant 0 : i32
    return %c0_i32, %c0_i32_0, %c0_i32_1 : i32, i32, i32
  }
  func.func @transform_3(%arg0: i32, %arg1: i32) -> (i32, i32, i32, i32) {
    %c0_i32 = arith.constant 0 : i32
    %c0_i32_0 = arith.constant 0 : i32
    %c0_i32_1 = arith.constant 0 : i32
    return %arg0, %arg1, %c0_i32, %c0_i32_0 : i32, i32, i32, i32
  }
}

</mosaic_0001>

<llo_original>
// kernel: tpu_custom_call.1
$region0: #{tpu_custom_call.1}
  #allocation0 [shape = 'u32[]', space=smem, size = 0x4, offset = 0x4, fixed_abs, tag = 'smem constant byte address 0x4 - core index']
  #allocation1 [shape = 'u32[144,128]{1,0:T(1,128)}', space=vmem, size = 0x12000, scoped, tag = 'internal scratch']
  #allocation2 [shape = 'bf16[22,27,4]{2,1,0:T(8,128)(2,1)}', space=vmem, size = 0x2c000, scoped, tag = 'scratch operand']
  %s0 = inlined_call_operand.vmem [shape: bf16[2,16,16,4], index: 0, kind: input, shape index: {}]
  %s1 = inlined_call_operand.vmem [shape: bf16[196,12], index: 1, kind: input, shape index: {}]
  %s2 = inlined_call_operand.vmem [shape: f32[1,1,12], index: 2, kind: input, shape index: {}]
  %s3 = inlined_call_operand.vmem [shape: f32[2,16,16,12], index: 3, kind: output, shape index: {}]
  %s4 = sld [smem:[#allocation0]]
  $region49: #{tpu_custom_call.1} parent=0
    _
  %s6 = ssub.s32 1, %s4
  %s7 = scalar_select 0, %s6, %s4
  loop: start=0, step=1, limit=4
  $region2: #{tpu_custom_call.1} parent=0 // loop_pre_header
    _
  $region3: #{tpu_custom_call.1} parent=0 // loop_header
    %s9 = sphi 0, %s13
    %p10 = scmp.ge.s32.totalorder %s9, 4
    %s16 = sphi 0, %s28
    %s17 = sphi 0, %s24
    %s18 = sphi 0, %s16
    %s19 = sphi 0, %s17
    %s20 = sphi 0, %s18
    %s21 = sphi 0, %s19
    %s31 = sphi 0, %s33
    %s34 = sphi 0, %s31
    %s35 = sphi 0, %s34
    %s51 = sphi 0, %s35
    %s55 = sphi 0, %s55
    %s57 = sphi 0, %s55
    %s58 = sphi 0, %s57
    %s72 = sphi 0, %s58
    %s76 = sphi 0, %s76
    %s78 = sphi 0, %s76
    %s79 = sphi 0, %s78
    %s93 = sphi 0, %s79
    %s101 = sphi 0, %s103
    %s104 = sphi 0, %s101
    %s105 = sphi 0, %s104
    %s121 = sphi 0, %s105
  $region4: #{tpu_custom_call.1} parent=0 // loop_header_branch
    %12 = sbr.rel (%p10) target = $region8
  $region5: #{tpu_custom_call.1} parent=0 // loop_body
    %s14 = ssub.s32 %s9, 1
    %s15 = ssub.s32 %s9, 2
    %s22 = sadd.s32 1, %s17
    %p23 = scmp.ge.s32.totalorder %s22, 1
    %s24 = scalar_select %p23, 0, %s22
    %s25 = sadd.s32 1, %s16
    %s26 = scalar_select %p23, %s25, %s16
    %p27 = scmp.ge.s32.totalorder %s26, 2
    %s28 = scalar_select %p27, 0, %s26
    %s29 = ssub.s32 %s16, %s28
    %p30 = scmp.eq.s32.totalorder %s29, 0
    %s32 = sadd.s32 %s31, 1
    %s33 = scalar_select %p30, %s31, %s32
    %p36 = pneg %p30
    %p37 = scmp.eq.s32.totalorder %s9, 1
    %p38 = por %p36, %p37
    %p39 = scmp.ne.s32.totalorder %s31, %s34
    %p40 = scmp.eq.s32.totalorder %s9, 0
    %p41 = por %p39, %p40
    %p42 = scmp.ne.s32.totalorder %s31, %s34
    %p43 = scmp.eq.s32.totalorder %s14, 1
    %p44 = por %p42, %p43
    %p45 = scmp.ne.s32.totalorder %s34, %s35
    %p46 = scmp.eq.s32.totalorder %s14, 0
    %p47 = por %p45, %p46
    %p48 = scmp.ne.s32.totalorder %s34, %s35
    %p49 = scmp.eq.s32.totalorder %s15, 1
    %p50 = por %p48, %p49
    %p52 = scmp.ne.s32.totalorder %s35, %s51
    %p53 = scmp.eq.s32.totalorder %s15, 0
    %p54 = por %p52, %p53
    %s56 = sadd.s32 %s55, 1
    %p59 = scmp.eq.s32.totalorder %s9, 1
    %p60 = scmp.ne.s32.totalorder %s55, %s57
    %p61 = scmp.eq.s32.totalorder %s9, 0
    %p62 = por %p60, %p61
    %p63 = scmp.ne.s32.totalorder %s55, %s57
    %p64 = scmp.eq.s32.totalorder %s14, 1
    %p65 = por %p63, %p64
    %p66 = scmp.ne.s32.totalorder %s57, %s58
    %p67 = scmp.eq.s32.totalorder %s14, 0
    %p68 = por %p66, %p67
    %p69 = scmp.ne.s32.totalorder %s57, %s58
    %p70 = scmp.eq.s32.totalorder %s15, 1
    %p71 = por %p69, %p70
    %p73 = scmp.ne.s32.totalorder %s58, %s72
    %p74 = scmp.eq.s32.totalorder %s15, 0
    %p75 = por %p73, %p74
    %s77 = sadd.s32 %s76, 1
    %p80 = scmp.eq.s32.totalorder %s9, 1
    %p81 = scmp.ne.s32.totalorder %s76, %s78
    %p82 = scmp.eq.s32.totalorder %s9, 0
    %p83 = por %p81, %p82
    %p84 = scmp.ne.s32.totalorder %s76, %s78
    %p85 = scmp.eq.s32.totalorder %s14, 1
    %p86 = por %p84, %p85
    %p87 = scmp.ne.s32.totalorder %s78, %s79
    %p88 = scmp.eq.s32.totalorder %s14, 0
    %p89 = por %p87, %p88
    %p90 = scmp.ne.s32.totalorder %s78, %s79
    %p91 = scmp.eq.s32.totalorder %s15, 1
    %p92 = por %p90, %p91
    %p94 = scmp.ne.s32.totalorder %s79, %s93
    %p95 = scmp.eq.s32.totalorder %s15, 0
    %p96 = por %p94, %p95
    %s97 = ssub.s32 %s16, %s28
    %s98 = ssub.s32 %s17, %s24
    %s99 = sor.u32 %s97, %s98
    %p100 = scmp.eq.s32.totalorder %s99, 0
    %s102 = sadd.s32 %s101, 1
    %s103 = scalar_select %p100, %s101, %s102
    %p106 = pneg %p100
    %p107 = scmp.eq.s32.totalorder %s9, 1
    %p108 = por %p106, %p107
    %p109 = scmp.ne.s32.totalorder %s101, %s104
    %p110 = scmp.eq.s32.totalorder %s9, 0
    %p111 = por %p109, %p110
    %p112 = scmp.ne.s32.totalorder %s101, %s104
    %p113 = scmp.eq.s32.totalorder %s14, 1
    %p114 = por %p112, %p113
    %p115 = scmp.ne.s32.totalorder %s104, %s105
    %p116 = scmp.eq.s32.totalorder %s14, 0
    %p117 = por %p115, %p116
    %p118 = scmp.ne.s32.totalorder %s104, %s105
    %p119 = scmp.eq.s32.totalorder %s15, 1
    %p120 = por %p118, %p119
    %p122 = scmp.ne.s32.totalorder %s105, %s121
    %p123 = scmp.eq.s32.totalorder %s15, 0
    %p124 = por %p122, %p123
    %p125 = scmp.le.s32.totalorder 1, %s9
    %p126 = scmp.lt.s32.totalorder %s9, 3
    %p127 = pnand %p125, %p126
    %p128 = pneg %p127
    // Predicated region
    $region9: #{tpu_custom_call.1} parent=5 // pred_check
      _
    $region10: #{tpu_custom_call.1} parent=5 // pred_check_branch
      %130 = sbr.rel (%p127) target = $region12
    $region11: #{tpu_custom_call.1} parent=5 // pred_region
      %s131 = ssub.s32 %s9, 1
      // Predicated region
      $region13: #{tpu_custom_call.1} parent=11 // pred_check
        %p132 = pneg %p68
      $region14: #{tpu_custom_call.1} parent=11 // pred_check_branch
        %134 = sbr.rel (%p132) target = $region16
      $region15: #{tpu_custom_call.1} parent=11 // pred_region
        _
      $region16: #{tpu_custom_call.1} parent=11 // pred_fallthru
        _
      // Predicated region
      $region17: #{tpu_custom_call.1} parent=11 // pred_check
        %p135 = pneg %p89
      $region18: #{tpu_custom_call.1} parent=11 // pred_check_branch
        %137 = sbr.rel (%p135) target = $region20
      $region19: #{tpu_custom_call.1} parent=11 // pred_region
        _
      $region20: #{tpu_custom_call.1} parent=11 // pred_fallthru
        _
    $region12: #{tpu_custom_call.1} parent=5 // pred_fallthru
      _
    %p138 = scmp.lt.s32.totalorder %s9, 2
    // Predicated region
    $region21: #{tpu_custom_call.1} parent=5 // pred_check
      %p139 = pneg %p138
    $region22: #{tpu_custom_call.1} parent=5 // pred_check_branch
      %141 = sbr.rel (%p139) target = $region24
    $region23: #{tpu_custom_call.1} parent=5 // pred_region
      // Predicated region
      $region25: #{tpu_custom_call.1} parent=23 // pred_check
        %p142 = pneg %p41
      $region26: #{tpu_custom_call.1} parent=23 // pred_check_branch
        %144 = sbr.rel (%p142) target = $region28
      $region27: #{tpu_custom_call.1} parent=23 // pred_region
        %p145 = scmp.lt.s32.totalorder %s16, 1
        %s146 = scalar_select %p145, %s16, 1
        %s147 = smul.addr %s146, 32
        %s148 = smul.addr %s147, 4
        %s149 = scalar_lea.vmem %s0, %s148
      $region28: #{tpu_custom_call.1} parent=23 // pred_fallthru
        _
    $region24: #{tpu_custom_call.1} parent=5 // pred_fallthru
      _
    %p150 = scmp.le.s32.totalorder 1, %s9
    %p151 = scmp.lt.s32.totalorder %s9, 3
    %p152 = pnand %p150, %p151
    %p153 = pneg %p152
    // Predicated region
    $region29: #{tpu_custom_call.1} parent=5 // pred_check
      _
    $region30: #{tpu_custom_call.1} parent=5 // pred_check_branch
      %155 = sbr.rel (%p152) target = $region32
    $region31: #{tpu_custom_call.1} parent=5 // pred_region
      %s156 = ssub.s32 %s9, 1
      %p157 = scmp.lt.s32.totalorder %s18, 1
      %s158 = scalar_select %p157, %s18, 1
      %s159 = smul.addr %s158, 32
      %s160 = smul.addr %s159, 4
      %s161 = scalar_lea.vmem %s0, %s160
      %p162 = pneg %p47
      %p163 = pneg %p44
      %p164 = pneg %p68
      %p165 = pneg %p65
      %p166 = pneg %p89
      %p167 = pneg %p86
      %p168 = pneg %p117
      %p169 = pneg %p114
      %s170 = smul.u32 16, %s19
      %p171 = scmp.lt.s32.totalorder %s18, 1
      %s172 = scalar_select %p171, %s18, 1
      %p173 = scmp.lt.s32.totalorder %s170, 15
      %s174 = scalar_select %p173, %s170, 15
      %s175 = smul.addr %s174, 2
      %s176 = smul.addr %s172, 32
      %s177 = sadd.s32 %s175, %s176
      %s178 = smul.addr %s177, 8
      %s179 = scalar_lea.vmem %s3, %s178
      %p180 = scmp.lt.s32.totalorder %s18, 1
      %s181 = scalar_select %p180, %s18, 1
      %s182 = smul.addr %s181, 32
      %s183 = smul.addr %s182, 4
      %s184 = scalar_lea.vmem %s0, %s183
      %s185 = smul.u32 16, %s19
      %p186 = scmp.lt.s32.totalorder %s18, 1
      %s187 = scalar_select %p186, %s18, 1
      %p188 = scmp.lt.s32.totalorder %s185, 15
      %s189 = scalar_select %p188, %s185, 15
      %s190 = smul.addr %s189, 2
      %s191 = smul.addr %s187, 32
      %s192 = sadd.s32 %s190, %s191
      %s193 = smul.addr %s192, 8
      %s194 = scalar_lea.vmem %s3, %s193
      %s195 = smul.u32 16, %s19
      %p197 = scmp.eq.s32.totalorder %s19, 0
      // Predicated region
      $region33: #{tpu_custom_call.1} parent=31 // pred_check
        %p198 = pneg %p197
      $region34: #{tpu_custom_call.1} parent=31 // pred_check_branch
        %200 = sbr.rel (%p198) target = $region36
      $region35: #{tpu_custom_call.1} parent=31 // pred_region
        %vm201 = vcmask 27648
        %202 = vst.msk [vmem:[#allocation2] sm:$0xf] %vm201, 0
        %203 = vst.msk [vmem:[#allocation2 + $0x4] sm:$0xf] %vm201, 0
        %204 = vst.msk [vmem:[#allocation2 + $0x8] sm:$0xf] %vm201, 0
        %vm205 = vcmask 25600
        %vm206 = vsmask.f32 1280
        %vm207 = vmand %vm205, %vm206
        %v208 = vld [vmem:[#allocation2 + $0xc] sm:$0x3]
        %v209 = vsel %vm207, 0, %v208
        %210 = vst [vmem:[#allocation2 + $0xc] sm:$0x3] %v209
        %211 = vst.msk [vmem:[#allocation2 + $0x10] sm:$0xf] %vm201, 0
        %212 = vst.msk [vmem:[#allocation2 + $0x14] sm:$0xf] %vm201, 0
        %213 = vst.msk [vmem:[#allocation2 + $0x18] sm:$0xf] %vm201, 0
        %v214 = vld [vmem:[#allocation2 + $0x1c] sm:$0x3]
        %v215 = vsel %vm207, 0, %v214
        %216 = vst [vmem:[#allocation2 + $0x1c] sm:$0x3] %v215
        %217 = vst.msk [vmem:[#allocation2 + $0x20] sm:$0xf] %vm201, 0
        %218 = vst.msk [vmem:[#allocation2 + $0x24] sm:$0xf] %vm201, 0
        %219 = vst.msk [vmem:[#allocation2 + $0x28] sm:$0xf] %vm201, 0
        %v220 = vld [vmem:[#allocation2 + $0x2c] sm:$0x3]
        %v221 = vsel %vm207, 0, %v220
        %222 = vst [vmem:[#allocation2 + $0x2c] sm:$0x3] %v221
        %223 = vst.msk [vmem:[#allocation2 + $0x30] sm:$0xf] %vm201, 0
        %224 = vst.msk [vmem:[#allocation2 + $0x34] sm:$0xf] %vm201, 0
        %225 = vst.msk [vmem:[#allocation2 + $0x38] sm:$0xf] %vm201, 0
        %v226 = vld [vmem:[#allocation2 + $0x3c] sm:$0x3]
        %v227 = vsel %vm207, 0, %v226
        %228 = vst [vmem:[#allocation2 + $0x3c] sm:$0x3] %v227
        %229 = vst.msk [vmem:[#allocation2 + $0x40] sm:$0xf] %vm201, 0
        %230 = vst.msk [vmem:[#allocation2 + $0x44] sm:$0xf] %vm201, 0
        %231 = vst.msk [vmem:[#allocation2 + $0x48] sm:$0xf] %vm201, 0
        %v232 = vld [vmem:[#allocation2 + $0x4c] sm:$0x3]
        %v233 = vsel %vm207, 0, %v232
        %234 = vst [vmem:[#allocation2 + $0x4c] sm:$0x3] %v233
        %235 = vst.msk [vmem:[#allocation2 + $0x50] sm:$0xf] %vm201, 0
        %236 = vst.msk [vmem:[#allocation2 + $0x54] sm:$0xf] %vm201, 0
        %237 = vst.msk [vmem:[#allocation2 + $0x58] sm:$0xf] %vm201, 0
        %v238 = vld [vmem:[#allocation2 + $0x5c] sm:$0x3]
        %v239 = vsel %vm207, 0, %v238
        %240 = vst [vmem:[#allocation2 + $0x5c] sm:$0x3] %v239
        %241 = vst.msk [vmem:[#allocation2 + $0x60] sm:$0xf] %vm201, 0
        %242 = vst.msk [vmem:[#allocation2 + $0x64] sm:$0xf] %vm201, 0
        %243 = vst.msk [vmem:[#allocation2 + $0x68] sm:$0xf] %vm201, 0
        %v244 = vld [vmem:[#allocation2 + $0x6c] sm:$0x3]
        %v245 = vsel %vm207, 0, %v244
        %246 = vst [vmem:[#allocation2 + $0x6c] sm:$0x3] %v245
        %247 = vst.msk [vmem:[#allocation2 + $0x70] sm:$0xf] %vm201, 0
        %248 = vst.msk [vmem:[#allocation2 + $0x74] sm:$0xf] %vm201, 0
        %249 = vst.msk [vmem:[#allocation2 + $0x78] sm:$0xf] %vm201, 0
        %v250 = vld [vmem:[#allocation2 + $0x7c] sm:$0x3]
        %v251 = vsel %vm207, 0, %v250
        %252 = vst [vmem:[#allocation2 + $0x7c] sm:$0x3] %v251
        %253 = vst.msk [vmem:[#allocation2 + $0x80] sm:$0xf] %vm201, 0
        %254 = vst.msk [vmem:[#allocation2 + $0x84] sm:$0xf] %vm201, 0
        %255 = vst.msk [vmem:[#allocation2 + $0x88] sm:$0xf] %vm201, 0
        %v256 = vld [vmem:[#allocation2 + $0x8c] sm:$0x3]
        %v257 = vsel %vm207, 0, %v256
        %258 = vst [vmem:[#allocation2 + $0x8c] sm:$0x3] %v257
        %259 = vst.msk [vmem:[#allocation2 + $0x90] sm:$0xf] %vm201, 0
        %260 = vst.msk [vmem:[#allocation2 + $0x94] sm:$0xf] %vm201, 0
        %261 = vst.msk [vmem:[#allocation2 + $0x98] sm:$0xf] %vm201, 0
        %v262 = vld [vmem:[#allocation2 + $0x9c] sm:$0x3]
        %v263 = vsel %vm207, 0, %v262
        %264 = vst [vmem:[#allocation2 + $0x9c] sm:$0x3] %v263
        %265 = vst.msk [vmem:[#allocation2 + $0xa0] sm:$0xf] %vm201, 0
        %266 = vst.msk [vmem:[#allocation2 + $0xa4] sm:$0xf] %vm201, 0
        %267 = vst.msk [vmem:[#allocation2 + $0xa8] sm:$0xf] %vm201, 0
        %v268 = vld [vmem:[#allocation2 + $0xac] sm:$0x3]
        %v269 = vsel %vm207, 0, %v268
        %270 = vst [vmem:[#allocation2 + $0xac] sm:$0x3] %v269
        %271 = vst.msk [vmem:[#allocation2 + $0xb0] sm:$0xf] %vm201, 0
        %272 = vst.msk [vmem:[#allocation2 + $0xb4] sm:$0xf] %vm201, 0
        %273 = vst.msk [vmem:[#allocation2 + $0xb8] sm:$0xf] %vm201, 0
        %v274 = vld [vmem:[#allocation2 + $0xbc] sm:$0x3]
        %v275 = vsel %vm207, 0, %v274
        %276 = vst [vmem:[#allocation2 + $0xbc] sm:$0x3] %v275
        %277 = vst.msk [vmem:[#allocation2 + $0xc0] sm:$0xf] %vm201, 0
        %278 = vst.msk [vmem:[#allocation2 + $0xc4] sm:$0xf] %vm201, 0
        %279 = vst.msk [vmem:[#allocation2 + $0xc8] sm:$0xf] %vm201, 0
        %v280 = vld [vmem:[#allocation2 + $0xcc] sm:$0x3]
        %v281 = vsel %vm207, 0, %v280
        %282 = vst [vmem:[#allocation2 + $0xcc] sm:$0x3] %v281
        %283 = vst.msk [vmem:[#allocation2 + $0xd0] sm:$0xf] %vm201, 0
        %284 = vst.msk [vmem:[#allocation2 + $0xd4] sm:$0xf] %vm201, 0
        %285 = vst.msk [vmem:[#allocation2 + $0xd8] sm:$0xf] %vm201, 0
        %v286 = vld [vmem:[#allocation2 + $0xdc] sm:$0x3]
        %v287 = vsel %vm207, 0, %v286
        %288 = vst [vmem:[#allocation2 + $0xdc] sm:$0x3] %v287
        %289 = vst.msk [vmem:[#allocation2 + $0xe0] sm:$0xf] %vm201, 0
        %290 = vst.msk [vmem:[#allocation2 + $0xe4] sm:$0xf] %vm201, 0
        %291 = vst.msk [vmem:[#allocation2 + $0xe8] sm:$0xf] %vm201, 0
        %v292 = vld [vmem:[#allocation2 + $0xec] sm:$0x3]
        %v293 = vsel %vm207, 0, %v292
        %294 = vst [vmem:[#allocation2 + $0xec] sm:$0x3] %v293
        %295 = vst.msk [vmem:[#allocation2 + $0xf0] sm:$0xf] %vm201, 0
        %296 = vst.msk [vmem:[#allocation2 + $0xf4] sm:$0xf] %vm201, 0
        %297 = vst.msk [vmem:[#allocation2 + $0xf8] sm:$0xf] %vm201, 0
        %v298 = vld [vmem:[#allocation2 + $0xfc] sm:$0x3]
        %v299 = vsel %vm207, 0, %v298
        %300 = vst [vmem:[#allocation2 + $0xfc] sm:$0x3] %v299
        %301 = vst.msk [vmem:[#allocation2 + $0x100] sm:$0xf] %vm201, 0
        %302 = vst.msk [vmem:[#allocation2 + $0x104] sm:$0xf] %vm201, 0
        %303 = vst.msk [vmem:[#allocation2 + $0x108] sm:$0xf] %vm201, 0
        %v304 = vld [vmem:[#allocation2 + $0x10c] sm:$0x3]
        %v305 = vsel %vm207, 0, %v304
        %306 = vst [vmem:[#allocation2 + $0x10c] sm:$0x3] %v305
        %307 = vst.msk [vmem:[#allocation2 + $0x110] sm:$0xf] %vm201, 0
        %308 = vst.msk [vmem:[#allocation2 + $0x114] sm:$0xf] %vm201, 0
        %309 = vst.msk [vmem:[#allocation2 + $0x118] sm:$0xf] %vm201, 0
        %v310 = vld [vmem:[#allocation2 + $0x11c] sm:$0x3]
        %v311 = vsel %vm207, 0, %v310
        %312 = vst [vmem:[#allocation2 + $0x11c] sm:$0x3] %v311
        %313 = vst.msk [vmem:[#allocation2 + $0x120] sm:$0xf] %vm201, 0
        %314 = vst.msk [vmem:[#allocation2 + $0x124] sm:$0xf] %vm201, 0
        %315 = vst.msk [vmem:[#allocation2 + $0x128] sm:$0xf] %vm201, 0
        %v316 = vld [vmem:[#allocation2 + $0x12c] sm:$0x3]
        %v317 = vsel %vm207, 0, %v316
        %318 = vst [vmem:[#allocation2 + $0x12c] sm:$0x3] %v317
        %319 = vst.msk [vmem:[#allocation2 + $0x130] sm:$0xf] %vm201, 0
        %320 = vst.msk [vmem:[#allocation2 + $0x134] sm:$0xf] %vm201, 0
        %321 = vst.msk [vmem:[#allocation2 + $0x138] sm:$0xf] %vm201, 0
        %v322 = vld [vmem:[#allocation2 + $0x13c] sm:$0x3]
        %v323 = vsel %vm207, 0, %v322
        %324 = vst [vmem:[#allocation2 + $0x13c] sm:$0x3] %v323
        %325 = vst.msk [vmem:[#allocation2 + $0x140] sm:$0xf] %vm201, 0
        %326 = vst.msk [vmem:[#allocation2 + $0x144] sm:$0xf] %vm201, 0
        %327 = vst.msk [vmem:[#allocation2 + $0x148] sm:$0xf] %vm201, 0
        %v328 = vld [vmem:[#allocation2 + $0x14c] sm:$0x3]
        %v329 = vsel %vm207, 0, %v328
        %330 = vst [vmem:[#allocation2 + $0x14c] sm:$0x3] %v329
        %331 = vst.msk [vmem:[#allocation2 + $0x150] sm:$0xf] %vm201, 0
        %332 = vst.msk [vmem:[#allocation2 + $0x154] sm:$0xf] %vm201, 0
        %333 = vst.msk [vmem:[#allocation2 + $0x158] sm:$0xf] %vm201, 0
        %v334 = vld [vmem:[#allocation2 + $0x15c] sm:$0x3]
        %v335 = vsel %vm207, 0, %v334
        %336 = vst [vmem:[#allocation2 + $0x15c] sm:$0x3] %v335
        %v337 = vld [vmem:[%s184] sm:$0xf]
        %v338 = vld [vmem:[%s184 + $0x4] sm:$0xf]
        %v339 = vld [vmem:[%s184 + $0x8] sm:$0xf]
        %v340 = vld [vmem:[%s184 + $0xc] sm:$0xf]
        %v341 = vld [vmem:[%s184 + $0x10] sm:$0xf]
        %v342 = vld [vmem:[%s184 + $0x14] sm:$0xf]
        %v343 = vld [vmem:[%s184 + $0x18] sm:$0xf]
        %v344 = vld [vmem:[%s184 + $0x1c] sm:$0xf]
        %v345 = vld [vmem:[%s184 + $0x20] sm:$0xf]
        %v346 = vld [vmem:[%s184 + $0x24] sm:$0xf]
        %v347 = vld [vmem:[%s184 + $0x28] sm:$0xf]
        %v348 = vld [vmem:[%s184 + $0x2c] sm:$0xf]
        %v349 = vld [vmem:[%s184 + $0x30] sm:$0xf]
        %v350 = vld [vmem:[%s184 + $0x34] sm:$0xf]
        %v351 = vld [vmem:[%s184 + $0x38] sm:$0xf]
        %v352 = vld [vmem:[%s184 + $0x3c] sm:$0xf]
        %v353 = vld [vmem:[%s184 + $0x40] sm:$0xf]
        %v354 = vld [vmem:[%s184 + $0x44] sm:$0xf]
        %v355 = vld [vmem:[%s184 + $0x48] sm:$0xf]
        %v356 = vld [vmem:[%s184 + $0x4c] sm:$0xf]
        %v357 = vld [vmem:[%s184 + $0x50] sm:$0xf]
        %v358 = vld [vmem:[%s184 + $0x54] sm:$0xf]
        %v359 = vld [vmem:[%s184 + $0x58] sm:$0xf]
        %v360 = vld [vmem:[%s184 + $0x5c] sm:$0xf]
        %v361 = vld [vmem:[%s184 + $0x60] sm:$0xf]
        %v362 = vld [vmem:[%s184 + $0x64] sm:$0xf]
        %v363 = vld [vmem:[%s184 + $0x68] sm:$0xf]
        %v364 = vld [vmem:[%s184 + $0x6c] sm:$0xf]
        %v365 = vld [vmem:[%s184 + $0x70] sm:$0xf]
        %v366 = vld [vmem:[%s184 + $0x74] sm:$0xf]
        %v367 = vld [vmem:[%s184 + $0x78] sm:$0xf]
        %v368 = vld [vmem:[%s184 + $0x7c] sm:$0xf]
        %s369 = scalar_lea.vmem [#allocation2], 48
        %370 = vst.msk [vmem:[%s369 + $0x4] sm:$0xf] %vm201, %v337
        %371 = vst.msk [vmem:[%s369 + $0x8] sm:$0xf] %vm201, %v338
        %372 = vst.msk [vmem:[%s369 + $0x14] sm:$0xf] %vm201, %v339
        %373 = vst.msk [vmem:[%s369 + $0x18] sm:$0xf] %vm201, %v340
        %374 = vst.msk [vmem:[%s369 + $0x24] sm:$0xf] %vm201, %v341
        %375 = vst.msk [vmem:[%s369 + $0x28] sm:$0xf] %vm201, %v342
        %376 = vst.msk [vmem:[%s369 + $0x34] sm:$0xf] %vm201, %v343
        %377 = vst.msk [vmem:[%s369 + $0x38] sm:$0xf] %vm201, %v344
        %378 = vst.msk [vmem:[%s369 + $0x44] sm:$0xf] %vm201, %v345
        %379 = vst.msk [vmem:[%s369 + $0x48] sm:$0xf] %vm201, %v346
        %380 = vst.msk [vmem:[%s369 + $0x54] sm:$0xf] %vm201, %v347
        %381 = vst.msk [vmem:[%s369 + $0x58] sm:$0xf] %vm201, %v348
        %382 = vst.msk [vmem:[%s369 + $0x64] sm:$0xf] %vm201, %v349
        %383 = vst.msk [vmem:[%s369 + $0x68] sm:$0xf] %vm201, %v350
        %384 = vst.msk [vmem:[%s369 + $0x74] sm:$0xf] %vm201, %v351
        %385 = vst.msk [vmem:[%s369 + $0x78] sm:$0xf] %vm201, %v352
        %386 = vst.msk [vmem:[%s369 + $0x84] sm:$0xf] %vm201, %v353
        %387 = vst.msk [vmem:[%s369 + $0x88] sm:$0xf] %vm201, %v354
        %388 = vst.msk [vmem:[%s369 + $0x94] sm:$0xf] %vm201, %v355
        %389 = vst.msk [vmem:[%s369 + $0x98] sm:$0xf] %vm201, %v356
        %390 = vst.msk [vmem:[%s369 + $0xa4] sm:$0xf] %vm201, %v357
        %391 = vst.msk [vmem:[%s369 + $0xa8] sm:$0xf] %vm201, %v358
        %392 = vst.msk [vmem:[%s369 + $0xb4] sm:$0xf] %vm201, %v359
        %393 = vst.msk [vmem:[%s369 + $0xb8] sm:$0xf] %vm201, %v360
        %394 = vst.msk [vmem:[%s369 + $0xc4] sm:$0xf] %vm201, %v361
        %395 = vst.msk [vmem:[%s369 + $0xc8] sm:$0xf] %vm201, %v362
        %396 = vst.msk [vmem:[%s369 + $0xd4] sm:$0xf] %vm201, %v363
        %397 = vst.msk [vmem:[%s369 + $0xd8] sm:$0xf] %vm201, %v364
        %398 = vst.msk [vmem:[%s369 + $0xe4] sm:$0xf] %vm201, %v365
        %399 = vst.msk [vmem:[%s369 + $0xe8] sm:$0xf] %vm201, %v366
        %400 = vst.msk [vmem:[%s369 + $0xf4] sm:$0xf] %vm201, %v367
        %401 = vst.msk [vmem:[%s369 + $0xf8] sm:$0xf] %vm201, %v368
      $region36: #{tpu_custom_call.1} parent=31 // pred_fallthru
        _
      %s402 = smul.u32 %s19, 16
      %s403 = smul.u32 %s402, 4
      %s404 = smul.addr %s403, 4
      %s405 = scalar_lea.vmem [#allocation2], %s404
      %v406 = vld [vmem:[%s405] sm:$0xf]
      %v407 = vld [vmem:[%s405 + $0x4] sm:$0xf]
      %v408 = vld [vmem:[%s405 + $0x8] sm:$0xf]
      %v409 = vld [vmem:[%s405 + $0xc] sm:$0x3]
      %v410 = vld [vmem:[%s405 + $0x10] sm:$0xf]
      %v411 = vld [vmem:[%s405 + $0x14] sm:$0xf]
      %v412 = vld [vmem:[%s405 + $0x18] sm:$0xf]
      %v413 = vld [vmem:[%s405 + $0x1c] sm:$0x3]
      %v414 = vld [vmem:[%s405 + $0x20] sm:$0xf]
      %v415 = vld [vmem:[%s405 + $0x24] sm:$0xf]
      %v416 = vld [vmem:[%s405 + $0x28] sm:$0xf]
      %v417 = vld [vmem:[%s405 + $0x2c] sm:$0x3]
      %v418 = vld [vmem:[%s405 + $0x30] sm:$0xf]
      %v419 = vld [vmem:[%s405 + $0x34] sm:$0xf]
      %v420 = vld [vmem:[%s405 + $0x38] sm:$0xf]
      %v421 = vld [vmem:[%s405 + $0x3c] sm:$0x3]
      %v422 = vld [vmem:[%s405 + $0x40] sm:$0xf]
      %v423 = vld [vmem:[%s405 + $0x44] sm:$0xf]
      %v424 = vld [vmem:[%s405 + $0x48] sm:$0xf]
      %v425 = vld [vmem:[%s405 + $0x4c] sm:$0x3]
      %v426 = vld [vmem:[%s405 + $0x50] sm:$0xf]
      %v427 = vld [vmem:[%s405 + $0x54] sm:$0xf]
      %v428 = vld [vmem:[%s405 + $0x58] sm:$0xf]
      %v429 = vld [vmem:[%s405 + $0x5c] sm:$0x3]
      %v430 = vld [vmem:[%s405 + $0x60] sm:$0xf]
      %v431 = vld [vmem:[%s405 + $0x64] sm:$0xf]
      %v432 = vld [vmem:[%s405 + $0x68] sm:$0xf]
      %v433 = vld [vmem:[%s405 + $0x6c] sm:$0x3]
      %v434 = vld [vmem:[%s405 + $0x70] sm:$0xf]
      %v435 = vld [vmem:[%s405 + $0x74] sm:$0xf]
      %v436 = vld [vmem:[%s405 + $0x78] sm:$0xf]
      %v437 = vld [vmem:[%s405 + $0x7c] sm:$0x3]
      %v438 = vld [vmem:[%s405 + $0x80] sm:$0xf]
      %v439 = vld [vmem:[%s405 + $0x84] sm:$0xf]
      %v440 = vld [vmem:[%s405 + $0x88] sm:$0xf]
      %v441 = vld [vmem:[%s405 + $0x8c] sm:$0x3]
      %v442 = vld [vmem:[%s405 + $0x90] sm:$0xf]
      %v443 = vld [vmem:[%s405 + $0x94] sm:$0xf]
      %v444 = vld [vmem:[%s405 + $0x98] sm:$0xf]
      %v445 = vld [vmem:[%s405 + $0x9c] sm:$0x3]
      %v446 = vld [vmem:[%s405 + $0xa0] sm:$0xf]
      %v447 = vld [vmem:[%s405 + $0xa4] sm:$0xf]
      %v448 = vld [vmem:[%s405 + $0xa8] sm:$0xf]
      %v449 = vld [vmem:[%s405 + $0xac] sm:$0x3]
      %v450 = vld [vmem:[%s405 + $0xb0] sm:$0xf]
      %v451 = vld [vmem:[%s405 + $0xb4] sm:$0xf]
      %v452 = vld [vmem:[%s405 + $0xb8] sm:$0xf]
      %v453 = vld [vmem:[%s405 + $0xbc] sm:$0x3]
      %v454 = vld [vmem:[%s405 + $0xc0] sm:$0xf]
      %v455 = vld [vmem:[%s405 + $0xc4] sm:$0xf]
      %v456 = vld [vmem:[%s405 + $0xc8] sm:$0xf]
      %v457 = vld [vmem:[%s405 + $0xcc] sm:$0x3]
      %v458 = vld [vmem:[%s405 + $0xd0] sm:$0xf]
      %v459 = vld [vmem:[%s405 + $0xd4] sm:$0xf]
      %v460 = vld [vmem:[%s405 + $0xd8] sm:$0xf]
      %v461 = vld [vmem:[%s405 + $0xdc] sm:$0x3]
      %v462 = vld [vmem:[%s405 + $0xe0] sm:$0xf]
      %v463 = vld [vmem:[%s405 + $0xe4] sm:$0xf]
      %v464 = vld [vmem:[%s405 + $0xe8] sm:$0xf]
      %v465 = vld [vmem:[%s405 + $0xec] sm:$0x3]
      %v466 = vld [vmem:[%s405 + $0xf0] sm:$0xf]
      %v467 = vld [vmem:[%s405 + $0xf4] sm:$0xf]
      %v468 = vld [vmem:[%s405 + $0xf8] sm:$0xf]
      %v469 = vld [vmem:[%s405 + $0xfc] sm:$0x3]
      %s470 = sadd.s32 %s402, 1
      %s471 = smul.u32 %s470, 4
      %s472 = smul.addr %s471, 4
      %s473 = scalar_lea.vmem [#allocation2], %s472
      %v474 = vld [vmem:[%s473] sm:$0xf]
      %v475 = vld [vmem:[%s473 + $0x4] sm:$0xf]
      %v476 = vld [vmem:[%s473 + $0x8] sm:$0xf]
      %v477 = vld [vmem:[%s473 + $0xc] sm:$0x3]
      %v478 = vld [vmem:[%s473 + $0x10] sm:$0xf]
      %v479 = vld [vmem:[%s473 + $0x14] sm:$0xf]
      %v480 = vld [vmem:[%s473 + $0x18] sm:$0xf]
      %v481 = vld [vmem:[%s473 + $0x1c] sm:$0x3]
      %v482 = vld [vmem:[%s473 + $0x20] sm:$0xf]
      %v483 = vld [vmem:[%s473 + $0x24] sm:$0xf]
      %v484 = vld [vmem:[%s473 + $0x28] sm:$0xf]
      %v485 = vld [vmem:[%s473 + $0x2c] sm:$0x3]
      %v486 = vld [vmem:[%s473 + $0x30] sm:$0xf]
      %v487 = vld [vmem:[%s473 + $0x34] sm:$0xf]
      %v488 = vld [vmem:[%s473 + $0x38] sm:$0xf]
      %v489 = vld [vmem:[%s473 + $0x3c] sm:$0x3]
      %v490 = vld [vmem:[%s473 + $0x40] sm:$0xf]
      %v491 = vld [vmem:[%s473 + $0x44] sm:$0xf]
      %v492 = vld [vmem:[%s473 + $0x48] sm:$0xf]
      %v493 = vld [vmem:[%s473 + $0x4c] sm:$0x3]
      %v494 = vld [vmem:[%s473 + $0x50] sm:$0xf]
      %v495 = vld [vmem:[%s473 + $0x54] sm:$0xf]
      %v496 = vld [vmem:[%s473 + $0x58] sm:$0xf]
      %v497 = vld [vmem:[%s473 + $0x5c] sm:$0x3]
      %v498 = vld [vmem:[%s473 + $0x60] sm:$0xf]
      %v499 = vld [vmem:[%s473 + $0x64] sm:$0xf]
      %v500 = vld [vmem:[%s473 + $0x68] sm:$0xf]
      %v501 = vld [vmem:[%s473 + $0x6c] sm:$0x3]
      %v502 = vld [vmem:[%s473 + $0x70] sm:$0xf]
      %v503 = vld [vmem:[%s473 + $0x74] sm:$0xf]
      %v504 = vld [vmem:[%s473 + $0x78] sm:$0xf]
      %v505 = vld [vmem:[%s473 + $0x7c] sm:$0x3]
      %v506 = vld [vmem:[%s473 + $0x80] sm:$0xf]
      %v507 = vld [vmem:[%s473 + $0x84] sm:$0xf]
      %v508 = vld [vmem:[%s473 + $0x88] sm:$0xf]
      %v509 = vld [vmem:[%s473 + $0x8c] sm:$0x3]
      %v510 = vld [vmem:[%s473 + $0x90] sm:$0xf]
      %v511 = vld [vmem:[%s473 + $0x94] sm:$0xf]
      %v512 = vld [vmem:[%s473 + $0x98] sm:$0xf]
      %v513 = vld [vmem:[%s473 + $0x9c] sm:$0x3]
      %v514 = vld [vmem:[%s473 + $0xa0] sm:$0xf]
      %v515 = vld [vmem:[%s473 + $0xa4] sm:$0xf]
      %v516 = vld [vmem:[%s473 + $0xa8] sm:$0xf]
      %v517 = vld [vmem:[%s473 + $0xac] sm:$0x3]
      %v518 = vld [vmem:[%s473 + $0xb0] sm:$0xf]
      %v519 = vld [vmem:[%s473 + $0xb4] sm:$0xf]
      %v520 = vld [vmem:[%s473 + $0xb8] sm:$0xf]
      %v521 = vld [vmem:[%s473 + $0xbc] sm:$0x3]
      %v522 = vld [vmem:[%s473 + $0xc0] sm:$0xf]
      %v523 = vld [vmem:[%s473 + $0xc4] sm:$0xf]
      %v524 = vld [vmem:[%s473 + $0xc8] sm:$0xf]
      %v525 = vld [vmem:[%s473 + $0xcc] sm:$0x3]
      %v526 = vld [vmem:[%s473 + $0xd0] sm:$0xf]
      %v527 = vld [vmem:[%s473 + $0xd4] sm:$0xf]
      %v528 = vld [vmem:[%s473 + $0xd8] sm:$0xf]
      %v529 = vld [vmem:[%s473 + $0xdc] sm:$0x3]
      %v530 = vld [vmem:[%s473 + $0xe0] sm:$0xf]
      %v531 = vld [vmem:[%s473 + $0xe4] sm:$0xf]
      %v532 = vld [vmem:[%s473 + $0xe8] sm:$0xf]
      %v533 = vld [vmem:[%s473 + $0xec] sm:$0x3]
      %v534 = vld [vmem:[%s473 + $0xf0] sm:$0xf]
      %v535 = vld [vmem:[%s473 + $0xf4] sm:$0xf]
      %v536 = vld [vmem:[%s473 + $0xf8] sm:$0xf]
      %v537 = vld [vmem:[%s473 + $0xfc] sm:$0x3]
      %s538 = sadd.s32 %s402, 2
      %s539 = smul.u32 %s538, 4
      %s540 = smul.addr %s539, 4
      %s541 = scalar_lea.vmem [#allocation2], %s540
      %v542 = vld [vmem:[%s541] sm:$0xf]
      %v543 = vld [vmem:[%s541 + $0x4] sm:$0xf]
      %v544 = vld [vmem:[%s541 + $0x8] sm:$0xf]
      %v545 = vld [vmem:[%s541 + $0xc] sm:$0x3]
      %v546 = vld [vmem:[%s541 + $0x10] sm:$0xf]
      %v547 = vld [vmem:[%s541 + $0x14] sm:$0xf]
      %v548 = vld [vmem:[%s541 + $0x18] sm:$0xf]
      %v549 = vld [vmem:[%s541 + $0x1c] sm:$0x3]
      %v550 = vld [vmem:[%s541 + $0x20] sm:$0xf]
      %v551 = vld [vmem:[%s541 + $0x24] sm:$0xf]
      %v552 = vld [vmem:[%s541 + $0x28] sm:$0xf]
      %v553 = vld [vmem:[%s541 + $0x2c] sm:$0x3]
      %v554 = vld [vmem:[%s541 + $0x30] sm:$0xf]
      %v555 = vld [vmem:[%s541 + $0x34] sm:$0xf]
      %v556 = vld [vmem:[%s541 + $0x38] sm:$0xf]
      %v557 = vld [vmem:[%s541 + $0x3c] sm:$0x3]
      %v558 = vld [vmem:[%s541 + $0x40] sm:$0xf]
      %v559 = vld [vmem:[%s541 + $0x44] sm:$0xf]
      %v560 = vld [vmem:[%s541 + $0x48] sm:$0xf]
      %v561 = vld [vmem:[%s541 + $0x4c] sm:$0x3]
      %v562 = vld [vmem:[%s541 + $0x50] sm:$0xf]
      %v563 = vld [vmem:[%s541 + $0x54] sm:$0xf]
      %v564 = vld [vmem:[%s541 + $0x58] sm:$0xf]
      %v565 = vld [vmem:[%s541 + $0x5c] sm:$0x3]
      %v566 = vld [vmem:[%s541 + $0x60] sm:$0xf]
      %v567 = vld [vmem:[%s541 + $0x64] sm:$0xf]
      %v568 = vld [vmem:[%s541 + $0x68] sm:$0xf]
      %v569 = vld [vmem:[%s541 + $0x6c] sm:$0x3]
      %v570 = vld [vmem:[%s541 + $0x70] sm:$0xf]
      %v571 = vld [vmem:[%s541 + $0x74] sm:$0xf]
      %v572 = vld [vmem:[%s541 + $0x78] sm:$0xf]
      %v573 = vld [vmem:[%s541 + $0x7c] sm:$0x3]
      %v574 = vld [vmem:[%s541 + $0x80] sm:$0xf]
      %v575 = vld [vmem:[%s541 + $0x84] sm:$0xf]
      %v576 = vld [vmem:[%s541 + $0x88] sm:$0xf]
      %v577 = vld [vmem:[%s541 + $0x8c] sm:$0x3]
      %v578 = vld [vmem:[%s541 + $0x90] sm:$0xf]
      %v579 = vld [vmem:[%s541 + $0x94] sm:$0xf]
      %v580 = vld [vmem:[%s541 + $0x98] sm:$0xf]
      %v581 = vld [vmem:[%s541 + $0x9c] sm:$0x3]
      %v582 = vld [vmem:[%s541 + $0xa0] sm:$0xf]
      %v583 = vld [vmem:[%s541 + $0xa4] sm:$0xf]
      %v584 = vld [vmem:[%s541 + $0xa8] sm:$0xf]
      %v585 = vld [vmem:[%s541 + $0xac] sm:$0x3]
      %v586 = vld [vmem:[%s541 + $0xb0] sm:$0xf]
      %v587 = vld [vmem:[%s541 + $0xb4] sm:$0xf]
      %v588 = vld [vmem:[%s541 + $0xb8] sm:$0xf]
      %v589 = vld [vmem:[%s541 + $0xbc] sm:$0x3]
      %v590 = vld [vmem:[%s541 + $0xc0] sm:$0xf]
      %v591 = vld [vmem:[%s541 + $0xc4] sm:$0xf]
      %v592 = vld [vmem:[%s541 + $0xc8] sm:$0xf]
      %v593 = vld [vmem:[%s541 + $0xcc] sm:$0x3]
      %v594 = vld [vmem:[%s541 + $0xd0] sm:$0xf]
      %v595 = vld [vmem:[%s541 + $0xd4] sm:$0xf]
      %v596 = vld [vmem:[%s541 + $0xd8] sm:$0xf]
      %v597 = vld [vmem:[%s541 + $0xdc] sm:$0x3]
      %v598 = vld [vmem:[%s541 + $0xe0] sm:$0xf]
      %v599 = vld [vmem:[%s541 + $0xe4] sm:$0xf]
      %v600 = vld [vmem:[%s541 + $0xe8] sm:$0xf]
      %v601 = vld [vmem:[%s541 + $0xec] sm:$0x3]
      %v602 = vld [vmem:[%s541 + $0xf0] sm:$0xf]
      %v603 = vld [vmem:[%s541 + $0xf4] sm:$0xf]
      %v604 = vld [vmem:[%s541 + $0xf8] sm:$0xf]
      %v605 = vld [vmem:[%s541 + $0xfc] sm:$0x3]
      %s606 = sadd.s32 %s402, 3
      %s607 = smul.u32 %s606, 4
      %s608 = smul.addr %s607, 4
      %s609 = scalar_lea.vmem [#allocation2], %s608
      %v610 = vld [vmem:[%s609] sm:$0xf]
      %v611 = vld [vmem:[%s609 + $0x4] sm:$0xf]
      %v612 = vld [vmem:[%s609 + $0x8] sm:$0xf]
      %v613 = vld [vmem:[%s609 + $0xc] sm:$0x3]
      %v614 = vld [vmem:[%s609 + $0x10] sm:$0xf]
      %v615 = vld [vmem:[%s609 + $0x14] sm:$0xf]
      %v616 = vld [vmem:[%s609 + $0x18] sm:$0xf]
      %v617 = vld [vmem:[%s609 + $0x1c] sm:$0x3]
      %v618 = vld [vmem:[%s609 + $0x20] sm:$0xf]
      %v619 = vld [vmem:[%s609 + $0x24] sm:$0xf]
      %v620 = vld [vmem:[%s609 + $0x28] sm:$0xf]
      %v621 = vld [vmem:[%s609 + $0x2c] sm:$0x3]
      %v622 = vld [vmem:[%s609 + $0x30] sm:$0xf]
      %v623 = vld [vmem:[%s609 + $0x34] sm:$0xf]
      %v624 = vld [vmem:[%s609 + $0x38] sm:$0xf]
      %v625 = vld [vmem:[%s609 + $0x3c] sm:$0x3]
      %v626 = vld [vmem:[%s609 + $0x40] sm:$0xf]
      %v627 = vld [vmem:[%s609 + $0x44] sm:$0xf]
      %v628 = vld [vmem:[%s609 + $0x48] sm:$0xf]
      %v629 = vld [vmem:[%s609 + $0x4c] sm:$0x3]
      %v630 = vld [vmem:[%s609 + $0x50] sm:$0xf]
      %v631 = vld [vmem:[%s609 + $0x54] sm:$0xf]
      %v632 = vld [vmem:[%s609 + $0x58] sm:$0xf]
      %v633 = vld [vmem:[%s609 + $0x5c] sm:$0x3]
      %v634 = vld [vmem:[%s609 + $0x60] sm:$0xf]
      %v635 = vld [vmem:[%s609 + $0x64] sm:$0xf]
      %v636 = vld [vmem:[%s609 + $0x68] sm:$0xf]
      %v637 = vld [vmem:[%s609 + $0x6c] sm:$0x3]
      %v638 = vld [vmem:[%s609 + $0x70] sm:$0xf]
      %v639 = vld [vmem:[%s609 + $0x74] sm:$0xf]
      %v640 = vld [vmem:[%s609 + $0x78] sm:$0xf]
      %v641 = vld [vmem:[%s609 + $0x7c] sm:$0x3]
      %v642 = vld [vmem:[%s609 + $0x80] sm:$0xf]
      %v643 = vld [vmem:[%s609 + $0x84] sm:$0xf]
      %v644 = vld [vmem:[%s609 + $0x88] sm:$0xf]
      %v645 = vld [vmem:[%s609 + $0x8c] sm:$0x3]
      %v646 = vld [vmem:[%s609 + $0x90] sm:$0xf]
      %v647 = vld [vmem:[%s609 + $0x94] sm:$0xf]
      %v648 = vld [vmem:[%s609 + $0x98] sm:$0xf]
      %v649 = vld [vmem:[%s609 + $0x9c] sm:$0x3]
      %v650 = vld [vmem:[%s609 + $0xa0] sm:$0xf]
      %v651 = vld [vmem:[%s609 + $0xa4] sm:$0xf]
      %v652 = vld [vmem:[%s609 + $0xa8] sm:$0xf]
      %v653 = vld [vmem:[%s609 + $0xac] sm:$0x3]
      %v654 = vld [vmem:[%s609 + $0xb0] sm:$0xf]
      %v655 = vld [vmem:[%s609 + $0xb4] sm:$0xf]
      %v656 = vld [vmem:[%s609 + $0xb8] sm:$0xf]
      %v657 = vld [vmem:[%s609 + $0xbc] sm:$0x3]
      %v658 = vld [vmem:[%s609 + $0xc0] sm:$0xf]
      %v659 = vld [vmem:[%s609 + $0xc4] sm:$0xf]
      %v660 = vld [vmem:[%s609 + $0xc8] sm:$0xf]
      %v661 = vld [vmem:[%s609 + $0xcc] sm:$0x3]
      %v662 = vld [vmem:[%s609 + $0xd0] sm:$0xf]
      %v663 = vld [vmem:[%s609 + $0xd4] sm:$0xf]
      %v664 = vld [vmem:[%s609 + $0xd8] sm:$0xf]
      %v665 = vld [vmem:[%s609 + $0xdc] sm:$0x3]
      %v666 = vld [vmem:[%s609 + $0xe0] sm:$0xf]
      %v667 = vld [vmem:[%s609 + $0xe4] sm:$0xf]
      %v668 = vld [vmem:[%s609 + $0xe8] sm:$0xf]
      %v669 = vld [vmem:[%s609 + $0xec] sm:$0x3]
      %v670 = vld [vmem:[%s609 + $0xf0] sm:$0xf]
      %v671 = vld [vmem:[%s609 + $0xf4] sm:$0xf]
      %v672 = vld [vmem:[%s609 + $0xf8] sm:$0xf]
      %v673 = vld [vmem:[%s609 + $0xfc] sm:$0x3]
      %s674 = sadd.s32 %s402, 4
      %s675 = smul.u32 %s674, 4
      %s676 = smul.addr %s675, 4
      %s677 = scalar_lea.vmem [#allocation2], %s676
      %v678 = vld [vmem:[%s677] sm:$0xf]
      %v679 = vld [vmem:[%s677 + $0x4] sm:$0xf]
      %v680 = vld [vmem:[%s677 + $0x8] sm:$0xf]
      %v681 = vld [vmem:[%s677 + $0xc] sm:$0x3]
      %v682 = vld [vmem:[%s677 + $0x10] sm:$0xf]
      %v683 = vld [vmem:[%s677 + $0x14] sm:$0xf]
      %v684 = vld [vmem:[%s677 + $0x18] sm:$0xf]
      %v685 = vld [vmem:[%s677 + $0x1c] sm:$0x3]
      %v686 = vld [vmem:[%s677 + $0x20] sm:$0xf]
      %v687 = vld [vmem:[%s677 + $0x24] sm:$0xf]
      %v688 = vld [vmem:[%s677 + $0x28] sm:$0xf]
      %v689 = vld [vmem:[%s677 + $0x2c] sm:$0x3]
      %v690 = vld [vmem:[%s677 + $0x30] sm:$0xf]
      %v691 = vld [vmem:[%s677 + $0x34] sm:$0xf]
      %v692 = vld [vmem:[%s677 + $0x38] sm:$0xf]
      %v693 = vld [vmem:[%s677 + $0x3c] sm:$0x3]
      %v694 = vld [vmem:[%s677 + $0x40] sm:$0xf]
      %v695 = vld [vmem:[%s677 + $0x44] sm:$0xf]
      %v696 = vld [vmem:[%s677 + $0x48] sm:$0xf]
      %v697 = vld [vmem:[%s677 + $0x4c] sm:$0x3]
      %v698 = vld [vmem:[%s677 + $0x50] sm:$0xf]
      %v699 = vld [vmem:[%s677 + $0x54] sm:$0xf]
      %v700 = vld [vmem:[%s677 + $0x58] sm:$0xf]
      %v701 = vld [vmem:[%s677 + $0x5c] sm:$0x3]
      %v702 = vld [vmem:[%s677 + $0x60] sm:$0xf]
      %v703 = vld [vmem:[%s677 + $0x64] sm:$0xf]
      %v704 = vld [vmem:[%s677 + $0x68] sm:$0xf]
      %v705 = vld [vmem:[%s677 + $0x6c] sm:$0x3]
      %v706 = vld [vmem:[%s677 + $0x70] sm:$0xf]
      %v707 = vld [vmem:[%s677 + $0x74] sm:$0xf]
      %v708 = vld [vmem:[%s677 + $0x78] sm:$0xf]
      %v709 = vld [vmem:[%s677 + $0x7c] sm:$0x3]
      %v710 = vld [vmem:[%s677 + $0x80] sm:$0xf]
      %v711 = vld [vmem:[%s677 + $0x84] sm:$0xf]
      %v712 = vld [vmem:[%s677 + $0x88] sm:$0xf]
      %v713 = vld [vmem:[%s677 + $0x8c] sm:$0x3]
      %v714 = vld [vmem:[%s677 + $0x90] sm:$0xf]
      %v715 = vld [vmem:[%s677 + $0x94] sm:$0xf]
      %v716 = vld [vmem:[%s677 + $0x98] sm:$0xf]
      %v717 = vld [vmem:[%s677 + $0x9c] sm:$0x3]
      %v718 = vld [vmem:[%s677 + $0xa0] sm:$0xf]
      %v719 = vld [vmem:[%s677 + $0xa4] sm:$0xf]
      %v720 = vld [vmem:[%s677 + $0xa8] sm:$0xf]
      %v721 = vld [vmem:[%s677 + $0xac] sm:$0x3]
      %v722 = vld [vmem:[%s677 + $0xb0] sm:$0xf]
      %v723 = vld [vmem:[%s677 + $0xb4] sm:$0xf]
      %v724 = vld [vmem:[%s677 + $0xb8] sm:$0xf]
      %v725 = vld [vmem:[%s677 + $0xbc] sm:$0x3]
      %v726 = vld [vmem:[%s677 + $0xc0] sm:$0xf]
      %v727 = vld [vmem:[%s677 + $0xc4] sm:$0xf]
      %v728 = vld [vmem:[%s677 + $0xc8] sm:$0xf]
      %v729 = vld [vmem:[%s677 + $0xcc] sm:$0x3]
      %v730 = vld [vmem:[%s677 + $0xd0] sm:$0xf]
      %v731 = vld [vmem:[%s677 + $0xd4] sm:$0xf]
      %v732 = vld [vmem:[%s677 + $0xd8] sm:$0xf]
      %v733 = vld [vmem:[%s677 + $0xdc] sm:$0x3]
      %v734 = vld [vmem:[%s677 + $0xe0] sm:$0xf]
      %v735 = vld [vmem:[%s677 + $0xe4] sm:$0xf]
      %v736 = vld [vmem:[%s677 + $0xe8] sm:$0xf]
      %v737 = vld [vmem:[%s677 + $0xec] sm:$0x3]
      %v738 = vld [vmem:[%s677 + $0xf0] sm:$0xf]
      %v739 = vld [vmem:[%s677 + $0xf4] sm:$0xf]
      %v740 = vld [vmem:[%s677 + $0xf8] sm:$0xf]
      %v741 = vld [vmem:[%s677 + $0xfc] sm:$0x3]
      %s742 = sadd.s32 %s402, 5
      %s743 = smul.u32 %s742, 4
      %s744 = smul.addr %s743, 4
      %s745 = scalar_lea.vmem [#allocation2], %s744
      %v746 = vld [vmem:[%s745] sm:$0xf]
      %v747 = vld [vmem:[%s745 + $0x4] sm:$0xf]
      %v748 = vld [vmem:[%s745 + $0x8] sm:$0xf]
      %v749 = vld [vmem:[%s745 + $0xc] sm:$0x3]
      %v750 = vld [vmem:[%s745 + $0x10] sm:$0xf]
      %v751 = vld [vmem:[%s745 + $0x14] sm:$0xf]
      %v752 = vld [vmem:[%s745 + $0x18] sm:$0xf]
      %v753 = vld [vmem:[%s745 + $0x1c] sm:$0x3]
      %v754 = vld [vmem:[%s745 + $0x20] sm:$0xf]
      %v755 = vld [vmem:[%s745 + $0x24] sm:$0xf]
      %v756 = vld [vmem:[%s745 + $0x28] sm:$0xf]
      %v757 = vld [vmem:[%s745 + $0x2c] sm:$0x3]
      %v758 = vld [vmem:[%s745 + $0x30] sm:$0xf]
      %v759 = vld [vmem:[%s745 + $0x34] sm:$0xf]
      %v760 = vld [vmem:[%s745 + $0x38] sm:$0xf]
      %v761 = vld [vmem:[%s745 + $0x3c] sm:$0x3]
      %v762 = vld [vmem:[%s745 + $0x40] sm:$0xf]
      %v763 = vld [vmem:[%s745 + $0x44] sm:$0xf]
      %v764 = vld [vmem:[%s745 + $0x48] sm:$0xf]
      %v765 = vld [vmem:[%s745 + $0x4c] sm:$0x3]
      %v766 = vld [vmem:[%s745 + $0x50] sm:$0xf]
      %v767 = vld [vmem:[%s745 + $0x54] sm:$0xf]
      %v768 = vld [vmem:[%s745 + $0x58] sm:$0xf]
      %v769 = vld [vmem:[%s745 + $0x5c] sm:$0x3]
      %v770 = vld [vmem:[%s745 + $0x60] sm:$0xf]
      %v771 = vld [vmem:[%s745 + $0x64] sm:$0xf]
      %v772 = vld [vmem:[%s745 + $0x68] sm:$0xf]
      %v773 = vld [vmem:[%s745 + $0x6c] sm:$0x3]
      %v774 = vld [vmem:[%s745 + $0x70] sm:$0xf]
      %v775 = vld [vmem:[%s745 + $0x74] sm:$0xf]
      %v776 = vld [vmem:[%s745 + $0x78] sm:$0xf]
      %v777 = vld [vmem:[%s745 + $0x7c] sm:$0x3]
      %v778 = vld [vmem:[%s745 + $0x80] sm:$0xf]
      %v779 = vld [vmem:[%s745 + $0x84] sm:$0xf]
      %v780 = vld [vmem:[%s745 + $0x88] sm:$0xf]
      %v781 = vld [vmem:[%s745 + $0x8c] sm:$0x3]
      %v782 = vld [vmem:[%s745 + $0x90] sm:$0xf]
      %v783 = vld [vmem:[%s745 + $0x94] sm:$0xf]
      %v784 = vld [vmem:[%s745 + $0x98] sm:$0xf]
      %v785 = vld [vmem:[%s745 + $0x9c] sm:$0x3]
      %v786 = vld [vmem:[%s745 + $0xa0] sm:$0xf]
      %v787 = vld [vmem:[%s745 + $0xa4] sm:$0xf]
      %v788 = vld [vmem:[%s745 + $0xa8] sm:$0xf]
      %v789 = vld [vmem:[%s745 + $0xac] sm:$0x3]
      %v790 = vld [vmem:[%s745 + $0xb0] sm:$0xf]
      %v791 = vld [vmem:[%s745 + $0xb4] sm:$0xf]
      %v792 = vld [vmem:[%s745 + $0xb8] sm:$0xf]
      %v793 = vld [vmem:[%s745 + $0xbc] sm:$0x3]
      %v794 = vld [vmem:[%s745 + $0xc0] sm:$0xf]
      %v795 = vld [vmem:[%s745 + $0xc4] sm:$0xf]
      %v796 = vld [vmem:[%s745 + $0xc8] sm:$0xf]
      %v797 = vld [vmem:[%s745 + $0xcc] sm:$0x3]
      %v798 = vld [vmem:[%s745 + $0xd0] sm:$0xf]
      %v799 = vld [vmem:[%s745 + $0xd4] sm:$0xf]
      %v800 = vld [vmem:[%s745 + $0xd8] sm:$0xf]
      %v801 = vld [vmem:[%s745 + $0xdc] sm:$0x3]
      %v802 = vld [vmem:[%s745 + $0xe0] sm:$0xf]
      %v803 = vld [vmem:[%s745 + $0xe4] sm:$0xf]
      %v804 = vld [vmem:[%s745 + $0xe8] sm:$0xf]
      %v805 = vld [vmem:[%s745 + $0xec] sm:$0x3]
      %v806 = vld [vmem:[%s745 + $0xf0] sm:$0xf]
      %v807 = vld [vmem:[%s745 + $0xf4] sm:$0xf]
      %v808 = vld [vmem:[%s745 + $0xf8] sm:$0xf]
      %v809 = vld [vmem:[%s745 + $0xfc] sm:$0x3]
      %s810 = sadd.s32 %s402, 6
      %s811 = smul.u32 %s810, 4
      %s812 = smul.addr %s811, 4
      %s813 = scalar_lea.vmem [#allocation2], %s812
      %v814 = vld [vmem:[%s813] sm:$0xf]
      %v815 = vld [vmem:[%s813 + $0x4] sm:$0xf]
      %v816 = vld [vmem:[%s813 + $0x8] sm:$0xf]
      %v817 = vld [vmem:[%s813 + $0xc] sm:$0x3]
      %v818 = vld [vmem:[%s813 + $0x10] sm:$0xf]
      %v819 = vld [vmem:[%s813 + $0x14] sm:$0xf]
      %v820 = vld [vmem:[%s813 + $0x18] sm:$0xf]
      %v821 = vld [vmem:[%s813 + $0x1c] sm:$0x3]
      %v822 = vld [vmem:[%s813 + $0x20] sm:$0xf]
      %v823 = vld [vmem:[%s813 + $0x24] sm:$0xf]
      %v824 = vld [vmem:[%s813 + $0x28] sm:$0xf]
      %v825 = vld [vmem:[%s813 + $0x2c] sm:$0x3]
      %v826 = vld [vmem:[%s813 + $0x30] sm:$0xf]
      %v827 = vld [vmem:[%s813 + $0x34] sm:$0xf]
      %v828 = vld [vmem:[%s813 + $0x38] sm:$0xf]
      %v829 = vld [vmem:[%s813 + $0x3c] sm:$0x3]
      %v830 = vld [vmem:[%s813 + $0x40] sm:$0xf]
      %v831 = vld [vmem:[%s813 + $0x44] sm:$0xf]
      %v832 = vld [vmem:[%s813 + $0x48] sm:$0xf]
      %v833 = vld [vmem:[%s813 + $0x4c] sm:$0x3]
      %v834 = vld [vmem:[%s813 + $0x50] sm:$0xf]
      %v835 = vld [vmem:[%s813 + $0x54] sm:$0xf]
      %v836 = vld [vmem:[%s813 + $0x58] sm:$0xf]
      %v837 = vld [vmem:[%s813 + $0x5c] sm:$0x3]
      %v838 = vld [vmem:[%s813 + $0x60] sm:$0xf]
      %v839 = vld [vmem:[%s813 + $0x64] sm:$0xf]
      %v840 = vld [vmem:[%s813 + $0x68] sm:$0xf]
      %v841 = vld [vmem:[%s813 + $0x6c] sm:$0x3]
      %v842 = vld [vmem:[%s813 + $0x70] sm:$0xf]
      %v843 = vld [vmem:[%s813 + $0x74] sm:$0xf]
      %v844 = vld [vmem:[%s813 + $0x78] sm:$0xf]
      %v845 = vld [vmem:[%s813 + $0x7c] sm:$0x3]
      %v846 = vld [vmem:[%s813 + $0x80] sm:$0xf]
      %v847 = vld [vmem:[%s813 + $0x84] sm:$0xf]
      %v848 = vld [vmem:[%s813 + $0x88] sm:$0xf]
      %v849 = vld [vmem:[%s813 + $0x8c] sm:$0x3]
      %v850 = vld [vmem:[%s813 + $0x90] sm:$0xf]
      %v851 = vld [vmem:[%s813 + $0x94] sm:$0xf]
      %v852 = vld [vmem:[%s813 + $0x98] sm:$0xf]
      %v853 = vld [vmem:[%s813 + $0x9c] sm:$0x3]
      %v854 = vld [vmem:[%s813 + $0xa0] sm:$0xf]
      %v855 = vld [vmem:[%s813 + $0xa4] sm:$0xf]
      %v856 = vld [vmem:[%s813 + $0xa8] sm:$0xf]
      %v857 = vld [vmem:[%s813 + $0xac] sm:$0x3]
      %v858 = vld [vmem:[%s813 + $0xb0] sm:$0xf]
      %v859 = vld [vmem:[%s813 + $0xb4] sm:$0xf]
      %v860 = vld [vmem:[%s813 + $0xb8] sm:$0xf]
      %v861 = vld [vmem:[%s813 + $0xbc] sm:$0x3]
      %v862 = vld [vmem:[%s813 + $0xc0] sm:$0xf]
      %v863 = vld [vmem:[%s813 + $0xc4] sm:$0xf]
      %v864 = vld [vmem:[%s813 + $0xc8] sm:$0xf]
      %v865 = vld [vmem:[%s813 + $0xcc] sm:$0x3]
      %v866 = vld [vmem:[%s813 + $0xd0] sm:$0xf]
      %v867 = vld [vmem:[%s813 + $0xd4] sm:$0xf]
      %v868 = vld [vmem:[%s813 + $0xd8] sm:$0xf]
      %v869 = vld [vmem:[%s813 + $0xdc] sm:$0x3]
      %v870 = vld [vmem:[%s813 + $0xe0] sm:$0xf]
      %v871 = vld [vmem:[%s813 + $0xe4] sm:$0xf]
      %v872 = vld [vmem:[%s813 + $0xe8] sm:$0xf]
      %v873 = vld [vmem:[%s813 + $0xec] sm:$0x3]
      %v874 = vld [vmem:[%s813 + $0xf0] sm:$0xf]
      %v875 = vld [vmem:[%s813 + $0xf4] sm:$0xf]
      %v876 = vld [vmem:[%s813 + $0xf8] sm:$0xf]
      %v877 = vld [vmem:[%s813 + $0xfc] sm:$0x3]
      %v926 = vunpack.c.l.b16 %v406
      %v927 = vunpack.c.l.b16 %v407
      %v928 = vunpack.c.l.b16 %v408
      %v929 = vunpack.c.l.b16 %v410
      %v930 = vunpack.c.l.b16 %v411
      %v931 = vunpack.c.l.b16 %v412
      %v932 = vunpack.c.l.b16 %v414
      %v933 = vunpack.c.l.b16 %v415
      %v934 = vunpack.c.l.b16 %v416
      %v935 = vunpack.c.l.b16 %v418
      %v936 = vunpack.c.l.b16 %v419
      %v937 = vunpack.c.l.b16 %v420
      %v938 = vunpack.c.l.b16 %v422
      %v939 = vunpack.c.l.b16 %v423
      %v940 = vunpack.c.l.b16 %v424
      %v941 = vunpack.c.l.b16 %v426
      %v942 = vunpack.c.l.b16 %v427
      %v943 = vunpack.c.l.b16 %v428
      %v944 = vunpack.c.l.b16 %v430
      %v945 = vunpack.c.l.b16 %v431
      %v946 = vunpack.c.l.b16 %v432
      %v947 = vunpack.c.l.b16 %v434
      %v948 = vunpack.c.l.b16 %v435
      %v949 = vunpack.c.l.b16 %v436
      %v950 = vunpack.c.l.b16 %v438
      %v951 = vunpack.c.l.b16 %v439
      %v952 = vunpack.c.l.b16 %v440
      %v953 = vunpack.c.l.b16 %v442
      %v954 = vunpack.c.l.b16 %v443
      %v955 = vunpack.c.l.b16 %v444
      %v956 = vunpack.c.l.b16 %v446
      %v957 = vunpack.c.l.b16 %v447
      %v958 = vunpack.c.l.b16 %v448
      %v959 = vunpack.c.l.b16 %v450
      %v960 = vunpack.c.l.b16 %v451
      %v961 = vunpack.c.l.b16 %v452
      %v962 = vunpack.c.l.b16 %v454
      %v963 = vunpack.c.l.b16 %v455
      %v964 = vunpack.c.l.b16 %v456
      %v965 = vunpack.c.l.b16 %v458
      %v966 = vunpack.c.l.b16 %v459
      %v967 = vunpack.c.l.b16 %v460
      %v968 = vunpack.c.l.b16 %v462
      %v969 = vunpack.c.l.b16 %v463
      %v970 = vunpack.c.l.b16 %v464
      %v971 = vunpack.c.l.b16 %v466
      %v972 = vunpack.c.l.b16 %v467
      %v973 = vunpack.c.l.b16 %v468
      %v974 = vpack.c.b16 %v927, %v926
      %v975 = vpack.c.b16 %v928, %v928
      %v976 = vpack.c.b16 %v930, %v929
      %v977 = vpack.c.b16 %v931, %v931
      %v978 = vpack.c.b16 %v933, %v932
      %v979 = vpack.c.b16 %v934, %v934
      %v980 = vpack.c.b16 %v936, %v935
      %v981 = vpack.c.b16 %v937, %v937
      %v982 = vpack.c.b16 %v939, %v938
      %v983 = vpack.c.b16 %v940, %v940
      %v984 = vpack.c.b16 %v942, %v941
      %v985 = vpack.c.b16 %v943, %v943
      %v986 = vpack.c.b16 %v945, %v944
      %v987 = vpack.c.b16 %v946, %v946
      %v988 = vpack.c.b16 %v948, %v947
      %v989 = vpack.c.b16 %v949, %v949
      %v990 = vpack.c.b16 %v951, %v950
      %v991 = vpack.c.b16 %v952, %v952
      %v992 = vpack.c.b16 %v954, %v953
      %v993 = vpack.c.b16 %v955, %v955
      %v994 = vpack.c.b16 %v957, %v956
      %v995 = vpack.c.b16 %v958, %v958
      %v996 = vpack.c.b16 %v960, %v959
      %v997 = vpack.c.b16 %v961, %v961
      %v998 = vpack.c.b16 %v963, %v962
      %v999 = vpack.c.b16 %v964, %v964
      %v1000 = vpack.c.b16 %v966, %v965
      %v1001 = vpack.c.b16 %v967, %v967
      %v1002 = vpack.c.b16 %v969, %v968
      %v1003 = vpack.c.b16 %v970, %v970
      %v1004 = vpack.c.b16 %v972, %v971
      %v1005 = vpack.c.b16 %v973, %v973
      %vm1006 = vsmask.f32 7424
      %v1008 = vshrl.u32 %v974, 16
      %v1010 = vshll.u32 %v974, 16
      %v1012 = vrot.slane %v1010, 1
      %v1013 = vor.u32 %v1008, %v1012
      %v1015 = vshll.u32 %v975, 16
      %v1017 = vrot.slane %v1015, 1
      %v1018 = vsel %vm1006, %v1013, %v1017
      %v1019 = vshrl.u32 %v975, 16
      %v1021 = vor.u32 %v1019, %v1017
      %v1023 = vshrl.u32 %v976, 16
      %v1025 = vshll.u32 %v976, 16
      %v1027 = vrot.slane %v1025, 1
      %v1028 = vor.u32 %v1023, %v1027
      %v1030 = vshll.u32 %v977, 16
      %v1032 = vrot.slane %v1030, 1
      %v1033 = vsel %vm1006, %v1028, %v1032
      %v1034 = vshrl.u32 %v977, 16
      %v1036 = vor.u32 %v1034, %v1032
      %v1038 = vshrl.u32 %v978, 16
      %v1040 = vshll.u32 %v978, 16
      %v1042 = vrot.slane %v1040, 1
      %v1043 = vor.u32 %v1038, %v1042
      %v1045 = vshll.u32 %v979, 16
      %v1047 = vrot.slane %v1045, 1
      %v1048 = vsel %vm1006, %v1043, %v1047
      %v1049 = vshrl.u32 %v979, 16
      %v1051 = vor.u32 %v1049, %v1047
      %v1053 = vshrl.u32 %v980, 16
      %v1055 = vshll.u32 %v980, 16
      %v1057 = vrot.slane %v1055, 1
      %v1058 = vor.u32 %v1053, %v1057
      %v1060 = vshll.u32 %v981, 16
      %v1062 = vrot.slane %v1060, 1
      %v1063 = vsel %vm1006, %v1058, %v1062
      %v1064 = vshrl.u32 %v981, 16
      %v1066 = vor.u32 %v1064, %v1062
      %v1068 = vshrl.u32 %v982, 16
      %v1070 = vshll.u32 %v982, 16
      %v1072 = vrot.slane %v1070, 1
      %v1073 = vor.u32 %v1068, %v1072
      %v1075 = vshll.u32 %v983, 16
      %v1077 = vrot.slane %v1075, 1
      %v1078 = vsel %vm1006, %v1073, %v1077
      %v1079 = vshrl.u32 %v983, 16
      %v1081 = vor.u32 %v1079, %v1077
      %v1083 = vshrl.u32 %v984, 16
      %v1085 = vshll.u32 %v984, 16
      %v1087 = vrot.slane %v1085, 1
      %v1088 = vor.u32 %v1083, %v1087
      %v1090 = vshll.u32 %v985, 16
      %v1092 = vrot.slane %v1090, 1
      %v1093 = vsel %vm1006, %v1088, %v1092
      %v1094 = vshrl.u32 %v985, 16
      %v1096 = vor.u32 %v1094, %v1092
      %v1098 = vshrl.u32 %v986, 16
      %v1100 = vshll.u32 %v986, 16
      %v1102 = vrot.slane %v1100, 1
      %v1103 = vor.u32 %v1098, %v1102
      %v1105 = vshll.u32 %v987, 16
      %v1107 = vrot.slane %v1105, 1
      %v1108 = vsel %vm1006, %v1103, %v1107
      %v1109 = vshrl.u32 %v987, 16
      %v1111 = vor.u32 %v1109, %v1107
      %v1113 = vshrl.u32 %v988, 16
      %v1115 = vshll.u32 %v988, 16
      %v1117 = vrot.slane %v1115, 1
      %v1118 = vor.u32 %v1113, %v1117
      %v1120 = vshll.u32 %v989, 16
      %v1122 = vrot.slane %v1120, 1
      %v1123 = vsel %vm1006, %v1118, %v1122
      %v1124 = vshrl.u32 %v989, 16
      %v1126 = vor.u32 %v1124, %v1122
      %v1128 = vshrl.u32 %v990, 16
      %v1130 = vshll.u32 %v990, 16
      %v1132 = vrot.slane %v1130, 1
      %v1133 = vor.u32 %v1128, %v1132
      %v1135 = vshll.u32 %v991, 16
      %v1137 = vrot.slane %v1135, 1
      %v1138 = vsel %vm1006, %v1133, %v1137
      %v1139 = vshrl.u32 %v991, 16
      %v1141 = vor.u32 %v1139, %v1137
      %v1143 = vshrl.u32 %v992, 16
      %v1145 = vshll.u32 %v992, 16
      %v1147 = vrot.slane %v1145, 1
      %v1148 = vor.u32 %v1143, %v1147
      %v1150 = vshll.u32 %v993, 16
      %v1152 = vrot.slane %v1150, 1
      %v1153 = vsel %vm1006, %v1148, %v1152
      %v1154 = vshrl.u32 %v993, 16
      %v1156 = vor.u32 %v1154, %v1152
      %v1158 = vshrl.u32 %v994, 16
      %v1160 = vshll.u32 %v994, 16
      %v1162 = vrot.slane %v1160, 1
      %v1163 = vor.u32 %v1158, %v1162
      %v1165 = vshll.u32 %v995, 16
      %v1167 = vrot.slane %v1165, 1
      %v1168 = vsel %vm1006, %v1163, %v1167
      %v1169 = vshrl.u32 %v995, 16
      %v1171 = vor.u32 %v1169, %v1167
      %v1173 = vshrl.u32 %v996, 16
      %v1175 = vshll.u32 %v996, 16
      %v1177 = vrot.slane %v1175, 1
      %v1178 = vor.u32 %v1173, %v1177
      %v1180 = vshll.u32 %v997, 16
      %v1182 = vrot.slane %v1180, 1
      %v1183 = vsel %vm1006, %v1178, %v1182
      %v1184 = vshrl.u32 %v997, 16
      %v1186 = vor.u32 %v1184, %v1182
      %v1188 = vshrl.u32 %v998, 16
      %v1190 = vshll.u32 %v998, 16
      %v1192 = vrot.slane %v1190, 1
      %v1193 = vor.u32 %v1188, %v1192
      %v1195 = vshll.u32 %v999, 16
      %v1197 = vrot.slane %v1195, 1
      %v1198 = vsel %vm1006, %v1193, %v1197
      %v1199 = vshrl.u32 %v999, 16
      %v1201 = vor.u32 %v1199, %v1197
      %v1203 = vshrl.u32 %v1000, 16
      %v1205 = vshll.u32 %v1000, 16
      %v1207 = vrot.slane %v1205, 1
      %v1208 = vor.u32 %v1203, %v1207
      %v1210 = vshll.u32 %v1001, 16
      %v1212 = vrot.slane %v1210, 1
      %v1213 = vsel %vm1006, %v1208, %v1212
      %v1214 = vshrl.u32 %v1001, 16
      %v1216 = vor.u32 %v1214, %v1212
      %v1218 = vshrl.u32 %v1002, 16
      %v1220 = vshll.u32 %v1002, 16
      %v1222 = vrot.slane %v1220, 1
      %v1223 = vor.u32 %v1218, %v1222
      %v1225 = vshll.u32 %v1003, 16
      %v1227 = vrot.slane %v1225, 1
      %v1228 = vsel %vm1006, %v1223, %v1227
      %v1229 = vshrl.u32 %v1003, 16
      %v1231 = vor.u32 %v1229, %v1227
      %v1233 = vshrl.u32 %v1004, 16
      %v1235 = vshll.u32 %v1004, 16
      %v1237 = vrot.slane %v1235, 1
      %v1238 = vor.u32 %v1233, %v1237
      %v1240 = vshll.u32 %v1005, 16
      %v1242 = vrot.slane %v1240, 1
      %v1243 = vsel %vm1006, %v1238, %v1242
      %v1244 = vshrl.u32 %v1005, 16
      %v1246 = vor.u32 %v1244, %v1242
      %1247 = vrot.lane.b32.xlu0 %v1018, 4
      %v1248 = vpop.permute.xlu0 %1247
      %1249 = vrot.lane.b32.xlu0 %v1021, 4
      %v1250 = vpop.permute.xlu0 %1249
      %1251 = vrot.lane.b32.xlu0 %v1033, 4
      %v1252 = vpop.permute.xlu0 %1251
      %1253 = vrot.lane.b32.xlu0 %v1036, 4
      %v1254 = vpop.permute.xlu0 %1253
      %1255 = vrot.lane.b32.xlu0 %v1048, 4
      %v1256 = vpop.permute.xlu0 %1255
      %1257 = vrot.lane.b32.xlu0 %v1051, 4
      %v1258 = vpop.permute.xlu0 %1257
      %1259 = vrot.lane.b32.xlu0 %v1063, 4
      %v1260 = vpop.permute.xlu0 %1259
      %1261 = vrot.lane.b32.xlu0 %v1066, 4
      %v1262 = vpop.permute.xlu0 %1261
      %1263 = vrot.lane.b32.xlu0 %v1078, 4
      %v1264 = vpop.permute.xlu0 %1263
      %1265 = vrot.lane.b32.xlu0 %v1081, 4
      %v1266 = vpop.permute.xlu0 %1265
      %1267 = vrot.lane.b32.xlu0 %v1093, 4
      %v1268 = vpop.permute.xlu0 %1267
      %1269 = vrot.lane.b32.xlu0 %v1096, 4
      %v1270 = vpop.permute.xlu0 %1269
      %1271 = vrot.lane.b32.xlu0 %v1108, 4
      %v1272 = vpop.permute.xlu0 %1271
      %1273 = vrot.lane.b32.xlu0 %v1111, 4
      %v1274 = vpop.permute.xlu0 %1273
      %1275 = vrot.lane.b32.xlu0 %v1123, 4
      %v1276 = vpop.permute.xlu0 %1275
      %1277 = vrot.lane.b32.xlu0 %v1126, 4
      %v1278 = vpop.permute.xlu0 %1277
      %1279 = vrot.lane.b32.xlu0 %v1138, 4
      %v1280 = vpop.permute.xlu0 %1279
      %1281 = vrot.lane.b32.xlu0 %v1141, 4
      %v1282 = vpop.permute.xlu0 %1281
      %1283 = vrot.lane.b32.xlu0 %v1153, 4
      %v1284 = vpop.permute.xlu0 %1283
      %1285 = vrot.lane.b32.xlu0 %v1156, 4
      %v1286 = vpop.permute.xlu0 %1285
      %1287 = vrot.lane.b32.xlu0 %v1168, 4
      %v1288 = vpop.permute.xlu0 %1287
      %1289 = vrot.lane.b32.xlu0 %v1171, 4
      %v1290 = vpop.permute.xlu0 %1289
      %1291 = vrot.lane.b32.xlu0 %v1183, 4
      %v1292 = vpop.permute.xlu0 %1291
      %1293 = vrot.lane.b32.xlu0 %v1186, 4
      %v1294 = vpop.permute.xlu0 %1293
      %1295 = vrot.lane.b32.xlu0 %v1198, 4
      %v1296 = vpop.permute.xlu0 %1295
      %1297 = vrot.lane.b32.xlu0 %v1201, 4
      %v1298 = vpop.permute.xlu0 %1297
      %1299 = vrot.lane.b32.xlu0 %v1213, 4
      %v1300 = vpop.permute.xlu0 %1299
      %1301 = vrot.lane.b32.xlu0 %v1216, 4
      %v1302 = vpop.permute.xlu0 %1301
      %1303 = vrot.lane.b32.xlu0 %v1228, 4
      %v1304 = vpop.permute.xlu0 %1303
      %1305 = vrot.lane.b32.xlu0 %v1231, 4
      %v1306 = vpop.permute.xlu0 %1305
      %1307 = vrot.lane.b32.xlu0 %v1243, 4
      %v1308 = vpop.permute.xlu0 %1307
      %1309 = vrot.lane.b32.xlu0 %v1246, 4
      %v1310 = vpop.permute.xlu0 %1309
      %vm1311 = vcmask 1046528
      %v1312 = vrot.slane %v974, 1
      %v1313 = vrot.slane %v975, 1
      %v1314 = vsel %vm1311, %v1312, %v1313
      %v1315 = vrot.slane %v976, 1
      %v1316 = vrot.slane %v977, 1
      %v1317 = vsel %vm1311, %v1315, %v1316
      %v1318 = vrot.slane %v978, 1
      %v1319 = vrot.slane %v979, 1
      %v1320 = vsel %vm1311, %v1318, %v1319
      %v1321 = vrot.slane %v980, 1
      %v1322 = vrot.slane %v981, 1
      %v1323 = vsel %vm1311, %v1321, %v1322
      %v1324 = vrot.slane %v982, 1
      %v1325 = vrot.slane %v983, 1
      %v1326 = vsel %vm1311, %v1324, %v1325
      %v1327 = vrot.slane %v984, 1
      %v1328 = vrot.slane %v985, 1
      %v1329 = vsel %vm1311, %v1327, %v1328
      %v1330 = vrot.slane %v986, 1
      %v1331 = vrot.slane %v987, 1
      %v1332 = vsel %vm1311, %v1330, %v1331
      %v1333 = vrot.slane %v988, 1
      %v1334 = vrot.slane %v989, 1
      %v1335 = vsel %vm1311, %v1333, %v1334
      %v1336 = vrot.slane %v990, 1
      %v1337 = vrot.slane %v991, 1
      %v1338 = vsel %vm1311, %v1336, %v1337
      %v1339 = vrot.slane %v992, 1
      %v1340 = vrot.slane %v993, 1
      %v1341 = vsel %vm1311, %v1339, %v1340
      %v1342 = vrot.slane %v994, 1
      %v1343 = vrot.slane %v995, 1
      %v1344 = vsel %vm1311, %v1342, %v1343
      %v1345 = vrot.slane %v996, 1
      %v1346 = vrot.slane %v997, 1
      %v1347 = vsel %vm1311, %v1345, %v1346
      %v1348 = vrot.slane %v998, 1
      %v1349 = vrot.slane %v999, 1
      %v1350 = vsel %vm1311, %v1348, %v1349
      %v1351 = vrot.slane %v1000, 1
      %v1352 = vrot.slane %v1001, 1
      %v1353 = vsel %vm1311, %v1351, %v1352
      %v1354 = vrot.slane %v1002, 1
      %v1355 = vrot.slane %v1003, 1
      %v1356 = vsel %vm1311, %v1354, %v1355
      %v1357 = vrot.slane %v1004, 1
      %v1358 = vrot.slane %v1005, 1
      %v1359 = vsel %vm1311, %v1357, %v1358
      %1360 = vrot.lane.b32.xlu0 %v1314, 8
      %v1361 = vpop.permute.xlu0 %1360
      %1362 = vrot.lane.b32.xlu0 %v1313, 8
      %v1363 = vpop.permute.xlu0 %1362
      %1364 = vrot.lane.b32.xlu0 %v1317, 8
      %v1365 = vpop.permute.xlu0 %1364
      %1366 = vrot.lane.b32.xlu0 %v1316, 8
      %v1367 = vpop.permute.xlu0 %1366
      %1368 = vrot.lane.b32.xlu0 %v1320, 8
      %v1369 = vpop.permute.xlu0 %1368
      %1370 = vrot.lane.b32.xlu0 %v1319, 8
      %v1371 = vpop.permute.xlu0 %1370
      %1372 = vrot.lane.b32.xlu0 %v1323, 8
      %v1373 = vpop.permute.xlu0 %1372
      %1374 = vrot.lane.b32.xlu0 %v1322, 8
      %v1375 = vpop.permute.xlu0 %1374
      %1376 = vrot.lane.b32.xlu0 %v1326, 8
      %v1377 = vpop.permute.xlu0 %1376
      %1378 = vrot.lane.b32.xlu0 %v1325, 8
      %v1379 = vpop.permute.xlu0 %1378
      %1380 = vrot.lane.b32.xlu0 %v1329, 8
      %v1381 = vpop.permute.xlu0 %1380
      %1382 = vrot.lane.b32.xlu0 %v1328, 8
      %v1383 = vpop.permute.xlu0 %1382
      %1384 = vrot.lane.b32.xlu0 %v1332, 8
      %v1385 = vpop.permute.xlu0 %1384
      %1386 = vrot.lane.b32.xlu0 %v1331, 8
      %v1387 = vpop.permute.xlu0 %1386
      %1388 = vrot.lane.b32.xlu0 %v1335, 8
      %v1389 = vpop.permute.xlu0 %1388
      %1390 = vrot.lane.b32.xlu0 %v1334, 8
      %v1391 = vpop.permute.xlu0 %1390
      %1392 = vrot.lane.b32.xlu0 %v1338, 8
      %v1393 = vpop.permute.xlu0 %1392
      %1394 = vrot.lane.b32.xlu0 %v1337, 8
      %v1395 = vpop.permute.xlu0 %1394
      %1396 = vrot.lane.b32.xlu0 %v1341, 8
      %v1397 = vpop.permute.xlu0 %1396
      %1398 = vrot.lane.b32.xlu0 %v1340, 8
      %v1399 = vpop.permute.xlu0 %1398
      %1400 = vrot.lane.b32.xlu0 %v1344, 8
      %v1401 = vpop.permute.xlu0 %1400
      %1402 = vrot.lane.b32.xlu0 %v1343, 8
      %v1403 = vpop.permute.xlu0 %1402
      %1404 = vrot.lane.b32.xlu0 %v1347, 8
      %v1405 = vpop.permute.xlu0 %1404
      %1406 = vrot.lane.b32.xlu0 %v1346, 8
      %v1407 = vpop.permute.xlu0 %1406
      %1408 = vrot.lane.b32.xlu0 %v1350, 8
      %v1409 = vpop.permute.xlu0 %1408
      %1410 = vrot.lane.b32.xlu0 %v1349, 8
      %v1411 = vpop.permute.xlu0 %1410
      %1412 = vrot.lane.b32.xlu0 %v1353, 8
      %v1413 = vpop.permute.xlu0 %1412
      %1414 = vrot.lane.b32.xlu0 %v1352, 8
      %v1415 = vpop.permute.xlu0 %1414
      %1416 = vrot.lane.b32.xlu0 %v1356, 8
      %v1417 = vpop.permute.xlu0 %1416
      %1418 = vrot.lane.b32.xlu0 %v1355, 8
      %v1419 = vpop.permute.xlu0 %1418
      %1420 = vrot.lane.b32.xlu0 %v1359, 8
      %v1421 = vpop.permute.xlu0 %1420
      %1422 = vrot.lane.b32.xlu0 %v1358, 8
      %v1423 = vpop.permute.xlu0 %1422
      %v1424 = vpack.c.b16 %v928, %v927
      %v1425 = vpack.c.b16 %v931, %v930
      %v1426 = vpack.c.b16 %v934, %v933
      %v1427 = vpack.c.b16 %v937, %v936
      %v1428 = vpack.c.b16 %v940, %v939
      %v1429 = vpack.c.b16 %v943, %v942
      %v1430 = vpack.c.b16 %v946, %v945
      %v1431 = vpack.c.b16 %v949, %v948
      %v1432 = vpack.c.b16 %v952, %v951
      %v1433 = vpack.c.b16 %v955, %v954
      %v1434 = vpack.c.b16 %v958, %v957
      %v1435 = vpack.c.b16 %v961, %v960
      %v1436 = vpack.c.b16 %v964, %v963
      %v1437 = vpack.c.b16 %v967, %v966
      %v1438 = vpack.c.b16 %v970, %v969
      %v1439 = vpack.c.b16 %v973, %v972
      %v1441 = vshrl.u32 %v1424, 16
      %v1443 = vrot.slane %v1441, 5
      %v1444 = vshll.u32 %v1424, 16
      %v1446 = vrot.slane %v1444, 6
      %v1447 = vor.u32 %v1443, %v1446
      %v1449 = vshrl.u32 %v1425, 16
      %v1451 = vrot.slane %v1449, 5
      %v1452 = vshll.u32 %v1425, 16
      %v1454 = vrot.slane %v1452, 6
      %v1455 = vor.u32 %v1451, %v1454
      %v1457 = vshrl.u32 %v1426, 16
      %v1459 = vrot.slane %v1457, 5
      %v1460 = vshll.u32 %v1426, 16
      %v1462 = vrot.slane %v1460, 6
      %v1463 = vor.u32 %v1459, %v1462
      %v1465 = vshrl.u32 %v1427, 16
      %v1467 = vrot.slane %v1465, 5
      %v1468 = vshll.u32 %v1427, 16
      %v1470 = vrot.slane %v1468, 6
      %v1471 = vor.u32 %v1467, %v1470
      %v1473 = vshrl.u32 %v1428, 16
      %v1475 = vrot.slane %v1473, 5
      %v1476 = vshll.u32 %v1428, 16
      %v1478 = vrot.slane %v1476, 6
      %v1479 = vor.u32 %v1475, %v1478
      %v1481 = vshrl.u32 %v1429, 16
      %v1483 = vrot.slane %v1481, 5
      %v1484 = vshll.u32 %v1429, 16
      %v1486 = vrot.slane %v1484, 6
      %v1487 = vor.u32 %v1483, %v1486
      %v1489 = vshrl.u32 %v1430, 16
      %v1491 = vrot.slane %v1489, 5
      %v1492 = vshll.u32 %v1430, 16
      %v1494 = vrot.slane %v1492, 6
      %v1495 = vor.u32 %v1491, %v1494
      %v1497 = vshrl.u32 %v1431, 16
      %v1499 = vrot.slane %v1497, 5
      %v1500 = vshll.u32 %v1431, 16
      %v1502 = vrot.slane %v1500, 6
      %v1503 = vor.u32 %v1499, %v1502
      %v1505 = vshrl.u32 %v1432, 16
      %v1507 = vrot.slane %v1505, 5
      %v1508 = vshll.u32 %v1432, 16
      %v1510 = vrot.slane %v1508, 6
      %v1511 = vor.u32 %v1507, %v1510
      %v1513 = vshrl.u32 %v1433, 16
      %v1515 = vrot.slane %v1513, 5
      %v1516 = vshll.u32 %v1433, 16
      %v1518 = vrot.slane %v1516, 6
      %v1519 = vor.u32 %v1515, %v1518
      %v1521 = vshrl.u32 %v1434, 16
      %v1523 = vrot.slane %v1521, 5
      %v1524 = vshll.u32 %v1434, 16
      %v1526 = vrot.slane %v1524, 6
      %v1527 = vor.u32 %v1523, %v1526
      %v1529 = vshrl.u32 %v1435, 16
      %v1531 = vrot.slane %v1529, 5
      %v1532 = vshll.u32 %v1435, 16
      %v1534 = vrot.slane %v1532, 6
      %v1535 = vor.u32 %v1531, %v1534
      %v1537 = vshrl.u32 %v1436, 16
      %v1539 = vrot.slane %v1537, 5
      %v1540 = vshll.u32 %v1436, 16
      %v1542 = vrot.slane %v1540, 6
      %v1543 = vor.u32 %v1539, %v1542
      %v1545 = vshrl.u32 %v1437, 16
      %v1547 = vrot.slane %v1545, 5
      %v1548 = vshll.u32 %v1437, 16
      %v1550 = vrot.slane %v1548, 6
      %v1551 = vor.u32 %v1547, %v1550
      %v1553 = vshrl.u32 %v1438, 16
      %v1555 = vrot.slane %v1553, 5
      %v1556 = vshll.u32 %v1438, 16
      %v1558 = vrot.slane %v1556, 6
      %v1559 = vor.u32 %v1555, %v1558
      %v1561 = vshrl.u32 %v1439, 16
      %v1563 = vrot.slane %v1561, 5
      %v1564 = vshll.u32 %v1439, 16
      %v1566 = vrot.slane %v1564, 6
      %v1567 = vor.u32 %v1563, %v1566
      %1568 = vrot.lane.b32.xlu0 %v1447, 12
      %v1569 = vpop.permute.xlu0 %1568
      %1570 = vrot.lane.b32.xlu0 %v1455, 12
      %v1571 = vpop.permute.xlu0 %1570
      %1572 = vrot.lane.b32.xlu0 %v1463, 12
      %v1573 = vpop.permute.xlu0 %1572
      %1574 = vrot.lane.b32.xlu0 %v1471, 12
      %v1575 = vpop.permute.xlu0 %1574
      %1576 = vrot.lane.b32.xlu0 %v1479, 12
      %v1577 = vpop.permute.xlu0 %1576
      %1578 = vrot.lane.b32.xlu0 %v1487, 12
      %v1579 = vpop.permute.xlu0 %1578
      %1580 = vrot.lane.b32.xlu0 %v1495, 12
      %v1581 = vpop.permute.xlu0 %1580
      %1582 = vrot.lane.b32.xlu0 %v1503, 12
      %v1583 = vpop.permute.xlu0 %1582
      %1584 = vrot.lane.b32.xlu0 %v1511, 12
      %v1585 = vpop.permute.xlu0 %1584
      %1586 = vrot.lane.b32.xlu0 %v1519, 12
      %v1587 = vpop.permute.xlu0 %1586
      %1588 = vrot.lane.b32.xlu0 %v1527, 12
      %v1589 = vpop.permute.xlu0 %1588
      %1590 = vrot.lane.b32.xlu0 %v1535, 12
      %v1591 = vpop.permute.xlu0 %1590
      %1592 = vrot.lane.b32.xlu0 %v1543, 12
      %v1593 = vpop.permute.xlu0 %1592
      %1594 = vrot.lane.b32.xlu0 %v1551, 12
      %v1595 = vpop.permute.xlu0 %1594
      %1596 = vrot.lane.b32.xlu0 %v1559, 12
      %v1597 = vpop.permute.xlu0 %1596
      %1598 = vrot.lane.b32.xlu0 %v1567, 12
      %v1599 = vpop.permute.xlu0 %1598
      %v1616 = vunpack.c.l.b16 %v409
      %v1617 = vunpack.c.l.b16 %v413
      %v1618 = vunpack.c.l.b16 %v417
      %v1619 = vunpack.c.l.b16 %v421
      %v1620 = vunpack.c.l.b16 %v425
      %v1621 = vunpack.c.l.b16 %v429
      %v1622 = vunpack.c.l.b16 %v433
      %v1623 = vunpack.c.l.b16 %v437
      %v1624 = vunpack.c.l.b16 %v441
      %v1625 = vunpack.c.l.b16 %v445
      %v1626 = vunpack.c.l.b16 %v449
      %v1627 = vunpack.c.l.b16 %v453
      %v1628 = vunpack.c.l.b16 %v457
      %v1629 = vunpack.c.l.b16 %v461
      %v1630 = vunpack.c.l.b16 %v465
      %v1631 = vunpack.c.l.b16 %v469
      %v1632 = vpack.c.b16 %v1616, %v1616
      %v1633 = vpack.c.b16 %v1617, %v1617
      %v1634 = vpack.c.b16 %v1618, %v1618
      %v1635 = vpack.c.b16 %v1619, %v1619
      %v1636 = vpack.c.b16 %v1620, %v1620
      %v1637 = vpack.c.b16 %v1621, %v1621
      %v1638 = vpack.c.b16 %v1622, %v1622
      %v1639 = vpack.c.b16 %v1623, %v1623
      %v1640 = vpack.c.b16 %v1624, %v1624
      %v1641 = vpack.c.b16 %v1625, %v1625
      %v1642 = vpack.c.b16 %v1626, %v1626
      %v1643 = vpack.c.b16 %v1627, %v1627
      %v1644 = vpack.c.b16 %v1628, %v1628
      %v1645 = vpack.c.b16 %v1629, %v1629
      %v1646 = vpack.c.b16 %v1630, %v1630
      %v1647 = vpack.c.b16 %v1631, %v1631
      %vm1648 = vcmask 1041408
      %v1649 = vrot.slane %v1424, 6
      %v1650 = vrot.slane %v1632, 6
      %v1651 = vsel %vm1648, %v1649, %v1650
      %v1652 = vrot.slane %v1425, 6
      %v1653 = vrot.slane %v1633, 6
      %v1654 = vsel %vm1648, %v1652, %v1653
      %v1655 = vrot.slane %v1426, 6
      %v1656 = vrot.slane %v1634, 6
      %v1657 = vsel %vm1648, %v1655, %v1656
      %v1658 = vrot.slane %v1427, 6
      %v1659 = vrot.slane %v1635, 6
      %v1660 = vsel %vm1648, %v1658, %v1659
      %v1661 = vrot.slane %v1428, 6
      %v1662 = vrot.slane %v1636, 6
      %v1663 = vsel %vm1648, %v1661, %v1662
      %v1664 = vrot.slane %v1429, 6
      %v1665 = vrot.slane %v1637, 6
      %v1666 = vsel %vm1648, %v1664, %v1665
      %v1667 = vrot.slane %v1430, 6
      %v1668 = vrot.slane %v1638, 6
      %v1669 = vsel %vm1648, %v1667, %v1668
      %v1670 = vrot.slane %v1431, 6
      %v1671 = vrot.slane %v1639, 6
      %v1672 = vsel %vm1648, %v1670, %v1671
      %v1673 = vrot.slane %v1432, 6
      %v1674 = vrot.slane %v1640, 6
      %v1675 = vsel %vm1648, %v1673, %v1674
      %v1676 = vrot.slane %v1433, 6
      %v1677 = vrot.slane %v1641, 6
      %v1678 = vsel %vm1648, %v1676, %v1677
      %v1679 = vrot.slane %v1434, 6
      %v1680 = vrot.slane %v1642, 6
      %v1681 = vsel %vm1648, %v1679, %v1680
      %v1682 = vrot.slane %v1435, 6
      %v1683 = vrot.slane %v1643, 6
      %v1684 = vsel %vm1648, %v1682, %v1683
      %v1685 = vrot.slane %v1436, 6
      %v1686 = vrot.slane %v1644, 6
      %v1687 = vsel %vm1648, %v1685, %v1686
      %v1688 = vrot.slane %v1437, 6
      %v1689 = vrot.slane %v1645, 6
      %v1690 = vsel %vm1648, %v1688, %v1689
      %v1691 = vrot.slane %v1438, 6
      %v1692 = vrot.slane %v1646, 6
      %v1693 = vsel %vm1648, %v1691, %v1692
      %v1694 = vrot.slane %v1439, 6
      %v1695 = vrot.slane %v1647, 6
      %v1696 = vsel %vm1648, %v1694, %v1695
      %1697 = vrot.lane.b32.xlu0 %v1649, 16
      %v1698 = vpop.permute.xlu0 %1697
      %1699 = vrot.lane.b32.xlu0 %v1651, 16
      %v1700 = vpop.permute.xlu0 %1699
      %1701 = vrot.lane.b32.xlu0 %v1652, 16
      %v1702 = vpop.permute.xlu0 %1701
      %1703 = vrot.lane.b32.xlu0 %v1654, 16
      %v1704 = vpop.permute.xlu0 %1703
      %1705 = vrot.lane.b32.xlu0 %v1655, 16
      %v1706 = vpop.permute.xlu0 %1705
      %1707 = vrot.lane.b32.xlu0 %v1657, 16
      %v1708 = vpop.permute.xlu0 %1707
      %1709 = vrot.lane.b32.xlu0 %v1658, 16
      %v1710 = vpop.permute.xlu0 %1709
      %1711 = vrot.lane.b32.xlu0 %v1660, 16
      %v1712 = vpop.permute.xlu0 %1711
      %1713 = vrot.lane.b32.xlu0 %v1661, 16
      %v1714 = vpop.permute.xlu0 %1713
      %1715 = vrot.lane.b32.xlu0 %v1663, 16
      %v1716 = vpop.permute.xlu0 %1715
      %1717 = vrot.lane.b32.xlu0 %v1664, 16
      %v1718 = vpop.permute.xlu0 %1717
      %1719 = vrot.lane.b32.xlu0 %v1666, 16
      %v1720 = vpop.permute.xlu0 %1719
      %1721 = vrot.lane.b32.xlu0 %v1667, 16
      %v1722 = vpop.permute.xlu0 %1721
      %1723 = vrot.lane.b32.xlu0 %v1669, 16
      %v1724 = vpop.permute.xlu0 %1723
      %1725 = vrot.lane.b32.xlu0 %v1670, 16
      %v1726 = vpop.permute.xlu0 %1725
      %1727 = vrot.lane.b32.xlu0 %v1672, 16
      %v1728 = vpop.permute.xlu0 %1727
      %1729 = vrot.lane.b32.xlu0 %v1673, 16
      %v1730 = vpop.permute.xlu0 %1729
      %1731 = vrot.lane.b32.xlu0 %v1675, 16
      %v1732 = vpop.permute.xlu0 %1731
      %1733 = vrot.lane.b32.xlu0 %v1676, 16
      %v1734 = vpop.permute.xlu0 %1733
      %1735 = vrot.lane.b32.xlu0 %v1678, 16
      %v1736 = vpop.permute.xlu0 %1735
      %1737 = vrot.lane.b32.xlu0 %v1679, 16
      %v1738 = vpop.permute.xlu0 %1737
      %1739 = vrot.lane.b32.xlu0 %v1681, 16
      %v1740 = vpop.permute.xlu0 %1739
      %1741 = vrot.lane.b32.xlu0 %v1682, 16
      %v1742 = vpop.permute.xlu0 %1741
      %1743 = vrot.lane.b32.xlu0 %v1684, 16
      %v1744 = vpop.permute.xlu0 %1743
      %1745 = vrot.lane.b32.xlu0 %v1685, 16
      %v1746 = vpop.permute.xlu0 %1745
      %1747 = vrot.lane.b32.xlu0 %v1687, 16
      %v1748 = vpop.permute.xlu0 %1747
      %1749 = vrot.lane.b32.xlu0 %v1688, 16
      %v1750 = vpop.permute.xlu0 %1749
      %1751 = vrot.lane.b32.xlu0 %v1690, 16
      %v1752 = vpop.permute.xlu0 %1751
      %1753 = vrot.lane.b32.xlu0 %v1691, 16
      %v1754 = vpop.permute.xlu0 %1753
      %1755 = vrot.lane.b32.xlu0 %v1693, 16
      %v1756 = vpop.permute.xlu0 %1755
      %1757 = vrot.lane.b32.xlu0 %v1694, 16
      %v1758 = vpop.permute.xlu0 %1757
      %1759 = vrot.lane.b32.xlu0 %v1696, 16
      %v1760 = vpop.permute.xlu0 %1759
      %vm1761 = vsmask.f32 1280
      %v1762 = vrot.slane %v1441, 6
      %v1763 = vrot.slane %v1444, 7
      %v1764 = vor.u32 %v1762, %v1763
      %v1766 = vshrl.u32 %v1632, 16
      %v1768 = vrot.slane %v1766, 6
      %v1769 = vshll.u32 %v1632, 16
      %v1771 = vrot.slane %v1769, 7
      %v1772 = vor.u32 %v1768, %v1771
      %v1773 = vsel %vm1761, %v1764, %v1772
      %v1774 = vrot.slane %v1449, 6
      %v1775 = vrot.slane %v1452, 7
      %v1776 = vor.u32 %v1774, %v1775
      %v1778 = vshrl.u32 %v1633, 16
      %v1780 = vrot.slane %v1778, 6
      %v1781 = vshll.u32 %v1633, 16
      %v1783 = vrot.slane %v1781, 7
      %v1784 = vor.u32 %v1780, %v1783
      %v1785 = vsel %vm1761, %v1776, %v1784
      %v1786 = vrot.slane %v1457, 6
      %v1787 = vrot.slane %v1460, 7
      %v1788 = vor.u32 %v1786, %v1787
      %v1790 = vshrl.u32 %v1634, 16
      %v1792 = vrot.slane %v1790, 6
      %v1793 = vshll.u32 %v1634, 16
      %v1795 = vrot.slane %v1793, 7
      %v1796 = vor.u32 %v1792, %v1795
      %v1797 = vsel %vm1761, %v1788, %v1796
      %v1798 = vrot.slane %v1465, 6
      %v1799 = vrot.slane %v1468, 7
      %v1800 = vor.u32 %v1798, %v1799
      %v1802 = vshrl.u32 %v1635, 16
      %v1804 = vrot.slane %v1802, 6
      %v1805 = vshll.u32 %v1635, 16
      %v1807 = vrot.slane %v1805, 7
      %v1808 = vor.u32 %v1804, %v1807
      %v1809 = vsel %vm1761, %v1800, %v1808
      %v1810 = vrot.slane %v1473, 6
      %v1811 = vrot.slane %v1476, 7
      %v1812 = vor.u32 %v1810, %v1811
      %v1814 = vshrl.u32 %v1636, 16
      %v1816 = vrot.slane %v1814, 6
      %v1817 = vshll.u32 %v1636, 16
      %v1819 = vrot.slane %v1817, 7
      %v1820 = vor.u32 %v1816, %v1819
      %v1821 = vsel %vm1761, %v1812, %v1820
      %v1822 = vrot.slane %v1481, 6
      %v1823 = vrot.slane %v1484, 7
      %v1824 = vor.u32 %v1822, %v1823
      %v1826 = vshrl.u32 %v1637, 16
      %v1828 = vrot.slane %v1826, 6
      %v1829 = vshll.u32 %v1637, 16
      %v1831 = vrot.slane %v1829, 7
      %v1832 = vor.u32 %v1828, %v1831
      %v1833 = vsel %vm1761, %v1824, %v1832
      %v1834 = vrot.slane %v1489, 6
      %v1835 = vrot.slane %v1492, 7
      %v1836 = vor.u32 %v1834, %v1835
      %v1838 = vshrl.u32 %v1638, 16
      %v1840 = vrot.slane %v1838, 6
      %v1841 = vshll.u32 %v1638, 16
      %v1843 = vrot.slane %v1841, 7
      %v1844 = vor.u32 %v1840, %v1843
      %v1845 = vsel %vm1761, %v1836, %v1844
      %v1846 = vrot.slane %v1497, 6
      %v1847 = vrot.slane %v1500, 7
      %v1848 = vor.u32 %v1846, %v1847
      %v1850 = vshrl.u32 %v1639, 16
      %v1852 = vrot.slane %v1850, 6
      %v1853 = vshll.u32 %v1639, 16
      %v1855 = vrot.slane %v1853, 7
      %v1856 = vor.u32 %v1852, %v1855
      %v1857 = vsel %vm1761, %v1848, %v1856
      %v1858 = vrot.slane %v1505, 6
      %v1859 = vrot.slane %v1508, 7
      %v1860 = vor.u32 %v1858, %v1859
      %v1862 = vshrl.u32 %v1640, 16
      %v1864 = vrot.slane %v1862, 6
      %v1865 = vshll.u32 %v1640, 16
      %v1867 = vrot.slane %v1865, 7
      %v1868 = vor.u32 %v1864, %v1867
      %v1869 = vsel %vm1761, %v1860, %v1868
      %v1870 = vrot.slane %v1513, 6
      %v1871 = vrot.slane %v1516, 7
      %v1872 = vor.u32 %v1870, %v1871
      %v1874 = vshrl.u32 %v1641, 16
      %v1876 = vrot.slane %v1874, 6
      %v1877 = vshll.u32 %v1641, 16
      %v1879 = vrot.slane %v1877, 7
      %v1880 = vor.u32 %v1876, %v1879
      %v1881 = vsel %vm1761, %v1872, %v1880
      %v1882 = vrot.slane %v1521, 6
      %v1883 = vrot.slane %v1524, 7
      %v1884 = vor.u32 %v1882, %v1883
      %v1886 = vshrl.u32 %v1642, 16
      %v1888 = vrot.slane %v1886, 6
      %v1889 = vshll.u32 %v1642, 16
      %v1891 = vrot.slane %v1889, 7
      %v1892 = vor.u32 %v1888, %v1891
      %v1893 = vsel %vm1761, %v1884, %v1892
      %v1894 = vrot.slane %v1529, 6
      %v1895 = vrot.slane %v1532, 7
      %v1896 = vor.u32 %v1894, %v1895
      %v1898 = vshrl.u32 %v1643, 16
      %v1900 = vrot.slane %v1898, 6
      %v1901 = vshll.u32 %v1643, 16
      %v1903 = vrot.slane %v1901, 7
      %v1904 = vor.u32 %v1900, %v1903
      %v1905 = vsel %vm1761, %v1896, %v1904
      %v1906 = vrot.slane %v1537, 6
      %v1907 = vrot.slane %v1540, 7
      %v1908 = vor.u32 %v1906, %v1907
      %v1910 = vshrl.u32 %v1644, 16
      %v1912 = vrot.slane %v1910, 6
      %v1913 = vshll.u32 %v1644, 16
      %v1915 = vrot.slane %v1913, 7
      %v1916 = vor.u32 %v1912, %v1915
      %v1917 = vsel %vm1761, %v1908, %v1916
      %v1918 = vrot.slane %v1545, 6
      %v1919 = vrot.slane %v1548, 7
      %v1920 = vor.u32 %v1918, %v1919
      %v1922 = vshrl.u32 %v1645, 16
      %v1924 = vrot.slane %v1922, 6
      %v1925 = vshll.u32 %v1645, 16
      %v1927 = vrot.slane %v1925, 7
      %v1928 = vor.u32 %v1924, %v1927
      %v1929 = vsel %vm1761, %v1920, %v1928
      %v1930 = vrot.slane %v1553, 6
      %v1931 = vrot.slane %v1556, 7
      %v1932 = vor.u32 %v1930, %v1931
      %v1934 = vshrl.u32 %v1646, 16
      %v1936 = vrot.slane %v1934, 6
      %v1937 = vshll.u32 %v1646, 16
      %v1939 = vrot.slane %v1937, 7
      %v1940 = vor.u32 %v1936, %v1939
      %v1941 = vsel %vm1761, %v1932, %v1940
      %v1942 = vrot.slane %v1561, 6
      %v1943 = vrot.slane %v1564, 7
      %v1944 = vor.u32 %v1942, %v1943
      %v1946 = vshrl.u32 %v1647, 16
      %v1948 = vrot.slane %v1946, 6
      %v1949 = vshll.u32 %v1647, 16
      %v1951 = vrot.slane %v1949, 7
      %v1952 = vor.u32 %v1948, %v1951
      %v1953 = vsel %vm1761, %v1944, %v1952
      %1954 = vrot.lane.b32.xlu0 %v1764, 20
      %v1955 = vpop.permute.xlu0 %1954
      %1956 = vrot.lane.b32.xlu0 %v1773, 20
      %v1957 = vpop.permute.xlu0 %1956
      %1958 = vrot.lane.b32.xlu0 %v1776, 20
      %v1959 = vpop.permute.xlu0 %1958
      %1960 = vrot.lane.b32.xlu0 %v1785, 20
      %v1961 = vpop.permute.xlu0 %1960
      %1962 = vrot.lane.b32.xlu0 %v1788, 20
      %v1963 = vpop.permute.xlu0 %1962
      %1964 = vrot.lane.b32.xlu0 %v1797, 20
      %v1965 = vpop.permute.xlu0 %1964
      %1966 = vrot.lane.b32.xlu0 %v1800, 20
      %v1967 = vpop.permute.xlu0 %1966
      %1968 = vrot.lane.b32.xlu0 %v1809, 20
      %v1969 = vpop.permute.xlu0 %1968
      %1970 = vrot.lane.b32.xlu0 %v1812, 20
      %v1971 = vpop.permute.xlu0 %1970
      %1972 = vrot.lane.b32.xlu0 %v1821, 20
      %v1973 = vpop.permute.xlu0 %1972
      %1974 = vrot.lane.b32.xlu0 %v1824, 20
      %v1975 = vpop.permute.xlu0 %1974
      %1976 = vrot.lane.b32.xlu0 %v1833, 20
      %v1977 = vpop.permute.xlu0 %1976
      %1978 = vrot.lane.b32.xlu0 %v1836, 20
      %v1979 = vpop.permute.xlu0 %1978
      %1980 = vrot.lane.b32.xlu0 %v1845, 20
      %v1981 = vpop.permute.xlu0 %1980
      %1982 = vrot.lane.b32.xlu0 %v1848, 20
      %v1983 = vpop.permute.xlu0 %1982
      %1984 = vrot.lane.b32.xlu0 %v1857, 20
      %v1985 = vpop.permute.xlu0 %1984
      %1986 = vrot.lane.b32.xlu0 %v1860, 20
      %v1987 = vpop.permute.xlu0 %1986
      %1988 = vrot.lane.b32.xlu0 %v1869, 20
      %v1989 = vpop.permute.xlu0 %1988
      %1990 = vrot.lane.b32.xlu0 %v1872, 20
      %v1991 = vpop.permute.xlu0 %1990
      %1992 = vrot.lane.b32.xlu0 %v1881, 20
      %v1993 = vpop.permute.xlu0 %1992
      %1994 = vrot.lane.b32.xlu0 %v1884, 20
      %v1995 = vpop.permute.xlu0 %1994
      %1996 = vrot.lane.b32.xlu0 %v1893, 20
      %v1997 = vpop.permute.xlu0 %1996
      %1998 = vrot.lane.b32.xlu0 %v1896, 20
      %v1999 = vpop.permute.xlu0 %1998
      %2000 = vrot.lane.b32.xlu0 %v1905, 20
      %v2001 = vpop.permute.xlu0 %2000
      %2002 = vrot.lane.b32.xlu0 %v1908, 20
      %v2003 = vpop.permute.xlu0 %2002
      %2004 = vrot.lane.b32.xlu0 %v1917, 20
      %v2005 = vpop.permute.xlu0 %2004
      %2006 = vrot.lane.b32.xlu0 %v1920, 20
      %v2007 = vpop.permute.xlu0 %2006
      %2008 = vrot.lane.b32.xlu0 %v1929, 20
      %v2009 = vpop.permute.xlu0 %2008
      %2010 = vrot.lane.b32.xlu0 %v1932, 20
      %v2011 = vpop.permute.xlu0 %2010
      %2012 = vrot.lane.b32.xlu0 %v1941, 20
      %v2013 = vpop.permute.xlu0 %2012
      %2014 = vrot.lane.b32.xlu0 %v1944, 20
      %v2015 = vpop.permute.xlu0 %2014
      %2016 = vrot.lane.b32.xlu0 %v1953, 20
      %v2017 = vpop.permute.xlu0 %2016
      %vm2018 = vcmask 1040384
      %v2019 = vrot.slane %v1424, 7
      %v2020 = vrot.slane %v1632, 7
      %v2021 = vsel %vm2018, %v2019, %v2020
      %v2022 = vrot.slane %v1425, 7
      %v2023 = vrot.slane %v1633, 7
      %v2024 = vsel %vm2018, %v2022, %v2023
      %v2025 = vrot.slane %v1426, 7
      %v2026 = vrot.slane %v1634, 7
      %v2027 = vsel %vm2018, %v2025, %v2026
      %v2028 = vrot.slane %v1427, 7
      %v2029 = vrot.slane %v1635, 7
      %v2030 = vsel %vm2018, %v2028, %v2029
      %v2031 = vrot.slane %v1428, 7
      %v2032 = vrot.slane %v1636, 7
      %v2033 = vsel %vm2018, %v2031, %v2032
      %v2034 = vrot.slane %v1429, 7
      %v2035 = vrot.slane %v1637, 7
      %v2036 = vsel %vm2018, %v2034, %v2035
      %v2037 = vrot.slane %v1430, 7
      %v2038 = vrot.slane %v1638, 7
      %v2039 = vsel %vm2018, %v2037, %v2038
      %v2040 = vrot.slane %v1431, 7
      %v2041 = vrot.slane %v1639, 7
      %v2042 = vsel %vm2018, %v2040, %v2041
      %v2043 = vrot.slane %v1432, 7
      %v2044 = vrot.slane %v1640, 7
      %v2045 = vsel %vm2018, %v2043, %v2044
      %v2046 = vrot.slane %v1433, 7
      %v2047 = vrot.slane %v1641, 7
      %v2048 = vsel %vm2018, %v2046, %v2047
      %v2049 = vrot.slane %v1434, 7
      %v2050 = vrot.slane %v1642, 7
      %v2051 = vsel %vm2018, %v2049, %v2050
      %v2052 = vrot.slane %v1435, 7
      %v2053 = vrot.slane %v1643, 7
      %v2054 = vsel %vm2018, %v2052, %v2053
      %v2055 = vrot.slane %v1436, 7
      %v2056 = vrot.slane %v1644, 7
      %v2057 = vsel %vm2018, %v2055, %v2056
      %v2058 = vrot.slane %v1437, 7
      %v2059 = vrot.slane %v1645, 7
      %v2060 = vsel %vm2018, %v2058, %v2059
      %v2061 = vrot.slane %v1438, 7
      %v2062 = vrot.slane %v1646, 7
      %v2063 = vsel %vm2018, %v2061, %v2062
      %v2064 = vrot.slane %v1439, 7
      %v2065 = vrot.slane %v1647, 7
      %v2066 = vsel %vm2018, %v2064, %v2065
      %2067 = vrot.lane.b32.xlu0 %v2019, 24
      %v2068 = vpop.permute.xlu0 %2067
      %2069 = vrot.lane.b32.xlu0 %v2021, 24
      %v2070 = vpop.permute.xlu0 %2069
      %2071 = vrot.lane.b32.xlu0 %v2022, 24
      %v2072 = vpop.permute.xlu0 %2071
      %2073 = vrot.lane.b32.xlu0 %v2024, 24
      %v2074 = vpop.permute.xlu0 %2073
      %2075 = vrot.lane.b32.xlu0 %v2025, 24
      %v2076 = vpop.permute.xlu0 %2075
      %2077 = vrot.lane.b32.xlu0 %v2027, 24
      %v2078 = vpop.permute.xlu0 %2077
      %2079 = vrot.lane.b32.xlu0 %v2028, 24
      %v2080 = vpop.permute.xlu0 %2079
      %2081 = vrot.lane.b32.xlu0 %v2030, 24
      %v2082 = vpop.permute.xlu0 %2081
      %2083 = vrot.lane.b32.xlu0 %v2031, 24
      %v2084 = vpop.permute.xlu0 %2083
      %2085 = vrot.lane.b32.xlu0 %v2033, 24
      %v2086 = vpop.permute.xlu0 %2085
      %2087 = vrot.lane.b32.xlu0 %v2034, 24
      %v2088 = vpop.permute.xlu0 %2087
      %2089 = vrot.lane.b32.xlu0 %v2036, 24
      %v2090 = vpop.permute.xlu0 %2089
      %2091 = vrot.lane.b32.xlu0 %v2037, 24
      %v2092 = vpop.permute.xlu0 %2091
      %2093 = vrot.lane.b32.xlu0 %v2039, 24
      %v2094 = vpop.permute.xlu0 %2093
      %2095 = vrot.lane.b32.xlu0 %v2040, 24
      %v2096 = vpop.permute.xlu0 %2095
      %2097 = vrot.lane.b32.xlu0 %v2042, 24
      %v2098 = vpop.permute.xlu0 %2097
      %2099 = vrot.lane.b32.xlu0 %v2043, 24
      %v2100 = vpop.permute.xlu0 %2099
      %2101 = vrot.lane.b32.xlu0 %v2045, 24
      %v2102 = vpop.permute.xlu0 %2101
      %2103 = vrot.lane.b32.xlu0 %v2046, 24
      %v2104 = vpop.permute.xlu0 %2103
      %2105 = vrot.lane.b32.xlu0 %v2048, 24
      %v2106 = vpop.permute.xlu0 %2105
      %2107 = vrot.lane.b32.xlu0 %v2049, 24
      %v2108 = vpop.permute.xlu0 %2107
      %2109 = vrot.lane.b32.xlu0 %v2051, 24
      %v2110 = vpop.permute.xlu0 %2109
      %2111 = vrot.lane.b32.xlu0 %v2052, 24
      %v2112 = vpop.permute.xlu0 %2111
      %2113 = vrot.lane.b32.xlu0 %v2054, 24
      %v2114 = vpop.permute.xlu0 %2113
      %2115 = vrot.lane.b32.xlu0 %v2055, 24
      %v2116 = vpop.permute.xlu0 %2115
      %2117 = vrot.lane.b32.xlu0 %v2057, 24
      %v2118 = vpop.permute.xlu0 %2117
      %2119 = vrot.lane.b32.xlu0 %v2058, 24
      %v2120 = vpop.permute.xlu0 %2119
      %2121 = vrot.lane.b32.xlu0 %v2060, 24
      %v2122 = vpop.permute.xlu0 %2121
      %2123 = vrot.lane.b32.xlu0 %v2061, 24
      %v2124 = vpop.permute.xlu0 %2123
      %2125 = vrot.lane.b32.xlu0 %v2063, 24
      %v2126 = vpop.permute.xlu0 %2125
      %2127 = vrot.lane.b32.xlu0 %v2064, 24
      %v2128 = vpop.permute.xlu0 %2127
      %2129 = vrot.lane.b32.xlu0 %v2066, 24
      %v2130 = vpop.permute.xlu0 %2129
      %v2179 = vunpack.c.l.b16 %v474
      %v2180 = vunpack.c.l.b16 %v475
      %v2181 = vunpack.c.l.b16 %v476
      %v2182 = vunpack.c.l.b16 %v478
      %v2183 = vunpack.c.l.b16 %v479
      %v2184 = vunpack.c.l.b16 %v480
      %v2185 = vunpack.c.l.b16 %v482
      %v2186 = vunpack.c.l.b16 %v483
      %v2187 = vunpack.c.l.b16 %v484
      %v2188 = vunpack.c.l.b16 %v486
      %v2189 = vunpack.c.l.b16 %v487
      %v2190 = vunpack.c.l.b16 %v488
      %v2191 = vunpack.c.l.b16 %v490
      %v2192 = vunpack.c.l.b16 %v491
      %v2193 = vunpack.c.l.b16 %v492
      %v2194 = vunpack.c.l.b16 %v494
      %v2195 = vunpack.c.l.b16 %v495
      %v2196 = vunpack.c.l.b16 %v496
      %v2197 = vunpack.c.l.b16 %v498
      %v2198 = vunpack.c.l.b16 %v499
      %v2199 = vunpack.c.l.b16 %v500
      %v2200 = vunpack.c.l.b16 %v502
      %v2201 = vunpack.c.l.b16 %v503
      %v2202 = vunpack.c.l.b16 %v504
      %v2203 = vunpack.c.l.b16 %v506
      %v2204 = vunpack.c.l.b16 %v507
      %v2205 = vunpack.c.l.b16 %v508
      %v2206 = vunpack.c.l.b16 %v510
      %v2207 = vunpack.c.l.b16 %v511
      %v2208 = vunpack.c.l.b16 %v512
      %v2209 = vunpack.c.l.b16 %v514
      %v2210 = vunpack.c.l.b16 %v515
      %v2211 = vunpack.c.l.b16 %v516
      %v2212 = vunpack.c.l.b16 %v518
      %v2213 = vunpack.c.l.b16 %v519
      %v2214 = vunpack.c.l.b16 %v520
      %v2215 = vunpack.c.l.b16 %v522
      %v2216 = vunpack.c.l.b16 %v523
      %v2217 = vunpack.c.l.b16 %v524
      %v2218 = vunpack.c.l.b16 %v526
      %v2219 = vunpack.c.l.b16 %v527
      %v2220 = vunpack.c.l.b16 %v528
      %v2221 = vunpack.c.l.b16 %v530
      %v2222 = vunpack.c.l.b16 %v531
      %v2223 = vunpack.c.l.b16 %v532
      %v2224 = vunpack.c.l.b16 %v534
      %v2225 = vunpack.c.l.b16 %v535
      %v2226 = vunpack.c.l.b16 %v536
      %v2227 = vpack.c.b16 %v2180, %v2179
      %v2228 = vpack.c.b16 %v2181, %v2181
      %v2229 = vpack.c.b16 %v2183, %v2182
      %v2230 = vpack.c.b16 %v2184, %v2184
      %v2231 = vpack.c.b16 %v2186, %v2185
      %v2232 = vpack.c.b16 %v2187, %v2187
      %v2233 = vpack.c.b16 %v2189, %v2188
      %v2234 = vpack.c.b16 %v2190, %v2190
      %v2235 = vpack.c.b16 %v2192, %v2191
      %v2236 = vpack.c.b16 %v2193, %v2193
      %v2237 = vpack.c.b16 %v2195, %v2194
      %v2238 = vpack.c.b16 %v2196, %v2196
      %v2239 = vpack.c.b16 %v2198, %v2197
      %v2240 = vpack.c.b16 %v2199, %v2199
      %v2241 = vpack.c.b16 %v2201, %v2200
      %v2242 = vpack.c.b16 %v2202, %v2202
      %v2243 = vpack.c.b16 %v2204, %v2203
      %v2244 = vpack.c.b16 %v2205, %v2205
      %v2245 = vpack.c.b16 %v2207, %v2206
      %v2246 = vpack.c.b16 %v2208, %v2208
      %v2247 = vpack.c.b16 %v2210, %v2209
      %v2248 = vpack.c.b16 %v2211, %v2211
      %v2249 = vpack.c.b16 %v2213, %v2212
      %v2250 = vpack.c.b16 %v2214, %v2214
      %v2251 = vpack.c.b16 %v2216, %v2215
      %v2252 = vpack.c.b16 %v2217, %v2217
      %v2253 = vpack.c.b16 %v2219, %v2218
      %v2254 = vpack.c.b16 %v2220, %v2220
      %v2255 = vpack.c.b16 %v2222, %v2221
      %v2256 = vpack.c.b16 %v2223, %v2223
      %v2257 = vpack.c.b16 %v2225, %v2224
      %v2258 = vpack.c.b16 %v2226, %v2226
      %2259 = vrot.lane.b32.xlu0 %v2227, 28
      %v2260 = vpop.permute.xlu0 %2259
      %2261 = vrot.lane.b32.xlu0 %v2228, 28
      %v2262 = vpop.permute.xlu0 %2261
      %2263 = vrot.lane.b32.xlu0 %v2229, 28
      %v2264 = vpop.permute.xlu0 %2263
      %2265 = vrot.lane.b32.xlu0 %v2230, 28
      %v2266 = vpop.permute.xlu0 %2265
      %2267 = vrot.lane.b32.xlu0 %v2231, 28
      %v2268 = vpop.permute.xlu0 %2267
      %2269 = vrot.lane.b32.xlu0 %v2232, 28
      %v2270 = vpop.permute.xlu0 %2269
      %2271 = vrot.lane.b32.xlu0 %v2233, 28
      %v2272 = vpop.permute.xlu0 %2271
      %2273 = vrot.lane.b32.xlu0 %v2234, 28
      %v2274 = vpop.permute.xlu0 %2273
      %2275 = vrot.lane.b32.xlu0 %v2235, 28
      %v2276 = vpop.permute.xlu0 %2275
      %2277 = vrot.lane.b32.xlu0 %v2236, 28
      %v2278 = vpop.permute.xlu0 %2277
      %2279 = vrot.lane.b32.xlu0 %v2237, 28
      %v2280 = vpop.permute.xlu0 %2279
      %2281 = vrot.lane.b32.xlu0 %v2238, 28
      %v2282 = vpop.permute.xlu0 %2281
      %2283 = vrot.lane.b32.xlu0 %v2239, 28
      %v2284 = vpop.permute.xlu0 %2283
      %2285 = vrot.lane.b32.xlu0 %v2240, 28
      %v2286 = vpop.permute.xlu0 %2285
      %2287 = vrot.lane.b32.xlu0 %v2241, 28
      %v2288 = vpop.permute.xlu0 %2287
      %2289 = vrot.lane.b32.xlu0 %v2242, 28
      %v2290 = vpop.permute.xlu0 %2289
      %2291 = vrot.lane.b32.xlu0 %v2243, 28
      %v2292 = vpop.permute.xlu0 %2291
      %2293 = vrot.lane.b32.xlu0 %v2244, 28
      %v2294 = vpop.permute.xlu0 %2293
      %2295 = vrot.lane.b32.xlu0 %v2245, 28
      %v2296 = vpop.permute.xlu0 %2295
      %2297 = vrot.lane.b32.xlu0 %v2246, 28
      %v2298 = vpop.permute.xlu0 %2297
      %2299 = vrot.lane.b32.xlu0 %v2247, 28
      %v2300 = vpop.permute.xlu0 %2299
      %2301 = vrot.lane.b32.xlu0 %v2248, 28
      %v2302 = vpop.permute.xlu0 %2301
      %2303 = vrot.lane.b32.xlu0 %v2249, 28
      %v2304 = vpop.permute.xlu0 %2303
      %2305 = vrot.lane.b32.xlu0 %v2250, 28
      %v2306 = vpop.permute.xlu0 %2305
      %2307 = vrot.lane.b32.xlu0 %v2251, 28
      %v2308 = vpop.permute.xlu0 %2307
      %2309 = vrot.lane.b32.xlu0 %v2252, 28
      %v2310 = vpop.permute.xlu0 %2309
      %2311 = vrot.lane.b32.xlu0 %v2253, 28
      %v2312 = vpop.permute.xlu0 %2311
      %2313 = vrot.lane.b32.xlu0 %v2254, 28
      %v2314 = vpop.permute.xlu0 %2313
      %2315 = vrot.lane.b32.xlu0 %v2255, 28
      %v2316 = vpop.permute.xlu0 %2315
      %2317 = vrot.lane.b32.xlu0 %v2256, 28
      %v2318 = vpop.permute.xlu0 %2317
      %2319 = vrot.lane.b32.xlu0 %v2257, 28
      %v2320 = vpop.permute.xlu0 %2319
      %2321 = vrot.lane.b32.xlu0 %v2258, 28
      %v2322 = vpop.permute.xlu0 %2321
      %v2324 = vshrl.u32 %v2227, 16
      %v2326 = vshll.u32 %v2227, 16
      %v2328 = vrot.slane %v2326, 1
      %v2329 = vor.u32 %v2324, %v2328
      %v2331 = vshll.u32 %v2228, 16
      %v2333 = vrot.slane %v2331, 1
      %v2334 = vsel %vm1006, %v2329, %v2333
      %v2335 = vshrl.u32 %v2228, 16
      %v2337 = vor.u32 %v2335, %v2333
      %v2339 = vshrl.u32 %v2229, 16
      %v2341 = vshll.u32 %v2229, 16
      %v2343 = vrot.slane %v2341, 1
      %v2344 = vor.u32 %v2339, %v2343
      %v2346 = vshll.u32 %v2230, 16
      %v2348 = vrot.slane %v2346, 1
      %v2349 = vsel %vm1006, %v2344, %v2348
      %v2350 = vshrl.u32 %v2230, 16
      %v2352 = vor.u32 %v2350, %v2348
      %v2354 = vshrl.u32 %v2231, 16
      %v2356 = vshll.u32 %v2231, 16
      %v2358 = vrot.slane %v2356, 1
      %v2359 = vor.u32 %v2354, %v2358
      %v2361 = vshll.u32 %v2232, 16
      %v2363 = vrot.slane %v2361, 1
      %v2364 = vsel %vm1006, %v2359, %v2363
      %v2365 = vshrl.u32 %v2232, 16
      %v2367 = vor.u32 %v2365, %v2363
      %v2369 = vshrl.u32 %v2233, 16
      %v2371 = vshll.u32 %v2233, 16
      %v2373 = vrot.slane %v2371, 1
      %v2374 = vor.u32 %v2369, %v2373
      %v2376 = vshll.u32 %v2234, 16
      %v2378 = vrot.slane %v2376, 1
      %v2379 = vsel %vm1006, %v2374, %v2378
      %v2380 = vshrl.u32 %v2234, 16
      %v2382 = vor.u32 %v2380, %v2378
      %v2384 = vshrl.u32 %v2235, 16
      %v2386 = vshll.u32 %v2235, 16
      %v2388 = vrot.slane %v2386, 1
      %v2389 = vor.u32 %v2384, %v2388
      %v2391 = vshll.u32 %v2236, 16
      %v2393 = vrot.slane %v2391, 1
      %v2394 = vsel %vm1006, %v2389, %v2393
      %v2395 = vshrl.u32 %v2236, 16
      %v2397 = vor.u32 %v2395, %v2393
      %v2399 = vshrl.u32 %v2237, 16
      %v2401 = vshll.u32 %v2237, 16
      %v2403 = vrot.slane %v2401, 1
      %v2404 = vor.u32 %v2399, %v2403
      %v2406 = vshll.u32 %v2238, 16
      %v2408 = vrot.slane %v2406, 1
      %v2409 = vsel %vm1006, %v2404, %v2408
      %v2410 = vshrl.u32 %v2238, 16
      %v2412 = vor.u32 %v2410, %v2408
      %v2414 = vshrl.u32 %v2239, 16
      %v2416 = vshll.u32 %v2239, 16
      %v2418 = vrot.slane %v2416, 1
      %v2419 = vor.u32 %v2414, %v2418
      %v2421 = vshll.u32 %v2240, 16
      %v2423 = vrot.slane %v2421, 1
      %v2424 = vsel %vm1006, %v2419, %v2423
      %v2425 = vshrl.u32 %v2240, 16
      %v2427 = vor.u32 %v2425, %v2423
      %v2429 = vshrl.u32 %v2241, 16
      %v2431 = vshll.u32 %v2241, 16
      %v2433 = vrot.slane %v2431, 1
      %v2434 = vor.u32 %v2429, %v2433
      %v2436 = vshll.u32 %v2242, 16
      %v2438 = vrot.slane %v2436, 1
      %v2439 = vsel %vm1006, %v2434, %v2438
      %v2440 = vshrl.u32 %v2242, 16
      %v2442 = vor.u32 %v2440, %v2438
      %v2444 = vshrl.u32 %v2243, 16
      %v2446 = vshll.u32 %v2243, 16
      %v2448 = vrot.slane %v2446, 1
      %v2449 = vor.u32 %v2444, %v2448
      %v2451 = vshll.u32 %v2244, 16
      %v2453 = vrot.slane %v2451, 1
      %v2454 = vsel %vm1006, %v2449, %v2453
      %v2455 = vshrl.u32 %v2244, 16
      %v2457 = vor.u32 %v2455, %v2453
      %v2459 = vshrl.u32 %v2245, 16
      %v2461 = vshll.u32 %v2245, 16
      %v2463 = vrot.slane %v2461, 1
      %v2464 = vor.u32 %v2459, %v2463
      %v2466 = vshll.u32 %v2246, 16
      %v2468 = vrot.slane %v2466, 1
      %v2469 = vsel %vm1006, %v2464, %v2468
      %v2470 = vshrl.u32 %v2246, 16
      %v2472 = vor.u32 %v2470, %v2468
      %v2474 = vshrl.u32 %v2247, 16
      %v2476 = vshll.u32 %v2247, 16
      %v2478 = vrot.slane %v2476, 1
      %v2479 = vor.u32 %v2474, %v2478
      %v2481 = vshll.u32 %v2248, 16
      %v2483 = vrot.slane %v2481, 1
      %v2484 = vsel %vm1006, %v2479, %v2483
      %v2485 = vshrl.u32 %v2248, 16
      %v2487 = vor.u32 %v2485, %v2483
      %v2489 = vshrl.u32 %v2249, 16
      %v2491 = vshll.u32 %v2249, 16
      %v2493 = vrot.slane %v2491, 1
      %v2494 = vor.u32 %v2489, %v2493
      %v2496 = vshll.u32 %v2250, 16
      %v2498 = vrot.slane %v2496, 1
      %v2499 = vsel %vm1006, %v2494, %v2498
      %v2500 = vshrl.u32 %v2250, 16
      %v2502 = vor.u32 %v2500, %v2498
      %v2504 = vshrl.u32 %v2251, 16
      %v2506 = vshll.u32 %v2251, 16
      %v2508 = vrot.slane %v2506, 1
      %v2509 = vor.u32 %v2504, %v2508
      %v2511 = vshll.u32 %v2252, 16
      %v2513 = vrot.slane %v2511, 1
      %v2514 = vsel %vm1006, %v2509, %v2513
      %v2515 = vshrl.u32 %v2252, 16
      %v2517 = vor.u32 %v2515, %v2513
      %v2519 = vshrl.u32 %v2253, 16
      %v2521 = vshll.u32 %v2253, 16
      %v2523 = vrot.slane %v2521, 1
      %v2524 = vor.u32 %v2519, %v2523
      %v2526 = vshll.u32 %v2254, 16
      %v2528 = vrot.slane %v2526, 1
      %v2529 = vsel %vm1006, %v2524, %v2528
      %v2530 = vshrl.u32 %v2254, 16
      %v2532 = vor.u32 %v2530, %v2528
      %v2534 = vshrl.u32 %v2255, 16
      %v2536 = vshll.u32 %v2255, 16
      %v2538 = vrot.slane %v2536, 1
      %v2539 = vor.u32 %v2534, %v2538
      %v2541 = vshll.u32 %v2256, 16
      %v2543 = vrot.slane %v2541, 1
      %v2544 = vsel %vm1006, %v2539, %v2543
      %v2545 = vshrl.u32 %v2256, 16
      %v2547 = vor.u32 %v2545, %v2543
      %v2549 = vshrl.u32 %v2257, 16
      %v2551 = vshll.u32 %v2257, 16
      %v2553 = vrot.slane %v2551, 1
      %v2554 = vor.u32 %v2549, %v2553
      %v2556 = vshll.u32 %v2258, 16
      %v2558 = vrot.slane %v2556, 1
      %v2559 = vsel %vm1006, %v2554, %v2558
      %v2560 = vshrl.u32 %v2258, 16
      %v2562 = vor.u32 %v2560, %v2558
      %2563 = vrot.lane.b32.xlu0 %v2334, 32
      %v2564 = vpop.permute.xlu0 %2563
      %2565 = vrot.lane.b32.xlu0 %v2337, 32
      %v2566 = vpop.permute.xlu0 %2565
      %2567 = vrot.lane.b32.xlu0 %v2349, 32
      %v2568 = vpop.permute.xlu0 %2567
      %2569 = vrot.lane.b32.xlu0 %v2352, 32
      %v2570 = vpop.permute.xlu0 %2569
      %2571 = vrot.lane.b32.xlu0 %v2364, 32
      %v2572 = vpop.permute.xlu0 %2571
      %2573 = vrot.lane.b32.xlu0 %v2367, 32
      %v2574 = vpop.permute.xlu0 %2573
      %2575 = vrot.lane.b32.xlu0 %v2379, 32
      %v2576 = vpop.permute.xlu0 %2575
      %2577 = vrot.lane.b32.xlu0 %v2382, 32
      %v2578 = vpop.permute.xlu0 %2577
      %2579 = vrot.lane.b32.xlu0 %v2394, 32
      %v2580 = vpop.permute.xlu0 %2579
      %2581 = vrot.lane.b32.xlu0 %v2397, 32
      %v2582 = vpop.permute.xlu0 %2581
      %2583 = vrot.lane.b32.xlu0 %v2409, 32
      %v2584 = vpop.permute.xlu0 %2583
      %2585 = vrot.lane.b32.xlu0 %v2412, 32
      %v2586 = vpop.permute.xlu0 %2585
      %2587 = vrot.lane.b32.xlu0 %v2424, 32
      %v2588 = vpop.permute.xlu0 %2587
      %2589 = vrot.lane.b32.xlu0 %v2427, 32
      %v2590 = vpop.permute.xlu0 %2589
      %2591 = vrot.lane.b32.xlu0 %v2439, 32
      %v2592 = vpop.permute.xlu0 %2591
      %2593 = vrot.lane.b32.xlu0 %v2442, 32
      %v2594 = vpop.permute.xlu0 %2593
      %2595 = vrot.lane.b32.xlu0 %v2454, 32
      %v2596 = vpop.permute.xlu0 %2595
      %2597 = vrot.lane.b32.xlu0 %v2457, 32
      %v2598 = vpop.permute.xlu0 %2597
      %2599 = vrot.lane.b32.xlu0 %v2469, 32
      %v2600 = vpop.permute.xlu0 %2599
      %2601 = vrot.lane.b32.xlu0 %v2472, 32
      %v2602 = vpop.permute.xlu0 %2601
      %2603 = vrot.lane.b32.xlu0 %v2484, 32
      %v2604 = vpop.permute.xlu0 %2603
      %2605 = vrot.lane.b32.xlu0 %v2487, 32
      %v2606 = vpop.permute.xlu0 %2605
      %2607 = vrot.lane.b32.xlu0 %v2499, 32
      %v2608 = vpop.permute.xlu0 %2607
      %2609 = vrot.lane.b32.xlu0 %v2502, 32
      %v2610 = vpop.permute.xlu0 %2609
      %2611 = vrot.lane.b32.xlu0 %v2514, 32
      %v2612 = vpop.permute.xlu0 %2611
      %2613 = vrot.lane.b32.xlu0 %v2517, 32
      %v2614 = vpop.permute.xlu0 %2613
      %2615 = vrot.lane.b32.xlu0 %v2529, 32
      %v2616 = vpop.permute.xlu0 %2615
      %2617 = vrot.lane.b32.xlu0 %v2532, 32
      %v2618 = vpop.permute.xlu0 %2617
      %2619 = vrot.lane.b32.xlu0 %v2544, 32
      %v2620 = vpop.permute.xlu0 %2619
      %2621 = vrot.lane.b32.xlu0 %v2547, 32
      %v2622 = vpop.permute.xlu0 %2621
      %2623 = vrot.lane.b32.xlu0 %v2559, 32
      %v2624 = vpop.permute.xlu0 %2623
      %2625 = vrot.lane.b32.xlu0 %v2562, 32
      %v2626 = vpop.permute.xlu0 %2625
      %v2627 = vrot.slane %v2227, 1
      %v2628 = vrot.slane %v2228, 1
      %v2629 = vsel %vm1311, %v2627, %v2628
      %v2630 = vrot.slane %v2229, 1
      %v2631 = vrot.slane %v2230, 1
      %v2632 = vsel %vm1311, %v2630, %v2631
      %v2633 = vrot.slane %v2231, 1
      %v2634 = vrot.slane %v2232, 1
      %v2635 = vsel %vm1311, %v2633, %v2634
      %v2636 = vrot.slane %v2233, 1
      %v2637 = vrot.slane %v2234, 1
      %v2638 = vsel %vm1311, %v2636, %v2637
      %v2639 = vrot.slane %v2235, 1
      %v2640 = vrot.slane %v2236, 1
      %v2641 = vsel %vm1311, %v2639, %v2640
      %v2642 = vrot.slane %v2237, 1
      %v2643 = vrot.slane %v2238, 1
      %v2644 = vsel %vm1311, %v2642, %v2643
      %v2645 = vrot.slane %v2239, 1
      %v2646 = vrot.slane %v2240, 1
      %v2647 = vsel %vm1311, %v2645, %v2646
      %v2648 = vrot.slane %v2241, 1
      %v2649 = vrot.slane %v2242, 1
      %v2650 = vsel %vm1311, %v2648, %v2649
      %v2651 = vrot.slane %v2243, 1
      %v2652 = vrot.slane %v2244, 1
      %v2653 = vsel %vm1311, %v2651, %v2652
      %v2654 = vrot.slane %v2245, 1
      %v2655 = vrot.slane %v2246, 1
      %v2656 = vsel %vm1311, %v2654, %v2655
      %v2657 = vrot.slane %v2247, 1
      %v2658 = vrot.slane %v2248, 1
      %v2659 = vsel %vm1311, %v2657, %v2658
      %v2660 = vrot.slane %v2249, 1
      %v2661 = vrot.slane %v2250, 1
      %v2662 = vsel %vm1311, %v2660, %v2661
      %v2663 = vrot.slane %v2251, 1
      %v2664 = vrot.slane %v2252, 1
      %v2665 = vsel %vm1311, %v2663, %v2664
      %v2666 = vrot.slane %v2253, 1
      %v2667 = vrot.slane %v2254, 1
      %v2668 = vsel %vm1311, %v2666, %v2667
      %v2669 = vrot.slane %v2255, 1
      %v2670 = vrot.slane %v2256, 1
      %v2671 = vsel %vm1311, %v2669, %v2670
      %v2672 = vrot.slane %v2257, 1
      %v2673 = vrot.slane %v2258, 1
      %v2674 = vsel %vm1311, %v2672, %v2673
      %2675 = vrot.lane.b32.xlu0 %v2629, 36
      %v2676 = vpop.permute.xlu0 %2675
      %2677 = vrot.lane.b32.xlu0 %v2628, 36
      %v2678 = vpop.permute.xlu0 %2677
      %2679 = vrot.lane.b32.xlu0 %v2632, 36
      %v2680 = vpop.permute.xlu0 %2679
      %2681 = vrot.lane.b32.xlu0 %v2631, 36
      %v2682 = vpop.permute.xlu0 %2681
      %2683 = vrot.lane.b32.xlu0 %v2635, 36
      %v2684 = vpop.permute.xlu0 %2683
      %2685 = vrot.lane.b32.xlu0 %v2634, 36
      %v2686 = vpop.permute.xlu0 %2685
      %2687 = vrot.lane.b32.xlu0 %v2638, 36
      %v2688 = vpop.permute.xlu0 %2687
      %2689 = vrot.lane.b32.xlu0 %v2637, 36
      %v2690 = vpop.permute.xlu0 %2689
      %2691 = vrot.lane.b32.xlu0 %v2641, 36
      %v2692 = vpop.permute.xlu0 %2691
      %2693 = vrot.lane.b32.xlu0 %v2640, 36
      %v2694 = vpop.permute.xlu0 %2693
      %2695 = vrot.lane.b32.xlu0 %v2644, 36
      %v2696 = vpop.permute.xlu0 %2695
      %2697 = vrot.lane.b32.xlu0 %v2643, 36
      %v2698 = vpop.permute.xlu0 %2697
      %2699 = vrot.lane.b32.xlu0 %v2647, 36
      %v2700 = vpop.permute.xlu0 %2699
      %2701 = vrot.lane.b32.xlu0 %v2646, 36
      %v2702 = vpop.permute.xlu0 %2701
      %2703 = vrot.lane.b32.xlu0 %v2650, 36
      %v2704 = vpop.permute.xlu0 %2703
      %2705 = vrot.lane.b32.xlu0 %v2649, 36
      %v2706 = vpop.permute.xlu0 %2705
      %2707 = vrot.lane.b32.xlu0 %v2653, 36
      %v2708 = vpop.permute.xlu0 %2707
      %2709 = vrot.lane.b32.xlu0 %v2652, 36
      %v2710 = vpop.permute.xlu0 %2709
      %2711 = vrot.lane.b32.xlu0 %v2656, 36
      %v2712 = vpop.permute.xlu0 %2711
      %2713 = vrot.lane.b32.xlu0 %v2655, 36
      %v2714 = vpop.permute.xlu0 %2713
      %2715 = vrot.lane.b32.xlu0 %v2659, 36
      %v2716 = vpop.permute.xlu0 %2715
      %2717 = vrot.lane.b32.xlu0 %v2658, 36
      %v2718 = vpop.permute.xlu0 %2717
      %2719 = vrot.lane.b32.xlu0 %v2662, 36
      %v2720 = vpop.permute.xlu0 %2719
      %2721 = vrot.lane.b32.xlu0 %v2661, 36
      %v2722 = vpop.permute.xlu0 %2721
      %2723 = vrot.lane.b32.xlu0 %v2665, 36
      %v2724 = vpop.permute.xlu0 %2723
      %2725 = vrot.lane.b32.xlu0 %v2664, 36
      %v2726 = vpop.permute.xlu0 %2725
      %2727 = vrot.lane.b32.xlu0 %v2668, 36
      %v2728 = vpop.permute.xlu0 %2727
      %2729 = vrot.lane.b32.xlu0 %v2667, 36
      %v2730 = vpop.permute.xlu0 %2729
      %2731 = vrot.lane.b32.xlu0 %v2671, 36
      %v2732 = vpop.permute.xlu0 %2731
      %2733 = vrot.lane.b32.xlu0 %v2670, 36
      %v2734 = vpop.permute.xlu0 %2733
      %2735 = vrot.lane.b32.xlu0 %v2674, 36
      %v2736 = vpop.permute.xlu0 %2735
      %2737 = vrot.lane.b32.xlu0 %v2673, 36
      %v2738 = vpop.permute.xlu0 %2737
      %v2739 = vpack.c.b16 %v2181, %v2180
      %v2740 = vpack.c.b16 %v2184, %v2183
      %v2741 = vpack.c.b16 %v2187, %v2186
      %v2742 = vpack.c.b16 %v2190, %v2189
      %v2743 = vpack.c.b16 %v2193, %v2192
      %v2744 = vpack.c.b16 %v2196, %v2195
      %v2745 = vpack.c.b16 %v2199, %v2198
      %v2746 = vpack.c.b16 %v2202, %v2201
      %v2747 = vpack.c.b16 %v2205, %v2204
      %v2748 = vpack.c.b16 %v2208, %v2207
      %v2749 = vpack.c.b16 %v2211, %v2210
      %v2750 = vpack.c.b16 %v2214, %v2213
      %v2751 = vpack.c.b16 %v2217, %v2216
      %v2752 = vpack.c.b16 %v2220, %v2219
      %v2753 = vpack.c.b16 %v2223, %v2222
      %v2754 = vpack.c.b16 %v2226, %v2225
      %v2756 = vshrl.u32 %v2739, 16
      %v2758 = vrot.slane %v2756, 5
      %v2759 = vshll.u32 %v2739, 16
      %v2761 = vrot.slane %v2759, 6
      %v2762 = vor.u32 %v2758, %v2761
      %v2764 = vshrl.u32 %v2740, 16
      %v2766 = vrot.slane %v2764, 5
      %v2767 = vshll.u32 %v2740, 16
      %v2769 = vrot.slane %v2767, 6
      %v2770 = vor.u32 %v2766, %v2769
      %v2772 = vshrl.u32 %v2741, 16
      %v2774 = vrot.slane %v2772, 5
      %v2775 = vshll.u32 %v2741, 16
      %v2777 = vrot.slane %v2775, 6
      %v2778 = vor.u32 %v2774, %v2777
      %v2780 = vshrl.u32 %v2742, 16
      %v2782 = vrot.slane %v2780, 5
      %v2783 = vshll.u32 %v2742, 16
      %v2785 = vrot.slane %v2783, 6
      %v2786 = vor.u32 %v2782, %v2785
      %v2788 = vshrl.u32 %v2743, 16
      %v2790 = vrot.slane %v2788, 5
      %v2791 = vshll.u32 %v2743, 16
      %v2793 = vrot.slane %v2791, 6
      %v2794 = vor.u32 %v2790, %v2793
      %v2796 = vshrl.u32 %v2744, 16
      %v2798 = vrot.slane %v2796, 5
      %v2799 = vshll.u32 %v2744, 16
      %v2801 = vrot.slane %v2799, 6
      %v2802 = vor.u32 %v2798, %v2801
      %v2804 = vshrl.u32 %v2745, 16
      %v2806 = vrot.slane %v2804, 5
      %v2807 = vshll.u32 %v2745, 16
      %v2809 = vrot.slane %v2807, 6
      %v2810 = vor.u32 %v2806, %v2809
      %v2812 = vshrl.u32 %v2746, 16
      %v2814 = vrot.slane %v2812, 5
      %v2815 = vshll.u32 %v2746, 16
      %v2817 = vrot.slane %v2815, 6
      %v2818 = vor.u32 %v2814, %v2817
      %v2820 = vshrl.u32 %v2747, 16
      %v2822 = vrot.slane %v2820, 5
      %v2823 = vshll.u32 %v2747, 16
      %v2825 = vrot.slane %v2823, 6
      %v2826 = vor.u32 %v2822, %v2825
      %v2828 = vshrl.u32 %v2748, 16
      %v2830 = vrot.slane %v2828, 5
      %v2831 = vshll.u32 %v2748, 16
      %v2833 = vrot.slane %v2831, 6
      %v2834 = vor.u32 %v2830, %v2833
      %v2836 = vshrl.u32 %v2749, 16
      %v2838 = vrot.slane %v2836, 5
      %v2839 = vshll.u32 %v2749, 16
      %v2841 = vrot.slane %v2839, 6
      %v2842 = vor.u32 %v2838, %v2841
      %v2844 = vshrl.u32 %v2750, 16
      %v2846 = vrot.slane %v2844, 5
      %v2847 = vshll.u32 %v2750, 16
      %v2849 = vrot.slane %v2847, 6
      %v2850 = vor.u32 %v2846, %v2849
      %v2852 = vshrl.u32 %v2751, 16
      %v2854 = vrot.slane %v2852, 5
      %v2855 = vshll.u32 %v2751, 16
      %v2857 = vrot.slane %v2855, 6
      %v2858 = vor.u32 %v2854, %v2857
      %v2860 = vshrl.u32 %v2752, 16
      %v2862 = vrot.slane %v2860, 5
      %v2863 = vshll.u32 %v2752, 16
      %v2865 = vrot.slane %v2863, 6
      %v2866 = vor.u32 %v2862, %v2865
      %v2868 = vshrl.u32 %v2753, 16
      %v2870 = vrot.slane %v2868, 5
      %v2871 = vshll.u32 %v2753, 16
      %v2873 = vrot.slane %v2871, 6
      %v2874 = vor.u32 %v2870, %v2873
      %v2876 = vshrl.u32 %v2754, 16
      %v2878 = vrot.slane %v2876, 5
      %v2879 = vshll.u32 %v2754, 16
      %v2881 = vrot.slane %v2879, 6
      %v2882 = vor.u32 %v2878, %v2881
      %2883 = vrot.lane.b32.xlu0 %v2762, 40
      %v2884 = vpop.permute.xlu0 %2883
      %2885 = vrot.lane.b32.xlu0 %v2770, 40
      %v2886 = vpop.permute.xlu0 %2885
      %2887 = vrot.lane.b32.xlu0 %v2778, 40
      %v2888 = vpop.permute.xlu0 %2887
      %2889 = vrot.lane.b32.xlu0 %v2786, 40
      %v2890 = vpop.permute.xlu0 %2889
      %2891 = vrot.lane.b32.xlu0 %v2794, 40
      %v2892 = vpop.permute.xlu0 %2891
      %2893 = vrot.lane.b32.xlu0 %v2802, 40
      %v2894 = vpop.permute.xlu0 %2893
      %2895 = vrot.lane.b32.xlu0 %v2810, 40
      %v2896 = vpop.permute.xlu0 %2895
      %2897 = vrot.lane.b32.xlu0 %v2818, 40
      %v2898 = vpop.permute.xlu0 %2897
      %2899 = vrot.lane.b32.xlu0 %v2826, 40
      %v2900 = vpop.permute.xlu0 %2899
      %2901 = vrot.lane.b32.xlu0 %v2834, 40
      %v2902 = vpop.permute.xlu0 %2901
      %2903 = vrot.lane.b32.xlu0 %v2842, 40
      %v2904 = vpop.permute.xlu0 %2903
      %2905 = vrot.lane.b32.xlu0 %v2850, 40
      %v2906 = vpop.permute.xlu0 %2905
      %2907 = vrot.lane.b32.xlu0 %v2858, 40
      %v2908 = vpop.permute.xlu0 %2907
      %2909 = vrot.lane.b32.xlu0 %v2866, 40
      %v2910 = vpop.permute.xlu0 %2909
      %2911 = vrot.lane.b32.xlu0 %v2874, 40
      %v2912 = vpop.permute.xlu0 %2911
      %2913 = vrot.lane.b32.xlu0 %v2882, 40
      %v2914 = vpop.permute.xlu0 %2913
      %v2931 = vunpack.c.l.b16 %v477
      %v2932 = vunpack.c.l.b16 %v481
      %v2933 = vunpack.c.l.b16 %v485
      %v2934 = vunpack.c.l.b16 %v489
      %v2935 = vunpack.c.l.b16 %v493
      %v2936 = vunpack.c.l.b16 %v497
      %v2937 = vunpack.c.l.b16 %v501
      %v2938 = vunpack.c.l.b16 %v505
      %v2939 = vunpack.c.l.b16 %v509
      %v2940 = vunpack.c.l.b16 %v513
      %v2941 = vunpack.c.l.b16 %v517
      %v2942 = vunpack.c.l.b16 %v521
      %v2943 = vunpack.c.l.b16 %v525
      %v2944 = vunpack.c.l.b16 %v529
      %v2945 = vunpack.c.l.b16 %v533
      %v2946 = vunpack.c.l.b16 %v537
      %v2947 = vpack.c.b16 %v2931, %v2931
      %v2948 = vpack.c.b16 %v2932, %v2932
      %v2949 = vpack.c.b16 %v2933, %v2933
      %v2950 = vpack.c.b16 %v2934, %v2934
      %v2951 = vpack.c.b16 %v2935, %v2935
      %v2952 = vpack.c.b16 %v2936, %v2936
      %v2953 = vpack.c.b16 %v2937, %v2937
      %v2954 = vpack.c.b16 %v2938, %v2938
      %v2955 = vpack.c.b16 %v2939, %v2939
      %v2956 = vpack.c.b16 %v2940, %v2940
      %v2957 = vpack.c.b16 %v2941, %v2941
      %v2958 = vpack.c.b16 %v2942, %v2942
      %v2959 = vpack.c.b16 %v2943, %v2943
      %v2960 = vpack.c.b16 %v2944, %v2944
      %v2961 = vpack.c.b16 %v2945, %v2945
      %v2962 = vpack.c.b16 %v2946, %v2946
      %v2963 = vrot.slane %v2739, 6
      %v2964 = vrot.slane %v2947, 6
      %v2965 = vsel %vm1648, %v2963, %v2964
      %v2966 = vrot.slane %v2740, 6
      %v2967 = vrot.slane %v2948, 6
      %v2968 = vsel %vm1648, %v2966, %v2967
      %v2969 = vrot.slane %v2741, 6
      %v2970 = vrot.slane %v2949, 6
      %v2971 = vsel %vm1648, %v2969, %v2970
      %v2972 = vrot.slane %v2742, 6
      %v2973 = vrot.slane %v2950, 6
      %v2974 = vsel %vm1648, %v2972, %v2973
      %v2975 = vrot.slane %v2743, 6
      %v2976 = vrot.slane %v2951, 6
      %v2977 = vsel %vm1648, %v2975, %v2976
      %v2978 = vrot.slane %v2744, 6
      %v2979 = vrot.slane %v2952, 6
      %v2980 = vsel %vm1648, %v2978, %v2979
      %v2981 = vrot.slane %v2745, 6
      %v2982 = vrot.slane %v2953, 6
      %v2983 = vsel %vm1648, %v2981, %v2982
      %v2984 = vrot.slane %v2746, 6
      %v2985 = vrot.slane %v2954, 6
      %v2986 = vsel %vm1648, %v2984, %v2985
      %v2987 = vrot.slane %v2747, 6
      %v2988 = vrot.slane %v2955, 6
      %v2989 = vsel %vm1648, %v2987, %v2988
      %v2990 = vrot.slane %v2748, 6
      %v2991 = vrot.slane %v2956, 6
      %v2992 = vsel %vm1648, %v2990, %v2991
      %v2993 = vrot.slane %v2749, 6
      %v2994 = vrot.slane %v2957, 6
      %v2995 = vsel %vm1648, %v2993, %v2994
      %v2996 = vrot.slane %v2750, 6
      %v2997 = vrot.slane %v2958, 6
      %v2998 = vsel %vm1648, %v2996, %v2997
      %v2999 = vrot.slane %v2751, 6
      %v3000 = vrot.slane %v2959, 6
      %v3001 = vsel %vm1648, %v2999, %v3000
      %v3002 = vrot.slane %v2752, 6
      %v3003 = vrot.slane %v2960, 6
      %v3004 = vsel %vm1648, %v3002, %v3003
      %v3005 = vrot.slane %v2753, 6
      %v3006 = vrot.slane %v2961, 6
      %v3007 = vsel %vm1648, %v3005, %v3006
      %v3008 = vrot.slane %v2754, 6
      %v3009 = vrot.slane %v2962, 6
      %v3010 = vsel %vm1648, %v3008, %v3009
      %3011 = vrot.lane.b32.xlu0 %v2963, 44
      %v3012 = vpop.permute.xlu0 %3011
      %3013 = vrot.lane.b32.xlu0 %v2965, 44
      %v3014 = vpop.permute.xlu0 %3013
      %3015 = vrot.lane.b32.xlu0 %v2966, 44
      %v3016 = vpop.permute.xlu0 %3015
      %3017 = vrot.lane.b32.xlu0 %v2968, 44
      %v3018 = vpop.permute.xlu0 %3017
      %3019 = vrot.lane.b32.xlu0 %v2969, 44
      %v3020 = vpop.permute.xlu0 %3019
      %3021 = vrot.lane.b32.xlu0 %v2971, 44
      %v3022 = vpop.permute.xlu0 %3021
      %3023 = vrot.lane.b32.xlu0 %v2972, 44
      %v3024 = vpop.permute.xlu0 %3023
      %3025 = vrot.lane.b32.xlu0 %v2974, 44
      %v3026 = vpop.permute.xlu0 %3025
      %3027 = vrot.lane.b32.xlu0 %v2975, 44
      %v3028 = vpop.permute.xlu0 %3027
      %3029 = vrot.lane.b32.xlu0 %v2977, 44
      %v3030 = vpop.permute.xlu0 %3029
      %3031 = vrot.lane.b32.xlu0 %v2978, 44
      %v3032 = vpop.permute.xlu0 %3031
      %3033 = vrot.lane.b32.xlu0 %v2980, 44
      %v3034 = vpop.permute.xlu0 %3033
      %3035 = vrot.lane.b32.xlu0 %v2981, 44
      %v3036 = vpop.permute.xlu0 %3035
      %3037 = vrot.lane.b32.xlu0 %v2983, 44
      %v3038 = vpop.permute.xlu0 %3037
      %3039 = vrot.lane.b32.xlu0 %v2984, 44
      %v3040 = vpop.permute.xlu0 %3039
      %3041 = vrot.lane.b32.xlu0 %v2986, 44
      %v3042 = vpop.permute.xlu0 %3041
      %3043 = vrot.lane.b32.xlu0 %v2987, 44
      %v3044 = vpop.permute.xlu0 %3043
      %3045 = vrot.lane.b32.xlu0 %v2989, 44
      %v3046 = vpop.permute.xlu0 %3045
      %3047 = vrot.lane.b32.xlu0 %v2990, 44
      %v3048 = vpop.permute.xlu0 %3047
      %3049 = vrot.lane.b32.xlu0 %v2992, 44
      %v3050 = vpop.permute.xlu0 %3049
      %3051 = vrot.lane.b32.xlu0 %v2993, 44
      %v3052 = vpop.permute.xlu0 %3051
      %3053 = vrot.lane.b32.xlu0 %v2995, 44
      %v3054 = vpop.permute.xlu0 %3053
      %3055 = vrot.lane.b32.xlu0 %v2996, 44
      %v3056 = vpop.permute.xlu0 %3055
      %3057 = vrot.lane.b32.xlu0 %v2998, 44
      %v3058 = vpop.permute.xlu0 %3057
      %3059 = vrot.lane.b32.xlu0 %v2999, 44
      %v3060 = vpop.permute.xlu0 %3059
      %3061 = vrot.lane.b32.xlu0 %v3001, 44
      %v3062 = vpop.permute.xlu0 %3061
      %3063 = vrot.lane.b32.xlu0 %v3002, 44
      %v3064 = vpop.permute.xlu0 %3063
      %3065 = vrot.lane.b32.xlu0 %v3004, 44
      %v3066 = vpop.permute.xlu0 %3065
      %3067 = vrot.lane.b32.xlu0 %v3005, 44
      %v3068 = vpop.permute.xlu0 %3067
      %3069 = vrot.lane.b32.xlu0 %v3007, 44
      %v3070 = vpop.permute.xlu0 %3069
      %3071 = vrot.lane.b32.xlu0 %v3008, 44
      %v3072 = vpop.permute.xlu0 %3071
      %3073 = vrot.lane.b32.xlu0 %v3010, 44
      %v3074 = vpop.permute.xlu0 %3073
      %v3075 = vrot.slane %v2756, 6
      %v3076 = vrot.slane %v2759, 7
      %v3077 = vor.u32 %v3075, %v3076
      %v3079 = vshrl.u32 %v2947, 16
      %v3081 = vrot.slane %v3079, 6
      %v3082 = vshll.u32 %v2947, 16
      %v3084 = vrot.slane %v3082, 7
      %v3085 = vor.u32 %v3081, %v3084
      %v3086 = vsel %vm1761, %v3077, %v3085
      %v3087 = vrot.slane %v2764, 6
      %v3088 = vrot.slane %v2767, 7
      %v3089 = vor.u32 %v3087, %v3088
      %v3091 = vshrl.u32 %v2948, 16
      %v3093 = vrot.slane %v3091, 6
      %v3094 = vshll.u32 %v2948, 16
      %v3096 = vrot.slane %v3094, 7
      %v3097 = vor.u32 %v3093, %v3096
      %v3098 = vsel %vm1761, %v3089, %v3097
      %v3099 = vrot.slane %v2772, 6
      %v3100 = vrot.slane %v2775, 7
      %v3101 = vor.u32 %v3099, %v3100
      %v3103 = vshrl.u32 %v2949, 16
      %v3105 = vrot.slane %v3103, 6
      %v3106 = vshll.u32 %v2949, 16
      %v3108 = vrot.slane %v3106, 7
      %v3109 = vor.u32 %v3105, %v3108
      %v3110 = vsel %vm1761, %v3101, %v3109
      %v3111 = vrot.slane %v2780, 6
      %v3112 = vrot.slane %v2783, 7
      %v3113 = vor.u32 %v3111, %v3112
      %v3115 = vshrl.u32 %v2950, 16
      %v3117 = vrot.slane %v3115, 6
      %v3118 = vshll.u32 %v2950, 16
      %v3120 = vrot.slane %v3118, 7
      %v3121 = vor.u32 %v3117, %v3120
      %v3122 = vsel %vm1761, %v3113, %v3121
      %v3123 = vrot.slane %v2788, 6
      %v3124 = vrot.slane %v2791, 7
      %v3125 = vor.u32 %v3123, %v3124
      %v3127 = vshrl.u32 %v2951, 16
      %v3129 = vrot.slane %v3127, 6
      %v3130 = vshll.u32 %v2951, 16
      %v3132 = vrot.slane %v3130, 7
      %v3133 = vor.u32 %v3129, %v3132
      %v3134 = vsel %vm1761, %v3125, %v3133
      %v3135 = vrot.slane %v2796, 6
      %v3136 = vrot.slane %v2799, 7
      %v3137 = vor.u32 %v3135, %v3136
      %v3139 = vshrl.u32 %v2952, 16
      %v3141 = vrot.slane %v3139, 6
      %v3142 = vshll.u32 %v2952, 16
      %v3144 = vrot.slane %v3142, 7
      %v3145 = vor.u32 %v3141, %v3144
      %v3146 = vsel %vm1761, %v3137, %v3145
      %v3147 = vrot.slane %v2804, 6
      %v3148 = vrot.slane %v2807, 7
      %v3149 = vor.u32 %v3147, %v3148
      %v3151 = vshrl.u32 %v2953, 16
      %v3153 = vrot.slane %v3151, 6
      %v3154 = vshll.u32 %v2953, 16
      %v3156 = vrot.slane %v3154, 7
      %v3157 = vor.u32 %v3153, %v3156
      %v3158 = vsel %vm1761, %v3149, %v3157
      %v3159 = vrot.slane %v2812, 6
      %v3160 = vrot.slane %v2815, 7
      %v3161 = vor.u32 %v3159, %v3160
      %v3163 = vshrl.u32 %v2954, 16
      %v3165 = vrot.slane %v3163, 6
      %v3166 = vshll.u32 %v2954, 16
      %v3168 = vrot.slane %v3166, 7
      %v3169 = vor.u32 %v3165, %v3168
      %v3170 = vsel %vm1761, %v3161, %v3169
      %v3171 = vrot.slane %v2820, 6
      %v3172 = vrot.slane %v2823, 7
      %v3173 = vor.u32 %v3171, %v3172
      %v3175 = vshrl.u32 %v2955, 16
      %v3177 = vrot.slane %v3175, 6
      %v3178 = vshll.u32 %v2955, 16
      %v3180 = vrot.slane %v3178, 7
      %v3181 = vor.u32 %v3177, %v3180
      %v3182 = vsel %vm1761, %v3173, %v3181
      %v3183 = vrot.slane %v2828, 6
      %v3184 = vrot.slane %v2831, 7
      %v3185 = vor.u32 %v3183, %v3184
      %v3187 = vshrl.u32 %v2956, 16
      %v3189 = vrot.slane %v3187, 6
      %v3190 = vshll.u32 %v2956, 16
      %v3192 = vrot.slane %v3190, 7
      %v3193 = vor.u32 %v3189, %v3192
      %v3194 = vsel %vm1761, %v3185, %v3193
      %v3195 = vrot.slane %v2836, 6
      %v3196 = vrot.slane %v2839, 7
      %v3197 = vor.u32 %v3195, %v3196
      %v3199 = vshrl.u32 %v2957, 16
      %v3201 = vrot.slane %v3199, 6
      %v3202 = vshll.u32 %v2957, 16
      %v3204 = vrot.slane %v3202, 7
      %v3205 = vor.u32 %v3201, %v3204
      %v3206 = vsel %vm1761, %v3197, %v3205
      %v3207 = vrot.slane %v2844, 6
      %v3208 = vrot.slane %v2847, 7
      %v3209 = vor.u32 %v3207, %v3208
      %v3211 = vshrl.u32 %v2958, 16
      %v3213 = vrot.slane %v3211, 6
      %v3214 = vshll.u32 %v2958, 16
      %v3216 = vrot.slane %v3214, 7
      %v3217 = vor.u32 %v3213, %v3216
      %v3218 = vsel %vm1761, %v3209, %v3217
      %v3219 = vrot.slane %v2852, 6
      %v3220 = vrot.slane %v2855, 7
      %v3221 = vor.u32 %v3219, %v3220
      %v3223 = vshrl.u32 %v2959, 16
      %v3225 = vrot.slane %v3223, 6
      %v3226 = vshll.u32 %v2959, 16
      %v3228 = vrot.slane %v3226, 7
      %v3229 = vor.u32 %v3225, %v3228
      %v3230 = vsel %vm1761, %v3221, %v3229
      %v3231 = vrot.slane %v2860, 6
      %v3232 = vrot.slane %v2863, 7
      %v3233 = vor.u32 %v3231, %v3232
      %v3235 = vshrl.u32 %v2960, 16
      %v3237 = vrot.slane %v3235, 6
      %v3238 = vshll.u32 %v2960, 16
      %v3240 = vrot.slane %v3238, 7
      %v3241 = vor.u32 %v3237, %v3240
      %v3242 = vsel %vm1761, %v3233, %v3241
      %v3243 = vrot.slane %v2868, 6
      %v3244 = vrot.slane %v2871, 7
      %v3245 = vor.u32 %v3243, %v3244
      %v3247 = vshrl.u32 %v2961, 16
      %v3249 = vrot.slane %v3247, 6
      %v3250 = vshll.u32 %v2961, 16
      %v3252 = vrot.slane %v3250, 7
      %v3253 = vor.u32 %v3249, %v3252
      %v3254 = vsel %vm1761, %v3245, %v3253
      %v3255 = vrot.slane %v2876, 6
      %v3256 = vrot.slane %v2879, 7
      %v3257 = vor.u32 %v3255, %v3256
      %v3259 = vshrl.u32 %v2962, 16
      %v3261 = vrot.slane %v3259, 6
      %v3262 = vshll.u32 %v2962, 16
      %v3264 = vrot.slane %v3262, 7
      %v3265 = vor.u32 %v3261, %v3264
      %v3266 = vsel %vm1761, %v3257, %v3265
      %3267 = vrot.lane.b32.xlu0 %v3077, 48
      %v3268 = vpop.permute.xlu0 %3267
      %3269 = vrot.lane.b32.xlu0 %v3086, 48
      %v3270 = vpop.permute.xlu0 %3269
      %3271 = vrot.lane.b32.xlu0 %v3089, 48
      %v3272 = vpop.permute.xlu0 %3271
      %3273 = vrot.lane.b32.xlu0 %v3098, 48
      %v3274 = vpop.permute.xlu0 %3273
      %3275 = vrot.lane.b32.xlu0 %v3101, 48
      %v3276 = vpop.permute.xlu0 %3275
      %3277 = vrot.lane.b32.xlu0 %v3110, 48
      %v3278 = vpop.permute.xlu0 %3277
      %3279 = vrot.lane.b32.xlu0 %v3113, 48
      %v3280 = vpop.permute.xlu0 %3279
      %3281 = vrot.lane.b32.xlu0 %v3122, 48
      %v3282 = vpop.permute.xlu0 %3281
      %3283 = vrot.lane.b32.xlu0 %v3125, 48
      %v3284 = vpop.permute.xlu0 %3283
      %3285 = vrot.lane.b32.xlu0 %v3134, 48
      %v3286 = vpop.permute.xlu0 %3285
      %3287 = vrot.lane.b32.xlu0 %v3137, 48
      %v3288 = vpop.permute.xlu0 %3287
      %3289 = vrot.lane.b32.xlu0 %v3146, 48
      %v3290 = vpop.permute.xlu0 %3289
      %3291 = vrot.lane.b32.xlu0 %v3149, 48
      %v3292 = vpop.permute.xlu0 %3291
      %3293 = vrot.lane.b32.xlu0 %v3158, 48
      %v3294 = vpop.permute.xlu0 %3293
      %3295 = vrot.lane.b32.xlu0 %v3161, 48
      %v3296 = vpop.permute.xlu0 %3295
      %3297 = vrot.lane.b32.xlu0 %v3170, 48
      %v3298 = vpop.permute.xlu0 %3297
      %3299 = vrot.lane.b32.xlu0 %v3173, 48
      %v3300 = vpop.permute.xlu0 %3299
      %3301 = vrot.lane.b32.xlu0 %v3182, 48
      %v3302 = vpop.permute.xlu0 %3301
      %3303 = vrot.lane.b32.xlu0 %v3185, 48
      %v3304 = vpop.permute.xlu0 %3303
      %3305 = vrot.lane.b32.xlu0 %v3194, 48
      %v3306 = vpop.permute.xlu0 %3305
      %3307 = vrot.lane.b32.xlu0 %v3197, 48
      %v3308 = vpop.permute.xlu0 %3307
      %3309 = vrot.lane.b32.xlu0 %v3206, 48
      %v3310 = vpop.permute.xlu0 %3309
      %3311 = vrot.lane.b32.xlu0 %v3209, 48
      %v3312 = vpop.permute.xlu0 %3311
      %3313 = vrot.lane.b32.xlu0 %v3218, 48
      %v3314 = vpop.permute.xlu0 %3313
      %3315 = vrot.lane.b32.xlu0 %v3221, 48
      %v3316 = vpop.permute.xlu0 %3315
      %3317 = vrot.lane.b32.xlu0 %v3230, 48
      %v3318 = vpop.permute.xlu0 %3317
      %3319 = vrot.lane.b32.xlu0 %v3233, 48
      %v3320 = vpop.permute.xlu0 %3319
      %3321 = vrot.lane.b32.xlu0 %v3242, 48
      %v3322 = vpop.permute.xlu0 %3321
      %3323 = vrot.lane.b32.xlu0 %v3245, 48
      %v3324 = vpop.permute.xlu0 %3323
      %3325 = vrot.lane.b32.xlu0 %v3254, 48
      %v3326 = vpop.permute.xlu0 %3325
      %3327 = vrot.lane.b32.xlu0 %v3257, 48
      %v3328 = vpop.permute.xlu0 %3327
      %3329 = vrot.lane.b32.xlu0 %v3266, 48
      %v3330 = vpop.permute.xlu0 %3329
      %v3331 = vrot.slane %v2739, 7
      %v3332 = vrot.slane %v2947, 7
      %v3333 = vsel %vm2018, %v3331, %v3332
      %v3334 = vrot.slane %v2740, 7
      %v3335 = vrot.slane %v2948, 7
      %v3336 = vsel %vm2018, %v3334, %v3335
      %v3337 = vrot.slane %v2741, 7
      %v3338 = vrot.slane %v2949, 7
      %v3339 = vsel %vm2018, %v3337, %v3338
      %v3340 = vrot.slane %v2742, 7
      %v3341 = vrot.slane %v2950, 7
      %v3342 = vsel %vm2018, %v3340, %v3341
      %v3343 = vrot.slane %v2743, 7
      %v3344 = vrot.slane %v2951, 7
      %v3345 = vsel %vm2018, %v3343, %v3344
      %v3346 = vrot.slane %v2744, 7
      %v3347 = vrot.slane %v2952, 7
      %v3348 = vsel %vm2018, %v3346, %v3347
      %v3349 = vrot.slane %v2745, 7
      %v3350 = vrot.slane %v2953, 7
      %v3351 = vsel %vm2018, %v3349, %v3350
      %v3352 = vrot.slane %v2746, 7
      %v3353 = vrot.slane %v2954, 7
      %v3354 = vsel %vm2018, %v3352, %v3353
      %v3355 = vrot.slane %v2747, 7
      %v3356 = vrot.slane %v2955, 7
      %v3357 = vsel %vm2018, %v3355, %v3356
      %v3358 = vrot.slane %v2748, 7
      %v3359 = vrot.slane %v2956, 7
      %v3360 = vsel %vm2018, %v3358, %v3359
      %v3361 = vrot.slane %v2749, 7
      %v3362 = vrot.slane %v2957, 7
      %v3363 = vsel %vm2018, %v3361, %v3362
      %v3364 = vrot.slane %v2750, 7
      %v3365 = vrot.slane %v2958, 7
      %v3366 = vsel %vm2018, %v3364, %v3365
      %v3367 = vrot.slane %v2751, 7
      %v3368 = vrot.slane %v2959, 7
      %v3369 = vsel %vm2018, %v3367, %v3368
      %v3370 = vrot.slane %v2752, 7
      %v3371 = vrot.slane %v2960, 7
      %v3372 = vsel %vm2018, %v3370, %v3371
      %v3373 = vrot.slane %v2753, 7
      %v3374 = vrot.slane %v2961, 7
      %v3375 = vsel %vm2018, %v3373, %v3374
      %v3376 = vrot.slane %v2754, 7
      %v3377 = vrot.slane %v2962, 7
      %v3378 = vsel %vm2018, %v3376, %v3377
      %3379 = vrot.lane.b32.xlu0 %v3331, 52
      %v3380 = vpop.permute.xlu0 %3379
      %3381 = vrot.lane.b32.xlu0 %v3333, 52
      %v3382 = vpop.permute.xlu0 %3381
      %3383 = vrot.lane.b32.xlu0 %v3334, 52
      %v3384 = vpop.permute.xlu0 %3383
      %3385 = vrot.lane.b32.xlu0 %v3336, 52
      %v3386 = vpop.permute.xlu0 %3385
      %3387 = vrot.lane.b32.xlu0 %v3337, 52
      %v3388 = vpop.permute.xlu0 %3387
      %3389 = vrot.lane.b32.xlu0 %v3339, 52
      %v3390 = vpop.permute.xlu0 %3389
      %3391 = vrot.lane.b32.xlu0 %v3340, 52
      %v3392 = vpop.permute.xlu0 %3391
      %3393 = vrot.lane.b32.xlu0 %v3342, 52
      %v3394 = vpop.permute.xlu0 %3393
      %3395 = vrot.lane.b32.xlu0 %v3343, 52
      %v3396 = vpop.permute.xlu0 %3395
      %3397 = vrot.lane.b32.xlu0 %v3345, 52
      %v3398 = vpop.permute.xlu0 %3397
      %3399 = vrot.lane.b32.xlu0 %v3346, 52
      %v3400 = vpop.permute.xlu0 %3399
      %3401 = vrot.lane.b32.xlu0 %v3348, 52
      %v3402 = vpop.permute.xlu0 %3401
      %3403 = vrot.lane.b32.xlu0 %v3349, 52
      %v3404 = vpop.permute.xlu0 %3403
      %3405 = vrot.lane.b32.xlu0 %v3351, 52
      %v3406 = vpop.permute.xlu0 %3405
      %3407 = vrot.lane.b32.xlu0 %v3352, 52
      %v3408 = vpop.permute.xlu0 %3407
      %3409 = vrot.lane.b32.xlu0 %v3354, 52
      %v3410 = vpop.permute.xlu0 %3409
      %3411 = vrot.lane.b32.xlu0 %v3355, 52
      %v3412 = vpop.permute.xlu0 %3411
      %3413 = vrot.lane.b32.xlu0 %v3357, 52
      %v3414 = vpop.permute.xlu0 %3413
      %3415 = vrot.lane.b32.xlu0 %v3358, 52
      %v3416 = vpop.permute.xlu0 %3415
      %3417 = vrot.lane.b32.xlu0 %v3360, 52
      %v3418 = vpop.permute.xlu0 %3417
      %3419 = vrot.lane.b32.xlu0 %v3361, 52
      %v3420 = vpop.permute.xlu0 %3419
      %3421 = vrot.lane.b32.xlu0 %v3363, 52
      %v3422 = vpop.permute.xlu0 %3421
      %3423 = vrot.lane.b32.xlu0 %v3364, 52
      %v3424 = vpop.permute.xlu0 %3423
      %3425 = vrot.lane.b32.xlu0 %v3366, 52
      %v3426 = vpop.permute.xlu0 %3425
      %3427 = vrot.lane.b32.xlu0 %v3367, 52
      %v3428 = vpop.permute.xlu0 %3427
      %3429 = vrot.lane.b32.xlu0 %v3369, 52
      %v3430 = vpop.permute.xlu0 %3429
      %3431 = vrot.lane.b32.xlu0 %v3370, 52
      %v3432 = vpop.permute.xlu0 %3431
      %3433 = vrot.lane.b32.xlu0 %v3372, 52
      %v3434 = vpop.permute.xlu0 %3433
      %3435 = vrot.lane.b32.xlu0 %v3373, 52
      %v3436 = vpop.permute.xlu0 %3435
      %3437 = vrot.lane.b32.xlu0 %v3375, 52
      %v3438 = vpop.permute.xlu0 %3437
      %3439 = vrot.lane.b32.xlu0 %v3376, 52
      %v3440 = vpop.permute.xlu0 %3439
      %3441 = vrot.lane.b32.xlu0 %v3378, 52
      %v3442 = vpop.permute.xlu0 %3441
      %v3491 = vunpack.c.l.b16 %v542
      %v3492 = vunpack.c.l.b16 %v543
      %v3493 = vunpack.c.l.b16 %v544
      %v3494 = vunpack.c.l.b16 %v546
      %v3495 = vunpack.c.l.b16 %v547
      %v3496 = vunpack.c.l.b16 %v548
      %v3497 = vunpack.c.l.b16 %v550
      %v3498 = vunpack.c.l.b16 %v551
      %v3499 = vunpack.c.l.b16 %v552
      %v3500 = vunpack.c.l.b16 %v554
      %v3501 = vunpack.c.l.b16 %v555
      %v3502 = vunpack.c.l.b16 %v556
      %v3503 = vunpack.c.l.b16 %v558
      %v3504 = vunpack.c.l.b16 %v559
      %v3505 = vunpack.c.l.b16 %v560
      %v3506 = vunpack.c.l.b16 %v562
      %v3507 = vunpack.c.l.b16 %v563
      %v3508 = vunpack.c.l.b16 %v564
      %v3509 = vunpack.c.l.b16 %v566
      %v3510 = vunpack.c.l.b16 %v567
      %v3511 = vunpack.c.l.b16 %v568
      %v3512 = vunpack.c.l.b16 %v570
      %v3513 = vunpack.c.l.b16 %v571
      %v3514 = vunpack.c.l.b16 %v572
      %v3515 = vunpack.c.l.b16 %v574
      %v3516 = vunpack.c.l.b16 %v575
      %v3517 = vunpack.c.l.b16 %v576
      %v3518 = vunpack.c.l.b16 %v578
      %v3519 = vunpack.c.l.b16 %v579
      %v3520 = vunpack.c.l.b16 %v580
      %v3521 = vunpack.c.l.b16 %v582
      %v3522 = vunpack.c.l.b16 %v583
      %v3523 = vunpack.c.l.b16 %v584
      %v3524 = vunpack.c.l.b16 %v586
      %v3525 = vunpack.c.l.b16 %v587
      %v3526 = vunpack.c.l.b16 %v588
      %v3527 = vunpack.c.l.b16 %v590
      %v3528 = vunpack.c.l.b16 %v591
      %v3529 = vunpack.c.l.b16 %v592
      %v3530 = vunpack.c.l.b16 %v594
      %v3531 = vunpack.c.l.b16 %v595
      %v3532 = vunpack.c.l.b16 %v596
      %v3533 = vunpack.c.l.b16 %v598
      %v3534 = vunpack.c.l.b16 %v599
      %v3535 = vunpack.c.l.b16 %v600
      %v3536 = vunpack.c.l.b16 %v602
      %v3537 = vunpack.c.l.b16 %v603
      %v3538 = vunpack.c.l.b16 %v604
      %v3539 = vpack.c.b16 %v3492, %v3491
      %v3540 = vpack.c.b16 %v3493, %v3493
      %v3541 = vpack.c.b16 %v3495, %v3494
      %v3542 = vpack.c.b16 %v3496, %v3496
      %v3543 = vpack.c.b16 %v3498, %v3497
      %v3544 = vpack.c.b16 %v3499, %v3499
      %v3545 = vpack.c.b16 %v3501, %v3500
      %v3546 = vpack.c.b16 %v3502, %v3502
      %v3547 = vpack.c.b16 %v3504, %v3503
      %v3548 = vpack.c.b16 %v3505, %v3505
      %v3549 = vpack.c.b16 %v3507, %v3506
      %v3550 = vpack.c.b16 %v3508, %v3508
      %v3551 = vpack.c.b16 %v3510, %v3509
      %v3552 = vpack.c.b16 %v3511, %v3511
      %v3553 = vpack.c.b16 %v3513, %v3512
      %v3554 = vpack.c.b16 %v3514, %v3514
      %v3555 = vpack.c.b16 %v3516, %v3515
      %v3556 = vpack.c.b16 %v3517, %v3517
      %v3557 = vpack.c.b16 %v3519, %v3518
      %v3558 = vpack.c.b16 %v3520, %v3520
      %v3559 = vpack.c.b16 %v3522, %v3521
      %v3560 = vpack.c.b16 %v3523, %v3523
      %v3561 = vpack.c.b16 %v3525, %v3524
      %v3562 = vpack.c.b16 %v3526, %v3526
      %v3563 = vpack.c.b16 %v3528, %v3527
      %v3564 = vpack.c.b16 %v3529, %v3529
      %v3565 = vpack.c.b16 %v3531, %v3530
      %v3566 = vpack.c.b16 %v3532, %v3532
      %v3567 = vpack.c.b16 %v3534, %v3533
      %v3568 = vpack.c.b16 %v3535, %v3535
      %v3569 = vpack.c.b16 %v3537, %v3536
      %v3570 = vpack.c.b16 %v3538, %v3538
      %3571 = vrot.lane.b32.xlu0 %v3539, 56
      %v3572 = vpop.permute.xlu0 %3571
      %3573 = vrot.lane.b32.xlu0 %v3540, 56
      %v3574 = vpop.permute.xlu0 %3573
      %3575 = vrot.lane.b32.xlu0 %v3541, 56
      %v3576 = vpop.permute.xlu0 %3575
      %3577 = vrot.lane.b32.xlu0 %v3542, 56
      %v3578 = vpop.permute.xlu0 %3577
      %3579 = vrot.lane.b32.xlu0 %v3543, 56
      %v3580 = vpop.permute.xlu0 %3579
      %3581 = vrot.lane.b32.xlu0 %v3544, 56
      %v3582 = vpop.permute.xlu0 %3581
      %3583 = vrot.lane.b32.xlu0 %v3545, 56
      %v3584 = vpop.permute.xlu0 %3583
      %3585 = vrot.lane.b32.xlu0 %v3546, 56
      %v3586 = vpop.permute.xlu0 %3585
      %3587 = vrot.lane.b32.xlu0 %v3547, 56
      %v3588 = vpop.permute.xlu0 %3587
      %3589 = vrot.lane.b32.xlu0 %v3548, 56
      %v3590 = vpop.permute.xlu0 %3589
      %3591 = vrot.lane.b32.xlu0 %v3549, 56
      %v3592 = vpop.permute.xlu0 %3591
      %3593 = vrot.lane.b32.xlu0 %v3550, 56
      %v3594 = vpop.permute.xlu0 %3593
      %3595 = vrot.lane.b32.xlu0 %v3551, 56
      %v3596 = vpop.permute.xlu0 %3595
      %3597 = vrot.lane.b32.xlu0 %v3552, 56
      %v3598 = vpop.permute.xlu0 %3597
      %3599 = vrot.lane.b32.xlu0 %v3553, 56
      %v3600 = vpop.permute.xlu0 %3599
      %3601 = vrot.lane.b32.xlu0 %v3554, 56
      %v3602 = vpop.permute.xlu0 %3601
      %3603 = vrot.lane.b32.xlu0 %v3555, 56
      %v3604 = vpop.permute.xlu0 %3603
      %3605 = vrot.lane.b32.xlu0 %v3556, 56
      %v3606 = vpop.permute.xlu0 %3605
      %3607 = vrot.lane.b32.xlu0 %v3557, 56
      %v3608 = vpop.permute.xlu0 %3607
      %3609 = vrot.lane.b32.xlu0 %v3558, 56
      %v3610 = vpop.permute.xlu0 %3609
      %3611 = vrot.lane.b32.xlu0 %v3559, 56
      %v3612 = vpop.permute.xlu0 %3611
      %3613 = vrot.lane.b32.xlu0 %v3560, 56
      %v3614 = vpop.permute.xlu0 %3613
      %3615 = vrot.lane.b32.xlu0 %v3561, 56
      %v3616 = vpop.permute.xlu0 %3615
      %3617 = vrot.lane.b32.xlu0 %v3562, 56
      %v3618 = vpop.permute.xlu0 %3617
      %3619 = vrot.lane.b32.xlu0 %v3563, 56
      %v3620 = vpop.permute.xlu0 %3619
      %3621 = vrot.lane.b32.xlu0 %v3564, 56
      %v3622 = vpop.permute.xlu0 %3621
      %3623 = vrot.lane.b32.xlu0 %v3565, 56
      %v3624 = vpop.permute.xlu0 %3623
      %3625 = vrot.lane.b32.xlu0 %v3566, 56
      %v3626 = vpop.permute.xlu0 %3625
      %3627 = vrot.lane.b32.xlu0 %v3567, 56
      %v3628 = vpop.permute.xlu0 %3627
      %3629 = vrot.lane.b32.xlu0 %v3568, 56
      %v3630 = vpop.permute.xlu0 %3629
      %3631 = vrot.lane.b32.xlu0 %v3569, 56
      %v3632 = vpop.permute.xlu0 %3631
      %3633 = vrot.lane.b32.xlu0 %v3570, 56
      %v3634 = vpop.permute.xlu0 %3633
      %v3636 = vshrl.u32 %v3539, 16
      %v3638 = vshll.u32 %v3539, 16
      %v3640 = vrot.slane %v3638, 1
      %v3641 = vor.u32 %v3636, %v3640
      %v3643 = vshll.u32 %v3540, 16
      %v3645 = vrot.slane %v3643, 1
      %v3646 = vsel %vm1006, %v3641, %v3645
      %v3647 = vshrl.u32 %v3540, 16
      %v3649 = vor.u32 %v3647, %v3645
      %v3651 = vshrl.u32 %v3541, 16
      %v3653 = vshll.u32 %v3541, 16
      %v3655 = vrot.slane %v3653, 1
      %v3656 = vor.u32 %v3651, %v3655
      %v3658 = vshll.u32 %v3542, 16
      %v3660 = vrot.slane %v3658, 1
      %v3661 = vsel %vm1006, %v3656, %v3660
      %v3662 = vshrl.u32 %v3542, 16
      %v3664 = vor.u32 %v3662, %v3660
      %v3666 = vshrl.u32 %v3543, 16
      %v3668 = vshll.u32 %v3543, 16
      %v3670 = vrot.slane %v3668, 1
      %v3671 = vor.u32 %v3666, %v3670
      %v3673 = vshll.u32 %v3544, 16
      %v3675 = vrot.slane %v3673, 1
      %v3676 = vsel %vm1006, %v3671, %v3675
      %v3677 = vshrl.u32 %v3544, 16
      %v3679 = vor.u32 %v3677, %v3675
      %v3681 = vshrl.u32 %v3545, 16
      %v3683 = vshll.u32 %v3545, 16
      %v3685 = vrot.slane %v3683, 1
      %v3686 = vor.u32 %v3681, %v3685
      %v3688 = vshll.u32 %v3546, 16
      %v3690 = vrot.slane %v3688, 1
      %v3691 = vsel %vm1006, %v3686, %v3690
      %v3692 = vshrl.u32 %v3546, 16
      %v3694 = vor.u32 %v3692, %v3690
      %v3696 = vshrl.u32 %v3547, 16
      %v3698 = vshll.u32 %v3547, 16
      %v3700 = vrot.slane %v3698, 1
      %v3701 = vor.u32 %v3696, %v3700
      %v3703 = vshll.u32 %v3548, 16
      %v3705 = vrot.slane %v3703, 1
      %v3706 = vsel %vm1006, %v3701, %v3705
      %v3707 = vshrl.u32 %v3548, 16
      %v3709 = vor.u32 %v3707, %v3705
      %v3711 = vshrl.u32 %v3549, 16
      %v3713 = vshll.u32 %v3549, 16
      %v3715 = vrot.slane %v3713, 1
      %v3716 = vor.u32 %v3711, %v3715
      %v3718 = vshll.u32 %v3550, 16
      %v3720 = vrot.slane %v3718, 1
      %v3721 = vsel %vm1006, %v3716, %v3720
      %v3722 = vshrl.u32 %v3550, 16
      %v3724 = vor.u32 %v3722, %v3720
      %v3726 = vshrl.u32 %v3551, 16
      %v3728 = vshll.u32 %v3551, 16
      %v3730 = vrot.slane %v3728, 1
      %v3731 = vor.u32 %v3726, %v3730
      %v3733 = vshll.u32 %v3552, 16
      %v3735 = vrot.slane %v3733, 1
      %v3736 = vsel %vm1006, %v3731, %v3735
      %v3737 = vshrl.u32 %v3552, 16
      %v3739 = vor.u32 %v3737, %v3735
      %v3741 = vshrl.u32 %v3553, 16
      %v3743 = vshll.u32 %v3553, 16
      %v3745 = vrot.slane %v3743, 1
      %v3746 = vor.u32 %v3741, %v3745
      %v3748 = vshll.u32 %v3554, 16
      %v3750 = vrot.slane %v3748, 1
      %v3751 = vsel %vm1006, %v3746, %v3750
      %v3752 = vshrl.u32 %v3554, 16
      %v3754 = vor.u32 %v3752, %v3750
      %v3756 = vshrl.u32 %v3555, 16
      %v3758 = vshll.u32 %v3555, 16
      %v3760 = vrot.slane %v3758, 1
      %v3761 = vor.u32 %v3756, %v3760
      %v3763 = vshll.u32 %v3556, 16
      %v3765 = vrot.slane %v3763, 1
      %v3766 = vsel %vm1006, %v3761, %v3765
      %v3767 = vshrl.u32 %v3556, 16
      %v3769 = vor.u32 %v3767, %v3765
      %v3771 = vshrl.u32 %v3557, 16
      %v3773 = vshll.u32 %v3557, 16
      %v3775 = vrot.slane %v3773, 1
      %v3776 = vor.u32 %v3771, %v3775
      %v3778 = vshll.u32 %v3558, 16
      %v3780 = vrot.slane %v3778, 1
      %v3781 = vsel %vm1006, %v3776, %v3780
      %v3782 = vshrl.u32 %v3558, 16
      %v3784 = vor.u32 %v3782, %v3780
      %v3786 = vshrl.u32 %v3559, 16
      %v3788 = vshll.u32 %v3559, 16
      %v3790 = vrot.slane %v3788, 1
      %v3791 = vor.u32 %v3786, %v3790
      %v3793 = vshll.u32 %v3560, 16
      %v3795 = vrot.slane %v3793, 1
      %v3796 = vsel %vm1006, %v3791, %v3795
      %v3797 = vshrl.u32 %v3560, 16
      %v3799 = vor.u32 %v3797, %v3795
      %v3801 = vshrl.u32 %v3561, 16
      %v3803 = vshll.u32 %v3561, 16
      %v3805 = vrot.slane %v3803, 1
      %v3806 = vor.u32 %v3801, %v3805
      %v3808 = vshll.u32 %v3562, 16
      %v3810 = vrot.slane %v3808, 1
      %v3811 = vsel %vm1006, %v3806, %v3810
      %v3812 = vshrl.u32 %v3562, 16
      %v3814 = vor.u32 %v3812, %v3810
      %v3816 = vshrl.u32 %v3563, 16
      %v3818 = vshll.u32 %v3563, 16
      %v3820 = vrot.slane %v3818, 1
      %v3821 = vor.u32 %v3816, %v3820
      %v3823 = vshll.u32 %v3564, 16
      %v3825 = vrot.slane %v3823, 1
      %v3826 = vsel %vm1006, %v3821, %v3825
      %v3827 = vshrl.u32 %v3564, 16
      %v3829 = vor.u32 %v3827, %v3825
      %v3831 = vshrl.u32 %v3565, 16
      %v3833 = vshll.u32 %v3565, 16
      %v3835 = vrot.slane %v3833, 1
      %v3836 = vor.u32 %v3831, %v3835
      %v3838 = vshll.u32 %v3566, 16
      %v3840 = vrot.slane %v3838, 1
      %v3841 = vsel %vm1006, %v3836, %v3840
      %v3842 = vshrl.u32 %v3566, 16
      %v3844 = vor.u32 %v3842, %v3840
      %v3846 = vshrl.u32 %v3567, 16
      %v3848 = vshll.u32 %v3567, 16
      %v3850 = vrot.slane %v3848, 1
      %v3851 = vor.u32 %v3846, %v3850
      %v3853 = vshll.u32 %v3568, 16
      %v3855 = vrot.slane %v3853, 1
      %v3856 = vsel %vm1006, %v3851, %v3855
      %v3857 = vshrl.u32 %v3568, 16
      %v3859 = vor.u32 %v3857, %v3855
      %v3861 = vshrl.u32 %v3569, 16
      %v3863 = vshll.u32 %v3569, 16
      %v3865 = vrot.slane %v3863, 1
      %v3866 = vor.u32 %v3861, %v3865
      %v3868 = vshll.u32 %v3570, 16
      %v3870 = vrot.slane %v3868, 1
      %v3871 = vsel %vm1006, %v3866, %v3870
      %v3872 = vshrl.u32 %v3570, 16
      %v3874 = vor.u32 %v3872, %v3870
      %3875 = vrot.lane.b32.xlu0 %v3646, 60
      %v3876 = vpop.permute.xlu0 %3875
      %3877 = vrot.lane.b32.xlu0 %v3649, 60
      %v3878 = vpop.permute.xlu0 %3877
      %3879 = vrot.lane.b32.xlu0 %v3661, 60
      %v3880 = vpop.permute.xlu0 %3879
      %3881 = vrot.lane.b32.xlu0 %v3664, 60
      %v3882 = vpop.permute.xlu0 %3881
      %3883 = vrot.lane.b32.xlu0 %v3676, 60
      %v3884 = vpop.permute.xlu0 %3883
      %3885 = vrot.lane.b32.xlu0 %v3679, 60
      %v3886 = vpop.permute.xlu0 %3885
      %3887 = vrot.lane.b32.xlu0 %v3691, 60
      %v3888 = vpop.permute.xlu0 %3887
      %3889 = vrot.lane.b32.xlu0 %v3694, 60
      %v3890 = vpop.permute.xlu0 %3889
      %3891 = vrot.lane.b32.xlu0 %v3706, 60
      %v3892 = vpop.permute.xlu0 %3891
      %3893 = vrot.lane.b32.xlu0 %v3709, 60
      %v3894 = vpop.permute.xlu0 %3893
      %3895 = vrot.lane.b32.xlu0 %v3721, 60
      %v3896 = vpop.permute.xlu0 %3895
      %3897 = vrot.lane.b32.xlu0 %v3724, 60
      %v3898 = vpop.permute.xlu0 %3897
      %3899 = vrot.lane.b32.xlu0 %v3736, 60
      %v3900 = vpop.permute.xlu0 %3899
      %3901 = vrot.lane.b32.xlu0 %v3739, 60
      %v3902 = vpop.permute.xlu0 %3901
      %3903 = vrot.lane.b32.xlu0 %v3751, 60
      %v3904 = vpop.permute.xlu0 %3903
      %3905 = vrot.lane.b32.xlu0 %v3754, 60
      %v3906 = vpop.permute.xlu0 %3905
      %3907 = vrot.lane.b32.xlu0 %v3766, 60
      %v3908 = vpop.permute.xlu0 %3907
      %3909 = vrot.lane.b32.xlu0 %v3769, 60
      %v3910 = vpop.permute.xlu0 %3909
      %3911 = vrot.lane.b32.xlu0 %v3781, 60
      %v3912 = vpop.permute.xlu0 %3911
      %3913 = vrot.lane.b32.xlu0 %v3784, 60
      %v3914 = vpop.permute.xlu0 %3913
      %3915 = vrot.lane.b32.xlu0 %v3796, 60
      %v3916 = vpop.permute.xlu0 %3915
      %3917 = vrot.lane.b32.xlu0 %v3799, 60
      %v3918 = vpop.permute.xlu0 %3917
      %3919 = vrot.lane.b32.xlu0 %v3811, 60
      %v3920 = vpop.permute.xlu0 %3919
      %3921 = vrot.lane.b32.xlu0 %v3814, 60
      %v3922 = vpop.permute.xlu0 %3921
      %3923 = vrot.lane.b32.xlu0 %v3826, 60
      %v3924 = vpop.permute.xlu0 %3923
      %3925 = vrot.lane.b32.xlu0 %v3829, 60
      %v3926 = vpop.permute.xlu0 %3925
      %3927 = vrot.lane.b32.xlu0 %v3841, 60
      %v3928 = vpop.permute.xlu0 %3927
      %3929 = vrot.lane.b32.xlu0 %v3844, 60
      %v3930 = vpop.permute.xlu0 %3929
      %3931 = vrot.lane.b32.xlu0 %v3856, 60
      %v3932 = vpop.permute.xlu0 %3931
      %3933 = vrot.lane.b32.xlu0 %v3859, 60
      %v3934 = vpop.permute.xlu0 %3933
      %3935 = vrot.lane.b32.xlu0 %v3871, 60
      %v3936 = vpop.permute.xlu0 %3935
      %3937 = vrot.lane.b32.xlu0 %v3874, 60
      %v3938 = vpop.permute.xlu0 %3937
      %vm3939 = vcmask 31744
      %v3941 = vsel %vm3939, %v974, %v1248
      %v3943 = vsel %vm3939, %v975, %v1250
      %v3945 = vsel %vm3939, %v976, %v1252
      %v3947 = vsel %vm3939, %v977, %v1254
      %v3949 = vsel %vm3939, %v978, %v1256
      %v3951 = vsel %vm3939, %v979, %v1258
      %v3953 = vsel %vm3939, %v980, %v1260
      %v3955 = vsel %vm3939, %v981, %v1262
      %v3957 = vsel %vm3939, %v982, %v1264
      %v3959 = vsel %vm3939, %v983, %v1266
      %v3961 = vsel %vm3939, %v984, %v1268
      %v3963 = vsel %vm3939, %v985, %v1270
      %v3965 = vsel %vm3939, %v986, %v1272
      %v3967 = vsel %vm3939, %v987, %v1274
      %v3969 = vsel %vm3939, %v988, %v1276
      %v3971 = vsel %vm3939, %v989, %v1278
      %v3973 = vsel %vm3939, %v990, %v1280
      %v3975 = vsel %vm3939, %v991, %v1282
      %v3977 = vsel %vm3939, %v992, %v1284
      %v3979 = vsel %vm3939, %v993, %v1286
      %v3981 = vsel %vm3939, %v994, %v1288
      %v3983 = vsel %vm3939, %v995, %v1290
      %v3985 = vsel %vm3939, %v996, %v1292
      %v3987 = vsel %vm3939, %v997, %v1294
      %v3989 = vsel %vm3939, %v998, %v1296
      %v3991 = vsel %vm3939, %v999, %v1298
      %v3993 = vsel %vm3939, %v1000, %v1300
      %v3995 = vsel %vm3939, %v1001, %v1302
      %v3997 = vsel %vm3939, %v1002, %v1304
      %v3999 = vsel %vm3939, %v1003, %v1306
      %v4001 = vsel %vm3939, %v1004, %v1308
      %v4003 = vsel %vm3939, %v1005, %v1310
      %vm4004 = vcmask 64512
      %v4006 = vsel %vm4004, %v3941, %v1361
      %v4008 = vsel %vm4004, %v3943, %v1363
      %v4010 = vsel %vm4004, %v3945, %v1365
      %v4012 = vsel %vm4004, %v3947, %v1367
      %v4014 = vsel %vm4004, %v3949, %v1369
      %v4016 = vsel %vm4004, %v3951, %v1371
      %v4018 = vsel %vm4004, %v3953, %v1373
      %v4020 = vsel %vm4004, %v3955, %v1375
      %v4022 = vsel %vm4004, %v3957, %v1377
      %v4024 = vsel %vm4004, %v3959, %v1379
      %v4026 = vsel %vm4004, %v3961, %v1381
      %v4028 = vsel %vm4004, %v3963, %v1383
      %v4030 = vsel %vm4004, %v3965, %v1385
      %v4032 = vsel %vm4004, %v3967, %v1387
      %v4034 = vsel %vm4004, %v3969, %v1389
      %v4036 = vsel %vm4004, %v3971, %v1391
      %v4038 = vsel %vm4004, %v3973, %v1393
      %v4040 = vsel %vm4004, %v3975, %v1395
      %v4042 = vsel %vm4004, %v3977, %v1397
      %v4044 = vsel %vm4004, %v3979, %v1399
      %v4046 = vsel %vm4004, %v3981, %v1401
      %v4048 = vsel %vm4004, %v3983, %v1403
      %v4050 = vsel %vm4004, %v3985, %v1405
      %v4052 = vsel %vm4004, %v3987, %v1407
      %v4054 = vsel %vm4004, %v3989, %v1409
      %v4056 = vsel %vm4004, %v3991, %v1411
      %v4058 = vsel %vm4004, %v3993, %v1413
      %v4060 = vsel %vm4004, %v3995, %v1415
      %v4062 = vsel %vm4004, %v3997, %v1417
      %v4064 = vsel %vm4004, %v3999, %v1419
      %v4066 = vsel %vm4004, %v4001, %v1421
      %v4068 = vsel %vm4004, %v4003, %v1423
      %vm4069 = vcmask 97280
      %v4071 = vsel %vm4069, %v4006, %v1569
      %v4072 = vsel %vm4069, %v4008, %v1569
      %v4074 = vsel %vm4069, %v4010, %v1571
      %v4075 = vsel %vm4069, %v4012, %v1571
      %v4077 = vsel %vm4069, %v4014, %v1573
      %v4078 = vsel %vm4069, %v4016, %v1573
      %v4080 = vsel %vm4069, %v4018, %v1575
      %v4081 = vsel %vm4069, %v4020, %v1575
      %v4083 = vsel %vm4069, %v4022, %v1577
      %v4084 = vsel %vm4069, %v4024, %v1577
      %v4086 = vsel %vm4069, %v4026, %v1579
      %v4087 = vsel %vm4069, %v4028, %v1579
      %v4089 = vsel %vm4069, %v4030, %v1581
      %v4090 = vsel %vm4069, %v4032, %v1581
      %v4092 = vsel %vm4069, %v4034, %v1583
      %v4093 = vsel %vm4069, %v4036, %v1583
      %v4095 = vsel %vm4069, %v4038, %v1585
      %v4096 = vsel %vm4069, %v4040, %v1585
      %v4098 = vsel %vm4069, %v4042, %v1587
      %v4099 = vsel %vm4069, %v4044, %v1587
      %v4101 = vsel %vm4069, %v4046, %v1589
      %v4102 = vsel %vm4069, %v4048, %v1589
      %v4104 = vsel %vm4069, %v4050, %v1591
      %v4105 = vsel %vm4069, %v4052, %v1591
      %v4107 = vsel %vm4069, %v4054, %v1593
      %v4108 = vsel %vm4069, %v4056, %v1593
      %v4110 = vsel %vm4069, %v4058, %v1595
      %v4111 = vsel %vm4069, %v4060, %v1595
      %v4113 = vsel %vm4069, %v4062, %v1597
      %v4114 = vsel %vm4069, %v4064, %v1597
      %v4116 = vsel %vm4069, %v4066, %v1599
      %v4117 = vsel %vm4069, %v4068, %v1599
      %vm4118 = vcmask 130048
      %v4120 = vsel %vm4118, %v4071, %v1698
      %v4122 = vsel %vm4118, %v4072, %v1700
      %v4124 = vsel %vm4118, %v4074, %v1702
      %v4126 = vsel %vm4118, %v4075, %v1704
      %v4128 = vsel %vm4118, %v4077, %v1706
      %v4130 = vsel %vm4118, %v4078, %v1708
      %v4132 = vsel %vm4118, %v4080, %v1710
      %v4134 = vsel %vm4118, %v4081, %v1712
      %v4136 = vsel %vm4118, %v4083, %v1714
      %v4138 = vsel %vm4118, %v4084, %v1716
      %v4140 = vsel %vm4118, %v4086, %v1718
      %v4142 = vsel %vm4118, %v4087, %v1720
      %v4144 = vsel %vm4118, %v4089, %v1722
      %v4146 = vsel %vm4118, %v4090, %v1724
      %v4148 = vsel %vm4118, %v4092, %v1726
      %v4150 = vsel %vm4118, %v4093, %v1728
      %v4152 = vsel %vm4118, %v4095, %v1730
      %v4154 = vsel %vm4118, %v4096, %v1732
      %v4156 = vsel %vm4118, %v4098, %v1734
      %v4158 = vsel %vm4118, %v4099, %v1736
      %v4160 = vsel %vm4118, %v4101, %v1738
      %v4162 = vsel %vm4118, %v4102, %v1740
      %v4164 = vsel %vm4118, %v4104, %v1742
      %v4166 = vsel %vm4118, %v4105, %v1744
      %v4168 = vsel %vm4118, %v4107, %v1746
      %v4170 = vsel %vm4118, %v4108, %v1748
      %v4172 = vsel %vm4118, %v4110, %v1750
      %v4174 = vsel %vm4118, %v4111, %v1752
      %v4176 = vsel %vm4118, %v4113, %v1754
      %v4178 = vsel %vm4118, %v4114, %v1756
      %v4180 = vsel %vm4118, %v4116, %v1758
      %v4182 = vsel %vm4118, %v4117, %v1760
      %vm4183 = vcmask 162816
      %v4185 = vsel %vm4183, %v4120, %v1955
      %v4187 = vsel %vm4183, %v4122, %v1957
      %v4189 = vsel %vm4183, %v4124, %v1959
      %v4191 = vsel %vm4183, %v4126, %v1961
      %v4193 = vsel %vm4183, %v4128, %v1963
      %v4195 = vsel %vm4183, %v4130, %v1965
      %v4197 = vsel %vm4183, %v4132, %v1967
      %v4199 = vsel %vm4183, %v4134, %v1969
      %v4201 = vsel %vm4183, %v4136, %v1971
      %v4203 = vsel %vm4183, %v4138, %v1973
      %v4205 = vsel %vm4183, %v4140, %v1975
      %v4207 = vsel %vm4183, %v4142, %v1977
      %v4209 = vsel %vm4183, %v4144, %v1979
      %v4211 = vsel %vm4183, %v4146, %v1981
      %v4213 = vsel %vm4183, %v4148, %v1983
      %v4215 = vsel %vm4183, %v4150, %v1985
      %v4217 = vsel %vm4183, %v4152, %v1987
      %v4219 = vsel %vm4183, %v4154, %v1989
      %v4221 = vsel %vm4183, %v4156, %v1991
      %v4223 = vsel %vm4183, %v4158, %v1993
      %v4225 = vsel %vm4183, %v4160, %v1995
      %v4227 = vsel %vm4183, %v4162, %v1997
      %v4229 = vsel %vm4183, %v4164, %v1999
      %v4231 = vsel %vm4183, %v4166, %v2001
      %v4233 = vsel %vm4183, %v4168, %v2003
      %v4235 = vsel %vm4183, %v4170, %v2005
      %v4237 = vsel %vm4183, %v4172, %v2007
      %v4239 = vsel %vm4183, %v4174, %v2009
      %v4241 = vsel %vm4183, %v4176, %v2011
      %v4243 = vsel %vm4183, %v4178, %v2013
      %v4245 = vsel %vm4183, %v4180, %v2015
      %v4247 = vsel %vm4183, %v4182, %v2017
      %vm4248 = vcmask 195584
      %v4250 = vsel %vm4248, %v4185, %v2068
      %v4252 = vsel %vm4248, %v4187, %v2070
      %v4254 = vsel %vm4248, %v4189, %v2072
      %v4256 = vsel %vm4248, %v4191, %v2074
      %v4258 = vsel %vm4248, %v4193, %v2076
      %v4260 = vsel %vm4248, %v4195, %v2078
      %v4262 = vsel %vm4248, %v4197, %v2080
      %v4264 = vsel %vm4248, %v4199, %v2082
      %v4266 = vsel %vm4248, %v4201, %v2084
      %v4268 = vsel %vm4248, %v4203, %v2086
      %v4270 = vsel %vm4248, %v4205, %v2088
      %v4272 = vsel %vm4248, %v4207, %v2090
      %v4274 = vsel %vm4248, %v4209, %v2092
      %v4276 = vsel %vm4248, %v4211, %v2094
      %v4278 = vsel %vm4248, %v4213, %v2096
      %v4280 = vsel %vm4248, %v4215, %v2098
      %v4282 = vsel %vm4248, %v4217, %v2100
      %v4284 = vsel %vm4248, %v4219, %v2102
      %v4286 = vsel %vm4248, %v4221, %v2104
      %v4288 = vsel %vm4248, %v4223, %v2106
      %v4290 = vsel %vm4248, %v4225, %v2108
      %v4292 = vsel %vm4248, %v4227, %v2110
      %v4294 = vsel %vm4248, %v4229, %v2112
      %v4296 = vsel %vm4248, %v4231, %v2114
      %v4298 = vsel %vm4248, %v4233, %v2116
      %v4300 = vsel %vm4248, %v4235, %v2118
      %v4302 = vsel %vm4248, %v4237, %v2120
      %v4304 = vsel %vm4248, %v4239, %v2122
      %v4306 = vsel %vm4248, %v4241, %v2124
      %v4308 = vsel %vm4248, %v4243, %v2126
      %v4310 = vsel %vm4248, %v4245, %v2128
      %v4312 = vsel %vm4248, %v4247, %v2130
      %vm4313 = vcmask 228352
      %v4315 = vsel %vm4313, %v4250, %v2260
      %v4317 = vsel %vm4313, %v4252, %v2262
      %v4319 = vsel %vm4313, %v4254, %v2264
      %v4321 = vsel %vm4313, %v4256, %v2266
      %v4323 = vsel %vm4313, %v4258, %v2268
      %v4325 = vsel %vm4313, %v4260, %v2270
      %v4327 = vsel %vm4313, %v4262, %v2272
      %v4329 = vsel %vm4313, %v4264, %v2274
      %v4331 = vsel %vm4313, %v4266, %v2276
      %v4333 = vsel %vm4313, %v4268, %v2278
      %v4335 = vsel %vm4313, %v4270, %v2280
      %v4337 = vsel %vm4313, %v4272, %v2282
      %v4339 = vsel %vm4313, %v4274, %v2284
      %v4341 = vsel %vm4313, %v4276, %v2286
      %v4343 = vsel %vm4313, %v4278, %v2288
      %v4345 = vsel %vm4313, %v4280, %v2290
      %v4347 = vsel %vm4313, %v4282, %v2292
      %v4349 = vsel %vm4313, %v4284, %v2294
      %v4351 = vsel %vm4313, %v4286, %v2296
      %v4353 = vsel %vm4313, %v4288, %v2298
      %v4355 = vsel %vm4313, %v4290, %v2300
      %v4357 = vsel %vm4313, %v4292, %v2302
      %v4359 = vsel %vm4313, %v4294, %v2304
      %v4361 = vsel %vm4313, %v4296, %v2306
      %v4363 = vsel %vm4313, %v4298, %v2308
      %v4365 = vsel %vm4313, %v4300, %v2310
      %v4367 = vsel %vm4313, %v4302, %v2312
      %v4369 = vsel %vm4313, %v4304, %v2314
      %v4371 = vsel %vm4313, %v4306, %v2316
      %v4373 = vsel %vm4313, %v4308, %v2318
      %v4375 = vsel %vm4313, %v4310, %v2320
      %v4377 = vsel %vm4313, %v4312, %v2322
      %vm4378 = vcmask 261120
      %v4380 = vsel %vm4378, %v4315, %v2564
      %v4382 = vsel %vm4378, %v4317, %v2566
      %v4384 = vsel %vm4378, %v4319, %v2568
      %v4386 = vsel %vm4378, %v4321, %v2570
      %v4388 = vsel %vm4378, %v4323, %v2572
      %v4390 = vsel %vm4378, %v4325, %v2574
      %v4392 = vsel %vm4378, %v4327, %v2576
      %v4394 = vsel %vm4378, %v4329, %v2578
      %v4396 = vsel %vm4378, %v4331, %v2580
      %v4398 = vsel %vm4378, %v4333, %v2582
      %v4400 = vsel %vm4378, %v4335, %v2584
      %v4402 = vsel %vm4378, %v4337, %v2586
      %v4404 = vsel %vm4378, %v4339, %v2588
      %v4406 = vsel %vm4378, %v4341, %v2590
      %v4408 = vsel %vm4378, %v4343, %v2592
      %v4410 = vsel %vm4378, %v4345, %v2594
      %v4412 = vsel %vm4378, %v4347, %v2596
      %v4414 = vsel %vm4378, %v4349, %v2598
      %v4416 = vsel %vm4378, %v4351, %v2600
      %v4418 = vsel %vm4378, %v4353, %v2602
      %v4420 = vsel %vm4378, %v4355, %v2604
      %v4422 = vsel %vm4378, %v4357, %v2606
      %v4424 = vsel %vm4378, %v4359, %v2608
      %v4426 = vsel %vm4378, %v4361, %v2610
      %v4428 = vsel %vm4378, %v4363, %v2612
      %v4430 = vsel %vm4378, %v4365, %v2614
      %v4432 = vsel %vm4378, %v4367, %v2616
      %v4434 = vsel %vm4378, %v4369, %v2618
      %v4436 = vsel %vm4378, %v4371, %v2620
      %v4438 = vsel %vm4378, %v4373, %v2622
      %v4440 = vsel %vm4378, %v4375, %v2624
      %v4442 = vsel %vm4378, %v4377, %v2626
      %vm4443 = vcmask 293888
      %v4445 = vsel %vm4443, %v4380, %v2676
      %v4447 = vsel %vm4443, %v4382, %v2678
      %v4449 = vsel %vm4443, %v4384, %v2680
      %v4451 = vsel %vm4443, %v4386, %v2682
      %v4453 = vsel %vm4443, %v4388, %v2684
      %v4455 = vsel %vm4443, %v4390, %v2686
      %v4457 = vsel %vm4443, %v4392, %v2688
      %v4459 = vsel %vm4443, %v4394, %v2690
      %v4461 = vsel %vm4443, %v4396, %v2692
      %v4463 = vsel %vm4443, %v4398, %v2694
      %v4465 = vsel %vm4443, %v4400, %v2696
      %v4467 = vsel %vm4443, %v4402, %v2698
      %v4469 = vsel %vm4443, %v4404, %v2700
      %v4471 = vsel %vm4443, %v4406, %v2702
      %v4473 = vsel %vm4443, %v4408, %v2704
      %v4475 = vsel %vm4443, %v4410, %v2706
      %v4477 = vsel %vm4443, %v4412, %v2708
      %v4479 = vsel %vm4443, %v4414, %v2710
      %v4481 = vsel %vm4443, %v4416, %v2712
      %v4483 = vsel %vm4443, %v4418, %v2714
      %v4485 = vsel %vm4443, %v4420, %v2716
      %v4487 = vsel %vm4443, %v4422, %v2718
      %v4489 = vsel %vm4443, %v4424, %v2720
      %v4491 = vsel %vm4443, %v4426, %v2722
      %v4493 = vsel %vm4443, %v4428, %v2724
      %v4495 = vsel %vm4443, %v4430, %v2726
      %v4497 = vsel %vm4443, %v4432, %v2728
      %v4499 = vsel %vm4443, %v4434, %v2730
      %v4501 = vsel %vm4443, %v4436, %v2732
      %v4503 = vsel %vm4443, %v4438, %v2734
      %v4505 = vsel %vm4443, %v4440, %v2736
      %v4507 = vsel %vm4443, %v4442, %v2738
      %vm4508 = vcmask 326656
      %v4510 = vsel %vm4508, %v4445, %v2884
      %v4511 = vsel %vm4508, %v4447, %v2884
      %v4513 = vsel %vm4508, %v4449, %v2886
      %v4514 = vsel %vm4508, %v4451, %v2886
      %v4516 = vsel %vm4508, %v4453, %v2888
      %v4517 = vsel %vm4508, %v4455, %v2888
      %v4519 = vsel %vm4508, %v4457, %v2890
      %v4520 = vsel %vm4508, %v4459, %v2890
      %v4522 = vsel %vm4508, %v4461, %v2892
      %v4523 = vsel %vm4508, %v4463, %v2892
      %v4525 = vsel %vm4508, %v4465, %v2894
      %v4526 = vsel %vm4508, %v4467, %v2894
      %v4528 = vsel %vm4508, %v4469, %v2896
      %v4529 = vsel %vm4508, %v4471, %v2896
      %v4531 = vsel %vm4508, %v4473, %v2898
      %v4532 = vsel %vm4508, %v4475, %v2898
      %v4534 = vsel %vm4508, %v4477, %v2900
      %v4535 = vsel %vm4508, %v4479, %v2900
      %v4537 = vsel %vm4508, %v4481, %v2902
      %v4538 = vsel %vm4508, %v4483, %v2902
      %v4540 = vsel %vm4508, %v4485, %v2904
      %v4541 = vsel %vm4508, %v4487, %v2904
      %v4543 = vsel %vm4508, %v4489, %v2906
      %v4544 = vsel %vm4508, %v4491, %v2906
      %v4546 = vsel %vm4508, %v4493, %v2908
      %v4547 = vsel %vm4508, %v4495, %v2908
      %v4549 = vsel %vm4508, %v4497, %v2910
      %v4550 = vsel %vm4508, %v4499, %v2910
      %v4552 = vsel %vm4508, %v4501, %v2912
      %v4553 = vsel %vm4508, %v4503, %v2912
      %v4555 = vsel %vm4508, %v4505, %v2914
      %v4556 = vsel %vm4508, %v4507, %v2914
      %vm4557 = vcmask 359424
      %v4559 = vsel %vm4557, %v4510, %v3012
      %v4561 = vsel %vm4557, %v4511, %v3014
      %v4563 = vsel %vm4557, %v4513, %v3016
      %v4565 = vsel %vm4557, %v4514, %v3018
      %v4567 = vsel %vm4557, %v4516, %v3020
      %v4569 = vsel %vm4557, %v4517, %v3022
      %v4571 = vsel %vm4557, %v4519, %v3024
      %v4573 = vsel %vm4557, %v4520, %v3026
      %v4575 = vsel %vm4557, %v4522, %v3028
      %v4577 = vsel %vm4557, %v4523, %v3030
      %v4579 = vsel %vm4557, %v4525, %v3032
      %v4581 = vsel %vm4557, %v4526, %v3034
      %v4583 = vsel %vm4557, %v4528, %v3036
      %v4585 = vsel %vm4557, %v4529, %v3038
      %v4587 = vsel %vm4557, %v4531, %v3040
      %v4589 = vsel %vm4557, %v4532, %v3042
      %v4591 = vsel %vm4557, %v4534, %v3044
      %v4593 = vsel %vm4557, %v4535, %v3046
      %v4595 = vsel %vm4557, %v4537, %v3048
      %v4597 = vsel %vm4557, %v4538, %v3050
      %v4599 = vsel %vm4557, %v4540, %v3052
      %v4601 = vsel %vm4557, %v4541, %v3054
      %v4603 = vsel %vm4557, %v4543, %v3056
      %v4605 = vsel %vm4557, %v4544, %v3058
      %v4607 = vsel %vm4557, %v4546, %v3060
      %v4609 = vsel %vm4557, %v4547, %v3062
      %v4611 = vsel %vm4557, %v4549, %v3064
      %v4613 = vsel %vm4557, %v4550, %v3066
      %v4615 = vsel %vm4557, %v4552, %v3068
      %v4617 = vsel %vm4557, %v4553, %v3070
      %v4619 = vsel %vm4557, %v4555, %v3072
      %v4621 = vsel %vm4557, %v4556, %v3074
      %vm4622 = vcmask 392192
      %v4624 = vsel %vm4622, %v4559, %v3268
      %v4626 = vsel %vm4622, %v4561, %v3270
      %v4628 = vsel %vm4622, %v4563, %v3272
      %v4630 = vsel %vm4622, %v4565, %v3274
      %v4632 = vsel %vm4622, %v4567, %v3276
      %v4634 = vsel %vm4622, %v4569, %v3278
      %v4636 = vsel %vm4622, %v4571, %v3280
      %v4638 = vsel %vm4622, %v4573, %v3282
      %v4640 = vsel %vm4622, %v4575, %v3284
      %v4642 = vsel %vm4622, %v4577, %v3286
      %v4644 = vsel %vm4622, %v4579, %v3288
      %v4646 = vsel %vm4622, %v4581, %v3290
      %v4648 = vsel %vm4622, %v4583, %v3292
      %v4650 = vsel %vm4622, %v4585, %v3294
      %v4652 = vsel %vm4622, %v4587, %v3296
      %v4654 = vsel %vm4622, %v4589, %v3298
      %v4656 = vsel %vm4622, %v4591, %v3300
      %v4658 = vsel %vm4622, %v4593, %v3302
      %v4660 = vsel %vm4622, %v4595, %v3304
      %v4662 = vsel %vm4622, %v4597, %v3306
      %v4664 = vsel %vm4622, %v4599, %v3308
      %v4666 = vsel %vm4622, %v4601, %v3310
      %v4668 = vsel %vm4622, %v4603, %v3312
      %v4670 = vsel %vm4622, %v4605, %v3314
      %v4672 = vsel %vm4622, %v4607, %v3316
      %v4674 = vsel %vm4622, %v4609, %v3318
      %v4676 = vsel %vm4622, %v4611, %v3320
      %v4678 = vsel %vm4622, %v4613, %v3322
      %v4680 = vsel %vm4622, %v4615, %v3324
      %v4682 = vsel %vm4622, %v4617, %v3326
      %v4684 = vsel %vm4622, %v4619, %v3328
      %v4686 = vsel %vm4622, %v4621, %v3330
      %vm4687 = vcmask 424960
      %v4689 = vsel %vm4687, %v4624, %v3380
      %v4691 = vsel %vm4687, %v4626, %v3382
      %v4693 = vsel %vm4687, %v4628, %v3384
      %v4695 = vsel %vm4687, %v4630, %v3386
      %v4697 = vsel %vm4687, %v4632, %v3388
      %v4699 = vsel %vm4687, %v4634, %v3390
      %v4701 = vsel %vm4687, %v4636, %v3392
      %v4703 = vsel %vm4687, %v4638, %v3394
      %v4705 = vsel %vm4687, %v4640, %v3396
      %v4707 = vsel %vm4687, %v4642, %v3398
      %v4709 = vsel %vm4687, %v4644, %v3400
      %v4711 = vsel %vm4687, %v4646, %v3402
      %v4713 = vsel %vm4687, %v4648, %v3404
      %v4715 = vsel %vm4687, %v4650, %v3406
      %v4717 = vsel %vm4687, %v4652, %v3408
      %v4719 = vsel %vm4687, %v4654, %v3410
      %v4721 = vsel %vm4687, %v4656, %v3412
      %v4723 = vsel %vm4687, %v4658, %v3414
      %v4725 = vsel %vm4687, %v4660, %v3416
      %v4727 = vsel %vm4687, %v4662, %v3418
      %v4729 = vsel %vm4687, %v4664, %v3420
      %v4731 = vsel %vm4687, %v4666, %v3422
      %v4733 = vsel %vm4687, %v4668, %v3424
      %v4735 = vsel %vm4687, %v4670, %v3426
      %v4737 = vsel %vm4687, %v4672, %v3428
      %v4739 = vsel %vm4687, %v4674, %v3430
      %v4741 = vsel %vm4687, %v4676, %v3432
      %v4743 = vsel %vm4687, %v4678, %v3434
      %v4745 = vsel %vm4687, %v4680, %v3436
      %v4747 = vsel %vm4687, %v4682, %v3438
      %v4749 = vsel %vm4687, %v4684, %v3440
      %v4751 = vsel %vm4687, %v4686, %v3442
      %vm4752 = vcmask 457728
      %v4754 = vsel %vm4752, %v4689, %v3572
      %v4756 = vsel %vm4752, %v4691, %v3574
      %v4758 = vsel %vm4752, %v4693, %v3576
      %v4760 = vsel %vm4752, %v4695, %v3578
      %v4762 = vsel %vm4752, %v4697, %v3580
      %v4764 = vsel %vm4752, %v4699, %v3582
      %v4766 = vsel %vm4752, %v4701, %v3584
      %v4768 = vsel %vm4752, %v4703, %v3586
      %v4770 = vsel %vm4752, %v4705, %v3588
      %v4772 = vsel %vm4752, %v4707, %v3590
      %v4774 = vsel %vm4752, %v4709, %v3592
      %v4776 = vsel %vm4752, %v4711, %v3594
      %v4778 = vsel %vm4752, %v4713, %v3596
      %v4780 = vsel %vm4752, %v4715, %v3598
      %v4782 = vsel %vm4752, %v4717, %v3600
      %v4784 = vsel %vm4752, %v4719, %v3602
      %v4786 = vsel %vm4752, %v4721, %v3604
      %v4788 = vsel %vm4752, %v4723, %v3606
      %v4790 = vsel %vm4752, %v4725, %v3608
      %v4792 = vsel %vm4752, %v4727, %v3610
      %v4794 = vsel %vm4752, %v4729, %v3612
      %v4796 = vsel %vm4752, %v4731, %v3614
      %v4798 = vsel %vm4752, %v4733, %v3616
      %v4800 = vsel %vm4752, %v4735, %v3618
      %v4802 = vsel %vm4752, %v4737, %v3620
      %v4804 = vsel %vm4752, %v4739, %v3622
      %v4806 = vsel %vm4752, %v4741, %v3624
      %v4808 = vsel %vm4752, %v4743, %v3626
      %v4810 = vsel %vm4752, %v4745, %v3628
      %v4812 = vsel %vm4752, %v4747, %v3630
      %v4814 = vsel %vm4752, %v4749, %v3632
      %v4816 = vsel %vm4752, %v4751, %v3634
      %vm4817 = vcmask 490496
      %v4819 = vsel %vm4817, %v4754, %v3876
      %v4821 = vsel %vm4817, %v4756, %v3878
      %v4823 = vsel %vm4817, %v4758, %v3880
      %v4825 = vsel %vm4817, %v4760, %v3882
      %v4827 = vsel %vm4817, %v4762, %v3884
      %v4829 = vsel %vm4817, %v4764, %v3886
      %v4831 = vsel %vm4817, %v4766, %v3888
      %v4833 = vsel %vm4817, %v4768, %v3890
      %v4835 = vsel %vm4817, %v4770, %v3892
      %v4837 = vsel %vm4817, %v4772, %v3894
      %v4839 = vsel %vm4817, %v4774, %v3896
      %v4841 = vsel %vm4817, %v4776, %v3898
      %v4843 = vsel %vm4817, %v4778, %v3900
      %v4845 = vsel %vm4817, %v4780, %v3902
      %v4847 = vsel %vm4817, %v4782, %v3904
      %v4849 = vsel %vm4817, %v4784, %v3906
      %v4851 = vsel %vm4817, %v4786, %v3908
      %v4853 = vsel %vm4817, %v4788, %v3910
      %v4855 = vsel %vm4817, %v4790, %v3912
      %v4857 = vsel %vm4817, %v4792, %v3914
      %v4859 = vsel %vm4817, %v4794, %v3916
      %v4861 = vsel %vm4817, %v4796, %v3918
      %v4863 = vsel %vm4817, %v4798, %v3920
      %v4865 = vsel %vm4817, %v4800, %v3922
      %v4867 = vsel %vm4817, %v4802, %v3924
      %v4869 = vsel %vm4817, %v4804, %v3926
      %v4871 = vsel %vm4817, %v4806, %v3928
      %v4873 = vsel %vm4817, %v4808, %v3930
      %v4875 = vsel %vm4817, %v4810, %v3932
      %v4877 = vsel %vm4817, %v4812, %v3934
      %v4879 = vsel %vm4817, %v4814, %v3936
      %v4881 = vsel %vm4817, %v4816, %v3938
      %v4882 = vpack.c.b16 %v3493, %v3492
      %v4883 = vpack.c.b16 %v3496, %v3495
      %v4884 = vpack.c.b16 %v3499, %v3498
      %v4885 = vpack.c.b16 %v3502, %v3501
      %v4886 = vpack.c.b16 %v3505, %v3504
      %v4887 = vpack.c.b16 %v3508, %v3507
      %v4888 = vpack.c.b16 %v3511, %v3510
      %v4889 = vpack.c.b16 %v3514, %v3513
      %v4890 = vpack.c.b16 %v3517, %v3516
      %v4891 = vpack.c.b16 %v3520, %v3519
      %v4892 = vpack.c.b16 %v3523, %v3522
      %v4893 = vpack.c.b16 %v3526, %v3525
      %v4894 = vpack.c.b16 %v3529, %v3528
      %v4895 = vpack.c.b16 %v3532, %v3531
      %v4896 = vpack.c.b16 %v3535, %v3534
      %v4897 = vpack.c.b16 %v3538, %v3537
      %v4899 = vshrl.u32 %v4882, 16
      %v4901 = vrot.slane %v4899, 4
      %v4902 = vshll.u32 %v4882, 16
      %v4904 = vrot.slane %v4902, 5
      %v4905 = vor.u32 %v4901, %v4904
      %v4907 = vshrl.u32 %v4883, 16
      %v4909 = vrot.slane %v4907, 4
      %v4910 = vshll.u32 %v4883, 16
      %v4912 = vrot.slane %v4910, 5
      %v4913 = vor.u32 %v4909, %v4912
      %v4915 = vshrl.u32 %v4884, 16
      %v4917 = vrot.slane %v4915, 4
      %v4918 = vshll.u32 %v4884, 16
      %v4920 = vrot.slane %v4918, 5
      %v4921 = vor.u32 %v4917, %v4920
      %v4923 = vshrl.u32 %v4885, 16
      %v4925 = vrot.slane %v4923, 4
      %v4926 = vshll.u32 %v4885, 16
      %v4928 = vrot.slane %v4926, 5
      %v4929 = vor.u32 %v4925, %v4928
      %v4931 = vshrl.u32 %v4886, 16
      %v4933 = vrot.slane %v4931, 4
      %v4934 = vshll.u32 %v4886, 16
      %v4936 = vrot.slane %v4934, 5
      %v4937 = vor.u32 %v4933, %v4936
      %v4939 = vshrl.u32 %v4887, 16
      %v4941 = vrot.slane %v4939, 4
      %v4942 = vshll.u32 %v4887, 16
      %v4944 = vrot.slane %v4942, 5
      %v4945 = vor.u32 %v4941, %v4944
      %v4947 = vshrl.u32 %v4888, 16
      %v4949 = vrot.slane %v4947, 4
      %v4950 = vshll.u32 %v4888, 16
      %v4952 = vrot.slane %v4950, 5
      %v4953 = vor.u32 %v4949, %v4952
      %v4955 = vshrl.u32 %v4889, 16
      %v4957 = vrot.slane %v4955, 4
      %v4958 = vshll.u32 %v4889, 16
      %v4960 = vrot.slane %v4958, 5
      %v4961 = vor.u32 %v4957, %v4960
      %v4963 = vshrl.u32 %v4890, 16
      %v4965 = vrot.slane %v4963, 4
      %v4966 = vshll.u32 %v4890, 16
      %v4968 = vrot.slane %v4966, 5
      %v4969 = vor.u32 %v4965, %v4968
      %v4971 = vshrl.u32 %v4891, 16
      %v4973 = vrot.slane %v4971, 4
      %v4974 = vshll.u32 %v4891, 16
      %v4976 = vrot.slane %v4974, 5
      %v4977 = vor.u32 %v4973, %v4976
      %v4979 = vshrl.u32 %v4892, 16
      %v4981 = vrot.slane %v4979, 4
      %v4982 = vshll.u32 %v4892, 16
      %v4984 = vrot.slane %v4982, 5
      %v4985 = vor.u32 %v4981, %v4984
      %v4987 = vshrl.u32 %v4893, 16
      %v4989 = vrot.slane %v4987, 4
      %v4990 = vshll.u32 %v4893, 16
      %v4992 = vrot.slane %v4990, 5
      %v4993 = vor.u32 %v4989, %v4992
      %v4995 = vshrl.u32 %v4894, 16
      %v4997 = vrot.slane %v4995, 4
      %v4998 = vshll.u32 %v4894, 16
      %v5000 = vrot.slane %v4998, 5
      %v5001 = vor.u32 %v4997, %v5000
      %v5003 = vshrl.u32 %v4895, 16
      %v5005 = vrot.slane %v5003, 4
      %v5006 = vshll.u32 %v4895, 16
      %v5008 = vrot.slane %v5006, 5
      %v5009 = vor.u32 %v5005, %v5008
      %v5011 = vshrl.u32 %v4896, 16
      %v5013 = vrot.slane %v5011, 4
      %v5014 = vshll.u32 %v4896, 16
      %v5016 = vrot.slane %v5014, 5
      %v5017 = vor.u32 %v5013, %v5016
      %v5019 = vshrl.u32 %v4897, 16
      %v5021 = vrot.slane %v5019, 4
      %v5022 = vshll.u32 %v4897, 16
      %v5024 = vrot.slane %v5022, 5
      %v5025 = vor.u32 %v5021, %v5024
      %5026 = vrot.lane.b32.xlu0 %v4905, 4
      %v5027 = vpop.permute.xlu0 %5026
      %5028 = vrot.lane.b32.xlu0 %v4913, 4
      %v5029 = vpop.permute.xlu0 %5028
      %5030 = vrot.lane.b32.xlu0 %v4921, 4
      %v5031 = vpop.permute.xlu0 %5030
      %5032 = vrot.lane.b32.xlu0 %v4929, 4
      %v5033 = vpop.permute.xlu0 %5032
      %5034 = vrot.lane.b32.xlu0 %v4937, 4
      %v5035 = vpop.permute.xlu0 %5034
      %5036 = vrot.lane.b32.xlu0 %v4945, 4
      %v5037 = vpop.permute.xlu0 %5036
      %5038 = vrot.lane.b32.xlu0 %v4953, 4
      %v5039 = vpop.permute.xlu0 %5038
      %5040 = vrot.lane.b32.xlu0 %v4961, 4
      %v5041 = vpop.permute.xlu0 %5040
      %5042 = vrot.lane.b32.xlu0 %v4969, 4
      %v5043 = vpop.permute.xlu0 %5042
      %5044 = vrot.lane.b32.xlu0 %v4977, 4
      %v5045 = vpop.permute.xlu0 %5044
      %5046 = vrot.lane.b32.xlu0 %v4985, 4
      %v5047 = vpop.permute.xlu0 %5046
      %5048 = vrot.lane.b32.xlu0 %v4993, 4
      %v5049 = vpop.permute.xlu0 %5048
      %5050 = vrot.lane.b32.xlu0 %v5001, 4
      %v5051 = vpop.permute.xlu0 %5050
      %5052 = vrot.lane.b32.xlu0 %v5009, 4
      %v5053 = vpop.permute.xlu0 %5052
      %5054 = vrot.lane.b32.xlu0 %v5017, 4
      %v5055 = vpop.permute.xlu0 %5054
      %5056 = vrot.lane.b32.xlu0 %v5025, 4
      %v5057 = vpop.permute.xlu0 %5056
      %v5074 = vunpack.c.l.b16 %v545
      %v5075 = vunpack.c.l.b16 %v549
      %v5076 = vunpack.c.l.b16 %v553
      %v5077 = vunpack.c.l.b16 %v557
      %v5078 = vunpack.c.l.b16 %v561
      %v5079 = vunpack.c.l.b16 %v565
      %v5080 = vunpack.c.l.b16 %v569
      %v5081 = vunpack.c.l.b16 %v573
      %v5082 = vunpack.c.l.b16 %v577
      %v5083 = vunpack.c.l.b16 %v581
      %v5084 = vunpack.c.l.b16 %v585
      %v5085 = vunpack.c.l.b16 %v589
      %v5086 = vunpack.c.l.b16 %v593
      %v5087 = vunpack.c.l.b16 %v597
      %v5088 = vunpack.c.l.b16 %v601
      %v5089 = vunpack.c.l.b16 %v605
      %v5090 = vpack.c.b16 %v5074, %v5074
      %v5091 = vpack.c.b16 %v5075, %v5075
      %v5092 = vpack.c.b16 %v5076, %v5076
      %v5093 = vpack.c.b16 %v5077, %v5077
      %v5094 = vpack.c.b16 %v5078, %v5078
      %v5095 = vpack.c.b16 %v5079, %v5079
      %v5096 = vpack.c.b16 %v5080, %v5080
      %v5097 = vpack.c.b16 %v5081, %v5081
      %v5098 = vpack.c.b16 %v5082, %v5082
      %v5099 = vpack.c.b16 %v5083, %v5083
      %v5100 = vpack.c.b16 %v5084, %v5084
      %v5101 = vpack.c.b16 %v5085, %v5085
      %v5102 = vpack.c.b16 %v5086, %v5086
      %v5103 = vpack.c.b16 %v5087, %v5087
      %v5104 = vpack.c.b16 %v5088, %v5088
      %v5105 = vpack.c.b16 %v5089, %v5089
      %vm5106 = vcmask 1042432
      %v5107 = vrot.slane %v4882, 5
      %v5108 = vrot.slane %v5090, 5
      %v5109 = vsel %vm5106, %v5107, %v5108
      %v5110 = vrot.slane %v4883, 5
      %v5111 = vrot.slane %v5091, 5
      %v5112 = vsel %vm5106, %v5110, %v5111
      %v5113 = vrot.slane %v4884, 5
      %v5114 = vrot.slane %v5092, 5
      %v5115 = vsel %vm5106, %v5113, %v5114
      %v5116 = vrot.slane %v4885, 5
      %v5117 = vrot.slane %v5093, 5
      %v5118 = vsel %vm5106, %v5116, %v5117
      %v5119 = vrot.slane %v4886, 5
      %v5120 = vrot.slane %v5094, 5
      %v5121 = vsel %vm5106, %v5119, %v5120
      %v5122 = vrot.slane %v4887, 5
      %v5123 = vrot.slane %v5095, 5
      %v5124 = vsel %vm5106, %v5122, %v5123
      %v5125 = vrot.slane %v4888, 5
      %v5126 = vrot.slane %v5096, 5
      %v5127 = vsel %vm5106, %v5125, %v5126
      %v5128 = vrot.slane %v4889, 5
      %v5129 = vrot.slane %v5097, 5
      %v5130 = vsel %vm5106, %v5128, %v5129
      %v5131 = vrot.slane %v4890, 5
      %v5132 = vrot.slane %v5098, 5
      %v5133 = vsel %vm5106, %v5131, %v5132
      %v5134 = vrot.slane %v4891, 5
      %v5135 = vrot.slane %v5099, 5
      %v5136 = vsel %vm5106, %v5134, %v5135
      %v5137 = vrot.slane %v4892, 5
      %v5138 = vrot.slane %v5100, 5
      %v5139 = vsel %vm5106, %v5137, %v5138
      %v5140 = vrot.slane %v4893, 5
      %v5141 = vrot.slane %v5101, 5
      %v5142 = vsel %vm5106, %v5140, %v5141
      %v5143 = vrot.slane %v4894, 5
      %v5144 = vrot.slane %v5102, 5
      %v5145 = vsel %vm5106, %v5143, %v5144
      %v5146 = vrot.slane %v4895, 5
      %v5147 = vrot.slane %v5103, 5
      %v5148 = vsel %vm5106, %v5146, %v5147
      %v5149 = vrot.slane %v4896, 5
      %v5150 = vrot.slane %v5104, 5
      %v5151 = vsel %vm5106, %v5149, %v5150
      %v5152 = vrot.slane %v4897, 5
      %v5153 = vrot.slane %v5105, 5
      %v5154 = vsel %vm5106, %v5152, %v5153
      %5155 = vrot.lane.b32.xlu0 %v5107, 8
      %v5156 = vpop.permute.xlu0 %5155
      %5157 = vrot.lane.b32.xlu0 %v5109, 8
      %v5158 = vpop.permute.xlu0 %5157
      %5159 = vrot.lane.b32.xlu0 %v5110, 8
      %v5160 = vpop.permute.xlu0 %5159
      %5161 = vrot.lane.b32.xlu0 %v5112, 8
      %v5162 = vpop.permute.xlu0 %5161
      %5163 = vrot.lane.b32.xlu0 %v5113, 8
      %v5164 = vpop.permute.xlu0 %5163
      %5165 = vrot.lane.b32.xlu0 %v5115, 8
      %v5166 = vpop.permute.xlu0 %5165
      %5167 = vrot.lane.b32.xlu0 %v5116, 8
      %v5168 = vpop.permute.xlu0 %5167
      %5169 = vrot.lane.b32.xlu0 %v5118, 8
      %v5170 = vpop.permute.xlu0 %5169
      %5171 = vrot.lane.b32.xlu0 %v5119, 8
      %v5172 = vpop.permute.xlu0 %5171
      %5173 = vrot.lane.b32.xlu0 %v5121, 8
      %v5174 = vpop.permute.xlu0 %5173
      %5175 = vrot.lane.b32.xlu0 %v5122, 8
      %v5176 = vpop.permute.xlu0 %5175
      %5177 = vrot.lane.b32.xlu0 %v5124, 8
      %v5178 = vpop.permute.xlu0 %5177
      %5179 = vrot.lane.b32.xlu0 %v5125, 8
      %v5180 = vpop.permute.xlu0 %5179
      %5181 = vrot.lane.b32.xlu0 %v5127, 8
      %v5182 = vpop.permute.xlu0 %5181
      %5183 = vrot.lane.b32.xlu0 %v5128, 8
      %v5184 = vpop.permute.xlu0 %5183
      %5185 = vrot.lane.b32.xlu0 %v5130, 8
      %v5186 = vpop.permute.xlu0 %5185
      %5187 = vrot.lane.b32.xlu0 %v5131, 8
      %v5188 = vpop.permute.xlu0 %5187
      %5189 = vrot.lane.b32.xlu0 %v5133, 8
      %v5190 = vpop.permute.xlu0 %5189
      %5191 = vrot.lane.b32.xlu0 %v5134, 8
      %v5192 = vpop.permute.xlu0 %5191
      %5193 = vrot.lane.b32.xlu0 %v5136, 8
      %v5194 = vpop.permute.xlu0 %5193
      %5195 = vrot.lane.b32.xlu0 %v5137, 8
      %v5196 = vpop.permute.xlu0 %5195
      %5197 = vrot.lane.b32.xlu0 %v5139, 8
      %v5198 = vpop.permute.xlu0 %5197
      %5199 = vrot.lane.b32.xlu0 %v5140, 8
      %v5200 = vpop.permute.xlu0 %5199
      %5201 = vrot.lane.b32.xlu0 %v5142, 8
      %v5202 = vpop.permute.xlu0 %5201
      %5203 = vrot.lane.b32.xlu0 %v5143, 8
      %v5204 = vpop.permute.xlu0 %5203
      %5205 = vrot.lane.b32.xlu0 %v5145, 8
      %v5206 = vpop.permute.xlu0 %5205
      %5207 = vrot.lane.b32.xlu0 %v5146, 8
      %v5208 = vpop.permute.xlu0 %5207
      %5209 = vrot.lane.b32.xlu0 %v5148, 8
      %v5210 = vpop.permute.xlu0 %5209
      %5211 = vrot.lane.b32.xlu0 %v5149, 8
      %v5212 = vpop.permute.xlu0 %5211
      %5213 = vrot.lane.b32.xlu0 %v5151, 8
      %v5214 = vpop.permute.xlu0 %5213
      %5215 = vrot.lane.b32.xlu0 %v5152, 8
      %v5216 = vpop.permute.xlu0 %5215
      %5217 = vrot.lane.b32.xlu0 %v5154, 8
      %v5218 = vpop.permute.xlu0 %5217
      %vm5219 = vsmask.f32 2304
      %v5220 = vrot.slane %v4899, 5
      %v5221 = vrot.slane %v4902, 6
      %v5222 = vor.u32 %v5220, %v5221
      %v5224 = vshrl.u32 %v5090, 16
      %v5226 = vrot.slane %v5224, 5
      %v5227 = vshll.u32 %v5090, 16
      %v5229 = vrot.slane %v5227, 6
      %v5230 = vor.u32 %v5226, %v5229
      %v5231 = vsel %vm5219, %v5222, %v5230
      %v5232 = vrot.slane %v4907, 5
      %v5233 = vrot.slane %v4910, 6
      %v5234 = vor.u32 %v5232, %v5233
      %v5236 = vshrl.u32 %v5091, 16
      %v5238 = vrot.slane %v5236, 5
      %v5239 = vshll.u32 %v5091, 16
      %v5241 = vrot.slane %v5239, 6
      %v5242 = vor.u32 %v5238, %v5241
      %v5243 = vsel %vm5219, %v5234, %v5242
      %v5244 = vrot.slane %v4915, 5
      %v5245 = vrot.slane %v4918, 6
      %v5246 = vor.u32 %v5244, %v5245
      %v5248 = vshrl.u32 %v5092, 16
      %v5250 = vrot.slane %v5248, 5
      %v5251 = vshll.u32 %v5092, 16
      %v5253 = vrot.slane %v5251, 6
      %v5254 = vor.u32 %v5250, %v5253
      %v5255 = vsel %vm5219, %v5246, %v5254
      %v5256 = vrot.slane %v4923, 5
      %v5257 = vrot.slane %v4926, 6
      %v5258 = vor.u32 %v5256, %v5257
      %v5260 = vshrl.u32 %v5093, 16
      %v5262 = vrot.slane %v5260, 5
      %v5263 = vshll.u32 %v5093, 16
      %v5265 = vrot.slane %v5263, 6
      %v5266 = vor.u32 %v5262, %v5265
      %v5267 = vsel %vm5219, %v5258, %v5266
      %v5268 = vrot.slane %v4931, 5
      %v5269 = vrot.slane %v4934, 6
      %v5270 = vor.u32 %v5268, %v5269
      %v5272 = vshrl.u32 %v5094, 16
      %v5274 = vrot.slane %v5272, 5
      %v5275 = vshll.u32 %v5094, 16
      %v5277 = vrot.slane %v5275, 6
      %v5278 = vor.u32 %v5274, %v5277
      %v5279 = vsel %vm5219, %v5270, %v5278
      %v5280 = vrot.slane %v4939, 5
      %v5281 = vrot.slane %v4942, 6
      %v5282 = vor.u32 %v5280, %v5281
      %v5284 = vshrl.u32 %v5095, 16
      %v5286 = vrot.slane %v5284, 5
      %v5287 = vshll.u32 %v5095, 16
      %v5289 = vrot.slane %v5287, 6
      %v5290 = vor.u32 %v5286, %v5289
      %v5291 = vsel %vm5219, %v5282, %v5290
      %v5292 = vrot.slane %v4947, 5
      %v5293 = vrot.slane %v4950, 6
      %v5294 = vor.u32 %v5292, %v5293
      %v5296 = vshrl.u32 %v5096, 16
      %v5298 = vrot.slane %v5296, 5
      %v5299 = vshll.u32 %v5096, 16
      %v5301 = vrot.slane %v5299, 6
      %v5302 = vor.u32 %v5298, %v5301
      %v5303 = vsel %vm5219, %v5294, %v5302
      %v5304 = vrot.slane %v4955, 5
      %v5305 = vrot.slane %v4958, 6
      %v5306 = vor.u32 %v5304, %v5305
      %v5308 = vshrl.u32 %v5097, 16
      %v5310 = vrot.slane %v5308, 5
      %v5311 = vshll.u32 %v5097, 16
      %v5313 = vrot.slane %v5311, 6
      %v5314 = vor.u32 %v5310, %v5313
      %v5315 = vsel %vm5219, %v5306, %v5314
      %v5316 = vrot.slane %v4963, 5
      %v5317 = vrot.slane %v4966, 6
      %v5318 = vor.u32 %v5316, %v5317
      %v5320 = vshrl.u32 %v5098, 16
      %v5322 = vrot.slane %v5320, 5
      %v5323 = vshll.u32 %v5098, 16
      %v5325 = vrot.slane %v5323, 6
      %v5326 = vor.u32 %v5322, %v5325
      %v5327 = vsel %vm5219, %v5318, %v5326
      %v5328 = vrot.slane %v4971, 5
      %v5329 = vrot.slane %v4974, 6
      %v5330 = vor.u32 %v5328, %v5329
      %v5332 = vshrl.u32 %v5099, 16
      %v5334 = vrot.slane %v5332, 5
      %v5335 = vshll.u32 %v5099, 16
      %v5337 = vrot.slane %v5335, 6
      %v5338 = vor.u32 %v5334, %v5337
      %v5339 = vsel %vm5219, %v5330, %v5338
      %v5340 = vrot.slane %v4979, 5
      %v5341 = vrot.slane %v4982, 6
      %v5342 = vor.u32 %v5340, %v5341
      %v5344 = vshrl.u32 %v5100, 16
      %v5346 = vrot.slane %v5344, 5
      %v5347 = vshll.u32 %v5100, 16
      %v5349 = vrot.slane %v5347, 6
      %v5350 = vor.u32 %v5346, %v5349
      %v5351 = vsel %vm5219, %v5342, %v5350
      %v5352 = vrot.slane %v4987, 5
      %v5353 = vrot.slane %v4990, 6
      %v5354 = vor.u32 %v5352, %v5353
      %v5356 = vshrl.u32 %v5101, 16
      %v5358 = vrot.slane %v5356, 5
      %v5359 = vshll.u32 %v5101, 16
      %v5361 = vrot.slane %v5359, 6
      %v5362 = vor.u32 %v5358, %v5361
      %v5363 = vsel %vm5219, %v5354, %v5362
      %v5364 = vrot.slane %v4995, 5
      %v5365 = vrot.slane %v4998, 6
      %v5366 = vor.u32 %v5364, %v5365
      %v5368 = vshrl.u32 %v5102, 16
      %v5370 = vrot.slane %v5368, 5
      %v5371 = vshll.u32 %v5102, 16
      %v5373 = vrot.slane %v5371, 6
      %v5374 = vor.u32 %v5370, %v5373
      %v5375 = vsel %vm5219, %v5366, %v5374
      %v5376 = vrot.slane %v5003, 5
      %v5377 = vrot.slane %v5006, 6
      %v5378 = vor.u32 %v5376, %v5377
      %v5380 = vshrl.u32 %v5103, 16
      %v5382 = vrot.slane %v5380, 5
      %v5383 = vshll.u32 %v5103, 16
      %v5385 = vrot.slane %v5383, 6
      %v5386 = vor.u32 %v5382, %v5385
      %v5387 = vsel %vm5219, %v5378, %v5386
      %v5388 = vrot.slane %v5011, 5
      %v5389 = vrot.slane %v5014, 6
      %v5390 = vor.u32 %v5388, %v5389
      %v5392 = vshrl.u32 %v5104, 16
      %v5394 = vrot.slane %v5392, 5
      %v5395 = vshll.u32 %v5104, 16
      %v5397 = vrot.slane %v5395, 6
      %v5398 = vor.u32 %v5394, %v5397
      %v5399 = vsel %vm5219, %v5390, %v5398
      %v5400 = vrot.slane %v5019, 5
      %v5401 = vrot.slane %v5022, 6
      %v5402 = vor.u32 %v5400, %v5401
      %v5404 = vshrl.u32 %v5105, 16
      %v5406 = vrot.slane %v5404, 5
      %v5407 = vshll.u32 %v5105, 16
      %v5409 = vrot.slane %v5407, 6
      %v5410 = vor.u32 %v5406, %v5409
      %v5411 = vsel %vm5219, %v5402, %v5410
      %5412 = vrot.lane.b32.xlu0 %v5222, 12
      %v5413 = vpop.permute.xlu0 %5412
      %5414 = vrot.lane.b32.xlu0 %v5231, 12
      %v5415 = vpop.permute.xlu0 %5414
      %5416 = vrot.lane.b32.xlu0 %v5234, 12
      %v5417 = vpop.permute.xlu0 %5416
      %5418 = vrot.lane.b32.xlu0 %v5243, 12
      %v5419 = vpop.permute.xlu0 %5418
      %5420 = vrot.lane.b32.xlu0 %v5246, 12
      %v5421 = vpop.permute.xlu0 %5420
      %5422 = vrot.lane.b32.xlu0 %v5255, 12
      %v5423 = vpop.permute.xlu0 %5422
      %5424 = vrot.lane.b32.xlu0 %v5258, 12
      %v5425 = vpop.permute.xlu0 %5424
      %5426 = vrot.lane.b32.xlu0 %v5267, 12
      %v5427 = vpop.permute.xlu0 %5426
      %5428 = vrot.lane.b32.xlu0 %v5270, 12
      %v5429 = vpop.permute.xlu0 %5428
      %5430 = vrot.lane.b32.xlu0 %v5279, 12
      %v5431 = vpop.permute.xlu0 %5430
      %5432 = vrot.lane.b32.xlu0 %v5282, 12
      %v5433 = vpop.permute.xlu0 %5432
      %5434 = vrot.lane.b32.xlu0 %v5291, 12
      %v5435 = vpop.permute.xlu0 %5434
      %5436 = vrot.lane.b32.xlu0 %v5294, 12
      %v5437 = vpop.permute.xlu0 %5436
      %5438 = vrot.lane.b32.xlu0 %v5303, 12
      %v5439 = vpop.permute.xlu0 %5438
      %5440 = vrot.lane.b32.xlu0 %v5306, 12
      %v5441 = vpop.permute.xlu0 %5440
      %5442 = vrot.lane.b32.xlu0 %v5315, 12
      %v5443 = vpop.permute.xlu0 %5442
      %5444 = vrot.lane.b32.xlu0 %v5318, 12
      %v5445 = vpop.permute.xlu0 %5444
      %5446 = vrot.lane.b32.xlu0 %v5327, 12
      %v5447 = vpop.permute.xlu0 %5446
      %5448 = vrot.lane.b32.xlu0 %v5330, 12
      %v5449 = vpop.permute.xlu0 %5448
      %5450 = vrot.lane.b32.xlu0 %v5339, 12
      %v5451 = vpop.permute.xlu0 %5450
      %5452 = vrot.lane.b32.xlu0 %v5342, 12
      %v5453 = vpop.permute.xlu0 %5452
      %5454 = vrot.lane.b32.xlu0 %v5351, 12
      %v5455 = vpop.permute.xlu0 %5454
      %5456 = vrot.lane.b32.xlu0 %v5354, 12
      %v5457 = vpop.permute.xlu0 %5456
      %5458 = vrot.lane.b32.xlu0 %v5363, 12
      %v5459 = vpop.permute.xlu0 %5458
      %5460 = vrot.lane.b32.xlu0 %v5366, 12
      %v5461 = vpop.permute.xlu0 %5460
      %5462 = vrot.lane.b32.xlu0 %v5375, 12
      %v5463 = vpop.permute.xlu0 %5462
      %5464 = vrot.lane.b32.xlu0 %v5378, 12
      %v5465 = vpop.permute.xlu0 %5464
      %5466 = vrot.lane.b32.xlu0 %v5387, 12
      %v5467 = vpop.permute.xlu0 %5466
      %5468 = vrot.lane.b32.xlu0 %v5390, 12
      %v5469 = vpop.permute.xlu0 %5468
      %5470 = vrot.lane.b32.xlu0 %v5399, 12
      %v5471 = vpop.permute.xlu0 %5470
      %5472 = vrot.lane.b32.xlu0 %v5402, 12
      %v5473 = vpop.permute.xlu0 %5472
      %5474 = vrot.lane.b32.xlu0 %v5411, 12
      %v5475 = vpop.permute.xlu0 %5474
      %v5476 = vrot.slane %v4882, 6
      %v5477 = vrot.slane %v5090, 6
      %v5478 = vsel %vm1648, %v5476, %v5477
      %v5479 = vrot.slane %v4883, 6
      %v5480 = vrot.slane %v5091, 6
      %v5481 = vsel %vm1648, %v5479, %v5480
      %v5482 = vrot.slane %v4884, 6
      %v5483 = vrot.slane %v5092, 6
      %v5484 = vsel %vm1648, %v5482, %v5483
      %v5485 = vrot.slane %v4885, 6
      %v5486 = vrot.slane %v5093, 6
      %v5487 = vsel %vm1648, %v5485, %v5486
      %v5488 = vrot.slane %v4886, 6
      %v5489 = vrot.slane %v5094, 6
      %v5490 = vsel %vm1648, %v5488, %v5489
      %v5491 = vrot.slane %v4887, 6
      %v5492 = vrot.slane %v5095, 6
      %v5493 = vsel %vm1648, %v5491, %v5492
      %v5494 = vrot.slane %v4888, 6
      %v5495 = vrot.slane %v5096, 6
      %v5496 = vsel %vm1648, %v5494, %v5495
      %v5497 = vrot.slane %v4889, 6
      %v5498 = vrot.slane %v5097, 6
      %v5499 = vsel %vm1648, %v5497, %v5498
      %v5500 = vrot.slane %v4890, 6
      %v5501 = vrot.slane %v5098, 6
      %v5502 = vsel %vm1648, %v5500, %v5501
      %v5503 = vrot.slane %v4891, 6
      %v5504 = vrot.slane %v5099, 6
      %v5505 = vsel %vm1648, %v5503, %v5504
      %v5506 = vrot.slane %v4892, 6
      %v5507 = vrot.slane %v5100, 6
      %v5508 = vsel %vm1648, %v5506, %v5507
      %v5509 = vrot.slane %v4893, 6
      %v5510 = vrot.slane %v5101, 6
      %v5511 = vsel %vm1648, %v5509, %v5510
      %v5512 = vrot.slane %v4894, 6
      %v5513 = vrot.slane %v5102, 6
      %v5514 = vsel %vm1648, %v5512, %v5513
      %v5515 = vrot.slane %v4895, 6
      %v5516 = vrot.slane %v5103, 6
      %v5517 = vsel %vm1648, %v5515, %v5516
      %v5518 = vrot.slane %v4896, 6
      %v5519 = vrot.slane %v5104, 6
      %v5520 = vsel %vm1648, %v5518, %v5519
      %v5521 = vrot.slane %v4897, 6
      %v5522 = vrot.slane %v5105, 6
      %v5523 = vsel %vm1648, %v5521, %v5522
      %5524 = vrot.lane.b32.xlu0 %v5476, 16
      %v5525 = vpop.permute.xlu0 %5524
      %5526 = vrot.lane.b32.xlu0 %v5478, 16
      %v5527 = vpop.permute.xlu0 %5526
      %5528 = vrot.lane.b32.xlu0 %v5479, 16
      %v5529 = vpop.permute.xlu0 %5528
      %5530 = vrot.lane.b32.xlu0 %v5481, 16
      %v5531 = vpop.permute.xlu0 %5530
      %5532 = vrot.lane.b32.xlu0 %v5482, 16
      %v5533 = vpop.permute.xlu0 %5532
      %5534 = vrot.lane.b32.xlu0 %v5484, 16
      %v5535 = vpop.permute.xlu0 %5534
      %5536 = vrot.lane.b32.xlu0 %v5485, 16
      %v5537 = vpop.permute.xlu0 %5536
      %5538 = vrot.lane.b32.xlu0 %v5487, 16
      %v5539 = vpop.permute.xlu0 %5538
      %5540 = vrot.lane.b32.xlu0 %v5488, 16
      %v5541 = vpop.permute.xlu0 %5540
      %5542 = vrot.lane.b32.xlu0 %v5490, 16
      %v5543 = vpop.permute.xlu0 %5542
      %5544 = vrot.lane.b32.xlu0 %v5491, 16
      %v5545 = vpop.permute.xlu0 %5544
      %5546 = vrot.lane.b32.xlu0 %v5493, 16
      %v5547 = vpop.permute.xlu0 %5546
      %5548 = vrot.lane.b32.xlu0 %v5494, 16
      %v5549 = vpop.permute.xlu0 %5548
      %5550 = vrot.lane.b32.xlu0 %v5496, 16
      %v5551 = vpop.permute.xlu0 %5550
      %5552 = vrot.lane.b32.xlu0 %v5497, 16
      %v5553 = vpop.permute.xlu0 %5552
      %5554 = vrot.lane.b32.xlu0 %v5499, 16
      %v5555 = vpop.permute.xlu0 %5554
      %5556 = vrot.lane.b32.xlu0 %v5500, 16
      %v5557 = vpop.permute.xlu0 %5556
      %5558 = vrot.lane.b32.xlu0 %v5502, 16
      %v5559 = vpop.permute.xlu0 %5558
      %5560 = vrot.lane.b32.xlu0 %v5503, 16
      %v5561 = vpop.permute.xlu0 %5560
      %5562 = vrot.lane.b32.xlu0 %v5505, 16
      %v5563 = vpop.permute.xlu0 %5562
      %5564 = vrot.lane.b32.xlu0 %v5506, 16
      %v5565 = vpop.permute.xlu0 %5564
      %5566 = vrot.lane.b32.xlu0 %v5508, 16
      %v5567 = vpop.permute.xlu0 %5566
      %5568 = vrot.lane.b32.xlu0 %v5509, 16
      %v5569 = vpop.permute.xlu0 %5568
      %5570 = vrot.lane.b32.xlu0 %v5511, 16
      %v5571 = vpop.permute.xlu0 %5570
      %5572 = vrot.lane.b32.xlu0 %v5512, 16
      %v5573 = vpop.permute.xlu0 %5572
      %5574 = vrot.lane.b32.xlu0 %v5514, 16
      %v5575 = vpop.permute.xlu0 %5574
      %5576 = vrot.lane.b32.xlu0 %v5515, 16
      %v5577 = vpop.permute.xlu0 %5576
      %5578 = vrot.lane.b32.xlu0 %v5517, 16
      %v5579 = vpop.permute.xlu0 %5578
      %5580 = vrot.lane.b32.xlu0 %v5518, 16
      %v5581 = vpop.permute.xlu0 %5580
      %5582 = vrot.lane.b32.xlu0 %v5520, 16
      %v5583 = vpop.permute.xlu0 %5582
      %5584 = vrot.lane.b32.xlu0 %v5521, 16
      %v5585 = vpop.permute.xlu0 %5584
      %5586 = vrot.lane.b32.xlu0 %v5523, 16
      %v5587 = vpop.permute.xlu0 %5586
      %v5636 = vunpack.c.l.b16 %v610
      %v5637 = vunpack.c.l.b16 %v611
      %v5638 = vunpack.c.l.b16 %v612
      %v5639 = vunpack.c.l.b16 %v614
      %v5640 = vunpack.c.l.b16 %v615
      %v5641 = vunpack.c.l.b16 %v616
      %v5642 = vunpack.c.l.b16 %v618
      %v5643 = vunpack.c.l.b16 %v619
      %v5644 = vunpack.c.l.b16 %v620
      %v5645 = vunpack.c.l.b16 %v622
      %v5646 = vunpack.c.l.b16 %v623
      %v5647 = vunpack.c.l.b16 %v624
      %v5648 = vunpack.c.l.b16 %v626
      %v5649 = vunpack.c.l.b16 %v627
      %v5650 = vunpack.c.l.b16 %v628
      %v5651 = vunpack.c.l.b16 %v630
      %v5652 = vunpack.c.l.b16 %v631
      %v5653 = vunpack.c.l.b16 %v632
      %v5654 = vunpack.c.l.b16 %v634
      %v5655 = vunpack.c.l.b16 %v635
      %v5656 = vunpack.c.l.b16 %v636
      %v5657 = vunpack.c.l.b16 %v638
      %v5658 = vunpack.c.l.b16 %v639
      %v5659 = vunpack.c.l.b16 %v640
      %v5660 = vunpack.c.l.b16 %v642
      %v5661 = vunpack.c.l.b16 %v643
      %v5662 = vunpack.c.l.b16 %v644
      %v5663 = vunpack.c.l.b16 %v646
      %v5664 = vunpack.c.l.b16 %v647
      %v5665 = vunpack.c.l.b16 %v648
      %v5666 = vunpack.c.l.b16 %v650
      %v5667 = vunpack.c.l.b16 %v651
      %v5668 = vunpack.c.l.b16 %v652
      %v5669 = vunpack.c.l.b16 %v654
      %v5670 = vunpack.c.l.b16 %v655
      %v5671 = vunpack.c.l.b16 %v656
      %v5672 = vunpack.c.l.b16 %v658
      %v5673 = vunpack.c.l.b16 %v659
      %v5674 = vunpack.c.l.b16 %v660
      %v5675 = vunpack.c.l.b16 %v662
      %v5676 = vunpack.c.l.b16 %v663
      %v5677 = vunpack.c.l.b16 %v664
      %v5678 = vunpack.c.l.b16 %v666
      %v5679 = vunpack.c.l.b16 %v667
      %v5680 = vunpack.c.l.b16 %v668
      %v5681 = vunpack.c.l.b16 %v670
      %v5682 = vunpack.c.l.b16 %v671
      %v5683 = vunpack.c.l.b16 %v672
      %v5684 = vpack.c.b16 %v5637, %v5636
      %v5685 = vpack.c.b16 %v5638, %v5638
      %v5686 = vpack.c.b16 %v5640, %v5639
      %v5687 = vpack.c.b16 %v5641, %v5641
      %v5688 = vpack.c.b16 %v5643, %v5642
      %v5689 = vpack.c.b16 %v5644, %v5644
      %v5690 = vpack.c.b16 %v5646, %v5645
      %v5691 = vpack.c.b16 %v5647, %v5647
      %v5692 = vpack.c.b16 %v5649, %v5648
      %v5693 = vpack.c.b16 %v5650, %v5650
      %v5694 = vpack.c.b16 %v5652, %v5651
      %v5695 = vpack.c.b16 %v5653, %v5653
      %v5696 = vpack.c.b16 %v5655, %v5654
      %v5697 = vpack.c.b16 %v5656, %v5656
      %v5698 = vpack.c.b16 %v5658, %v5657
      %v5699 = vpack.c.b16 %v5659, %v5659
      %v5700 = vpack.c.b16 %v5661, %v5660
      %v5701 = vpack.c.b16 %v5662, %v5662
      %v5702 = vpack.c.b16 %v5664, %v5663
      %v5703 = vpack.c.b16 %v5665, %v5665
      %v5704 = vpack.c.b16 %v5667, %v5666
      %v5705 = vpack.c.b16 %v5668, %v5668
      %v5706 = vpack.c.b16 %v5670, %v5669
      %v5707 = vpack.c.b16 %v5671, %v5671
      %v5708 = vpack.c.b16 %v5673, %v5672
      %v5709 = vpack.c.b16 %v5674, %v5674
      %v5710 = vpack.c.b16 %v5676, %v5675
      %v5711 = vpack.c.b16 %v5677, %v5677
      %v5712 = vpack.c.b16 %v5679, %v5678
      %v5713 = vpack.c.b16 %v5680, %v5680
      %v5714 = vpack.c.b16 %v5682, %v5681
      %v5715 = vpack.c.b16 %v5683, %v5683
      %v5716 = vrot.slane %v5684, 7
      %v5717 = vrot.slane %v5685, 7
      %v5718 = vsel %vm2018, %v5716, %v5717
      %v5719 = vrot.slane %v5686, 7
      %v5720 = vrot.slane %v5687, 7
      %v5721 = vsel %vm2018, %v5719, %v5720
      %v5722 = vrot.slane %v5688, 7
      %v5723 = vrot.slane %v5689, 7
      %v5724 = vsel %vm2018, %v5722, %v5723
      %v5725 = vrot.slane %v5690, 7
      %v5726 = vrot.slane %v5691, 7
      %v5727 = vsel %vm2018, %v5725, %v5726
      %v5728 = vrot.slane %v5692, 7
      %v5729 = vrot.slane %v5693, 7
      %v5730 = vsel %vm2018, %v5728, %v5729
      %v5731 = vrot.slane %v5694, 7
      %v5732 = vrot.slane %v5695, 7
      %v5733 = vsel %vm2018, %v5731, %v5732
      %v5734 = vrot.slane %v5696, 7
      %v5735 = vrot.slane %v5697, 7
      %v5736 = vsel %vm2018, %v5734, %v5735
      %v5737 = vrot.slane %v5698, 7
      %v5738 = vrot.slane %v5699, 7
      %v5739 = vsel %vm2018, %v5737, %v5738
      %v5740 = vrot.slane %v5700, 7
      %v5741 = vrot.slane %v5701, 7
      %v5742 = vsel %vm2018, %v5740, %v5741
      %v5743 = vrot.slane %v5702, 7
      %v5744 = vrot.slane %v5703, 7
      %v5745 = vsel %vm2018, %v5743, %v5744
      %v5746 = vrot.slane %v5704, 7
      %v5747 = vrot.slane %v5705, 7
      %v5748 = vsel %vm2018, %v5746, %v5747
      %v5749 = vrot.slane %v5706, 7
      %v5750 = vrot.slane %v5707, 7
      %v5751 = vsel %vm2018, %v5749, %v5750
      %v5752 = vrot.slane %v5708, 7
      %v5753 = vrot.slane %v5709, 7
      %v5754 = vsel %vm2018, %v5752, %v5753
      %v5755 = vrot.slane %v5710, 7
      %v5756 = vrot.slane %v5711, 7
      %v5757 = vsel %vm2018, %v5755, %v5756
      %v5758 = vrot.slane %v5712, 7
      %v5759 = vrot.slane %v5713, 7
      %v5760 = vsel %vm2018, %v5758, %v5759
      %v5761 = vrot.slane %v5714, 7
      %v5762 = vrot.slane %v5715, 7
      %v5763 = vsel %vm2018, %v5761, %v5762
      %5764 = vrot.lane.b32.xlu0 %v5716, 20
      %v5765 = vpop.permute.xlu0 %5764
      %5766 = vrot.lane.b32.xlu0 %v5718, 20
      %v5767 = vpop.permute.xlu0 %5766
      %5768 = vrot.lane.b32.xlu0 %v5719, 20
      %v5769 = vpop.permute.xlu0 %5768
      %5770 = vrot.lane.b32.xlu0 %v5721, 20
      %v5771 = vpop.permute.xlu0 %5770
      %5772 = vrot.lane.b32.xlu0 %v5722, 20
      %v5773 = vpop.permute.xlu0 %5772
      %5774 = vrot.lane.b32.xlu0 %v5724, 20
      %v5775 = vpop.permute.xlu0 %5774
      %5776 = vrot.lane.b32.xlu0 %v5725, 20
      %v5777 = vpop.permute.xlu0 %5776
      %5778 = vrot.lane.b32.xlu0 %v5727, 20
      %v5779 = vpop.permute.xlu0 %5778
      %5780 = vrot.lane.b32.xlu0 %v5728, 20
      %v5781 = vpop.permute.xlu0 %5780
      %5782 = vrot.lane.b32.xlu0 %v5730, 20
      %v5783 = vpop.permute.xlu0 %5782
      %5784 = vrot.lane.b32.xlu0 %v5731, 20
      %v5785 = vpop.permute.xlu0 %5784
      %5786 = vrot.lane.b32.xlu0 %v5733, 20
      %v5787 = vpop.permute.xlu0 %5786
      %5788 = vrot.lane.b32.xlu0 %v5734, 20
      %v5789 = vpop.permute.xlu0 %5788
      %5790 = vrot.lane.b32.xlu0 %v5736, 20
      %v5791 = vpop.permute.xlu0 %5790
      %5792 = vrot.lane.b32.xlu0 %v5737, 20
      %v5793 = vpop.permute.xlu0 %5792
      %5794 = vrot.lane.b32.xlu0 %v5739, 20
      %v5795 = vpop.permute.xlu0 %5794
      %5796 = vrot.lane.b32.xlu0 %v5740, 20
      %v5797 = vpop.permute.xlu0 %5796
      %5798 = vrot.lane.b32.xlu0 %v5742, 20
      %v5799 = vpop.permute.xlu0 %5798
      %5800 = vrot.lane.b32.xlu0 %v5743, 20
      %v5801 = vpop.permute.xlu0 %5800
      %5802 = vrot.lane.b32.xlu0 %v5745, 20
      %v5803 = vpop.permute.xlu0 %5802
      %5804 = vrot.lane.b32.xlu0 %v5746, 20
      %v5805 = vpop.permute.xlu0 %5804
      %5806 = vrot.lane.b32.xlu0 %v5748, 20
      %v5807 = vpop.permute.xlu0 %5806
      %5808 = vrot.lane.b32.xlu0 %v5749, 20
      %v5809 = vpop.permute.xlu0 %5808
      %5810 = vrot.lane.b32.xlu0 %v5751, 20
      %v5811 = vpop.permute.xlu0 %5810
      %5812 = vrot.lane.b32.xlu0 %v5752, 20
      %v5813 = vpop.permute.xlu0 %5812
      %5814 = vrot.lane.b32.xlu0 %v5754, 20
      %v5815 = vpop.permute.xlu0 %5814
      %5816 = vrot.lane.b32.xlu0 %v5755, 20
      %v5817 = vpop.permute.xlu0 %5816
      %5818 = vrot.lane.b32.xlu0 %v5757, 20
      %v5819 = vpop.permute.xlu0 %5818
      %5820 = vrot.lane.b32.xlu0 %v5758, 20
      %v5821 = vpop.permute.xlu0 %5820
      %5822 = vrot.lane.b32.xlu0 %v5760, 20
      %v5823 = vpop.permute.xlu0 %5822
      %5824 = vrot.lane.b32.xlu0 %v5761, 20
      %v5825 = vpop.permute.xlu0 %5824
      %5826 = vrot.lane.b32.xlu0 %v5763, 20
      %v5827 = vpop.permute.xlu0 %5826
      %vm5828 = vsmask.f32 256
      %v5830 = vshrl.u32 %v5684, 16
      %v5832 = vrot.slane %v5830, 7
      %v5833 = vshll.u32 %v5684, 16
      %v5835 = vor.u32 %v5832, %v5833
      %v5837 = vshrl.u32 %v5685, 16
      %v5839 = vrot.slane %v5837, 7
      %v5840 = vshll.u32 %v5685, 16
      %v5842 = vor.u32 %v5839, %v5840
      %v5843 = vsel %vm5828, %v5832, %v5842
      %v5845 = vshrl.u32 %v5686, 16
      %v5847 = vrot.slane %v5845, 7
      %v5848 = vshll.u32 %v5686, 16
      %v5850 = vor.u32 %v5847, %v5848
      %v5852 = vshrl.u32 %v5687, 16
      %v5854 = vrot.slane %v5852, 7
      %v5855 = vshll.u32 %v5687, 16
      %v5857 = vor.u32 %v5854, %v5855
      %v5858 = vsel %vm5828, %v5847, %v5857
      %v5860 = vshrl.u32 %v5688, 16
      %v5862 = vrot.slane %v5860, 7
      %v5863 = vshll.u32 %v5688, 16
      %v5865 = vor.u32 %v5862, %v5863
      %v5867 = vshrl.u32 %v5689, 16
      %v5869 = vrot.slane %v5867, 7
      %v5870 = vshll.u32 %v5689, 16
      %v5872 = vor.u32 %v5869, %v5870
      %v5873 = vsel %vm5828, %v5862, %v5872
      %v5875 = vshrl.u32 %v5690, 16
      %v5877 = vrot.slane %v5875, 7
      %v5878 = vshll.u32 %v5690, 16
      %v5880 = vor.u32 %v5877, %v5878
      %v5882 = vshrl.u32 %v5691, 16
      %v5884 = vrot.slane %v5882, 7
      %v5885 = vshll.u32 %v5691, 16
      %v5887 = vor.u32 %v5884, %v5885
      %v5888 = vsel %vm5828, %v5877, %v5887
      %v5890 = vshrl.u32 %v5692, 16
      %v5892 = vrot.slane %v5890, 7
      %v5893 = vshll.u32 %v5692, 16
      %v5895 = vor.u32 %v5892, %v5893
      %v5897 = vshrl.u32 %v5693, 16
      %v5899 = vrot.slane %v5897, 7
      %v5900 = vshll.u32 %v5693, 16
      %v5902 = vor.u32 %v5899, %v5900
      %v5903 = vsel %vm5828, %v5892, %v5902
      %v5905 = vshrl.u32 %v5694, 16
      %v5907 = vrot.slane %v5905, 7
      %v5908 = vshll.u32 %v5694, 16
      %v5910 = vor.u32 %v5907, %v5908
      %v5912 = vshrl.u32 %v5695, 16
      %v5914 = vrot.slane %v5912, 7
      %v5915 = vshll.u32 %v5695, 16
      %v5917 = vor.u32 %v5914, %v5915
      %v5918 = vsel %vm5828, %v5907, %v5917
      %v5920 = vshrl.u32 %v5696, 16
      %v5922 = vrot.slane %v5920, 7
      %v5923 = vshll.u32 %v5696, 16
      %v5925 = vor.u32 %v5922, %v5923
      %v5927 = vshrl.u32 %v5697, 16
      %v5929 = vrot.slane %v5927, 7
      %v5930 = vshll.u32 %v5697, 16
      %v5932 = vor.u32 %v5929, %v5930
      %v5933 = vsel %vm5828, %v5922, %v5932
      %v5935 = vshrl.u32 %v5698, 16
      %v5937 = vrot.slane %v5935, 7
      %v5938 = vshll.u32 %v5698, 16
      %v5940 = vor.u32 %v5937, %v5938
      %v5942 = vshrl.u32 %v5699, 16
      %v5944 = vrot.slane %v5942, 7
      %v5945 = vshll.u32 %v5699, 16
      %v5947 = vor.u32 %v5944, %v5945
      %v5948 = vsel %vm5828, %v5937, %v5947
      %v5950 = vshrl.u32 %v5700, 16
      %v5952 = vrot.slane %v5950, 7
      %v5953 = vshll.u32 %v5700, 16
      %v5955 = vor.u32 %v5952, %v5953
      %v5957 = vshrl.u32 %v5701, 16
      %v5959 = vrot.slane %v5957, 7
      %v5960 = vshll.u32 %v5701, 16
      %v5962 = vor.u32 %v5959, %v5960
      %v5963 = vsel %vm5828, %v5952, %v5962
      %v5965 = vshrl.u32 %v5702, 16
      %v5967 = vrot.slane %v5965, 7
      %v5968 = vshll.u32 %v5702, 16
      %v5970 = vor.u32 %v5967, %v5968
      %v5972 = vshrl.u32 %v5703, 16
      %v5974 = vrot.slane %v5972, 7
      %v5975 = vshll.u32 %v5703, 16
      %v5977 = vor.u32 %v5974, %v5975
      %v5978 = vsel %vm5828, %v5967, %v5977
      %v5980 = vshrl.u32 %v5704, 16
      %v5982 = vrot.slane %v5980, 7
      %v5983 = vshll.u32 %v5704, 16
      %v5985 = vor.u32 %v5982, %v5983
      %v5987 = vshrl.u32 %v5705, 16
      %v5989 = vrot.slane %v5987, 7
      %v5990 = vshll.u32 %v5705, 16
      %v5992 = vor.u32 %v5989, %v5990
      %v5993 = vsel %vm5828, %v5982, %v5992
      %v5995 = vshrl.u32 %v5706, 16
      %v5997 = vrot.slane %v5995, 7
      %v5998 = vshll.u32 %v5706, 16
      %v6000 = vor.u32 %v5997, %v5998
      %v6002 = vshrl.u32 %v5707, 16
      %v6004 = vrot.slane %v6002, 7
      %v6005 = vshll.u32 %v5707, 16
      %v6007 = vor.u32 %v6004, %v6005
      %v6008 = vsel %vm5828, %v5997, %v6007
      %v6010 = vshrl.u32 %v5708, 16
      %v6012 = vrot.slane %v6010, 7
      %v6013 = vshll.u32 %v5708, 16
      %v6015 = vor.u32 %v6012, %v6013
      %v6017 = vshrl.u32 %v5709, 16
      %v6019 = vrot.slane %v6017, 7
      %v6020 = vshll.u32 %v5709, 16
      %v6022 = vor.u32 %v6019, %v6020
      %v6023 = vsel %vm5828, %v6012, %v6022
      %v6025 = vshrl.u32 %v5710, 16
      %v6027 = vrot.slane %v6025, 7
      %v6028 = vshll.u32 %v5710, 16
      %v6030 = vor.u32 %v6027, %v6028
      %v6032 = vshrl.u32 %v5711, 16
      %v6034 = vrot.slane %v6032, 7
      %v6035 = vshll.u32 %v5711, 16
      %v6037 = vor.u32 %v6034, %v6035
      %v6038 = vsel %vm5828, %v6027, %v6037
      %v6040 = vshrl.u32 %v5712, 16
      %v6042 = vrot.slane %v6040, 7
      %v6043 = vshll.u32 %v5712, 16
      %v6045 = vor.u32 %v6042, %v6043
      %v6047 = vshrl.u32 %v5713, 16
      %v6049 = vrot.slane %v6047, 7
      %v6050 = vshll.u32 %v5713, 16
      %v6052 = vor.u32 %v6049, %v6050
      %v6053 = vsel %vm5828, %v6042, %v6052
      %v6055 = vshrl.u32 %v5714, 16
      %v6057 = vrot.slane %v6055, 7
      %v6058 = vshll.u32 %v5714, 16
      %v6060 = vor.u32 %v6057, %v6058
      %v6062 = vshrl.u32 %v5715, 16
      %v6064 = vrot.slane %v6062, 7
      %v6065 = vshll.u32 %v5715, 16
      %v6067 = vor.u32 %v6064, %v6065
      %v6068 = vsel %vm5828, %v6057, %v6067
      %6069 = vrot.lane.b32.xlu0 %v5835, 24
      %v6070 = vpop.permute.xlu0 %6069
      %6071 = vrot.lane.b32.xlu0 %v5843, 24
      %v6072 = vpop.permute.xlu0 %6071
      %6073 = vrot.lane.b32.xlu0 %v5850, 24
      %v6074 = vpop.permute.xlu0 %6073
      %6075 = vrot.lane.b32.xlu0 %v5858, 24
      %v6076 = vpop.permute.xlu0 %6075
      %6077 = vrot.lane.b32.xlu0 %v5865, 24
      %v6078 = vpop.permute.xlu0 %6077
      %6079 = vrot.lane.b32.xlu0 %v5873, 24
      %v6080 = vpop.permute.xlu0 %6079
      %6081 = vrot.lane.b32.xlu0 %v5880, 24
      %v6082 = vpop.permute.xlu0 %6081
      %6083 = vrot.lane.b32.xlu0 %v5888, 24
      %v6084 = vpop.permute.xlu0 %6083
      %6085 = vrot.lane.b32.xlu0 %v5895, 24
      %v6086 = vpop.permute.xlu0 %6085
      %6087 = vrot.lane.b32.xlu0 %v5903, 24
      %v6088 = vpop.permute.xlu0 %6087
      %6089 = vrot.lane.b32.xlu0 %v5910, 24
      %v6090 = vpop.permute.xlu0 %6089
      %6091 = vrot.lane.b32.xlu0 %v5918, 24
      %v6092 = vpop.permute.xlu0 %6091
      %6093 = vrot.lane.b32.xlu0 %v5925, 24
      %v6094 = vpop.permute.xlu0 %6093
      %6095 = vrot.lane.b32.xlu0 %v5933, 24
      %v6096 = vpop.permute.xlu0 %6095
      %6097 = vrot.lane.b32.xlu0 %v5940, 24
      %v6098 = vpop.permute.xlu0 %6097
      %6099 = vrot.lane.b32.xlu0 %v5948, 24
      %v6100 = vpop.permute.xlu0 %6099
      %6101 = vrot.lane.b32.xlu0 %v5955, 24
      %v6102 = vpop.permute.xlu0 %6101
      %6103 = vrot.lane.b32.xlu0 %v5963, 24
      %v6104 = vpop.permute.xlu0 %6103
      %6105 = vrot.lane.b32.xlu0 %v5970, 24
      %v6106 = vpop.permute.xlu0 %6105
      %6107 = vrot.lane.b32.xlu0 %v5978, 24
      %v6108 = vpop.permute.xlu0 %6107
      %6109 = vrot.lane.b32.xlu0 %v5985, 24
      %v6110 = vpop.permute.xlu0 %6109
      %6111 = vrot.lane.b32.xlu0 %v5993, 24
      %v6112 = vpop.permute.xlu0 %6111
      %6113 = vrot.lane.b32.xlu0 %v6000, 24
      %v6114 = vpop.permute.xlu0 %6113
      %6115 = vrot.lane.b32.xlu0 %v6008, 24
      %v6116 = vpop.permute.xlu0 %6115
      %6117 = vrot.lane.b32.xlu0 %v6015, 24
      %v6118 = vpop.permute.xlu0 %6117
      %6119 = vrot.lane.b32.xlu0 %v6023, 24
      %v6120 = vpop.permute.xlu0 %6119
      %6121 = vrot.lane.b32.xlu0 %v6030, 24
      %v6122 = vpop.permute.xlu0 %6121
      %6123 = vrot.lane.b32.xlu0 %v6038, 24
      %v6124 = vpop.permute.xlu0 %6123
      %6125 = vrot.lane.b32.xlu0 %v6045, 24
      %v6126 = vpop.permute.xlu0 %6125
      %6127 = vrot.lane.b32.xlu0 %v6053, 24
      %v6128 = vpop.permute.xlu0 %6127
      %6129 = vrot.lane.b32.xlu0 %v6060, 24
      %v6130 = vpop.permute.xlu0 %6129
      %6131 = vrot.lane.b32.xlu0 %v6068, 24
      %v6132 = vpop.permute.xlu0 %6131
      %6133 = vrot.lane.b32.xlu0 %v5684, 28
      %v6134 = vpop.permute.xlu0 %6133
      %6135 = vrot.lane.b32.xlu0 %v5685, 28
      %v6136 = vpop.permute.xlu0 %6135
      %6137 = vrot.lane.b32.xlu0 %v5686, 28
      %v6138 = vpop.permute.xlu0 %6137
      %6139 = vrot.lane.b32.xlu0 %v5687, 28
      %v6140 = vpop.permute.xlu0 %6139
      %6141 = vrot.lane.b32.xlu0 %v5688, 28
      %v6142 = vpop.permute.xlu0 %6141
      %6143 = vrot.lane.b32.xlu0 %v5689, 28
      %v6144 = vpop.permute.xlu0 %6143
      %6145 = vrot.lane.b32.xlu0 %v5690, 28
      %v6146 = vpop.permute.xlu0 %6145
      %6147 = vrot.lane.b32.xlu0 %v5691, 28
      %v6148 = vpop.permute.xlu0 %6147
      %6149 = vrot.lane.b32.xlu0 %v5692, 28
      %v6150 = vpop.permute.xlu0 %6149
      %6151 = vrot.lane.b32.xlu0 %v5693, 28
      %v6152 = vpop.permute.xlu0 %6151
      %6153 = vrot.lane.b32.xlu0 %v5694, 28
      %v6154 = vpop.permute.xlu0 %6153
      %6155 = vrot.lane.b32.xlu0 %v5695, 28
      %v6156 = vpop.permute.xlu0 %6155
      %6157 = vrot.lane.b32.xlu0 %v5696, 28
      %v6158 = vpop.permute.xlu0 %6157
      %6159 = vrot.lane.b32.xlu0 %v5697, 28
      %v6160 = vpop.permute.xlu0 %6159
      %6161 = vrot.lane.b32.xlu0 %v5698, 28
      %v6162 = vpop.permute.xlu0 %6161
      %6163 = vrot.lane.b32.xlu0 %v5699, 28
      %v6164 = vpop.permute.xlu0 %6163
      %6165 = vrot.lane.b32.xlu0 %v5700, 28
      %v6166 = vpop.permute.xlu0 %6165
      %6167 = vrot.lane.b32.xlu0 %v5701, 28
      %v6168 = vpop.permute.xlu0 %6167
      %6169 = vrot.lane.b32.xlu0 %v5702, 28
      %v6170 = vpop.permute.xlu0 %6169
      %6171 = vrot.lane.b32.xlu0 %v5703, 28
      %v6172 = vpop.permute.xlu0 %6171
      %6173 = vrot.lane.b32.xlu0 %v5704, 28
      %v6174 = vpop.permute.xlu0 %6173
      %6175 = vrot.lane.b32.xlu0 %v5705, 28
      %v6176 = vpop.permute.xlu0 %6175
      %6177 = vrot.lane.b32.xlu0 %v5706, 28
      %v6178 = vpop.permute.xlu0 %6177
      %6179 = vrot.lane.b32.xlu0 %v5707, 28
      %v6180 = vpop.permute.xlu0 %6179
      %6181 = vrot.lane.b32.xlu0 %v5708, 28
      %v6182 = vpop.permute.xlu0 %6181
      %6183 = vrot.lane.b32.xlu0 %v5709, 28
      %v6184 = vpop.permute.xlu0 %6183
      %6185 = vrot.lane.b32.xlu0 %v5710, 28
      %v6186 = vpop.permute.xlu0 %6185
      %6187 = vrot.lane.b32.xlu0 %v5711, 28
      %v6188 = vpop.permute.xlu0 %6187
      %6189 = vrot.lane.b32.xlu0 %v5712, 28
      %v6190 = vpop.permute.xlu0 %6189
      %6191 = vrot.lane.b32.xlu0 %v5713, 28
      %v6192 = vpop.permute.xlu0 %6191
      %6193 = vrot.lane.b32.xlu0 %v5714, 28
      %v6194 = vpop.permute.xlu0 %6193
      %6195 = vrot.lane.b32.xlu0 %v5715, 28
      %v6196 = vpop.permute.xlu0 %6195
      %v6197 = vpack.c.b16 %v5638, %v5637
      %v6198 = vpack.c.b16 %v5641, %v5640
      %v6199 = vpack.c.b16 %v5644, %v5643
      %v6200 = vpack.c.b16 %v5647, %v5646
      %v6201 = vpack.c.b16 %v5650, %v5649
      %v6202 = vpack.c.b16 %v5653, %v5652
      %v6203 = vpack.c.b16 %v5656, %v5655
      %v6204 = vpack.c.b16 %v5659, %v5658
      %v6205 = vpack.c.b16 %v5662, %v5661
      %v6206 = vpack.c.b16 %v5665, %v5664
      %v6207 = vpack.c.b16 %v5668, %v5667
      %v6208 = vpack.c.b16 %v5671, %v5670
      %v6209 = vpack.c.b16 %v5674, %v5673
      %v6210 = vpack.c.b16 %v5677, %v5676
      %v6211 = vpack.c.b16 %v5680, %v5679
      %v6212 = vpack.c.b16 %v5683, %v5682
      %v6214 = vshrl.u32 %v6197, 16
      %v6216 = vrot.slane %v6214, 4
      %v6217 = vshll.u32 %v6197, 16
      %v6219 = vrot.slane %v6217, 5
      %v6220 = vor.u32 %v6216, %v6219
      %v6222 = vshrl.u32 %v6198, 16
      %v6224 = vrot.slane %v6222, 4
      %v6225 = vshll.u32 %v6198, 16
      %v6227 = vrot.slane %v6225, 5
      %v6228 = vor.u32 %v6224, %v6227
      %v6230 = vshrl.u32 %v6199, 16
      %v6232 = vrot.slane %v6230, 4
      %v6233 = vshll.u32 %v6199, 16
      %v6235 = vrot.slane %v6233, 5
      %v6236 = vor.u32 %v6232, %v6235
      %v6238 = vshrl.u32 %v6200, 16
      %v6240 = vrot.slane %v6238, 4
      %v6241 = vshll.u32 %v6200, 16
      %v6243 = vrot.slane %v6241, 5
      %v6244 = vor.u32 %v6240, %v6243
      %v6246 = vshrl.u32 %v6201, 16
      %v6248 = vrot.slane %v6246, 4
      %v6249 = vshll.u32 %v6201, 16
      %v6251 = vrot.slane %v6249, 5
      %v6252 = vor.u32 %v6248, %v6251
      %v6254 = vshrl.u32 %v6202, 16
      %v6256 = vrot.slane %v6254, 4
      %v6257 = vshll.u32 %v6202, 16
      %v6259 = vrot.slane %v6257, 5
      %v6260 = vor.u32 %v6256, %v6259
      %v6262 = vshrl.u32 %v6203, 16
      %v6264 = vrot.slane %v6262, 4
      %v6265 = vshll.u32 %v6203, 16
      %v6267 = vrot.slane %v6265, 5
      %v6268 = vor.u32 %v6264, %v6267
      %v6270 = vshrl.u32 %v6204, 16
      %v6272 = vrot.slane %v6270, 4
      %v6273 = vshll.u32 %v6204, 16
      %v6275 = vrot.slane %v6273, 5
      %v6276 = vor.u32 %v6272, %v6275
      %v6278 = vshrl.u32 %v6205, 16
      %v6280 = vrot.slane %v6278, 4
      %v6281 = vshll.u32 %v6205, 16
      %v6283 = vrot.slane %v6281, 5
      %v6284 = vor.u32 %v6280, %v6283
      %v6286 = vshrl.u32 %v6206, 16
      %v6288 = vrot.slane %v6286, 4
      %v6289 = vshll.u32 %v6206, 16
      %v6291 = vrot.slane %v6289, 5
      %v6292 = vor.u32 %v6288, %v6291
      %v6294 = vshrl.u32 %v6207, 16
      %v6296 = vrot.slane %v6294, 4
      %v6297 = vshll.u32 %v6207, 16
      %v6299 = vrot.slane %v6297, 5
      %v6300 = vor.u32 %v6296, %v6299
      %v6302 = vshrl.u32 %v6208, 16
      %v6304 = vrot.slane %v6302, 4
      %v6305 = vshll.u32 %v6208, 16
      %v6307 = vrot.slane %v6305, 5
      %v6308 = vor.u32 %v6304, %v6307
      %v6310 = vshrl.u32 %v6209, 16
      %v6312 = vrot.slane %v6310, 4
      %v6313 = vshll.u32 %v6209, 16
      %v6315 = vrot.slane %v6313, 5
      %v6316 = vor.u32 %v6312, %v6315
      %v6318 = vshrl.u32 %v6210, 16
      %v6320 = vrot.slane %v6318, 4
      %v6321 = vshll.u32 %v6210, 16
      %v6323 = vrot.slane %v6321, 5
      %v6324 = vor.u32 %v6320, %v6323
      %v6326 = vshrl.u32 %v6211, 16
      %v6328 = vrot.slane %v6326, 4
      %v6329 = vshll.u32 %v6211, 16
      %v6331 = vrot.slane %v6329, 5
      %v6332 = vor.u32 %v6328, %v6331
      %v6334 = vshrl.u32 %v6212, 16
      %v6336 = vrot.slane %v6334, 4
      %v6337 = vshll.u32 %v6212, 16
      %v6339 = vrot.slane %v6337, 5
      %v6340 = vor.u32 %v6336, %v6339
      %6341 = vrot.lane.b32.xlu0 %v6220, 32
      %v6342 = vpop.permute.xlu0 %6341
      %6343 = vrot.lane.b32.xlu0 %v6228, 32
      %v6344 = vpop.permute.xlu0 %6343
      %6345 = vrot.lane.b32.xlu0 %v6236, 32
      %v6346 = vpop.permute.xlu0 %6345
      %6347 = vrot.lane.b32.xlu0 %v6244, 32
      %v6348 = vpop.permute.xlu0 %6347
      %6349 = vrot.lane.b32.xlu0 %v6252, 32
      %v6350 = vpop.permute.xlu0 %6349
      %6351 = vrot.lane.b32.xlu0 %v6260, 32
      %v6352 = vpop.permute.xlu0 %6351
      %6353 = vrot.lane.b32.xlu0 %v6268, 32
      %v6354 = vpop.permute.xlu0 %6353
      %6355 = vrot.lane.b32.xlu0 %v6276, 32
      %v6356 = vpop.permute.xlu0 %6355
      %6357 = vrot.lane.b32.xlu0 %v6284, 32
      %v6358 = vpop.permute.xlu0 %6357
      %6359 = vrot.lane.b32.xlu0 %v6292, 32
      %v6360 = vpop.permute.xlu0 %6359
      %6361 = vrot.lane.b32.xlu0 %v6300, 32
      %v6362 = vpop.permute.xlu0 %6361
      %6363 = vrot.lane.b32.xlu0 %v6308, 32
      %v6364 = vpop.permute.xlu0 %6363
      %6365 = vrot.lane.b32.xlu0 %v6316, 32
      %v6366 = vpop.permute.xlu0 %6365
      %6367 = vrot.lane.b32.xlu0 %v6324, 32
      %v6368 = vpop.permute.xlu0 %6367
      %6369 = vrot.lane.b32.xlu0 %v6332, 32
      %v6370 = vpop.permute.xlu0 %6369
      %6371 = vrot.lane.b32.xlu0 %v6340, 32
      %v6372 = vpop.permute.xlu0 %6371
      %v6389 = vunpack.c.l.b16 %v613
      %v6390 = vunpack.c.l.b16 %v617
      %v6391 = vunpack.c.l.b16 %v621
      %v6392 = vunpack.c.l.b16 %v625
      %v6393 = vunpack.c.l.b16 %v629
      %v6394 = vunpack.c.l.b16 %v633
      %v6395 = vunpack.c.l.b16 %v637
      %v6396 = vunpack.c.l.b16 %v641
      %v6397 = vunpack.c.l.b16 %v645
      %v6398 = vunpack.c.l.b16 %v649
      %v6399 = vunpack.c.l.b16 %v653
      %v6400 = vunpack.c.l.b16 %v657
      %v6401 = vunpack.c.l.b16 %v661
      %v6402 = vunpack.c.l.b16 %v665
      %v6403 = vunpack.c.l.b16 %v669
      %v6404 = vunpack.c.l.b16 %v673
      %v6405 = vpack.c.b16 %v6389, %v6389
      %v6406 = vpack.c.b16 %v6390, %v6390
      %v6407 = vpack.c.b16 %v6391, %v6391
      %v6408 = vpack.c.b16 %v6392, %v6392
      %v6409 = vpack.c.b16 %v6393, %v6393
      %v6410 = vpack.c.b16 %v6394, %v6394
      %v6411 = vpack.c.b16 %v6395, %v6395
      %v6412 = vpack.c.b16 %v6396, %v6396
      %v6413 = vpack.c.b16 %v6397, %v6397
      %v6414 = vpack.c.b16 %v6398, %v6398
      %v6415 = vpack.c.b16 %v6399, %v6399
      %v6416 = vpack.c.b16 %v6400, %v6400
      %v6417 = vpack.c.b16 %v6401, %v6401
      %v6418 = vpack.c.b16 %v6402, %v6402
      %v6419 = vpack.c.b16 %v6403, %v6403
      %v6420 = vpack.c.b16 %v6404, %v6404
      %v6421 = vrot.slane %v6197, 5
      %v6422 = vrot.slane %v6405, 5
      %v6423 = vsel %vm5106, %v6421, %v6422
      %v6424 = vrot.slane %v6198, 5
      %v6425 = vrot.slane %v6406, 5
      %v6426 = vsel %vm5106, %v6424, %v6425
      %v6427 = vrot.slane %v6199, 5
      %v6428 = vrot.slane %v6407, 5
      %v6429 = vsel %vm5106, %v6427, %v6428
      %v6430 = vrot.slane %v6200, 5
      %v6431 = vrot.slane %v6408, 5
      %v6432 = vsel %vm5106, %v6430, %v6431
      %v6433 = vrot.slane %v6201, 5
      %v6434 = vrot.slane %v6409, 5
      %v6435 = vsel %vm5106, %v6433, %v6434
      %v6436 = vrot.slane %v6202, 5
      %v6437 = vrot.slane %v6410, 5
      %v6438 = vsel %vm5106, %v6436, %v6437
      %v6439 = vrot.slane %v6203, 5
      %v6440 = vrot.slane %v6411, 5
      %v6441 = vsel %vm5106, %v6439, %v6440
      %v6442 = vrot.slane %v6204, 5
      %v6443 = vrot.slane %v6412, 5
      %v6444 = vsel %vm5106, %v6442, %v6443
      %v6445 = vrot.slane %v6205, 5
      %v6446 = vrot.slane %v6413, 5
      %v6447 = vsel %vm5106, %v6445, %v6446
      %v6448 = vrot.slane %v6206, 5
      %v6449 = vrot.slane %v6414, 5
      %v6450 = vsel %vm5106, %v6448, %v6449
      %v6451 = vrot.slane %v6207, 5
      %v6452 = vrot.slane %v6415, 5
      %v6453 = vsel %vm5106, %v6451, %v6452
      %v6454 = vrot.slane %v6208, 5
      %v6455 = vrot.slane %v6416, 5
      %v6456 = vsel %vm5106, %v6454, %v6455
      %v6457 = vrot.slane %v6209, 5
      %v6458 = vrot.slane %v6417, 5
      %v6459 = vsel %vm5106, %v6457, %v6458
      %v6460 = vrot.slane %v6210, 5
      %v6461 = vrot.slane %v6418, 5
      %v6462 = vsel %vm5106, %v6460, %v6461
      %v6463 = vrot.slane %v6211, 5
      %v6464 = vrot.slane %v6419, 5
      %v6465 = vsel %vm5106, %v6463, %v6464
      %v6466 = vrot.slane %v6212, 5
      %v6467 = vrot.slane %v6420, 5
      %v6468 = vsel %vm5106, %v6466, %v6467
      %6469 = vrot.lane.b32.xlu0 %v6421, 36
      %v6470 = vpop.permute.xlu0 %6469
      %6471 = vrot.lane.b32.xlu0 %v6423, 36
      %v6472 = vpop.permute.xlu0 %6471
      %6473 = vrot.lane.b32.xlu0 %v6424, 36
      %v6474 = vpop.permute.xlu0 %6473
      %6475 = vrot.lane.b32.xlu0 %v6426, 36
      %v6476 = vpop.permute.xlu0 %6475
      %6477 = vrot.lane.b32.xlu0 %v6427, 36
      %v6478 = vpop.permute.xlu0 %6477
      %6479 = vrot.lane.b32.xlu0 %v6429, 36
      %v6480 = vpop.permute.xlu0 %6479
      %6481 = vrot.lane.b32.xlu0 %v6430, 36
      %v6482 = vpop.permute.xlu0 %6481
      %6483 = vrot.lane.b32.xlu0 %v6432, 36
      %v6484 = vpop.permute.xlu0 %6483
      %6485 = vrot.lane.b32.xlu0 %v6433, 36
      %v6486 = vpop.permute.xlu0 %6485
      %6487 = vrot.lane.b32.xlu0 %v6435, 36
      %v6488 = vpop.permute.xlu0 %6487
      %6489 = vrot.lane.b32.xlu0 %v6436, 36
      %v6490 = vpop.permute.xlu0 %6489
      %6491 = vrot.lane.b32.xlu0 %v6438, 36
      %v6492 = vpop.permute.xlu0 %6491
      %6493 = vrot.lane.b32.xlu0 %v6439, 36
      %v6494 = vpop.permute.xlu0 %6493
      %6495 = vrot.lane.b32.xlu0 %v6441, 36
      %v6496 = vpop.permute.xlu0 %6495
      %6497 = vrot.lane.b32.xlu0 %v6442, 36
      %v6498 = vpop.permute.xlu0 %6497
      %6499 = vrot.lane.b32.xlu0 %v6444, 36
      %v6500 = vpop.permute.xlu0 %6499
      %6501 = vrot.lane.b32.xlu0 %v6445, 36
      %v6502 = vpop.permute.xlu0 %6501
      %6503 = vrot.lane.b32.xlu0 %v6447, 36
      %v6504 = vpop.permute.xlu0 %6503
      %6505 = vrot.lane.b32.xlu0 %v6448, 36
      %v6506 = vpop.permute.xlu0 %6505
      %6507 = vrot.lane.b32.xlu0 %v6450, 36
      %v6508 = vpop.permute.xlu0 %6507
      %6509 = vrot.lane.b32.xlu0 %v6451, 36
      %v6510 = vpop.permute.xlu0 %6509
      %6511 = vrot.lane.b32.xlu0 %v6453, 36
      %v6512 = vpop.permute.xlu0 %6511
      %6513 = vrot.lane.b32.xlu0 %v6454, 36
      %v6514 = vpop.permute.xlu0 %6513
      %6515 = vrot.lane.b32.xlu0 %v6456, 36
      %v6516 = vpop.permute.xlu0 %6515
      %6517 = vrot.lane.b32.xlu0 %v6457, 36
      %v6518 = vpop.permute.xlu0 %6517
      %6519 = vrot.lane.b32.xlu0 %v6459, 36
      %v6520 = vpop.permute.xlu0 %6519
      %6521 = vrot.lane.b32.xlu0 %v6460, 36
      %v6522 = vpop.permute.xlu0 %6521
      %6523 = vrot.lane.b32.xlu0 %v6462, 36
      %v6524 = vpop.permute.xlu0 %6523
      %6525 = vrot.lane.b32.xlu0 %v6463, 36
      %v6526 = vpop.permute.xlu0 %6525
      %6527 = vrot.lane.b32.xlu0 %v6465, 36
      %v6528 = vpop.permute.xlu0 %6527
      %6529 = vrot.lane.b32.xlu0 %v6466, 36
      %v6530 = vpop.permute.xlu0 %6529
      %6531 = vrot.lane.b32.xlu0 %v6468, 36
      %v6532 = vpop.permute.xlu0 %6531
      %v6533 = vrot.slane %v6214, 5
      %v6534 = vrot.slane %v6217, 6
      %v6535 = vor.u32 %v6533, %v6534
      %v6537 = vshrl.u32 %v6405, 16
      %v6539 = vrot.slane %v6537, 5
      %v6540 = vshll.u32 %v6405, 16
      %v6542 = vrot.slane %v6540, 6
      %v6543 = vor.u32 %v6539, %v6542
      %v6544 = vsel %vm5219, %v6535, %v6543
      %v6545 = vrot.slane %v6222, 5
      %v6546 = vrot.slane %v6225, 6
      %v6547 = vor.u32 %v6545, %v6546
      %v6549 = vshrl.u32 %v6406, 16
      %v6551 = vrot.slane %v6549, 5
      %v6552 = vshll.u32 %v6406, 16
      %v6554 = vrot.slane %v6552, 6
      %v6555 = vor.u32 %v6551, %v6554
      %v6556 = vsel %vm5219, %v6547, %v6555
      %v6557 = vrot.slane %v6230, 5
      %v6558 = vrot.slane %v6233, 6
      %v6559 = vor.u32 %v6557, %v6558
      %v6561 = vshrl.u32 %v6407, 16
      %v6563 = vrot.slane %v6561, 5
      %v6564 = vshll.u32 %v6407, 16
      %v6566 = vrot.slane %v6564, 6
      %v6567 = vor.u32 %v6563, %v6566
      %v6568 = vsel %vm5219, %v6559, %v6567
      %v6569 = vrot.slane %v6238, 5
      %v6570 = vrot.slane %v6241, 6
      %v6571 = vor.u32 %v6569, %v6570
      %v6573 = vshrl.u32 %v6408, 16
      %v6575 = vrot.slane %v6573, 5
      %v6576 = vshll.u32 %v6408, 16
      %v6578 = vrot.slane %v6576, 6
      %v6579 = vor.u32 %v6575, %v6578
      %v6580 = vsel %vm5219, %v6571, %v6579
      %v6581 = vrot.slane %v6246, 5
      %v6582 = vrot.slane %v6249, 6
      %v6583 = vor.u32 %v6581, %v6582
      %v6585 = vshrl.u32 %v6409, 16
      %v6587 = vrot.slane %v6585, 5
      %v6588 = vshll.u32 %v6409, 16
      %v6590 = vrot.slane %v6588, 6
      %v6591 = vor.u32 %v6587, %v6590
      %v6592 = vsel %vm5219, %v6583, %v6591
      %v6593 = vrot.slane %v6254, 5
      %v6594 = vrot.slane %v6257, 6
      %v6595 = vor.u32 %v6593, %v6594
      %v6597 = vshrl.u32 %v6410, 16
      %v6599 = vrot.slane %v6597, 5
      %v6600 = vshll.u32 %v6410, 16
      %v6602 = vrot.slane %v6600, 6
      %v6603 = vor.u32 %v6599, %v6602
      %v6604 = vsel %vm5219, %v6595, %v6603
      %v6605 = vrot.slane %v6262, 5
      %v6606 = vrot.slane %v6265, 6
      %v6607 = vor.u32 %v6605, %v6606
      %v6609 = vshrl.u32 %v6411, 16
      %v6611 = vrot.slane %v6609, 5
      %v6612 = vshll.u32 %v6411, 16
      %v6614 = vrot.slane %v6612, 6
      %v6615 = vor.u32 %v6611, %v6614
      %v6616 = vsel %vm5219, %v6607, %v6615
      %v6617 = vrot.slane %v6270, 5
      %v6618 = vrot.slane %v6273, 6
      %v6619 = vor.u32 %v6617, %v6618
      %v6621 = vshrl.u32 %v6412, 16
      %v6623 = vrot.slane %v6621, 5
      %v6624 = vshll.u32 %v6412, 16
      %v6626 = vrot.slane %v6624, 6
      %v6627 = vor.u32 %v6623, %v6626
      %v6628 = vsel %vm5219, %v6619, %v6627
      %v6629 = vrot.slane %v6278, 5
      %v6630 = vrot.slane %v6281, 6
      %v6631 = vor.u32 %v6629, %v6630
      %v6633 = vshrl.u32 %v6413, 16
      %v6635 = vrot.slane %v6633, 5
      %v6636 = vshll.u32 %v6413, 16
      %v6638 = vrot.slane %v6636, 6
      %v6639 = vor.u32 %v6635, %v6638
      %v6640 = vsel %vm5219, %v6631, %v6639
      %v6641 = vrot.slane %v6286, 5
      %v6642 = vrot.slane %v6289, 6
      %v6643 = vor.u32 %v6641, %v6642
      %v6645 = vshrl.u32 %v6414, 16
      %v6647 = vrot.slane %v6645, 5
      %v6648 = vshll.u32 %v6414, 16
      %v6650 = vrot.slane %v6648, 6
      %v6651 = vor.u32 %v6647, %v6650
      %v6652 = vsel %vm5219, %v6643, %v6651
      %v6653 = vrot.slane %v6294, 5
      %v6654 = vrot.slane %v6297, 6
      %v6655 = vor.u32 %v6653, %v6654
      %v6657 = vshrl.u32 %v6415, 16
      %v6659 = vrot.slane %v6657, 5
      %v6660 = vshll.u32 %v6415, 16
      %v6662 = vrot.slane %v6660, 6
      %v6663 = vor.u32 %v6659, %v6662
      %v6664 = vsel %vm5219, %v6655, %v6663
      %v6665 = vrot.slane %v6302, 5
      %v6666 = vrot.slane %v6305, 6
      %v6667 = vor.u32 %v6665, %v6666
      %v6669 = vshrl.u32 %v6416, 16
      %v6671 = vrot.slane %v6669, 5
      %v6672 = vshll.u32 %v6416, 16
      %v6674 = vrot.slane %v6672, 6
      %v6675 = vor.u32 %v6671, %v6674
      %v6676 = vsel %vm5219, %v6667, %v6675
      %v6677 = vrot.slane %v6310, 5
      %v6678 = vrot.slane %v6313, 6
      %v6679 = vor.u32 %v6677, %v6678
      %v6681 = vshrl.u32 %v6417, 16
      %v6683 = vrot.slane %v6681, 5
      %v6684 = vshll.u32 %v6417, 16
      %v6686 = vrot.slane %v6684, 6
      %v6687 = vor.u32 %v6683, %v6686
      %v6688 = vsel %vm5219, %v6679, %v6687
      %v6689 = vrot.slane %v6318, 5
      %v6690 = vrot.slane %v6321, 6
      %v6691 = vor.u32 %v6689, %v6690
      %v6693 = vshrl.u32 %v6418, 16
      %v6695 = vrot.slane %v6693, 5
      %v6696 = vshll.u32 %v6418, 16
      %v6698 = vrot.slane %v6696, 6
      %v6699 = vor.u32 %v6695, %v6698
      %v6700 = vsel %vm5219, %v6691, %v6699
      %v6701 = vrot.slane %v6326, 5
      %v6702 = vrot.slane %v6329, 6
      %v6703 = vor.u32 %v6701, %v6702
      %v6705 = vshrl.u32 %v6419, 16
      %v6707 = vrot.slane %v6705, 5
      %v6708 = vshll.u32 %v6419, 16
      %v6710 = vrot.slane %v6708, 6
      %v6711 = vor.u32 %v6707, %v6710
      %v6712 = vsel %vm5219, %v6703, %v6711
      %v6713 = vrot.slane %v6334, 5
      %v6714 = vrot.slane %v6337, 6
      %v6715 = vor.u32 %v6713, %v6714
      %v6717 = vshrl.u32 %v6420, 16
      %v6719 = vrot.slane %v6717, 5
      %v6720 = vshll.u32 %v6420, 16
      %v6722 = vrot.slane %v6720, 6
      %v6723 = vor.u32 %v6719, %v6722
      %v6724 = vsel %vm5219, %v6715, %v6723
      %6725 = vrot.lane.b32.xlu0 %v6535, 40
      %v6726 = vpop.permute.xlu0 %6725
      %6727 = vrot.lane.b32.xlu0 %v6544, 40
      %v6728 = vpop.permute.xlu0 %6727
      %6729 = vrot.lane.b32.xlu0 %v6547, 40
      %v6730 = vpop.permute.xlu0 %6729
      %6731 = vrot.lane.b32.xlu0 %v6556, 40
      %v6732 = vpop.permute.xlu0 %6731
      %6733 = vrot.lane.b32.xlu0 %v6559, 40
      %v6734 = vpop.permute.xlu0 %6733
      %6735 = vrot.lane.b32.xlu0 %v6568, 40
      %v6736 = vpop.permute.xlu0 %6735
      %6737 = vrot.lane.b32.xlu0 %v6571, 40
      %v6738 = vpop.permute.xlu0 %6737
      %6739 = vrot.lane.b32.xlu0 %v6580, 40
      %v6740 = vpop.permute.xlu0 %6739
      %6741 = vrot.lane.b32.xlu0 %v6583, 40
      %v6742 = vpop.permute.xlu0 %6741
      %6743 = vrot.lane.b32.xlu0 %v6592, 40
      %v6744 = vpop.permute.xlu0 %6743
      %6745 = vrot.lane.b32.xlu0 %v6595, 40
      %v6746 = vpop.permute.xlu0 %6745
      %6747 = vrot.lane.b32.xlu0 %v6604, 40
      %v6748 = vpop.permute.xlu0 %6747
      %6749 = vrot.lane.b32.xlu0 %v6607, 40
      %v6750 = vpop.permute.xlu0 %6749
      %6751 = vrot.lane.b32.xlu0 %v6616, 40
      %v6752 = vpop.permute.xlu0 %6751
      %6753 = vrot.lane.b32.xlu0 %v6619, 40
      %v6754 = vpop.permute.xlu0 %6753
      %6755 = vrot.lane.b32.xlu0 %v6628, 40
      %v6756 = vpop.permute.xlu0 %6755
      %6757 = vrot.lane.b32.xlu0 %v6631, 40
      %v6758 = vpop.permute.xlu0 %6757
      %6759 = vrot.lane.b32.xlu0 %v6640, 40
      %v6760 = vpop.permute.xlu0 %6759
      %6761 = vrot.lane.b32.xlu0 %v6643, 40
      %v6762 = vpop.permute.xlu0 %6761
      %6763 = vrot.lane.b32.xlu0 %v6652, 40
      %v6764 = vpop.permute.xlu0 %6763
      %6765 = vrot.lane.b32.xlu0 %v6655, 40
      %v6766 = vpop.permute.xlu0 %6765
      %6767 = vrot.lane.b32.xlu0 %v6664, 40
      %v6768 = vpop.permute.xlu0 %6767
      %6769 = vrot.lane.b32.xlu0 %v6667, 40
      %v6770 = vpop.permute.xlu0 %6769
      %6771 = vrot.lane.b32.xlu0 %v6676, 40
      %v6772 = vpop.permute.xlu0 %6771
      %6773 = vrot.lane.b32.xlu0 %v6679, 40
      %v6774 = vpop.permute.xlu0 %6773
      %6775 = vrot.lane.b32.xlu0 %v6688, 40
      %v6776 = vpop.permute.xlu0 %6775
      %6777 = vrot.lane.b32.xlu0 %v6691, 40
      %v6778 = vpop.permute.xlu0 %6777
      %6779 = vrot.lane.b32.xlu0 %v6700, 40
      %v6780 = vpop.permute.xlu0 %6779
      %6781 = vrot.lane.b32.xlu0 %v6703, 40
      %v6782 = vpop.permute.xlu0 %6781
      %6783 = vrot.lane.b32.xlu0 %v6712, 40
      %v6784 = vpop.permute.xlu0 %6783
      %6785 = vrot.lane.b32.xlu0 %v6715, 40
      %v6786 = vpop.permute.xlu0 %6785
      %6787 = vrot.lane.b32.xlu0 %v6724, 40
      %v6788 = vpop.permute.xlu0 %6787
      %v6789 = vrot.slane %v6197, 6
      %v6790 = vrot.slane %v6405, 6
      %v6791 = vsel %vm1648, %v6789, %v6790
      %v6792 = vrot.slane %v6198, 6
      %v6793 = vrot.slane %v6406, 6
      %v6794 = vsel %vm1648, %v6792, %v6793
      %v6795 = vrot.slane %v6199, 6
      %v6796 = vrot.slane %v6407, 6
      %v6797 = vsel %vm1648, %v6795, %v6796
      %v6798 = vrot.slane %v6200, 6
      %v6799 = vrot.slane %v6408, 6
      %v6800 = vsel %vm1648, %v6798, %v6799
      %v6801 = vrot.slane %v6201, 6
      %v6802 = vrot.slane %v6409, 6
      %v6803 = vsel %vm1648, %v6801, %v6802
      %v6804 = vrot.slane %v6202, 6
      %v6805 = vrot.slane %v6410, 6
      %v6806 = vsel %vm1648, %v6804, %v6805
      %v6807 = vrot.slane %v6203, 6
      %v6808 = vrot.slane %v6411, 6
      %v6809 = vsel %vm1648, %v6807, %v6808
      %v6810 = vrot.slane %v6204, 6
      %v6811 = vrot.slane %v6412, 6
      %v6812 = vsel %vm1648, %v6810, %v6811
      %v6813 = vrot.slane %v6205, 6
      %v6814 = vrot.slane %v6413, 6
      %v6815 = vsel %vm1648, %v6813, %v6814
      %v6816 = vrot.slane %v6206, 6
      %v6817 = vrot.slane %v6414, 6
      %v6818 = vsel %vm1648, %v6816, %v6817
      %v6819 = vrot.slane %v6207, 6
      %v6820 = vrot.slane %v6415, 6
      %v6821 = vsel %vm1648, %v6819, %v6820
      %v6822 = vrot.slane %v6208, 6
      %v6823 = vrot.slane %v6416, 6
      %v6824 = vsel %vm1648, %v6822, %v6823
      %v6825 = vrot.slane %v6209, 6
      %v6826 = vrot.slane %v6417, 6
      %v6827 = vsel %vm1648, %v6825, %v6826
      %v6828 = vrot.slane %v6210, 6
      %v6829 = vrot.slane %v6418, 6
      %v6830 = vsel %vm1648, %v6828, %v6829
      %v6831 = vrot.slane %v6211, 6
      %v6832 = vrot.slane %v6419, 6
      %v6833 = vsel %vm1648, %v6831, %v6832
      %v6834 = vrot.slane %v6212, 6
      %v6835 = vrot.slane %v6420, 6
      %v6836 = vsel %vm1648, %v6834, %v6835
      %6837 = vrot.lane.b32.xlu0 %v6789, 44
      %v6838 = vpop.permute.xlu0 %6837
      %6839 = vrot.lane.b32.xlu0 %v6791, 44
      %v6840 = vpop.permute.xlu0 %6839
      %6841 = vrot.lane.b32.xlu0 %v6792, 44
      %v6842 = vpop.permute.xlu0 %6841
      %6843 = vrot.lane.b32.xlu0 %v6794, 44
      %v6844 = vpop.permute.xlu0 %6843
      %6845 = vrot.lane.b32.xlu0 %v6795, 44
      %v6846 = vpop.permute.xlu0 %6845
      %6847 = vrot.lane.b32.xlu0 %v6797, 44
      %v6848 = vpop.permute.xlu0 %6847
      %6849 = vrot.lane.b32.xlu0 %v6798, 44
      %v6850 = vpop.permute.xlu0 %6849
      %6851 = vrot.lane.b32.xlu0 %v6800, 44
      %v6852 = vpop.permute.xlu0 %6851
      %6853 = vrot.lane.b32.xlu0 %v6801, 44
      %v6854 = vpop.permute.xlu0 %6853
      %6855 = vrot.lane.b32.xlu0 %v6803, 44
      %v6856 = vpop.permute.xlu0 %6855
      %6857 = vrot.lane.b32.xlu0 %v6804, 44
      %v6858 = vpop.permute.xlu0 %6857
      %6859 = vrot.lane.b32.xlu0 %v6806, 44
      %v6860 = vpop.permute.xlu0 %6859
      %6861 = vrot.lane.b32.xlu0 %v6807, 44
      %v6862 = vpop.permute.xlu0 %6861
      %6863 = vrot.lane.b32.xlu0 %v6809, 44
      %v6864 = vpop.permute.xlu0 %6863
      %6865 = vrot.lane.b32.xlu0 %v6810, 44
      %v6866 = vpop.permute.xlu0 %6865
      %6867 = vrot.lane.b32.xlu0 %v6812, 44
      %v6868 = vpop.permute.xlu0 %6867
      %6869 = vrot.lane.b32.xlu0 %v6813, 44
      %v6870 = vpop.permute.xlu0 %6869
      %6871 = vrot.lane.b32.xlu0 %v6815, 44
      %v6872 = vpop.permute.xlu0 %6871
      %6873 = vrot.lane.b32.xlu0 %v6816, 44
      %v6874 = vpop.permute.xlu0 %6873
      %6875 = vrot.lane.b32.xlu0 %v6818, 44
      %v6876 = vpop.permute.xlu0 %6875
      %6877 = vrot.lane.b32.xlu0 %v6819, 44
      %v6878 = vpop.permute.xlu0 %6877
      %6879 = vrot.lane.b32.xlu0 %v6821, 44
      %v6880 = vpop.permute.xlu0 %6879
      %6881 = vrot.lane.b32.xlu0 %v6822, 44
      %v6882 = vpop.permute.xlu0 %6881
      %6883 = vrot.lane.b32.xlu0 %v6824, 44
      %v6884 = vpop.permute.xlu0 %6883
      %6885 = vrot.lane.b32.xlu0 %v6825, 44
      %v6886 = vpop.permute.xlu0 %6885
      %6887 = vrot.lane.b32.xlu0 %v6827, 44
      %v6888 = vpop.permute.xlu0 %6887
      %6889 = vrot.lane.b32.xlu0 %v6828, 44
      %v6890 = vpop.permute.xlu0 %6889
      %6891 = vrot.lane.b32.xlu0 %v6830, 44
      %v6892 = vpop.permute.xlu0 %6891
      %6893 = vrot.lane.b32.xlu0 %v6831, 44
      %v6894 = vpop.permute.xlu0 %6893
      %6895 = vrot.lane.b32.xlu0 %v6833, 44
      %v6896 = vpop.permute.xlu0 %6895
      %6897 = vrot.lane.b32.xlu0 %v6834, 44
      %v6898 = vpop.permute.xlu0 %6897
      %6899 = vrot.lane.b32.xlu0 %v6836, 44
      %v6900 = vpop.permute.xlu0 %6899
      %v6949 = vunpack.c.l.b16 %v678
      %v6950 = vunpack.c.l.b16 %v679
      %v6951 = vunpack.c.l.b16 %v680
      %v6952 = vunpack.c.l.b16 %v682
      %v6953 = vunpack.c.l.b16 %v683
      %v6954 = vunpack.c.l.b16 %v684
      %v6955 = vunpack.c.l.b16 %v686
      %v6956 = vunpack.c.l.b16 %v687
      %v6957 = vunpack.c.l.b16 %v688
      %v6958 = vunpack.c.l.b16 %v690
      %v6959 = vunpack.c.l.b16 %v691
      %v6960 = vunpack.c.l.b16 %v692
      %v6961 = vunpack.c.l.b16 %v694
      %v6962 = vunpack.c.l.b16 %v695
      %v6963 = vunpack.c.l.b16 %v696
      %v6964 = vunpack.c.l.b16 %v698
      %v6965 = vunpack.c.l.b16 %v699
      %v6966 = vunpack.c.l.b16 %v700
      %v6967 = vunpack.c.l.b16 %v702
      %v6968 = vunpack.c.l.b16 %v703
      %v6969 = vunpack.c.l.b16 %v704
      %v6970 = vunpack.c.l.b16 %v706
      %v6971 = vunpack.c.l.b16 %v707
      %v6972 = vunpack.c.l.b16 %v708
      %v6973 = vunpack.c.l.b16 %v710
      %v6974 = vunpack.c.l.b16 %v711
      %v6975 = vunpack.c.l.b16 %v712
      %v6976 = vunpack.c.l.b16 %v714
      %v6977 = vunpack.c.l.b16 %v715
      %v6978 = vunpack.c.l.b16 %v716
      %v6979 = vunpack.c.l.b16 %v718
      %v6980 = vunpack.c.l.b16 %v719
      %v6981 = vunpack.c.l.b16 %v720
      %v6982 = vunpack.c.l.b16 %v722
      %v6983 = vunpack.c.l.b16 %v723
      %v6984 = vunpack.c.l.b16 %v724
      %v6985 = vunpack.c.l.b16 %v726
      %v6986 = vunpack.c.l.b16 %v727
      %v6987 = vunpack.c.l.b16 %v728
      %v6988 = vunpack.c.l.b16 %v730
      %v6989 = vunpack.c.l.b16 %v731
      %v6990 = vunpack.c.l.b16 %v732
      %v6991 = vunpack.c.l.b16 %v734
      %v6992 = vunpack.c.l.b16 %v735
      %v6993 = vunpack.c.l.b16 %v736
      %v6994 = vunpack.c.l.b16 %v738
      %v6995 = vunpack.c.l.b16 %v739
      %v6996 = vunpack.c.l.b16 %v740
      %v6997 = vpack.c.b16 %v6950, %v6949
      %v6998 = vpack.c.b16 %v6951, %v6951
      %v6999 = vpack.c.b16 %v6953, %v6952
      %v7000 = vpack.c.b16 %v6954, %v6954
      %v7001 = vpack.c.b16 %v6956, %v6955
      %v7002 = vpack.c.b16 %v6957, %v6957
      %v7003 = vpack.c.b16 %v6959, %v6958
      %v7004 = vpack.c.b16 %v6960, %v6960
      %v7005 = vpack.c.b16 %v6962, %v6961
      %v7006 = vpack.c.b16 %v6963, %v6963
      %v7007 = vpack.c.b16 %v6965, %v6964
      %v7008 = vpack.c.b16 %v6966, %v6966
      %v7009 = vpack.c.b16 %v6968, %v6967
      %v7010 = vpack.c.b16 %v6969, %v6969
      %v7011 = vpack.c.b16 %v6971, %v6970
      %v7012 = vpack.c.b16 %v6972, %v6972
      %v7013 = vpack.c.b16 %v6974, %v6973
      %v7014 = vpack.c.b16 %v6975, %v6975
      %v7015 = vpack.c.b16 %v6977, %v6976
      %v7016 = vpack.c.b16 %v6978, %v6978
      %v7017 = vpack.c.b16 %v6980, %v6979
      %v7018 = vpack.c.b16 %v6981, %v6981
      %v7019 = vpack.c.b16 %v6983, %v6982
      %v7020 = vpack.c.b16 %v6984, %v6984
      %v7021 = vpack.c.b16 %v6986, %v6985
      %v7022 = vpack.c.b16 %v6987, %v6987
      %v7023 = vpack.c.b16 %v6989, %v6988
      %v7024 = vpack.c.b16 %v6990, %v6990
      %v7025 = vpack.c.b16 %v6992, %v6991
      %v7026 = vpack.c.b16 %v6993, %v6993
      %v7027 = vpack.c.b16 %v6995, %v6994
      %v7028 = vpack.c.b16 %v6996, %v6996
      %v7029 = vrot.slane %v6997, 7
      %v7030 = vrot.slane %v6998, 7
      %v7031 = vsel %vm2018, %v7029, %v7030
      %v7032 = vrot.slane %v6999, 7
      %v7033 = vrot.slane %v7000, 7
      %v7034 = vsel %vm2018, %v7032, %v7033
      %v7035 = vrot.slane %v7001, 7
      %v7036 = vrot.slane %v7002, 7
      %v7037 = vsel %vm2018, %v7035, %v7036
      %v7038 = vrot.slane %v7003, 7
      %v7039 = vrot.slane %v7004, 7
      %v7040 = vsel %vm2018, %v7038, %v7039
      %v7041 = vrot.slane %v7005, 7
      %v7042 = vrot.slane %v7006, 7
      %v7043 = vsel %vm2018, %v7041, %v7042
      %v7044 = vrot.slane %v7007, 7
      %v7045 = vrot.slane %v7008, 7
      %v7046 = vsel %vm2018, %v7044, %v7045
      %v7047 = vrot.slane %v7009, 7
      %v7048 = vrot.slane %v7010, 7
      %v7049 = vsel %vm2018, %v7047, %v7048
      %v7050 = vrot.slane %v7011, 7
      %v7051 = vrot.slane %v7012, 7
      %v7052 = vsel %vm2018, %v7050, %v7051
      %v7053 = vrot.slane %v7013, 7
      %v7054 = vrot.slane %v7014, 7
      %v7055 = vsel %vm2018, %v7053, %v7054
      %v7056 = vrot.slane %v7015, 7
      %v7057 = vrot.slane %v7016, 7
      %v7058 = vsel %vm2018, %v7056, %v7057
      %v7059 = vrot.slane %v7017, 7
      %v7060 = vrot.slane %v7018, 7
      %v7061 = vsel %vm2018, %v7059, %v7060
      %v7062 = vrot.slane %v7019, 7
      %v7063 = vrot.slane %v7020, 7
      %v7064 = vsel %vm2018, %v7062, %v7063
      %v7065 = vrot.slane %v7021, 7
      %v7066 = vrot.slane %v7022, 7
      %v7067 = vsel %vm2018, %v7065, %v7066
      %v7068 = vrot.slane %v7023, 7
      %v7069 = vrot.slane %v7024, 7
      %v7070 = vsel %vm2018, %v7068, %v7069
      %v7071 = vrot.slane %v7025, 7
      %v7072 = vrot.slane %v7026, 7
      %v7073 = vsel %vm2018, %v7071, %v7072
      %v7074 = vrot.slane %v7027, 7
      %v7075 = vrot.slane %v7028, 7
      %v7076 = vsel %vm2018, %v7074, %v7075
      %7077 = vrot.lane.b32.xlu0 %v7029, 48
      %v7078 = vpop.permute.xlu0 %7077
      %7079 = vrot.lane.b32.xlu0 %v7031, 48
      %v7080 = vpop.permute.xlu0 %7079
      %7081 = vrot.lane.b32.xlu0 %v7032, 48
      %v7082 = vpop.permute.xlu0 %7081
      %7083 = vrot.lane.b32.xlu0 %v7034, 48
      %v7084 = vpop.permute.xlu0 %7083
      %7085 = vrot.lane.b32.xlu0 %v7035, 48
      %v7086 = vpop.permute.xlu0 %7085
      %7087 = vrot.lane.b32.xlu0 %v7037, 48
      %v7088 = vpop.permute.xlu0 %7087
      %7089 = vrot.lane.b32.xlu0 %v7038, 48
      %v7090 = vpop.permute.xlu0 %7089
      %7091 = vrot.lane.b32.xlu0 %v7040, 48
      %v7092 = vpop.permute.xlu0 %7091
      %7093 = vrot.lane.b32.xlu0 %v7041, 48
      %v7094 = vpop.permute.xlu0 %7093
      %7095 = vrot.lane.b32.xlu0 %v7043, 48
      %v7096 = vpop.permute.xlu0 %7095
      %7097 = vrot.lane.b32.xlu0 %v7044, 48
      %v7098 = vpop.permute.xlu0 %7097
      %7099 = vrot.lane.b32.xlu0 %v7046, 48
      %v7100 = vpop.permute.xlu0 %7099
      %7101 = vrot.lane.b32.xlu0 %v7047, 48
      %v7102 = vpop.permute.xlu0 %7101
      %7103 = vrot.lane.b32.xlu0 %v7049, 48
      %v7104 = vpop.permute.xlu0 %7103
      %7105 = vrot.lane.b32.xlu0 %v7050, 48
      %v7106 = vpop.permute.xlu0 %7105
      %7107 = vrot.lane.b32.xlu0 %v7052, 48
      %v7108 = vpop.permute.xlu0 %7107
      %7109 = vrot.lane.b32.xlu0 %v7053, 48
      %v7110 = vpop.permute.xlu0 %7109
      %7111 = vrot.lane.b32.xlu0 %v7055, 48
      %v7112 = vpop.permute.xlu0 %7111
      %7113 = vrot.lane.b32.xlu0 %v7056, 48
      %v7114 = vpop.permute.xlu0 %7113
      %7115 = vrot.lane.b32.xlu0 %v7058, 48
      %v7116 = vpop.permute.xlu0 %7115
      %7117 = vrot.lane.b32.xlu0 %v7059, 48
      %v7118 = vpop.permute.xlu0 %7117
      %7119 = vrot.lane.b32.xlu0 %v7061, 48
      %v7120 = vpop.permute.xlu0 %7119
      %7121 = vrot.lane.b32.xlu0 %v7062, 48
      %v7122 = vpop.permute.xlu0 %7121
      %7123 = vrot.lane.b32.xlu0 %v7064, 48
      %v7124 = vpop.permute.xlu0 %7123
      %7125 = vrot.lane.b32.xlu0 %v7065, 48
      %v7126 = vpop.permute.xlu0 %7125
      %7127 = vrot.lane.b32.xlu0 %v7067, 48
      %v7128 = vpop.permute.xlu0 %7127
      %7129 = vrot.lane.b32.xlu0 %v7068, 48
      %v7130 = vpop.permute.xlu0 %7129
      %7131 = vrot.lane.b32.xlu0 %v7070, 48
      %v7132 = vpop.permute.xlu0 %7131
      %7133 = vrot.lane.b32.xlu0 %v7071, 48
      %v7134 = vpop.permute.xlu0 %7133
      %7135 = vrot.lane.b32.xlu0 %v7073, 48
      %v7136 = vpop.permute.xlu0 %7135
      %7137 = vrot.lane.b32.xlu0 %v7074, 48
      %v7138 = vpop.permute.xlu0 %7137
      %7139 = vrot.lane.b32.xlu0 %v7076, 48
      %v7140 = vpop.permute.xlu0 %7139
      %v7142 = vshrl.u32 %v6997, 16
      %v7144 = vrot.slane %v7142, 7
      %v7145 = vshll.u32 %v6997, 16
      %v7147 = vor.u32 %v7144, %v7145
      %v7149 = vshrl.u32 %v6998, 16
      %v7151 = vrot.slane %v7149, 7
      %v7152 = vshll.u32 %v6998, 16
      %v7154 = vor.u32 %v7151, %v7152
      %v7155 = vsel %vm5828, %v7144, %v7154
      %v7157 = vshrl.u32 %v6999, 16
      %v7159 = vrot.slane %v7157, 7
      %v7160 = vshll.u32 %v6999, 16
      %v7162 = vor.u32 %v7159, %v7160
      %v7164 = vshrl.u32 %v7000, 16
      %v7166 = vrot.slane %v7164, 7
      %v7167 = vshll.u32 %v7000, 16
      %v7169 = vor.u32 %v7166, %v7167
      %v7170 = vsel %vm5828, %v7159, %v7169
      %v7172 = vshrl.u32 %v7001, 16
      %v7174 = vrot.slane %v7172, 7
      %v7175 = vshll.u32 %v7001, 16
      %v7177 = vor.u32 %v7174, %v7175
      %v7179 = vshrl.u32 %v7002, 16
      %v7181 = vrot.slane %v7179, 7
      %v7182 = vshll.u32 %v7002, 16
      %v7184 = vor.u32 %v7181, %v7182
      %v7185 = vsel %vm5828, %v7174, %v7184
      %v7187 = vshrl.u32 %v7003, 16
      %v7189 = vrot.slane %v7187, 7
      %v7190 = vshll.u32 %v7003, 16
      %v7192 = vor.u32 %v7189, %v7190
      %v7194 = vshrl.u32 %v7004, 16
      %v7196 = vrot.slane %v7194, 7
      %v7197 = vshll.u32 %v7004, 16
      %v7199 = vor.u32 %v7196, %v7197
      %v7200 = vsel %vm5828, %v7189, %v7199
      %v7202 = vshrl.u32 %v7005, 16
      %v7204 = vrot.slane %v7202, 7
      %v7205 = vshll.u32 %v7005, 16
      %v7207 = vor.u32 %v7204, %v7205
      %v7209 = vshrl.u32 %v7006, 16
      %v7211 = vrot.slane %v7209, 7
      %v7212 = vshll.u32 %v7006, 16
      %v7214 = vor.u32 %v7211, %v7212
      %v7215 = vsel %vm5828, %v7204, %v7214
      %v7217 = vshrl.u32 %v7007, 16
      %v7219 = vrot.slane %v7217, 7
      %v7220 = vshll.u32 %v7007, 16
      %v7222 = vor.u32 %v7219, %v7220
      %v7224 = vshrl.u32 %v7008, 16
      %v7226 = vrot.slane %v7224, 7
      %v7227 = vshll.u32 %v7008, 16
      %v7229 = vor.u32 %v7226, %v7227
      %v7230 = vsel %vm5828, %v7219, %v7229
      %v7232 = vshrl.u32 %v7009, 16
      %v7234 = vrot.slane %v7232, 7
      %v7235 = vshll.u32 %v7009, 16
      %v7237 = vor.u32 %v7234, %v7235
      %v7239 = vshrl.u32 %v7010, 16
      %v7241 = vrot.slane %v7239, 7
      %v7242 = vshll.u32 %v7010, 16
      %v7244 = vor.u32 %v7241, %v7242
      %v7245 = vsel %vm5828, %v7234, %v7244
      %v7247 = vshrl.u32 %v7011, 16
      %v7249 = vrot.slane %v7247, 7
      %v7250 = vshll.u32 %v7011, 16
      %v7252 = vor.u32 %v7249, %v7250
      %v7254 = vshrl.u32 %v7012, 16
      %v7256 = vrot.slane %v7254, 7
      %v7257 = vshll.u32 %v7012, 16
      %v7259 = vor.u32 %v7256, %v7257
      %v7260 = vsel %vm5828, %v7249, %v7259
      %v7262 = vshrl.u32 %v7013, 16
      %v7264 = vrot.slane %v7262, 7
      %v7265 = vshll.u32 %v7013, 16
      %v7267 = vor.u32 %v7264, %v7265
      %v7269 = vshrl.u32 %v7014, 16
      %v7271 = vrot.slane %v7269, 7
      %v7272 = vshll.u32 %v7014, 16
      %v7274 = vor.u32 %v7271, %v7272
      %v7275 = vsel %vm5828, %v7264, %v7274
      %v7277 = vshrl.u32 %v7015, 16
      %v7279 = vrot.slane %v7277, 7
      %v7280 = vshll.u32 %v7015, 16
      %v7282 = vor.u32 %v7279, %v7280
      %v7284 = vshrl.u32 %v7016, 16
      %v7286 = vrot.slane %v7284, 7
      %v7287 = vshll.u32 %v7016, 16
      %v7289 = vor.u32 %v7286, %v7287
      %v7290 = vsel %vm5828, %v7279, %v7289
      %v7292 = vshrl.u32 %v7017, 16
      %v7294 = vrot.slane %v7292, 7
      %v7295 = vshll.u32 %v7017, 16
      %v7297 = vor.u32 %v7294, %v7295
      %v7299 = vshrl.u32 %v7018, 16
      %v7301 = vrot.slane %v7299, 7
      %v7302 = vshll.u32 %v7018, 16
      %v7304 = vor.u32 %v7301, %v7302
      %v7305 = vsel %vm5828, %v7294, %v7304
      %v7307 = vshrl.u32 %v7019, 16
      %v7309 = vrot.slane %v7307, 7
      %v7310 = vshll.u32 %v7019, 16
      %v7312 = vor.u32 %v7309, %v7310
      %v7314 = vshrl.u32 %v7020, 16
      %v7316 = vrot.slane %v7314, 7
      %v7317 = vshll.u32 %v7020, 16
      %v7319 = vor.u32 %v7316, %v7317
      %v7320 = vsel %vm5828, %v7309, %v7319
      %v7322 = vshrl.u32 %v7021, 16
      %v7324 = vrot.slane %v7322, 7
      %v7325 = vshll.u32 %v7021, 16
      %v7327 = vor.u32 %v7324, %v7325
      %v7329 = vshrl.u32 %v7022, 16
      %v7331 = vrot.slane %v7329, 7
      %v7332 = vshll.u32 %v7022, 16
      %v7334 = vor.u32 %v7331, %v7332
      %v7335 = vsel %vm5828, %v7324, %v7334
      %v7337 = vshrl.u32 %v7023, 16
      %v7339 = vrot.slane %v7337, 7
      %v7340 = vshll.u32 %v7023, 16
      %v7342 = vor.u32 %v7339, %v7340
      %v7344 = vshrl.u32 %v7024, 16
      %v7346 = vrot.slane %v7344, 7
      %v7347 = vshll.u32 %v7024, 16
      %v7349 = vor.u32 %v7346, %v7347
      %v7350 = vsel %vm5828, %v7339, %v7349
      %v7352 = vshrl.u32 %v7025, 16
      %v7354 = vrot.slane %v7352, 7
      %v7355 = vshll.u32 %v7025, 16
      %v7357 = vor.u32 %v7354, %v7355
      %v7359 = vshrl.u32 %v7026, 16
      %v7361 = vrot.slane %v7359, 7
      %v7362 = vshll.u32 %v7026, 16
      %v7364 = vor.u32 %v7361, %v7362
      %v7365 = vsel %vm5828, %v7354, %v7364
      %v7367 = vshrl.u32 %v7027, 16
      %v7369 = vrot.slane %v7367, 7
      %v7370 = vshll.u32 %v7027, 16
      %v7372 = vor.u32 %v7369, %v7370
      %v7374 = vshrl.u32 %v7028, 16
      %v7376 = vrot.slane %v7374, 7
      %v7377 = vshll.u32 %v7028, 16
      %v7379 = vor.u32 %v7376, %v7377
      %v7380 = vsel %vm5828, %v7369, %v7379
      %7381 = vrot.lane.b32.xlu0 %v7147, 52
      %v7382 = vpop.permute.xlu0 %7381
      %7383 = vrot.lane.b32.xlu0 %v7155, 52
      %v7384 = vpop.permute.xlu0 %7383
      %7385 = vrot.lane.b32.xlu0 %v7162, 52
      %v7386 = vpop.permute.xlu0 %7385
      %7387 = vrot.lane.b32.xlu0 %v7170, 52
      %v7388 = vpop.permute.xlu0 %7387
      %7389 = vrot.lane.b32.xlu0 %v7177, 52
      %v7390 = vpop.permute.xlu0 %7389
      %7391 = vrot.lane.b32.xlu0 %v7185, 52
      %v7392 = vpop.permute.xlu0 %7391
      %7393 = vrot.lane.b32.xlu0 %v7192, 52
      %v7394 = vpop.permute.xlu0 %7393
      %7395 = vrot.lane.b32.xlu0 %v7200, 52
      %v7396 = vpop.permute.xlu0 %7395
      %7397 = vrot.lane.b32.xlu0 %v7207, 52
      %v7398 = vpop.permute.xlu0 %7397
      %7399 = vrot.lane.b32.xlu0 %v7215, 52
      %v7400 = vpop.permute.xlu0 %7399
      %7401 = vrot.lane.b32.xlu0 %v7222, 52
      %v7402 = vpop.permute.xlu0 %7401
      %7403 = vrot.lane.b32.xlu0 %v7230, 52
      %v7404 = vpop.permute.xlu0 %7403
      %7405 = vrot.lane.b32.xlu0 %v7237, 52
      %v7406 = vpop.permute.xlu0 %7405
      %7407 = vrot.lane.b32.xlu0 %v7245, 52
      %v7408 = vpop.permute.xlu0 %7407
      %7409 = vrot.lane.b32.xlu0 %v7252, 52
      %v7410 = vpop.permute.xlu0 %7409
      %7411 = vrot.lane.b32.xlu0 %v7260, 52
      %v7412 = vpop.permute.xlu0 %7411
      %7413 = vrot.lane.b32.xlu0 %v7267, 52
      %v7414 = vpop.permute.xlu0 %7413
      %7415 = vrot.lane.b32.xlu0 %v7275, 52
      %v7416 = vpop.permute.xlu0 %7415
      %7417 = vrot.lane.b32.xlu0 %v7282, 52
      %v7418 = vpop.permute.xlu0 %7417
      %7419 = vrot.lane.b32.xlu0 %v7290, 52
      %v7420 = vpop.permute.xlu0 %7419
      %7421 = vrot.lane.b32.xlu0 %v7297, 52
      %v7422 = vpop.permute.xlu0 %7421
      %7423 = vrot.lane.b32.xlu0 %v7305, 52
      %v7424 = vpop.permute.xlu0 %7423
      %7425 = vrot.lane.b32.xlu0 %v7312, 52
      %v7426 = vpop.permute.xlu0 %7425
      %7427 = vrot.lane.b32.xlu0 %v7320, 52
      %v7428 = vpop.permute.xlu0 %7427
      %7429 = vrot.lane.b32.xlu0 %v7327, 52
      %v7430 = vpop.permute.xlu0 %7429
      %7431 = vrot.lane.b32.xlu0 %v7335, 52
      %v7432 = vpop.permute.xlu0 %7431
      %7433 = vrot.lane.b32.xlu0 %v7342, 52
      %v7434 = vpop.permute.xlu0 %7433
      %7435 = vrot.lane.b32.xlu0 %v7350, 52
      %v7436 = vpop.permute.xlu0 %7435
      %7437 = vrot.lane.b32.xlu0 %v7357, 52
      %v7438 = vpop.permute.xlu0 %7437
      %7439 = vrot.lane.b32.xlu0 %v7365, 52
      %v7440 = vpop.permute.xlu0 %7439
      %7441 = vrot.lane.b32.xlu0 %v7372, 52
      %v7442 = vpop.permute.xlu0 %7441
      %7443 = vrot.lane.b32.xlu0 %v7380, 52
      %v7444 = vpop.permute.xlu0 %7443
      %7445 = vrot.lane.b32.xlu0 %v6997, 56
      %v7446 = vpop.permute.xlu0 %7445
      %7447 = vrot.lane.b32.xlu0 %v6998, 56
      %v7448 = vpop.permute.xlu0 %7447
      %7449 = vrot.lane.b32.xlu0 %v6999, 56
      %v7450 = vpop.permute.xlu0 %7449
      %7451 = vrot.lane.b32.xlu0 %v7000, 56
      %v7452 = vpop.permute.xlu0 %7451
      %7453 = vrot.lane.b32.xlu0 %v7001, 56
      %v7454 = vpop.permute.xlu0 %7453
      %7455 = vrot.lane.b32.xlu0 %v7002, 56
      %v7456 = vpop.permute.xlu0 %7455
      %7457 = vrot.lane.b32.xlu0 %v7003, 56
      %v7458 = vpop.permute.xlu0 %7457
      %7459 = vrot.lane.b32.xlu0 %v7004, 56
      %v7460 = vpop.permute.xlu0 %7459
      %7461 = vrot.lane.b32.xlu0 %v7005, 56
      %v7462 = vpop.permute.xlu0 %7461
      %7463 = vrot.lane.b32.xlu0 %v7006, 56
      %v7464 = vpop.permute.xlu0 %7463
      %7465 = vrot.lane.b32.xlu0 %v7007, 56
      %v7466 = vpop.permute.xlu0 %7465
      %7467 = vrot.lane.b32.xlu0 %v7008, 56
      %v7468 = vpop.permute.xlu0 %7467
      %7469 = vrot.lane.b32.xlu0 %v7009, 56
      %v7470 = vpop.permute.xlu0 %7469
      %7471 = vrot.lane.b32.xlu0 %v7010, 56
      %v7472 = vpop.permute.xlu0 %7471
      %7473 = vrot.lane.b32.xlu0 %v7011, 56
      %v7474 = vpop.permute.xlu0 %7473
      %7475 = vrot.lane.b32.xlu0 %v7012, 56
      %v7476 = vpop.permute.xlu0 %7475
      %7477 = vrot.lane.b32.xlu0 %v7013, 56
      %v7478 = vpop.permute.xlu0 %7477
      %7479 = vrot.lane.b32.xlu0 %v7014, 56
      %v7480 = vpop.permute.xlu0 %7479
      %7481 = vrot.lane.b32.xlu0 %v7015, 56
      %v7482 = vpop.permute.xlu0 %7481
      %7483 = vrot.lane.b32.xlu0 %v7016, 56
      %v7484 = vpop.permute.xlu0 %7483
      %7485 = vrot.lane.b32.xlu0 %v7017, 56
      %v7486 = vpop.permute.xlu0 %7485
      %7487 = vrot.lane.b32.xlu0 %v7018, 56
      %v7488 = vpop.permute.xlu0 %7487
      %7489 = vrot.lane.b32.xlu0 %v7019, 56
      %v7490 = vpop.permute.xlu0 %7489
      %7491 = vrot.lane.b32.xlu0 %v7020, 56
      %v7492 = vpop.permute.xlu0 %7491
      %7493 = vrot.lane.b32.xlu0 %v7021, 56
      %v7494 = vpop.permute.xlu0 %7493
      %7495 = vrot.lane.b32.xlu0 %v7022, 56
      %v7496 = vpop.permute.xlu0 %7495
      %7497 = vrot.lane.b32.xlu0 %v7023, 56
      %v7498 = vpop.permute.xlu0 %7497
      %7499 = vrot.lane.b32.xlu0 %v7024, 56
      %v7500 = vpop.permute.xlu0 %7499
      %7501 = vrot.lane.b32.xlu0 %v7025, 56
      %v7502 = vpop.permute.xlu0 %7501
      %7503 = vrot.lane.b32.xlu0 %v7026, 56
      %v7504 = vpop.permute.xlu0 %7503
      %7505 = vrot.lane.b32.xlu0 %v7027, 56
      %v7506 = vpop.permute.xlu0 %7505
      %7507 = vrot.lane.b32.xlu0 %v7028, 56
      %v7508 = vpop.permute.xlu0 %7507
      %v7509 = vpack.c.b16 %v6951, %v6950
      %v7510 = vpack.c.b16 %v6954, %v6953
      %v7511 = vpack.c.b16 %v6957, %v6956
      %v7512 = vpack.c.b16 %v6960, %v6959
      %v7513 = vpack.c.b16 %v6963, %v6962
      %v7514 = vpack.c.b16 %v6966, %v6965
      %v7515 = vpack.c.b16 %v6969, %v6968
      %v7516 = vpack.c.b16 %v6972, %v6971
      %v7517 = vpack.c.b16 %v6975, %v6974
      %v7518 = vpack.c.b16 %v6978, %v6977
      %v7519 = vpack.c.b16 %v6981, %v6980
      %v7520 = vpack.c.b16 %v6984, %v6983
      %v7521 = vpack.c.b16 %v6987, %v6986
      %v7522 = vpack.c.b16 %v6990, %v6989
      %v7523 = vpack.c.b16 %v6993, %v6992
      %v7524 = vpack.c.b16 %v6996, %v6995
      %v7526 = vshrl.u32 %v7509, 16
      %v7528 = vrot.slane %v7526, 4
      %v7529 = vshll.u32 %v7509, 16
      %v7531 = vrot.slane %v7529, 5
      %v7532 = vor.u32 %v7528, %v7531
      %v7534 = vshrl.u32 %v7510, 16
      %v7536 = vrot.slane %v7534, 4
      %v7537 = vshll.u32 %v7510, 16
      %v7539 = vrot.slane %v7537, 5
      %v7540 = vor.u32 %v7536, %v7539
      %v7542 = vshrl.u32 %v7511, 16
      %v7544 = vrot.slane %v7542, 4
      %v7545 = vshll.u32 %v7511, 16
      %v7547 = vrot.slane %v7545, 5
      %v7548 = vor.u32 %v7544, %v7547
      %v7550 = vshrl.u32 %v7512, 16
      %v7552 = vrot.slane %v7550, 4
      %v7553 = vshll.u32 %v7512, 16
      %v7555 = vrot.slane %v7553, 5
      %v7556 = vor.u32 %v7552, %v7555
      %v7558 = vshrl.u32 %v7513, 16
      %v7560 = vrot.slane %v7558, 4
      %v7561 = vshll.u32 %v7513, 16
      %v7563 = vrot.slane %v7561, 5
      %v7564 = vor.u32 %v7560, %v7563
      %v7566 = vshrl.u32 %v7514, 16
      %v7568 = vrot.slane %v7566, 4
      %v7569 = vshll.u32 %v7514, 16
      %v7571 = vrot.slane %v7569, 5
      %v7572 = vor.u32 %v7568, %v7571
      %v7574 = vshrl.u32 %v7515, 16
      %v7576 = vrot.slane %v7574, 4
      %v7577 = vshll.u32 %v7515, 16
      %v7579 = vrot.slane %v7577, 5
      %v7580 = vor.u32 %v7576, %v7579
      %v7582 = vshrl.u32 %v7516, 16
      %v7584 = vrot.slane %v7582, 4
      %v7585 = vshll.u32 %v7516, 16
      %v7587 = vrot.slane %v7585, 5
      %v7588 = vor.u32 %v7584, %v7587
      %v7590 = vshrl.u32 %v7517, 16
      %v7592 = vrot.slane %v7590, 4
      %v7593 = vshll.u32 %v7517, 16
      %v7595 = vrot.slane %v7593, 5
      %v7596 = vor.u32 %v7592, %v7595
      %v7598 = vshrl.u32 %v7518, 16
      %v7600 = vrot.slane %v7598, 4
      %v7601 = vshll.u32 %v7518, 16
      %v7603 = vrot.slane %v7601, 5
      %v7604 = vor.u32 %v7600, %v7603
      %v7606 = vshrl.u32 %v7519, 16
      %v7608 = vrot.slane %v7606, 4
      %v7609 = vshll.u32 %v7519, 16
      %v7611 = vrot.slane %v7609, 5
      %v7612 = vor.u32 %v7608, %v7611
      %v7614 = vshrl.u32 %v7520, 16
      %v7616 = vrot.slane %v7614, 4
      %v7617 = vshll.u32 %v7520, 16
      %v7619 = vrot.slane %v7617, 5
      %v7620 = vor.u32 %v7616, %v7619
      %v7622 = vshrl.u32 %v7521, 16
      %v7624 = vrot.slane %v7622, 4
      %v7625 = vshll.u32 %v7521, 16
      %v7627 = vrot.slane %v7625, 5
      %v7628 = vor.u32 %v7624, %v7627
      %v7630 = vshrl.u32 %v7522, 16
      %v7632 = vrot.slane %v7630, 4
      %v7633 = vshll.u32 %v7522, 16
      %v7635 = vrot.slane %v7633, 5
      %v7636 = vor.u32 %v7632, %v7635
      %v7638 = vshrl.u32 %v7523, 16
      %v7640 = vrot.slane %v7638, 4
      %v7641 = vshll.u32 %v7523, 16
      %v7643 = vrot.slane %v7641, 5
      %v7644 = vor.u32 %v7640, %v7643
      %v7646 = vshrl.u32 %v7524, 16
      %v7648 = vrot.slane %v7646, 4
      %v7649 = vshll.u32 %v7524, 16
      %v7651 = vrot.slane %v7649, 5
      %v7652 = vor.u32 %v7648, %v7651
      %7653 = vrot.lane.b32.xlu0 %v7532, 60
      %v7654 = vpop.permute.xlu0 %7653
      %7655 = vrot.lane.b32.xlu0 %v7540, 60
      %v7656 = vpop.permute.xlu0 %7655
      %7657 = vrot.lane.b32.xlu0 %v7548, 60
      %v7658 = vpop.permute.xlu0 %7657
      %7659 = vrot.lane.b32.xlu0 %v7556, 60
      %v7660 = vpop.permute.xlu0 %7659
      %7661 = vrot.lane.b32.xlu0 %v7564, 60
      %v7662 = vpop.permute.xlu0 %7661
      %7663 = vrot.lane.b32.xlu0 %v7572, 60
      %v7664 = vpop.permute.xlu0 %7663
      %7665 = vrot.lane.b32.xlu0 %v7580, 60
      %v7666 = vpop.permute.xlu0 %7665
      %7667 = vrot.lane.b32.xlu0 %v7588, 60
      %v7668 = vpop.permute.xlu0 %7667
      %7669 = vrot.lane.b32.xlu0 %v7596, 60
      %v7670 = vpop.permute.xlu0 %7669
      %7671 = vrot.lane.b32.xlu0 %v7604, 60
      %v7672 = vpop.permute.xlu0 %7671
      %7673 = vrot.lane.b32.xlu0 %v7612, 60
      %v7674 = vpop.permute.xlu0 %7673
      %7675 = vrot.lane.b32.xlu0 %v7620, 60
      %v7676 = vpop.permute.xlu0 %7675
      %7677 = vrot.lane.b32.xlu0 %v7628, 60
      %v7678 = vpop.permute.xlu0 %7677
      %7679 = vrot.lane.b32.xlu0 %v7636, 60
      %v7680 = vpop.permute.xlu0 %7679
      %7681 = vrot.lane.b32.xlu0 %v7644, 60
      %v7682 = vpop.permute.xlu0 %7681
      %7683 = vrot.lane.b32.xlu0 %v7652, 60
      %v7684 = vpop.permute.xlu0 %7683
      %v7686 = vsel %vm3939, %v3539, %v5027
      %v7687 = vsel %vm3939, %v3540, %v5027
      %v7689 = vsel %vm3939, %v3541, %v5029
      %v7690 = vsel %vm3939, %v3542, %v5029
      %v7692 = vsel %vm3939, %v3543, %v5031
      %v7693 = vsel %vm3939, %v3544, %v5031
      %v7695 = vsel %vm3939, %v3545, %v5033
      %v7696 = vsel %vm3939, %v3546, %v5033
      %v7698 = vsel %vm3939, %v3547, %v5035
      %v7699 = vsel %vm3939, %v3548, %v5035
      %v7701 = vsel %vm3939, %v3549, %v5037
      %v7702 = vsel %vm3939, %v3550, %v5037
      %v7704 = vsel %vm3939, %v3551, %v5039
      %v7705 = vsel %vm3939, %v3552, %v5039
      %v7707 = vsel %vm3939, %v3553, %v5041
      %v7708 = vsel %vm3939, %v3554, %v5041
      %v7710 = vsel %vm3939, %v3555, %v5043
      %v7711 = vsel %vm3939, %v3556, %v5043
      %v7713 = vsel %vm3939, %v3557, %v5045
      %v7714 = vsel %vm3939, %v3558, %v5045
      %v7716 = vsel %vm3939, %v3559, %v5047
      %v7717 = vsel %vm3939, %v3560, %v5047
      %v7719 = vsel %vm3939, %v3561, %v5049
      %v7720 = vsel %vm3939, %v3562, %v5049
      %v7722 = vsel %vm3939, %v3563, %v5051
      %v7723 = vsel %vm3939, %v3564, %v5051
      %v7725 = vsel %vm3939, %v3565, %v5053
      %v7726 = vsel %vm3939, %v3566, %v5053
      %v7728 = vsel %vm3939, %v3567, %v5055
      %v7729 = vsel %vm3939, %v3568, %v5055
      %v7731 = vsel %vm3939, %v3569, %v5057
      %v7732 = vsel %vm3939, %v3570, %v5057
      %v7734 = vsel %vm4004, %v7686, %v5156
      %v7736 = vsel %vm4004, %v7687, %v5158
      %v7738 = vsel %vm4004, %v7689, %v5160
      %v7740 = vsel %vm4004, %v7690, %v5162
      %v7742 = vsel %vm4004, %v7692, %v5164
      %v7744 = vsel %vm4004, %v7693, %v5166
      %v7746 = vsel %vm4004, %v7695, %v5168
      %v7748 = vsel %vm4004, %v7696, %v5170
      %v7750 = vsel %vm4004, %v7698, %v5172
      %v7752 = vsel %vm4004, %v7699, %v5174
      %v7754 = vsel %vm4004, %v7701, %v5176
      %v7756 = vsel %vm4004, %v7702, %v5178
      %v7758 = vsel %vm4004, %v7704, %v5180
      %v7760 = vsel %vm4004, %v7705, %v5182
      %v7762 = vsel %vm4004, %v7707, %v5184
      %v7764 = vsel %vm4004, %v7708, %v5186
      %v7766 = vsel %vm4004, %v7710, %v5188
      %v7768 = vsel %vm4004, %v7711, %v5190
      %v7770 = vsel %vm4004, %v7713, %v5192
      %v7772 = vsel %vm4004, %v7714, %v5194
      %v7774 = vsel %vm4004, %v7716, %v5196
      %v7776 = vsel %vm4004, %v7717, %v5198
      %v7778 = vsel %vm4004, %v7719, %v5200
      %v7780 = vsel %vm4004, %v7720, %v5202
      %v7782 = vsel %vm4004, %v7722, %v5204
      %v7784 = vsel %vm4004, %v7723, %v5206
      %v7786 = vsel %vm4004, %v7725, %v5208
      %v7788 = vsel %vm4004, %v7726, %v5210
      %v7790 = vsel %vm4004, %v7728, %v5212
      %v7792 = vsel %vm4004, %v7729, %v5214
      %v7794 = vsel %vm4004, %v7731, %v5216
      %v7796 = vsel %vm4004, %v7732, %v5218
      %v7798 = vsel %vm4069, %v7734, %v5413
      %v7800 = vsel %vm4069, %v7736, %v5415
      %v7802 = vsel %vm4069, %v7738, %v5417
      %v7804 = vsel %vm4069, %v7740, %v5419
      %v7806 = vsel %vm4069, %v7742, %v5421
      %v7808 = vsel %vm4069, %v7744, %v5423
      %v7810 = vsel %vm4069, %v7746, %v5425
      %v7812 = vsel %vm4069, %v7748, %v5427
      %v7814 = vsel %vm4069, %v7750, %v5429
      %v7816 = vsel %vm4069, %v7752, %v5431
      %v7818 = vsel %vm4069, %v7754, %v5433
      %v7820 = vsel %vm4069, %v7756, %v5435
      %v7822 = vsel %vm4069, %v7758, %v5437
      %v7824 = vsel %vm4069, %v7760, %v5439
      %v7826 = vsel %vm4069, %v7762, %v5441
      %v7828 = vsel %vm4069, %v7764, %v5443
      %v7830 = vsel %vm4069, %v7766, %v5445
      %v7832 = vsel %vm4069, %v7768, %v5447
      %v7834 = vsel %vm4069, %v7770, %v5449
      %v7836 = vsel %vm4069, %v7772, %v5451
      %v7838 = vsel %vm4069, %v7774, %v5453
      %v7840 = vsel %vm4069, %v7776, %v5455
      %v7842 = vsel %vm4069, %v7778, %v5457
      %v7844 = vsel %vm4069, %v7780, %v5459
      %v7846 = vsel %vm4069, %v7782, %v5461
      %v7848 = vsel %vm4069, %v7784, %v5463
      %v7850 = vsel %vm4069, %v7786, %v5465
      %v7852 = vsel %vm4069, %v7788, %v5467
      %v7854 = vsel %vm4069, %v7790, %v5469
      %v7856 = vsel %vm4069, %v7792, %v5471
      %v7858 = vsel %vm4069, %v7794, %v5473
      %v7860 = vsel %vm4069, %v7796, %v5475
      %v7862 = vsel %vm4118, %v7798, %v5525
      %v7864 = vsel %vm4118, %v7800, %v5527
      %v7866 = vsel %vm4118, %v7802, %v5529
      %v7868 = vsel %vm4118, %v7804, %v5531
      %v7870 = vsel %vm4118, %v7806, %v5533
      %v7872 = vsel %vm4118, %v7808, %v5535
      %v7874 = vsel %vm4118, %v7810, %v5537
      %v7876 = vsel %vm4118, %v7812, %v5539
      %v7878 = vsel %vm4118, %v7814, %v5541
      %v7880 = vsel %vm4118, %v7816, %v5543
      %v7882 = vsel %vm4118, %v7818, %v5545
      %v7884 = vsel %vm4118, %v7820, %v5547
      %v7886 = vsel %vm4118, %v7822, %v5549
      %v7888 = vsel %vm4118, %v7824, %v5551
      %v7890 = vsel %vm4118, %v7826, %v5553
      %v7892 = vsel %vm4118, %v7828, %v5555
      %v7894 = vsel %vm4118, %v7830, %v5557
      %v7896 = vsel %vm4118, %v7832, %v5559
      %v7898 = vsel %vm4118, %v7834, %v5561
      %v7900 = vsel %vm4118, %v7836, %v5563
      %v7902 = vsel %vm4118, %v7838, %v5565
      %v7904 = vsel %vm4118, %v7840, %v5567
      %v7906 = vsel %vm4118, %v7842, %v5569
      %v7908 = vsel %vm4118, %v7844, %v5571
      %v7910 = vsel %vm4118, %v7846, %v5573
      %v7912 = vsel %vm4118, %v7848, %v5575
      %v7914 = vsel %vm4118, %v7850, %v5577
      %v7916 = vsel %vm4118, %v7852, %v5579
      %v7918 = vsel %vm4118, %v7854, %v5581
      %v7920 = vsel %vm4118, %v7856, %v5583
      %v7922 = vsel %vm4118, %v7858, %v5585
      %v7924 = vsel %vm4118, %v7860, %v5587
      %v7926 = vsel %vm4183, %v7862, %v5765
      %v7928 = vsel %vm4183, %v7864, %v5767
      %v7930 = vsel %vm4183, %v7866, %v5769
      %v7932 = vsel %vm4183, %v7868, %v5771
      %v7934 = vsel %vm4183, %v7870, %v5773
      %v7936 = vsel %vm4183, %v7872, %v5775
      %v7938 = vsel %vm4183, %v7874, %v5777
      %v7940 = vsel %vm4183, %v7876, %v5779
      %v7942 = vsel %vm4183, %v7878, %v5781
      %v7944 = vsel %vm4183, %v7880, %v5783
      %v7946 = vsel %vm4183, %v7882, %v5785
      %v7948 = vsel %vm4183, %v7884, %v5787
      %v7950 = vsel %vm4183, %v7886, %v5789
      %v7952 = vsel %vm4183, %v7888, %v5791
      %v7954 = vsel %vm4183, %v7890, %v5793
      %v7956 = vsel %vm4183, %v7892, %v5795
      %v7958 = vsel %vm4183, %v7894, %v5797
      %v7960 = vsel %vm4183, %v7896, %v5799
      %v7962 = vsel %vm4183, %v7898, %v5801
      %v7964 = vsel %vm4183, %v7900, %v5803
      %v7966 = vsel %vm4183, %v7902, %v5805
      %v7968 = vsel %vm4183, %v7904, %v5807
      %v7970 = vsel %vm4183, %v7906, %v5809
      %v7972 = vsel %vm4183, %v7908, %v5811
      %v7974 = vsel %vm4183, %v7910, %v5813
      %v7976 = vsel %vm4183, %v7912, %v5815
      %v7978 = vsel %vm4183, %v7914, %v5817
      %v7980 = vsel %vm4183, %v7916, %v5819
      %v7982 = vsel %vm4183, %v7918, %v5821
      %v7984 = vsel %vm4183, %v7920, %v5823
      %v7986 = vsel %vm4183, %v7922, %v5825
      %v7988 = vsel %vm4183, %v7924, %v5827
      %v7990 = vsel %vm4248, %v7926, %v6070
      %v7992 = vsel %vm4248, %v7928, %v6072
      %v7994 = vsel %vm4248, %v7930, %v6074
      %v7996 = vsel %vm4248, %v7932, %v6076
      %v7998 = vsel %vm4248, %v7934, %v6078
      %v8000 = vsel %vm4248, %v7936, %v6080
      %v8002 = vsel %vm4248, %v7938, %v6082
      %v8004 = vsel %vm4248, %v7940, %v6084
      %v8006 = vsel %vm4248, %v7942, %v6086
      %v8008 = vsel %vm4248, %v7944, %v6088
      %v8010 = vsel %vm4248, %v7946, %v6090
      %v8012 = vsel %vm4248, %v7948, %v6092
      %v8014 = vsel %vm4248, %v7950, %v6094
      %v8016 = vsel %vm4248, %v7952, %v6096
      %v8018 = vsel %vm4248, %v7954, %v6098
      %v8020 = vsel %vm4248, %v7956, %v6100
      %v8022 = vsel %vm4248, %v7958, %v6102
      %v8024 = vsel %vm4248, %v7960, %v6104
      %v8026 = vsel %vm4248, %v7962, %v6106
      %v8028 = vsel %vm4248, %v7964, %v6108
      %v8030 = vsel %vm4248, %v7966, %v6110
      %v8032 = vsel %vm4248, %v7968, %v6112
      %v8034 = vsel %vm4248, %v7970, %v6114
      %v8036 = vsel %vm4248, %v7972, %v6116
      %v8038 = vsel %vm4248, %v7974, %v6118
      %v8040 = vsel %vm4248, %v7976, %v6120
      %v8042 = vsel %vm4248, %v7978, %v6122
      %v8044 = vsel %vm4248, %v7980, %v6124
      %v8046 = vsel %vm4248, %v7982, %v6126
      %v8048 = vsel %vm4248, %v7984, %v6128
      %v8050 = vsel %vm4248, %v7986, %v6130
      %v8052 = vsel %vm4248, %v7988, %v6132
      %v8054 = vsel %vm4313, %v7990, %v6134
      %v8056 = vsel %vm4313, %v7992, %v6136
      %v8058 = vsel %vm4313, %v7994, %v6138
      %v8060 = vsel %vm4313, %v7996, %v6140
      %v8062 = vsel %vm4313, %v7998, %v6142
      %v8064 = vsel %vm4313, %v8000, %v6144
      %v8066 = vsel %vm4313, %v8002, %v6146
      %v8068 = vsel %vm4313, %v8004, %v6148
      %v8070 = vsel %vm4313, %v8006, %v6150
      %v8072 = vsel %vm4313, %v8008, %v6152
      %v8074 = vsel %vm4313, %v8010, %v6154
      %v8076 = vsel %vm4313, %v8012, %v6156
      %v8078 = vsel %vm4313, %v8014, %v6158
      %v8080 = vsel %vm4313, %v8016, %v6160
      %v8082 = vsel %vm4313, %v8018, %v6162
      %v8084 = vsel %vm4313, %v8020, %v6164
      %v8086 = vsel %vm4313, %v8022, %v6166
      %v8088 = vsel %vm4313, %v8024, %v6168
      %v8090 = vsel %vm4313, %v8026, %v6170
      %v8092 = vsel %vm4313, %v8028, %v6172
      %v8094 = vsel %vm4313, %v8030, %v6174
      %v8096 = vsel %vm4313, %v8032, %v6176
      %v8098 = vsel %vm4313, %v8034, %v6178
      %v8100 = vsel %vm4313, %v8036, %v6180
      %v8102 = vsel %vm4313, %v8038, %v6182
      %v8104 = vsel %vm4313, %v8040, %v6184
      %v8106 = vsel %vm4313, %v8042, %v6186
      %v8108 = vsel %vm4313, %v8044, %v6188
      %v8110 = vsel %vm4313, %v8046, %v6190
      %v8112 = vsel %vm4313, %v8048, %v6192
      %v8114 = vsel %vm4313, %v8050, %v6194
      %v8116 = vsel %vm4313, %v8052, %v6196
      %v8118 = vsel %vm4378, %v8054, %v6342
      %v8119 = vsel %vm4378, %v8056, %v6342
      %v8121 = vsel %vm4378, %v8058, %v6344
      %v8122 = vsel %vm4378, %v8060, %v6344
      %v8124 = vsel %vm4378, %v8062, %v6346
      %v8125 = vsel %vm4378, %v8064, %v6346
      %v8127 = vsel %vm4378, %v8066, %v6348
      %v8128 = vsel %vm4378, %v8068, %v6348
      %v8130 = vsel %vm4378, %v8070, %v6350
      %v8131 = vsel %vm4378, %v8072, %v6350
      %v8133 = vsel %vm4378, %v8074, %v6352
      %v8134 = vsel %vm4378, %v8076, %v6352
      %v8136 = vsel %vm4378, %v8078, %v6354
      %v8137 = vsel %vm4378, %v8080, %v6354
      %v8139 = vsel %vm4378, %v8082, %v6356
      %v8140 = vsel %vm4378, %v8084, %v6356
      %v8142 = vsel %vm4378, %v8086, %v6358
      %v8143 = vsel %vm4378, %v8088, %v6358
      %v8145 = vsel %vm4378, %v8090, %v6360
      %v8146 = vsel %vm4378, %v8092, %v6360
      %v8148 = vsel %vm4378, %v8094, %v6362
      %v8149 = vsel %vm4378, %v8096, %v6362
      %v8151 = vsel %vm4378, %v8098, %v6364
      %v8152 = vsel %vm4378, %v8100, %v6364
      %v8154 = vsel %vm4378, %v8102, %v6366
      %v8155 = vsel %vm4378, %v8104, %v6366
      %v8157 = vsel %vm4378, %v8106, %v6368
      %v8158 = vsel %vm4378, %v8108, %v6368
      %v8160 = vsel %vm4378, %v8110, %v6370
      %v8161 = vsel %vm4378, %v8112, %v6370
      %v8163 = vsel %vm4378, %v8114, %v6372
      %v8164 = vsel %vm4378, %v8116, %v6372
      %v8166 = vsel %vm4443, %v8118, %v6470
      %v8168 = vsel %vm4443, %v8119, %v6472
      %v8170 = vsel %vm4443, %v8121, %v6474
      %v8172 = vsel %vm4443, %v8122, %v6476
      %v8174 = vsel %vm4443, %v8124, %v6478
      %v8176 = vsel %vm4443, %v8125, %v6480
      %v8178 = vsel %vm4443, %v8127, %v6482
      %v8180 = vsel %vm4443, %v8128, %v6484
      %v8182 = vsel %vm4443, %v8130, %v6486
      %v8184 = vsel %vm4443, %v8131, %v6488
      %v8186 = vsel %vm4443, %v8133, %v6490
      %v8188 = vsel %vm4443, %v8134, %v6492
      %v8190 = vsel %vm4443, %v8136, %v6494
      %v8192 = vsel %vm4443, %v8137, %v6496
      %v8194 = vsel %vm4443, %v8139, %v6498
      %v8196 = vsel %vm4443, %v8140, %v6500
      %v8198 = vsel %vm4443, %v8142, %v6502
      %v8200 = vsel %vm4443, %v8143, %v6504
      %v8202 = vsel %vm4443, %v8145, %v6506
      %v8204 = vsel %vm4443, %v8146, %v6508
      %v8206 = vsel %vm4443, %v8148, %v6510
      %v8208 = vsel %vm4443, %v8149, %v6512
      %v8210 = vsel %vm4443, %v8151, %v6514
      %v8212 = vsel %vm4443, %v8152, %v6516
      %v8214 = vsel %vm4443, %v8154, %v6518
      %v8216 = vsel %vm4443, %v8155, %v6520
      %v8218 = vsel %vm4443, %v8157, %v6522
      %v8220 = vsel %vm4443, %v8158, %v6524
      %v8222 = vsel %vm4443, %v8160, %v6526
      %v8224 = vsel %vm4443, %v8161, %v6528
      %v8226 = vsel %vm4443, %v8163, %v6530
      %v8228 = vsel %vm4443, %v8164, %v6532
      %v8230 = vsel %vm4508, %v8166, %v6726
      %v8232 = vsel %vm4508, %v8168, %v6728
      %v8234 = vsel %vm4508, %v8170, %v6730
      %v8236 = vsel %vm4508, %v8172, %v6732
      %v8238 = vsel %vm4508, %v8174, %v6734
      %v8240 = vsel %vm4508, %v8176, %v6736
      %v8242 = vsel %vm4508, %v8178, %v6738
      %v8244 = vsel %vm4508, %v8180, %v6740
      %v8246 = vsel %vm4508, %v8182, %v6742
      %v8248 = vsel %vm4508, %v8184, %v6744
      %v8250 = vsel %vm4508, %v8186, %v6746
      %v8252 = vsel %vm4508, %v8188, %v6748
      %v8254 = vsel %vm4508, %v8190, %v6750
      %v8256 = vsel %vm4508, %v8192, %v6752
      %v8258 = vsel %vm4508, %v8194, %v6754
      %v8260 = vsel %vm4508, %v8196, %v6756
      %v8262 = vsel %vm4508, %v8198, %v6758
      %v8264 = vsel %vm4508, %v8200, %v6760
      %v8266 = vsel %vm4508, %v8202, %v6762
      %v8268 = vsel %vm4508, %v8204, %v6764
      %v8270 = vsel %vm4508, %v8206, %v6766
      %v8272 = vsel %vm4508, %v8208, %v6768
      %v8274 = vsel %vm4508, %v8210, %v6770
      %v8276 = vsel %vm4508, %v8212, %v6772
      %v8278 = vsel %vm4508, %v8214, %v6774
      %v8280 = vsel %vm4508, %v8216, %v6776
      %v8282 = vsel %vm4508, %v8218, %v6778
      %v8284 = vsel %vm4508, %v8220, %v6780
      %v8286 = vsel %vm4508, %v8222, %v6782
      %v8288 = vsel %vm4508, %v8224, %v6784
      %v8290 = vsel %vm4508, %v8226, %v6786
      %v8292 = vsel %vm4508, %v8228, %v6788
      %v8294 = vsel %vm4557, %v8230, %v6838
      %v8296 = vsel %vm4557, %v8232, %v6840
      %v8298 = vsel %vm4557, %v8234, %v6842
      %v8300 = vsel %vm4557, %v8236, %v6844
      %v8302 = vsel %vm4557, %v8238, %v6846
      %v8304 = vsel %vm4557, %v8240, %v6848
      %v8306 = vsel %vm4557, %v8242, %v6850
      %v8308 = vsel %vm4557, %v8244, %v6852
      %v8310 = vsel %vm4557, %v8246, %v6854
      %v8312 = vsel %vm4557, %v8248, %v6856
      %v8314 = vsel %vm4557, %v8250, %v6858
      %v8316 = vsel %vm4557, %v8252, %v6860
      %v8318 = vsel %vm4557, %v8254, %v6862
      %v8320 = vsel %vm4557, %v8256, %v6864
      %v8322 = vsel %vm4557, %v8258, %v6866
      %v8324 = vsel %vm4557, %v8260, %v6868
      %v8326 = vsel %vm4557, %v8262, %v6870
      %v8328 = vsel %vm4557, %v8264, %v6872
      %v8330 = vsel %vm4557, %v8266, %v6874
      %v8332 = vsel %vm4557, %v8268, %v6876
      %v8334 = vsel %vm4557, %v8270, %v6878
      %v8336 = vsel %vm4557, %v8272, %v6880
      %v8338 = vsel %vm4557, %v8274, %v6882
      %v8340 = vsel %vm4557, %v8276, %v6884
      %v8342 = vsel %vm4557, %v8278, %v6886
      %v8344 = vsel %vm4557, %v8280, %v6888
      %v8346 = vsel %vm4557, %v8282, %v6890
      %v8348 = vsel %vm4557, %v8284, %v6892
      %v8350 = vsel %vm4557, %v8286, %v6894
      %v8352 = vsel %vm4557, %v8288, %v6896
      %v8354 = vsel %vm4557, %v8290, %v6898
      %v8356 = vsel %vm4557, %v8292, %v6900
      %v8358 = vsel %vm4622, %v8294, %v7078
      %v8360 = vsel %vm4622, %v8296, %v7080
      %v8362 = vsel %vm4622, %v8298, %v7082
      %v8364 = vsel %vm4622, %v8300, %v7084
      %v8366 = vsel %vm4622, %v8302, %v7086
      %v8368 = vsel %vm4622, %v8304, %v7088
      %v8370 = vsel %vm4622, %v8306, %v7090
      %v8372 = vsel %vm4622, %v8308, %v7092
      %v8374 = vsel %vm4622, %v8310, %v7094
      %v8376 = vsel %vm4622, %v8312, %v7096
      %v8378 = vsel %vm4622, %v8314, %v7098
      %v8380 = vsel %vm4622, %v8316, %v7100
      %v8382 = vsel %vm4622, %v8318, %v7102
      %v8384 = vsel %vm4622, %v8320, %v7104
      %v8386 = vsel %vm4622, %v8322, %v7106
      %v8388 = vsel %vm4622, %v8324, %v7108
      %v8390 = vsel %vm4622, %v8326, %v7110
      %v8392 = vsel %vm4622, %v8328, %v7112
      %v8394 = vsel %vm4622, %v8330, %v7114
      %v8396 = vsel %vm4622, %v8332, %v7116
      %v8398 = vsel %vm4622, %v8334, %v7118
      %v8400 = vsel %vm4622, %v8336, %v7120
      %v8402 = vsel %vm4622, %v8338, %v7122
      %v8404 = vsel %vm4622, %v8340, %v7124
      %v8406 = vsel %vm4622, %v8342, %v7126
      %v8408 = vsel %vm4622, %v8344, %v7128
      %v8410 = vsel %vm4622, %v8346, %v7130
      %v8412 = vsel %vm4622, %v8348, %v7132
      %v8414 = vsel %vm4622, %v8350, %v7134
      %v8416 = vsel %vm4622, %v8352, %v7136
      %v8418 = vsel %vm4622, %v8354, %v7138
      %v8420 = vsel %vm4622, %v8356, %v7140
      %v8422 = vsel %vm4687, %v8358, %v7382
      %v8424 = vsel %vm4687, %v8360, %v7384
      %v8426 = vsel %vm4687, %v8362, %v7386
      %v8428 = vsel %vm4687, %v8364, %v7388
      %v8430 = vsel %vm4687, %v8366, %v7390
      %v8432 = vsel %vm4687, %v8368, %v7392
      %v8434 = vsel %vm4687, %v8370, %v7394
      %v8436 = vsel %vm4687, %v8372, %v7396
      %v8438 = vsel %vm4687, %v8374, %v7398
      %v8440 = vsel %vm4687, %v8376, %v7400
      %v8442 = vsel %vm4687, %v8378, %v7402
      %v8444 = vsel %vm4687, %v8380, %v7404
      %v8446 = vsel %vm4687, %v8382, %v7406
      %v8448 = vsel %vm4687, %v8384, %v7408
      %v8450 = vsel %vm4687, %v8386, %v7410
      %v8452 = vsel %vm4687, %v8388, %v7412
      %v8454 = vsel %vm4687, %v8390, %v7414
      %v8456 = vsel %vm4687, %v8392, %v7416
      %v8458 = vsel %vm4687, %v8394, %v7418
      %v8460 = vsel %vm4687, %v8396, %v7420
      %v8462 = vsel %vm4687, %v8398, %v7422
      %v8464 = vsel %vm4687, %v8400, %v7424
      %v8466 = vsel %vm4687, %v8402, %v7426
      %v8468 = vsel %vm4687, %v8404, %v7428
      %v8470 = vsel %vm4687, %v8406, %v7430
      %v8472 = vsel %vm4687, %v8408, %v7432
      %v8474 = vsel %vm4687, %v8410, %v7434
      %v8476 = vsel %vm4687, %v8412, %v7436
      %v8478 = vsel %vm4687, %v8414, %v7438
      %v8480 = vsel %vm4687, %v8416, %v7440
      %v8482 = vsel %vm4687, %v8418, %v7442
      %v8484 = vsel %vm4687, %v8420, %v7444
      %v8486 = vsel %vm4752, %v8422, %v7446
      %v8488 = vsel %vm4752, %v8424, %v7448
      %v8490 = vsel %vm4752, %v8426, %v7450
      %v8492 = vsel %vm4752, %v8428, %v7452
      %v8494 = vsel %vm4752, %v8430, %v7454
      %v8496 = vsel %vm4752, %v8432, %v7456
      %v8498 = vsel %vm4752, %v8434, %v7458
      %v8500 = vsel %vm4752, %v8436, %v7460
      %v8502 = vsel %vm4752, %v8438, %v7462
      %v8504 = vsel %vm4752, %v8440, %v7464
      %v8506 = vsel %vm4752, %v8442, %v7466
      %v8508 = vsel %vm4752, %v8444, %v7468
      %v8510 = vsel %vm4752, %v8446, %v7470
      %v8512 = vsel %vm4752, %v8448, %v7472
      %v8514 = vsel %vm4752, %v8450, %v7474
      %v8516 = vsel %vm4752, %v8452, %v7476
      %v8518 = vsel %vm4752, %v8454, %v7478
      %v8520 = vsel %vm4752, %v8456, %v7480
      %v8522 = vsel %vm4752, %v8458, %v7482
      %v8524 = vsel %vm4752, %v8460, %v7484
      %v8526 = vsel %vm4752, %v8462, %v7486
      %v8528 = vsel %vm4752, %v8464, %v7488
      %v8530 = vsel %vm4752, %v8466, %v7490
      %v8532 = vsel %vm4752, %v8468, %v7492
      %v8534 = vsel %vm4752, %v8470, %v7494
      %v8536 = vsel %vm4752, %v8472, %v7496
      %v8538 = vsel %vm4752, %v8474, %v7498
      %v8540 = vsel %vm4752, %v8476, %v7500
      %v8542 = vsel %vm4752, %v8478, %v7502
      %v8544 = vsel %vm4752, %v8480, %v7504
      %v8546 = vsel %vm4752, %v8482, %v7506
      %v8548 = vsel %vm4752, %v8484, %v7508
      %v8550 = vsel %vm4817, %v8486, %v7654
      %v8551 = vsel %vm4817, %v8488, %v7654
      %v8553 = vsel %vm4817, %v8490, %v7656
      %v8554 = vsel %vm4817, %v8492, %v7656
      %v8556 = vsel %vm4817, %v8494, %v7658
      %v8557 = vsel %vm4817, %v8496, %v7658
      %v8559 = vsel %vm4817, %v8498, %v7660
      %v8560 = vsel %vm4817, %v8500, %v7660
      %v8562 = vsel %vm4817, %v8502, %v7662
      %v8563 = vsel %vm4817, %v8504, %v7662
      %v8565 = vsel %vm4817, %v8506, %v7664
      %v8566 = vsel %vm4817, %v8508, %v7664
      %v8568 = vsel %vm4817, %v8510, %v7666
      %v8569 = vsel %vm4817, %v8512, %v7666
      %v8571 = vsel %vm4817, %v8514, %v7668
      %v8572 = vsel %vm4817, %v8516, %v7668
      %v8574 = vsel %vm4817, %v8518, %v7670
      %v8575 = vsel %vm4817, %v8520, %v7670
      %v8577 = vsel %vm4817, %v8522, %v7672
      %v8578 = vsel %vm4817, %v8524, %v7672
      %v8580 = vsel %vm4817, %v8526, %v7674
      %v8581 = vsel %vm4817, %v8528, %v7674
      %v8583 = vsel %vm4817, %v8530, %v7676
      %v8584 = vsel %vm4817, %v8532, %v7676
      %v8586 = vsel %vm4817, %v8534, %v7678
      %v8587 = vsel %vm4817, %v8536, %v7678
      %v8589 = vsel %vm4817, %v8538, %v7680
      %v8590 = vsel %vm4817, %v8540, %v7680
      %v8592 = vsel %vm4817, %v8542, %v7682
      %v8593 = vsel %vm4817, %v8544, %v7682
      %v8595 = vsel %vm4817, %v8546, %v7684
      %v8596 = vsel %vm4817, %v8548, %v7684
      %v8613 = vunpack.c.l.b16 %v681
      %v8614 = vunpack.c.l.b16 %v685
      %v8615 = vunpack.c.l.b16 %v689
      %v8616 = vunpack.c.l.b16 %v693
      %v8617 = vunpack.c.l.b16 %v697
      %v8618 = vunpack.c.l.b16 %v701
      %v8619 = vunpack.c.l.b16 %v705
      %v8620 = vunpack.c.l.b16 %v709
      %v8621 = vunpack.c.l.b16 %v713
      %v8622 = vunpack.c.l.b16 %v717
      %v8623 = vunpack.c.l.b16 %v721
      %v8624 = vunpack.c.l.b16 %v725
      %v8625 = vunpack.c.l.b16 %v729
      %v8626 = vunpack.c.l.b16 %v733
      %v8627 = vunpack.c.l.b16 %v737
      %v8628 = vunpack.c.l.b16 %v741
      %v8629 = vpack.c.b16 %v8613, %v8613
      %v8630 = vpack.c.b16 %v8614, %v8614
      %v8631 = vpack.c.b16 %v8615, %v8615
      %v8632 = vpack.c.b16 %v8616, %v8616
      %v8633 = vpack.c.b16 %v8617, %v8617
      %v8634 = vpack.c.b16 %v8618, %v8618
      %v8635 = vpack.c.b16 %v8619, %v8619
      %v8636 = vpack.c.b16 %v8620, %v8620
      %v8637 = vpack.c.b16 %v8621, %v8621
      %v8638 = vpack.c.b16 %v8622, %v8622
      %v8639 = vpack.c.b16 %v8623, %v8623
      %v8640 = vpack.c.b16 %v8624, %v8624
      %v8641 = vpack.c.b16 %v8625, %v8625
      %v8642 = vpack.c.b16 %v8626, %v8626
      %v8643 = vpack.c.b16 %v8627, %v8627
      %v8644 = vpack.c.b16 %v8628, %v8628
      %v8645 = vrot.slane %v7529, 1
      %v8646 = vor.u32 %v7526, %v8645
      %v8648 = vshll.u32 %v8629, 16
      %v8650 = vrot.slane %v8648, 1
      %v8651 = vsel %vm1006, %v8646, %v8650
      %v8652 = vshrl.u32 %v8629, 16
      %v8654 = vrot.slane %v7537, 1
      %v8655 = vor.u32 %v7534, %v8654
      %v8657 = vshll.u32 %v8630, 16
      %v8659 = vrot.slane %v8657, 1
      %v8660 = vsel %vm1006, %v8655, %v8659
      %v8661 = vshrl.u32 %v8630, 16
      %v8663 = vrot.slane %v7545, 1
      %v8664 = vor.u32 %v7542, %v8663
      %v8666 = vshll.u32 %v8631, 16
      %v8668 = vrot.slane %v8666, 1
      %v8669 = vsel %vm1006, %v8664, %v8668
      %v8670 = vshrl.u32 %v8631, 16
      %v8672 = vrot.slane %v7553, 1
      %v8673 = vor.u32 %v7550, %v8672
      %v8675 = vshll.u32 %v8632, 16
      %v8677 = vrot.slane %v8675, 1
      %v8678 = vsel %vm1006, %v8673, %v8677
      %v8679 = vshrl.u32 %v8632, 16
      %v8681 = vrot.slane %v7561, 1
      %v8682 = vor.u32 %v7558, %v8681
      %v8684 = vshll.u32 %v8633, 16
      %v8686 = vrot.slane %v8684, 1
      %v8687 = vsel %vm1006, %v8682, %v8686
      %v8688 = vshrl.u32 %v8633, 16
      %v8690 = vrot.slane %v7569, 1
      %v8691 = vor.u32 %v7566, %v8690
      %v8693 = vshll.u32 %v8634, 16
      %v8695 = vrot.slane %v8693, 1
      %v8696 = vsel %vm1006, %v8691, %v8695
      %v8697 = vshrl.u32 %v8634, 16
      %v8699 = vrot.slane %v7577, 1
      %v8700 = vor.u32 %v7574, %v8699
      %v8702 = vshll.u32 %v8635, 16
      %v8704 = vrot.slane %v8702, 1
      %v8705 = vsel %vm1006, %v8700, %v8704
      %v8706 = vshrl.u32 %v8635, 16
      %v8708 = vrot.slane %v7585, 1
      %v8709 = vor.u32 %v7582, %v8708
      %v8711 = vshll.u32 %v8636, 16
      %v8713 = vrot.slane %v8711, 1
      %v8714 = vsel %vm1006, %v8709, %v8713
      %v8715 = vshrl.u32 %v8636, 16
      %v8717 = vrot.slane %v7593, 1
      %v8718 = vor.u32 %v7590, %v8717
      %v8720 = vshll.u32 %v8637, 16
      %v8722 = vrot.slane %v8720, 1
      %v8723 = vsel %vm1006, %v8718, %v8722
      %v8724 = vshrl.u32 %v8637, 16
      %v8726 = vrot.slane %v7601, 1
      %v8727 = vor.u32 %v7598, %v8726
      %v8729 = vshll.u32 %v8638, 16
      %v8731 = vrot.slane %v8729, 1
      %v8732 = vsel %vm1006, %v8727, %v8731
      %v8733 = vshrl.u32 %v8638, 16
      %v8735 = vrot.slane %v7609, 1
      %v8736 = vor.u32 %v7606, %v8735
      %v8738 = vshll.u32 %v8639, 16
      %v8740 = vrot.slane %v8738, 1
      %v8741 = vsel %vm1006, %v8736, %v8740
      %v8742 = vshrl.u32 %v8639, 16
      %v8744 = vrot.slane %v7617, 1
      %v8745 = vor.u32 %v7614, %v8744
      %v8747 = vshll.u32 %v8640, 16
      %v8749 = vrot.slane %v8747, 1
      %v8750 = vsel %vm1006, %v8745, %v8749
      %v8751 = vshrl.u32 %v8640, 16
      %v8753 = vrot.slane %v7625, 1
      %v8754 = vor.u32 %v7622, %v8753
      %v8756 = vshll.u32 %v8641, 16
      %v8758 = vrot.slane %v8756, 1
      %v8759 = vsel %vm1006, %v8754, %v8758
      %v8760 = vshrl.u32 %v8641, 16
      %v8762 = vrot.slane %v7633, 1
      %v8763 = vor.u32 %v7630, %v8762
      %v8765 = vshll.u32 %v8642, 16
      %v8767 = vrot.slane %v8765, 1
      %v8768 = vsel %vm1006, %v8763, %v8767
      %v8769 = vshrl.u32 %v8642, 16
      %v8771 = vrot.slane %v7641, 1
      %v8772 = vor.u32 %v7638, %v8771
      %v8774 = vshll.u32 %v8643, 16
      %v8776 = vrot.slane %v8774, 1
      %v8777 = vsel %vm1006, %v8772, %v8776
      %v8778 = vshrl.u32 %v8643, 16
      %v8780 = vrot.slane %v7649, 1
      %v8781 = vor.u32 %v7646, %v8780
      %v8783 = vshll.u32 %v8644, 16
      %v8785 = vrot.slane %v8783, 1
      %v8786 = vsel %vm1006, %v8781, %v8785
      %v8787 = vshrl.u32 %v8644, 16
      %8789 = vrot.lane.b32.xlu0 %v8651, 4
      %v8790 = vpop.permute.xlu0 %8789
      %8791 = vrot.lane.b32.xlu0 %v8652, 4
      %v8792 = vpop.permute.xlu0 %8791
      %8793 = vrot.lane.b32.xlu0 %v8660, 4
      %v8794 = vpop.permute.xlu0 %8793
      %8795 = vrot.lane.b32.xlu0 %v8661, 4
      %v8796 = vpop.permute.xlu0 %8795
      %8797 = vrot.lane.b32.xlu0 %v8669, 4
      %v8798 = vpop.permute.xlu0 %8797
      %8799 = vrot.lane.b32.xlu0 %v8670, 4
      %v8800 = vpop.permute.xlu0 %8799
      %8801 = vrot.lane.b32.xlu0 %v8678, 4
      %v8802 = vpop.permute.xlu0 %8801
      %8803 = vrot.lane.b32.xlu0 %v8679, 4
      %v8804 = vpop.permute.xlu0 %8803
      %8805 = vrot.lane.b32.xlu0 %v8687, 4
      %v8806 = vpop.permute.xlu0 %8805
      %8807 = vrot.lane.b32.xlu0 %v8688, 4
      %v8808 = vpop.permute.xlu0 %8807
      %8809 = vrot.lane.b32.xlu0 %v8696, 4
      %v8810 = vpop.permute.xlu0 %8809
      %8811 = vrot.lane.b32.xlu0 %v8697, 4
      %v8812 = vpop.permute.xlu0 %8811
      %8813 = vrot.lane.b32.xlu0 %v8705, 4
      %v8814 = vpop.permute.xlu0 %8813
      %8815 = vrot.lane.b32.xlu0 %v8706, 4
      %v8816 = vpop.permute.xlu0 %8815
      %8817 = vrot.lane.b32.xlu0 %v8714, 4
      %v8818 = vpop.permute.xlu0 %8817
      %8819 = vrot.lane.b32.xlu0 %v8715, 4
      %v8820 = vpop.permute.xlu0 %8819
      %8821 = vrot.lane.b32.xlu0 %v8723, 4
      %v8822 = vpop.permute.xlu0 %8821
      %8823 = vrot.lane.b32.xlu0 %v8724, 4
      %v8824 = vpop.permute.xlu0 %8823
      %8825 = vrot.lane.b32.xlu0 %v8732, 4
      %v8826 = vpop.permute.xlu0 %8825
      %8827 = vrot.lane.b32.xlu0 %v8733, 4
      %v8828 = vpop.permute.xlu0 %8827
      %8829 = vrot.lane.b32.xlu0 %v8741, 4
      %v8830 = vpop.permute.xlu0 %8829
      %8831 = vrot.lane.b32.xlu0 %v8742, 4
      %v8832 = vpop.permute.xlu0 %8831
      %8833 = vrot.lane.b32.xlu0 %v8750, 4
      %v8834 = vpop.permute.xlu0 %8833
      %8835 = vrot.lane.b32.xlu0 %v8751, 4
      %v8836 = vpop.permute.xlu0 %8835
      %8837 = vrot.lane.b32.xlu0 %v8759, 4
      %v8838 = vpop.permute.xlu0 %8837
      %8839 = vrot.lane.b32.xlu0 %v8760, 4
      %v8840 = vpop.permute.xlu0 %8839
      %8841 = vrot.lane.b32.xlu0 %v8768, 4
      %v8842 = vpop.permute.xlu0 %8841
      %8843 = vrot.lane.b32.xlu0 %v8769, 4
      %v8844 = vpop.permute.xlu0 %8843
      %8845 = vrot.lane.b32.xlu0 %v8777, 4
      %v8846 = vpop.permute.xlu0 %8845
      %8847 = vrot.lane.b32.xlu0 %v8778, 4
      %v8848 = vpop.permute.xlu0 %8847
      %8849 = vrot.lane.b32.xlu0 %v8786, 4
      %v8850 = vpop.permute.xlu0 %8849
      %8851 = vrot.lane.b32.xlu0 %v8787, 4
      %v8852 = vpop.permute.xlu0 %8851
      %v8853 = vrot.slane %v7509, 1
      %v8854 = vrot.slane %v8629, 1
      %v8855 = vsel %vm1311, %v8853, %v8854
      %v8856 = vrot.slane %v7510, 1
      %v8857 = vrot.slane %v8630, 1
      %v8858 = vsel %vm1311, %v8856, %v8857
      %v8859 = vrot.slane %v7511, 1
      %v8860 = vrot.slane %v8631, 1
      %v8861 = vsel %vm1311, %v8859, %v8860
      %v8862 = vrot.slane %v7512, 1
      %v8863 = vrot.slane %v8632, 1
      %v8864 = vsel %vm1311, %v8862, %v8863
      %v8865 = vrot.slane %v7513, 1
      %v8866 = vrot.slane %v8633, 1
      %v8867 = vsel %vm1311, %v8865, %v8866
      %v8868 = vrot.slane %v7514, 1
      %v8869 = vrot.slane %v8634, 1
      %v8870 = vsel %vm1311, %v8868, %v8869
      %v8871 = vrot.slane %v7515, 1
      %v8872 = vrot.slane %v8635, 1
      %v8873 = vsel %vm1311, %v8871, %v8872
      %v8874 = vrot.slane %v7516, 1
      %v8875 = vrot.slane %v8636, 1
      %v8876 = vsel %vm1311, %v8874, %v8875
      %v8877 = vrot.slane %v7517, 1
      %v8878 = vrot.slane %v8637, 1
      %v8879 = vsel %vm1311, %v8877, %v8878
      %v8880 = vrot.slane %v7518, 1
      %v8881 = vrot.slane %v8638, 1
      %v8882 = vsel %vm1311, %v8880, %v8881
      %v8883 = vrot.slane %v7519, 1
      %v8884 = vrot.slane %v8639, 1
      %v8885 = vsel %vm1311, %v8883, %v8884
      %v8886 = vrot.slane %v7520, 1
      %v8887 = vrot.slane %v8640, 1
      %v8888 = vsel %vm1311, %v8886, %v8887
      %v8889 = vrot.slane %v7521, 1
      %v8890 = vrot.slane %v8641, 1
      %v8891 = vsel %vm1311, %v8889, %v8890
      %v8892 = vrot.slane %v7522, 1
      %v8893 = vrot.slane %v8642, 1
      %v8894 = vsel %vm1311, %v8892, %v8893
      %v8895 = vrot.slane %v7523, 1
      %v8896 = vrot.slane %v8643, 1
      %v8897 = vsel %vm1311, %v8895, %v8896
      %v8898 = vrot.slane %v7524, 1
      %v8899 = vrot.slane %v8644, 1
      %v8900 = vsel %vm1311, %v8898, %v8899
      %8901 = vrot.lane.b32.xlu0 %v8855, 8
      %v8902 = vpop.permute.xlu0 %8901
      %8903 = vrot.lane.b32.xlu0 %v8854, 8
      %v8904 = vpop.permute.xlu0 %8903
      %8905 = vrot.lane.b32.xlu0 %v8858, 8
      %v8906 = vpop.permute.xlu0 %8905
      %8907 = vrot.lane.b32.xlu0 %v8857, 8
      %v8908 = vpop.permute.xlu0 %8907
      %8909 = vrot.lane.b32.xlu0 %v8861, 8
      %v8910 = vpop.permute.xlu0 %8909
      %8911 = vrot.lane.b32.xlu0 %v8860, 8
      %v8912 = vpop.permute.xlu0 %8911
      %8913 = vrot.lane.b32.xlu0 %v8864, 8
      %v8914 = vpop.permute.xlu0 %8913
      %8915 = vrot.lane.b32.xlu0 %v8863, 8
      %v8916 = vpop.permute.xlu0 %8915
      %8917 = vrot.lane.b32.xlu0 %v8867, 8
      %v8918 = vpop.permute.xlu0 %8917
      %8919 = vrot.lane.b32.xlu0 %v8866, 8
      %v8920 = vpop.permute.xlu0 %8919
      %8921 = vrot.lane.b32.xlu0 %v8870, 8
      %v8922 = vpop.permute.xlu0 %8921
      %8923 = vrot.lane.b32.xlu0 %v8869, 8
      %v8924 = vpop.permute.xlu0 %8923
      %8925 = vrot.lane.b32.xlu0 %v8873, 8
      %v8926 = vpop.permute.xlu0 %8925
      %8927 = vrot.lane.b32.xlu0 %v8872, 8
      %v8928 = vpop.permute.xlu0 %8927
      %8929 = vrot.lane.b32.xlu0 %v8876, 8
      %v8930 = vpop.permute.xlu0 %8929
      %8931 = vrot.lane.b32.xlu0 %v8875, 8
      %v8932 = vpop.permute.xlu0 %8931
      %8933 = vrot.lane.b32.xlu0 %v8879, 8
      %v8934 = vpop.permute.xlu0 %8933
      %8935 = vrot.lane.b32.xlu0 %v8878, 8
      %v8936 = vpop.permute.xlu0 %8935
      %8937 = vrot.lane.b32.xlu0 %v8882, 8
      %v8938 = vpop.permute.xlu0 %8937
      %8939 = vrot.lane.b32.xlu0 %v8881, 8
      %v8940 = vpop.permute.xlu0 %8939
      %8941 = vrot.lane.b32.xlu0 %v8885, 8
      %v8942 = vpop.permute.xlu0 %8941
      %8943 = vrot.lane.b32.xlu0 %v8884, 8
      %v8944 = vpop.permute.xlu0 %8943
      %8945 = vrot.lane.b32.xlu0 %v8888, 8
      %v8946 = vpop.permute.xlu0 %8945
      %8947 = vrot.lane.b32.xlu0 %v8887, 8
      %v8948 = vpop.permute.xlu0 %8947
      %8949 = vrot.lane.b32.xlu0 %v8891, 8
      %v8950 = vpop.permute.xlu0 %8949
      %8951 = vrot.lane.b32.xlu0 %v8890, 8
      %v8952 = vpop.permute.xlu0 %8951
      %8953 = vrot.lane.b32.xlu0 %v8894, 8
      %v8954 = vpop.permute.xlu0 %8953
      %8955 = vrot.lane.b32.xlu0 %v8893, 8
      %v8956 = vpop.permute.xlu0 %8955
      %8957 = vrot.lane.b32.xlu0 %v8897, 8
      %v8958 = vpop.permute.xlu0 %8957
      %8959 = vrot.lane.b32.xlu0 %v8896, 8
      %v8960 = vpop.permute.xlu0 %8959
      %8961 = vrot.lane.b32.xlu0 %v8900, 8
      %v8962 = vpop.permute.xlu0 %8961
      %8963 = vrot.lane.b32.xlu0 %v8899, 8
      %v8964 = vpop.permute.xlu0 %8963
      %v9013 = vunpack.c.l.b16 %v746
      %v9014 = vunpack.c.l.b16 %v747
      %v9015 = vunpack.c.l.b16 %v748
      %v9016 = vunpack.c.l.b16 %v750
      %v9017 = vunpack.c.l.b16 %v751
      %v9018 = vunpack.c.l.b16 %v752
      %v9019 = vunpack.c.l.b16 %v754
      %v9020 = vunpack.c.l.b16 %v755
      %v9021 = vunpack.c.l.b16 %v756
      %v9022 = vunpack.c.l.b16 %v758
      %v9023 = vunpack.c.l.b16 %v759
      %v9024 = vunpack.c.l.b16 %v760
      %v9025 = vunpack.c.l.b16 %v762
      %v9026 = vunpack.c.l.b16 %v763
      %v9027 = vunpack.c.l.b16 %v764
      %v9028 = vunpack.c.l.b16 %v766
      %v9029 = vunpack.c.l.b16 %v767
      %v9030 = vunpack.c.l.b16 %v768
      %v9031 = vunpack.c.l.b16 %v770
      %v9032 = vunpack.c.l.b16 %v771
      %v9033 = vunpack.c.l.b16 %v772
      %v9034 = vunpack.c.l.b16 %v774
      %v9035 = vunpack.c.l.b16 %v775
      %v9036 = vunpack.c.l.b16 %v776
      %v9037 = vunpack.c.l.b16 %v778
      %v9038 = vunpack.c.l.b16 %v779
      %v9039 = vunpack.c.l.b16 %v780
      %v9040 = vunpack.c.l.b16 %v782
      %v9041 = vunpack.c.l.b16 %v783
      %v9042 = vunpack.c.l.b16 %v784
      %v9043 = vunpack.c.l.b16 %v786
      %v9044 = vunpack.c.l.b16 %v787
      %v9045 = vunpack.c.l.b16 %v788
      %v9046 = vunpack.c.l.b16 %v790
      %v9047 = vunpack.c.l.b16 %v791
      %v9048 = vunpack.c.l.b16 %v792
      %v9049 = vunpack.c.l.b16 %v794
      %v9050 = vunpack.c.l.b16 %v795
      %v9051 = vunpack.c.l.b16 %v796
      %v9052 = vunpack.c.l.b16 %v798
      %v9053 = vunpack.c.l.b16 %v799
      %v9054 = vunpack.c.l.b16 %v800
      %v9055 = vunpack.c.l.b16 %v802
      %v9056 = vunpack.c.l.b16 %v803
      %v9057 = vunpack.c.l.b16 %v804
      %v9058 = vunpack.c.l.b16 %v806
      %v9059 = vunpack.c.l.b16 %v807
      %v9060 = vunpack.c.l.b16 %v808
      %v9061 = vpack.c.b16 %v9014, %v9013
      %v9062 = vpack.c.b16 %v9015, %v9015
      %v9063 = vpack.c.b16 %v9017, %v9016
      %v9064 = vpack.c.b16 %v9018, %v9018
      %v9065 = vpack.c.b16 %v9020, %v9019
      %v9066 = vpack.c.b16 %v9021, %v9021
      %v9067 = vpack.c.b16 %v9023, %v9022
      %v9068 = vpack.c.b16 %v9024, %v9024
      %v9069 = vpack.c.b16 %v9026, %v9025
      %v9070 = vpack.c.b16 %v9027, %v9027
      %v9071 = vpack.c.b16 %v9029, %v9028
      %v9072 = vpack.c.b16 %v9030, %v9030
      %v9073 = vpack.c.b16 %v9032, %v9031
      %v9074 = vpack.c.b16 %v9033, %v9033
      %v9075 = vpack.c.b16 %v9035, %v9034
      %v9076 = vpack.c.b16 %v9036, %v9036
      %v9077 = vpack.c.b16 %v9038, %v9037
      %v9078 = vpack.c.b16 %v9039, %v9039
      %v9079 = vpack.c.b16 %v9041, %v9040
      %v9080 = vpack.c.b16 %v9042, %v9042
      %v9081 = vpack.c.b16 %v9044, %v9043
      %v9082 = vpack.c.b16 %v9045, %v9045
      %v9083 = vpack.c.b16 %v9047, %v9046
      %v9084 = vpack.c.b16 %v9048, %v9048
      %v9085 = vpack.c.b16 %v9050, %v9049
      %v9086 = vpack.c.b16 %v9051, %v9051
      %v9087 = vpack.c.b16 %v9053, %v9052
      %v9088 = vpack.c.b16 %v9054, %v9054
      %v9089 = vpack.c.b16 %v9056, %v9055
      %v9090 = vpack.c.b16 %v9057, %v9057
      %v9091 = vpack.c.b16 %v9059, %v9058
      %v9092 = vpack.c.b16 %v9060, %v9060
      %vm9093 = vcmask 1045504
      %v9094 = vrot.slane %v9061, 2
      %v9095 = vrot.slane %v9062, 2
      %v9096 = vsel %vm9093, %v9094, %v9095
      %v9097 = vrot.slane %v9063, 2
      %v9098 = vrot.slane %v9064, 2
      %v9099 = vsel %vm9093, %v9097, %v9098
      %v9100 = vrot.slane %v9065, 2
      %v9101 = vrot.slane %v9066, 2
      %v9102 = vsel %vm9093, %v9100, %v9101
      %v9103 = vrot.slane %v9067, 2
      %v9104 = vrot.slane %v9068, 2
      %v9105 = vsel %vm9093, %v9103, %v9104
      %v9106 = vrot.slane %v9069, 2
      %v9107 = vrot.slane %v9070, 2
      %v9108 = vsel %vm9093, %v9106, %v9107
      %v9109 = vrot.slane %v9071, 2
      %v9110 = vrot.slane %v9072, 2
      %v9111 = vsel %vm9093, %v9109, %v9110
      %v9112 = vrot.slane %v9073, 2
      %v9113 = vrot.slane %v9074, 2
      %v9114 = vsel %vm9093, %v9112, %v9113
      %v9115 = vrot.slane %v9075, 2
      %v9116 = vrot.slane %v9076, 2
      %v9117 = vsel %vm9093, %v9115, %v9116
      %v9118 = vrot.slane %v9077, 2
      %v9119 = vrot.slane %v9078, 2
      %v9120 = vsel %vm9093, %v9118, %v9119
      %v9121 = vrot.slane %v9079, 2
      %v9122 = vrot.slane %v9080, 2
      %v9123 = vsel %vm9093, %v9121, %v9122
      %v9124 = vrot.slane %v9081, 2
      %v9125 = vrot.slane %v9082, 2
      %v9126 = vsel %vm9093, %v9124, %v9125
      %v9127 = vrot.slane %v9083, 2
      %v9128 = vrot.slane %v9084, 2
      %v9129 = vsel %vm9093, %v9127, %v9128
      %v9130 = vrot.slane %v9085, 2
      %v9131 = vrot.slane %v9086, 2
      %v9132 = vsel %vm9093, %v9130, %v9131
      %v9133 = vrot.slane %v9087, 2
      %v9134 = vrot.slane %v9088, 2
      %v9135 = vsel %vm9093, %v9133, %v9134
      %v9136 = vrot.slane %v9089, 2
      %v9137 = vrot.slane %v9090, 2
      %v9138 = vsel %vm9093, %v9136, %v9137
      %v9139 = vrot.slane %v9091, 2
      %v9140 = vrot.slane %v9092, 2
      %v9141 = vsel %vm9093, %v9139, %v9140
      %9142 = vrot.lane.b32.xlu0 %v9096, 12
      %v9143 = vpop.permute.xlu0 %9142
      %9144 = vrot.lane.b32.xlu0 %v9095, 12
      %v9145 = vpop.permute.xlu0 %9144
      %9146 = vrot.lane.b32.xlu0 %v9099, 12
      %v9147 = vpop.permute.xlu0 %9146
      %9148 = vrot.lane.b32.xlu0 %v9098, 12
      %v9149 = vpop.permute.xlu0 %9148
      %9150 = vrot.lane.b32.xlu0 %v9102, 12
      %v9151 = vpop.permute.xlu0 %9150
      %9152 = vrot.lane.b32.xlu0 %v9101, 12
      %v9153 = vpop.permute.xlu0 %9152
      %9154 = vrot.lane.b32.xlu0 %v9105, 12
      %v9155 = vpop.permute.xlu0 %9154
      %9156 = vrot.lane.b32.xlu0 %v9104, 12
      %v9157 = vpop.permute.xlu0 %9156
      %9158 = vrot.lane.b32.xlu0 %v9108, 12
      %v9159 = vpop.permute.xlu0 %9158
      %9160 = vrot.lane.b32.xlu0 %v9107, 12
      %v9161 = vpop.permute.xlu0 %9160
      %9162 = vrot.lane.b32.xlu0 %v9111, 12
      %v9163 = vpop.permute.xlu0 %9162
      %9164 = vrot.lane.b32.xlu0 %v9110, 12
      %v9165 = vpop.permute.xlu0 %9164
      %9166 = vrot.lane.b32.xlu0 %v9114, 12
      %v9167 = vpop.permute.xlu0 %9166
      %9168 = vrot.lane.b32.xlu0 %v9113, 12
      %v9169 = vpop.permute.xlu0 %9168
      %9170 = vrot.lane.b32.xlu0 %v9117, 12
      %v9171 = vpop.permute.xlu0 %9170
      %9172 = vrot.lane.b32.xlu0 %v9116, 12
      %v9173 = vpop.permute.xlu0 %9172
      %9174 = vrot.lane.b32.xlu0 %v9120, 12
      %v9175 = vpop.permute.xlu0 %9174
      %9176 = vrot.lane.b32.xlu0 %v9119, 12
      %v9177 = vpop.permute.xlu0 %9176
      %9178 = vrot.lane.b32.xlu0 %v9123, 12
      %v9179 = vpop.permute.xlu0 %9178
      %9180 = vrot.lane.b32.xlu0 %v9122, 12
      %v9181 = vpop.permute.xlu0 %9180
      %9182 = vrot.lane.b32.xlu0 %v9126, 12
      %v9183 = vpop.permute.xlu0 %9182
      %9184 = vrot.lane.b32.xlu0 %v9125, 12
      %v9185 = vpop.permute.xlu0 %9184
      %9186 = vrot.lane.b32.xlu0 %v9129, 12
      %v9187 = vpop.permute.xlu0 %9186
      %9188 = vrot.lane.b32.xlu0 %v9128, 12
      %v9189 = vpop.permute.xlu0 %9188
      %9190 = vrot.lane.b32.xlu0 %v9132, 12
      %v9191 = vpop.permute.xlu0 %9190
      %9192 = vrot.lane.b32.xlu0 %v9131, 12
      %v9193 = vpop.permute.xlu0 %9192
      %9194 = vrot.lane.b32.xlu0 %v9135, 12
      %v9195 = vpop.permute.xlu0 %9194
      %9196 = vrot.lane.b32.xlu0 %v9134, 12
      %v9197 = vpop.permute.xlu0 %9196
      %9198 = vrot.lane.b32.xlu0 %v9138, 12
      %v9199 = vpop.permute.xlu0 %9198
      %9200 = vrot.lane.b32.xlu0 %v9137, 12
      %v9201 = vpop.permute.xlu0 %9200
      %9202 = vrot.lane.b32.xlu0 %v9141, 12
      %v9203 = vpop.permute.xlu0 %9202
      %9204 = vrot.lane.b32.xlu0 %v9140, 12
      %v9205 = vpop.permute.xlu0 %9204
      %vm9206 = vsmask.f32 5376
      %v9208 = vshrl.u32 %v9061, 16
      %v9210 = vrot.slane %v9208, 2
      %v9211 = vshll.u32 %v9061, 16
      %v9213 = vrot.slane %v9211, 3
      %v9214 = vor.u32 %v9210, %v9213
      %v9216 = vshrl.u32 %v9062, 16
      %v9218 = vrot.slane %v9216, 2
      %v9219 = vshll.u32 %v9062, 16
      %v9221 = vrot.slane %v9219, 3
      %v9222 = vor.u32 %v9218, %v9221
      %v9223 = vsel %vm9206, %v9214, %v9222
      %v9225 = vshrl.u32 %v9063, 16
      %v9227 = vrot.slane %v9225, 2
      %v9228 = vshll.u32 %v9063, 16
      %v9230 = vrot.slane %v9228, 3
      %v9231 = vor.u32 %v9227, %v9230
      %v9233 = vshrl.u32 %v9064, 16
      %v9235 = vrot.slane %v9233, 2
      %v9236 = vshll.u32 %v9064, 16
      %v9238 = vrot.slane %v9236, 3
      %v9239 = vor.u32 %v9235, %v9238
      %v9240 = vsel %vm9206, %v9231, %v9239
      %v9242 = vshrl.u32 %v9065, 16
      %v9244 = vrot.slane %v9242, 2
      %v9245 = vshll.u32 %v9065, 16
      %v9247 = vrot.slane %v9245, 3
      %v9248 = vor.u32 %v9244, %v9247
      %v9250 = vshrl.u32 %v9066, 16
      %v9252 = vrot.slane %v9250, 2
      %v9253 = vshll.u32 %v9066, 16
      %v9255 = vrot.slane %v9253, 3
      %v9256 = vor.u32 %v9252, %v9255
      %v9257 = vsel %vm9206, %v9248, %v9256
      %v9259 = vshrl.u32 %v9067, 16
      %v9261 = vrot.slane %v9259, 2
      %v9262 = vshll.u32 %v9067, 16
      %v9264 = vrot.slane %v9262, 3
      %v9265 = vor.u32 %v9261, %v9264
      %v9267 = vshrl.u32 %v9068, 16
      %v9269 = vrot.slane %v9267, 2
      %v9270 = vshll.u32 %v9068, 16
      %v9272 = vrot.slane %v9270, 3
      %v9273 = vor.u32 %v9269, %v9272
      %v9274 = vsel %vm9206, %v9265, %v9273
      %v9276 = vshrl.u32 %v9069, 16
      %v9278 = vrot.slane %v9276, 2
      %v9279 = vshll.u32 %v9069, 16
      %v9281 = vrot.slane %v9279, 3
      %v9282 = vor.u32 %v9278, %v9281
      %v9284 = vshrl.u32 %v9070, 16
      %v9286 = vrot.slane %v9284, 2
      %v9287 = vshll.u32 %v9070, 16
      %v9289 = vrot.slane %v9287, 3
      %v9290 = vor.u32 %v9286, %v9289
      %v9291 = vsel %vm9206, %v9282, %v9290
      %v9293 = vshrl.u32 %v9071, 16
      %v9295 = vrot.slane %v9293, 2
      %v9296 = vshll.u32 %v9071, 16
      %v9298 = vrot.slane %v9296, 3
      %v9299 = vor.u32 %v9295, %v9298
      %v9301 = vshrl.u32 %v9072, 16
      %v9303 = vrot.slane %v9301, 2
      %v9304 = vshll.u32 %v9072, 16
      %v9306 = vrot.slane %v9304, 3
      %v9307 = vor.u32 %v9303, %v9306
      %v9308 = vsel %vm9206, %v9299, %v9307
      %v9310 = vshrl.u32 %v9073, 16
      %v9312 = vrot.slane %v9310, 2
      %v9313 = vshll.u32 %v9073, 16
      %v9315 = vrot.slane %v9313, 3
      %v9316 = vor.u32 %v9312, %v9315
      %v9318 = vshrl.u32 %v9074, 16
      %v9320 = vrot.slane %v9318, 2
      %v9321 = vshll.u32 %v9074, 16
      %v9323 = vrot.slane %v9321, 3
      %v9324 = vor.u32 %v9320, %v9323
      %v9325 = vsel %vm9206, %v9316, %v9324
      %v9327 = vshrl.u32 %v9075, 16
      %v9329 = vrot.slane %v9327, 2
      %v9330 = vshll.u32 %v9075, 16
      %v9332 = vrot.slane %v9330, 3
      %v9333 = vor.u32 %v9329, %v9332
      %v9335 = vshrl.u32 %v9076, 16
      %v9337 = vrot.slane %v9335, 2
      %v9338 = vshll.u32 %v9076, 16
      %v9340 = vrot.slane %v9338, 3
      %v9341 = vor.u32 %v9337, %v9340
      %v9342 = vsel %vm9206, %v9333, %v9341
      %v9344 = vshrl.u32 %v9077, 16
      %v9346 = vrot.slane %v9344, 2
      %v9347 = vshll.u32 %v9077, 16
      %v9349 = vrot.slane %v9347, 3
      %v9350 = vor.u32 %v9346, %v9349
      %v9352 = vshrl.u32 %v9078, 16
      %v9354 = vrot.slane %v9352, 2
      %v9355 = vshll.u32 %v9078, 16
      %v9357 = vrot.slane %v9355, 3
      %v9358 = vor.u32 %v9354, %v9357
      %v9359 = vsel %vm9206, %v9350, %v9358
      %v9361 = vshrl.u32 %v9079, 16
      %v9363 = vrot.slane %v9361, 2
      %v9364 = vshll.u32 %v9079, 16
      %v9366 = vrot.slane %v9364, 3
      %v9367 = vor.u32 %v9363, %v9366
      %v9369 = vshrl.u32 %v9080, 16
      %v9371 = vrot.slane %v9369, 2
      %v9372 = vshll.u32 %v9080, 16
      %v9374 = vrot.slane %v9372, 3
      %v9375 = vor.u32 %v9371, %v9374
      %v9376 = vsel %vm9206, %v9367, %v9375
      %v9378 = vshrl.u32 %v9081, 16
      %v9380 = vrot.slane %v9378, 2
      %v9381 = vshll.u32 %v9081, 16
      %v9383 = vrot.slane %v9381, 3
      %v9384 = vor.u32 %v9380, %v9383
      %v9386 = vshrl.u32 %v9082, 16
      %v9388 = vrot.slane %v9386, 2
      %v9389 = vshll.u32 %v9082, 16
      %v9391 = vrot.slane %v9389, 3
      %v9392 = vor.u32 %v9388, %v9391
      %v9393 = vsel %vm9206, %v9384, %v9392
      %v9395 = vshrl.u32 %v9083, 16
      %v9397 = vrot.slane %v9395, 2
      %v9398 = vshll.u32 %v9083, 16
      %v9400 = vrot.slane %v9398, 3
      %v9401 = vor.u32 %v9397, %v9400
      %v9403 = vshrl.u32 %v9084, 16
      %v9405 = vrot.slane %v9403, 2
      %v9406 = vshll.u32 %v9084, 16
      %v9408 = vrot.slane %v9406, 3
      %v9409 = vor.u32 %v9405, %v9408
      %v9410 = vsel %vm9206, %v9401, %v9409
      %v9412 = vshrl.u32 %v9085, 16
      %v9414 = vrot.slane %v9412, 2
      %v9415 = vshll.u32 %v9085, 16
      %v9417 = vrot.slane %v9415, 3
      %v9418 = vor.u32 %v9414, %v9417
      %v9420 = vshrl.u32 %v9086, 16
      %v9422 = vrot.slane %v9420, 2
      %v9423 = vshll.u32 %v9086, 16
      %v9425 = vrot.slane %v9423, 3
      %v9426 = vor.u32 %v9422, %v9425
      %v9427 = vsel %vm9206, %v9418, %v9426
      %v9429 = vshrl.u32 %v9087, 16
      %v9431 = vrot.slane %v9429, 2
      %v9432 = vshll.u32 %v9087, 16
      %v9434 = vrot.slane %v9432, 3
      %v9435 = vor.u32 %v9431, %v9434
      %v9437 = vshrl.u32 %v9088, 16
      %v9439 = vrot.slane %v9437, 2
      %v9440 = vshll.u32 %v9088, 16
      %v9442 = vrot.slane %v9440, 3
      %v9443 = vor.u32 %v9439, %v9442
      %v9444 = vsel %vm9206, %v9435, %v9443
      %v9446 = vshrl.u32 %v9089, 16
      %v9448 = vrot.slane %v9446, 2
      %v9449 = vshll.u32 %v9089, 16
      %v9451 = vrot.slane %v9449, 3
      %v9452 = vor.u32 %v9448, %v9451
      %v9454 = vshrl.u32 %v9090, 16
      %v9456 = vrot.slane %v9454, 2
      %v9457 = vshll.u32 %v9090, 16
      %v9459 = vrot.slane %v9457, 3
      %v9460 = vor.u32 %v9456, %v9459
      %v9461 = vsel %vm9206, %v9452, %v9460
      %v9463 = vshrl.u32 %v9091, 16
      %v9465 = vrot.slane %v9463, 2
      %v9466 = vshll.u32 %v9091, 16
      %v9468 = vrot.slane %v9466, 3
      %v9469 = vor.u32 %v9465, %v9468
      %v9471 = vshrl.u32 %v9092, 16
      %v9473 = vrot.slane %v9471, 2
      %v9474 = vshll.u32 %v9092, 16
      %v9476 = vrot.slane %v9474, 3
      %v9477 = vor.u32 %v9473, %v9476
      %v9478 = vsel %vm9206, %v9469, %v9477
      %9479 = vrot.lane.b32.xlu0 %v9223, 16
      %v9480 = vpop.permute.xlu0 %9479
      %9481 = vrot.lane.b32.xlu0 %v9218, 16
      %v9482 = vpop.permute.xlu0 %9481
      %9483 = vrot.lane.b32.xlu0 %v9240, 16
      %v9484 = vpop.permute.xlu0 %9483
      %9485 = vrot.lane.b32.xlu0 %v9235, 16
      %v9486 = vpop.permute.xlu0 %9485
      %9487 = vrot.lane.b32.xlu0 %v9257, 16
      %v9488 = vpop.permute.xlu0 %9487
      %9489 = vrot.lane.b32.xlu0 %v9252, 16
      %v9490 = vpop.permute.xlu0 %9489
      %9491 = vrot.lane.b32.xlu0 %v9274, 16
      %v9492 = vpop.permute.xlu0 %9491
      %9493 = vrot.lane.b32.xlu0 %v9269, 16
      %v9494 = vpop.permute.xlu0 %9493
      %9495 = vrot.lane.b32.xlu0 %v9291, 16
      %v9496 = vpop.permute.xlu0 %9495
      %9497 = vrot.lane.b32.xlu0 %v9286, 16
      %v9498 = vpop.permute.xlu0 %9497
      %9499 = vrot.lane.b32.xlu0 %v9308, 16
      %v9500 = vpop.permute.xlu0 %9499
      %9501 = vrot.lane.b32.xlu0 %v9303, 16
      %v9502 = vpop.permute.xlu0 %9501
      %9503 = vrot.lane.b32.xlu0 %v9325, 16
      %v9504 = vpop.permute.xlu0 %9503
      %9505 = vrot.lane.b32.xlu0 %v9320, 16
      %v9506 = vpop.permute.xlu0 %9505
      %9507 = vrot.lane.b32.xlu0 %v9342, 16
      %v9508 = vpop.permute.xlu0 %9507
      %9509 = vrot.lane.b32.xlu0 %v9337, 16
      %v9510 = vpop.permute.xlu0 %9509
      %9511 = vrot.lane.b32.xlu0 %v9359, 16
      %v9512 = vpop.permute.xlu0 %9511
      %9513 = vrot.lane.b32.xlu0 %v9354, 16
      %v9514 = vpop.permute.xlu0 %9513
      %9515 = vrot.lane.b32.xlu0 %v9376, 16
      %v9516 = vpop.permute.xlu0 %9515
      %9517 = vrot.lane.b32.xlu0 %v9371, 16
      %v9518 = vpop.permute.xlu0 %9517
      %9519 = vrot.lane.b32.xlu0 %v9393, 16
      %v9520 = vpop.permute.xlu0 %9519
      %9521 = vrot.lane.b32.xlu0 %v9388, 16
      %v9522 = vpop.permute.xlu0 %9521
      %9523 = vrot.lane.b32.xlu0 %v9410, 16
      %v9524 = vpop.permute.xlu0 %9523
      %9525 = vrot.lane.b32.xlu0 %v9405, 16
      %v9526 = vpop.permute.xlu0 %9525
      %9527 = vrot.lane.b32.xlu0 %v9427, 16
      %v9528 = vpop.permute.xlu0 %9527
      %9529 = vrot.lane.b32.xlu0 %v9422, 16
      %v9530 = vpop.permute.xlu0 %9529
      %9531 = vrot.lane.b32.xlu0 %v9444, 16
      %v9532 = vpop.permute.xlu0 %9531
      %9533 = vrot.lane.b32.xlu0 %v9439, 16
      %v9534 = vpop.permute.xlu0 %9533
      %9535 = vrot.lane.b32.xlu0 %v9461, 16
      %v9536 = vpop.permute.xlu0 %9535
      %9537 = vrot.lane.b32.xlu0 %v9456, 16
      %v9538 = vpop.permute.xlu0 %9537
      %9539 = vrot.lane.b32.xlu0 %v9478, 16
      %v9540 = vpop.permute.xlu0 %9539
      %9541 = vrot.lane.b32.xlu0 %v9473, 16
      %v9542 = vpop.permute.xlu0 %9541
      %vm9543 = vcmask 1044480
      %v9544 = vrot.slane %v9061, 3
      %v9545 = vrot.slane %v9062, 3
      %v9546 = vsel %vm9543, %v9544, %v9545
      %v9547 = vrot.slane %v9063, 3
      %v9548 = vrot.slane %v9064, 3
      %v9549 = vsel %vm9543, %v9547, %v9548
      %v9550 = vrot.slane %v9065, 3
      %v9551 = vrot.slane %v9066, 3
      %v9552 = vsel %vm9543, %v9550, %v9551
      %v9553 = vrot.slane %v9067, 3
      %v9554 = vrot.slane %v9068, 3
      %v9555 = vsel %vm9543, %v9553, %v9554
      %v9556 = vrot.slane %v9069, 3
      %v9557 = vrot.slane %v9070, 3
      %v9558 = vsel %vm9543, %v9556, %v9557
      %v9559 = vrot.slane %v9071, 3
      %v9560 = vrot.slane %v9072, 3
      %v9561 = vsel %vm9543, %v9559, %v9560
      %v9562 = vrot.slane %v9073, 3
      %v9563 = vrot.slane %v9074, 3
      %v9564 = vsel %vm9543, %v9562, %v9563
      %v9565 = vrot.slane %v9075, 3
      %v9566 = vrot.slane %v9076, 3
      %v9567 = vsel %vm9543, %v9565, %v9566
      %v9568 = vrot.slane %v9077, 3
      %v9569 = vrot.slane %v9078, 3
      %v9570 = vsel %vm9543, %v9568, %v9569
      %v9571 = vrot.slane %v9079, 3
      %v9572 = vrot.slane %v9080, 3
      %v9573 = vsel %vm9543, %v9571, %v9572
      %v9574 = vrot.slane %v9081, 3
      %v9575 = vrot.slane %v9082, 3
      %v9576 = vsel %vm9543, %v9574, %v9575
      %v9577 = vrot.slane %v9083, 3
      %v9578 = vrot.slane %v9084, 3
      %v9579 = vsel %vm9543, %v9577, %v9578
      %v9580 = vrot.slane %v9085, 3
      %v9581 = vrot.slane %v9086, 3
      %v9582 = vsel %vm9543, %v9580, %v9581
      %v9583 = vrot.slane %v9087, 3
      %v9584 = vrot.slane %v9088, 3
      %v9585 = vsel %vm9543, %v9583, %v9584
      %v9586 = vrot.slane %v9089, 3
      %v9587 = vrot.slane %v9090, 3
      %v9588 = vsel %vm9543, %v9586, %v9587
      %v9589 = vrot.slane %v9091, 3
      %v9590 = vrot.slane %v9092, 3
      %v9591 = vsel %vm9543, %v9589, %v9590
      %9592 = vrot.lane.b32.xlu0 %v9546, 20
      %v9593 = vpop.permute.xlu0 %9592
      %9594 = vrot.lane.b32.xlu0 %v9545, 20
      %v9595 = vpop.permute.xlu0 %9594
      %9596 = vrot.lane.b32.xlu0 %v9549, 20
      %v9597 = vpop.permute.xlu0 %9596
      %9598 = vrot.lane.b32.xlu0 %v9548, 20
      %v9599 = vpop.permute.xlu0 %9598
      %9600 = vrot.lane.b32.xlu0 %v9552, 20
      %v9601 = vpop.permute.xlu0 %9600
      %9602 = vrot.lane.b32.xlu0 %v9551, 20
      %v9603 = vpop.permute.xlu0 %9602
      %9604 = vrot.lane.b32.xlu0 %v9555, 20
      %v9605 = vpop.permute.xlu0 %9604
      %9606 = vrot.lane.b32.xlu0 %v9554, 20
      %v9607 = vpop.permute.xlu0 %9606
      %9608 = vrot.lane.b32.xlu0 %v9558, 20
      %v9609 = vpop.permute.xlu0 %9608
      %9610 = vrot.lane.b32.xlu0 %v9557, 20
      %v9611 = vpop.permute.xlu0 %9610
      %9612 = vrot.lane.b32.xlu0 %v9561, 20
      %v9613 = vpop.permute.xlu0 %9612
      %9614 = vrot.lane.b32.xlu0 %v9560, 20
      %v9615 = vpop.permute.xlu0 %9614
      %9616 = vrot.lane.b32.xlu0 %v9564, 20
      %v9617 = vpop.permute.xlu0 %9616
      %9618 = vrot.lane.b32.xlu0 %v9563, 20
      %v9619 = vpop.permute.xlu0 %9618
      %9620 = vrot.lane.b32.xlu0 %v9567, 20
      %v9621 = vpop.permute.xlu0 %9620
      %9622 = vrot.lane.b32.xlu0 %v9566, 20
      %v9623 = vpop.permute.xlu0 %9622
      %9624 = vrot.lane.b32.xlu0 %v9570, 20
      %v9625 = vpop.permute.xlu0 %9624
      %9626 = vrot.lane.b32.xlu0 %v9569, 20
      %v9627 = vpop.permute.xlu0 %9626
      %9628 = vrot.lane.b32.xlu0 %v9573, 20
      %v9629 = vpop.permute.xlu0 %9628
      %9630 = vrot.lane.b32.xlu0 %v9572, 20
      %v9631 = vpop.permute.xlu0 %9630
      %9632 = vrot.lane.b32.xlu0 %v9576, 20
      %v9633 = vpop.permute.xlu0 %9632
      %9634 = vrot.lane.b32.xlu0 %v9575, 20
      %v9635 = vpop.permute.xlu0 %9634
      %9636 = vrot.lane.b32.xlu0 %v9579, 20
      %v9637 = vpop.permute.xlu0 %9636
      %9638 = vrot.lane.b32.xlu0 %v9578, 20
      %v9639 = vpop.permute.xlu0 %9638
      %9640 = vrot.lane.b32.xlu0 %v9582, 20
      %v9641 = vpop.permute.xlu0 %9640
      %9642 = vrot.lane.b32.xlu0 %v9581, 20
      %v9643 = vpop.permute.xlu0 %9642
      %9644 = vrot.lane.b32.xlu0 %v9585, 20
      %v9645 = vpop.permute.xlu0 %9644
      %9646 = vrot.lane.b32.xlu0 %v9584, 20
      %v9647 = vpop.permute.xlu0 %9646
      %9648 = vrot.lane.b32.xlu0 %v9588, 20
      %v9649 = vpop.permute.xlu0 %9648
      %9650 = vrot.lane.b32.xlu0 %v9587, 20
      %v9651 = vpop.permute.xlu0 %9650
      %9652 = vrot.lane.b32.xlu0 %v9591, 20
      %v9653 = vpop.permute.xlu0 %9652
      %9654 = vrot.lane.b32.xlu0 %v9590, 20
      %v9655 = vpop.permute.xlu0 %9654
      %v9656 = vpack.c.b16 %v9015, %v9014
      %v9657 = vpack.c.b16 %v9018, %v9017
      %v9658 = vpack.c.b16 %v9021, %v9020
      %v9659 = vpack.c.b16 %v9024, %v9023
      %v9660 = vpack.c.b16 %v9027, %v9026
      %v9661 = vpack.c.b16 %v9030, %v9029
      %v9662 = vpack.c.b16 %v9033, %v9032
      %v9663 = vpack.c.b16 %v9036, %v9035
      %v9664 = vpack.c.b16 %v9039, %v9038
      %v9665 = vpack.c.b16 %v9042, %v9041
      %v9666 = vpack.c.b16 %v9045, %v9044
      %v9667 = vpack.c.b16 %v9048, %v9047
      %v9668 = vpack.c.b16 %v9051, %v9050
      %v9669 = vpack.c.b16 %v9054, %v9053
      %v9670 = vpack.c.b16 %v9057, %v9056
      %v9671 = vpack.c.b16 %v9060, %v9059
      %v9673 = vshrl.u32 %v9656, 16
      %v9675 = vrot.slane %v9673, 7
      %v9676 = vshll.u32 %v9656, 16
      %v9678 = vor.u32 %v9675, %v9676
      %v9680 = vshrl.u32 %v9657, 16
      %v9682 = vrot.slane %v9680, 7
      %v9683 = vshll.u32 %v9657, 16
      %v9685 = vor.u32 %v9682, %v9683
      %v9687 = vshrl.u32 %v9658, 16
      %v9689 = vrot.slane %v9687, 7
      %v9690 = vshll.u32 %v9658, 16
      %v9692 = vor.u32 %v9689, %v9690
      %v9694 = vshrl.u32 %v9659, 16
      %v9696 = vrot.slane %v9694, 7
      %v9697 = vshll.u32 %v9659, 16
      %v9699 = vor.u32 %v9696, %v9697
      %v9701 = vshrl.u32 %v9660, 16
      %v9703 = vrot.slane %v9701, 7
      %v9704 = vshll.u32 %v9660, 16
      %v9706 = vor.u32 %v9703, %v9704
      %v9708 = vshrl.u32 %v9661, 16
      %v9710 = vrot.slane %v9708, 7
      %v9711 = vshll.u32 %v9661, 16
      %v9713 = vor.u32 %v9710, %v9711
      %v9715 = vshrl.u32 %v9662, 16
      %v9717 = vrot.slane %v9715, 7
      %v9718 = vshll.u32 %v9662, 16
      %v9720 = vor.u32 %v9717, %v9718
      %v9722 = vshrl.u32 %v9663, 16
      %v9724 = vrot.slane %v9722, 7
      %v9725 = vshll.u32 %v9663, 16
      %v9727 = vor.u32 %v9724, %v9725
      %v9729 = vshrl.u32 %v9664, 16
      %v9731 = vrot.slane %v9729, 7
      %v9732 = vshll.u32 %v9664, 16
      %v9734 = vor.u32 %v9731, %v9732
      %v9736 = vshrl.u32 %v9665, 16
      %v9738 = vrot.slane %v9736, 7
      %v9739 = vshll.u32 %v9665, 16
      %v9741 = vor.u32 %v9738, %v9739
      %v9743 = vshrl.u32 %v9666, 16
      %v9745 = vrot.slane %v9743, 7
      %v9746 = vshll.u32 %v9666, 16
      %v9748 = vor.u32 %v9745, %v9746
      %v9750 = vshrl.u32 %v9667, 16
      %v9752 = vrot.slane %v9750, 7
      %v9753 = vshll.u32 %v9667, 16
      %v9755 = vor.u32 %v9752, %v9753
      %v9757 = vshrl.u32 %v9668, 16
      %v9759 = vrot.slane %v9757, 7
      %v9760 = vshll.u32 %v9668, 16
      %v9762 = vor.u32 %v9759, %v9760
      %v9764 = vshrl.u32 %v9669, 16
      %v9766 = vrot.slane %v9764, 7
      %v9767 = vshll.u32 %v9669, 16
      %v9769 = vor.u32 %v9766, %v9767
      %v9771 = vshrl.u32 %v9670, 16
      %v9773 = vrot.slane %v9771, 7
      %v9774 = vshll.u32 %v9670, 16
      %v9776 = vor.u32 %v9773, %v9774
      %v9778 = vshrl.u32 %v9671, 16
      %v9780 = vrot.slane %v9778, 7
      %v9781 = vshll.u32 %v9671, 16
      %v9783 = vor.u32 %v9780, %v9781
      %9784 = vrot.lane.b32.xlu0 %v9678, 24
      %v9785 = vpop.permute.xlu0 %9784
      %9786 = vrot.lane.b32.xlu0 %v9675, 24
      %v9787 = vpop.permute.xlu0 %9786
      %9788 = vrot.lane.b32.xlu0 %v9685, 24
      %v9789 = vpop.permute.xlu0 %9788
      %9790 = vrot.lane.b32.xlu0 %v9682, 24
      %v9791 = vpop.permute.xlu0 %9790
      %9792 = vrot.lane.b32.xlu0 %v9692, 24
      %v9793 = vpop.permute.xlu0 %9792
      %9794 = vrot.lane.b32.xlu0 %v9689, 24
      %v9795 = vpop.permute.xlu0 %9794
      %9796 = vrot.lane.b32.xlu0 %v9699, 24
      %v9797 = vpop.permute.xlu0 %9796
      %9798 = vrot.lane.b32.xlu0 %v9696, 24
      %v9799 = vpop.permute.xlu0 %9798
      %9800 = vrot.lane.b32.xlu0 %v9706, 24
      %v9801 = vpop.permute.xlu0 %9800
      %9802 = vrot.lane.b32.xlu0 %v9703, 24
      %v9803 = vpop.permute.xlu0 %9802
      %9804 = vrot.lane.b32.xlu0 %v9713, 24
      %v9805 = vpop.permute.xlu0 %9804
      %9806 = vrot.lane.b32.xlu0 %v9710, 24
      %v9807 = vpop.permute.xlu0 %9806
      %9808 = vrot.lane.b32.xlu0 %v9720, 24
      %v9809 = vpop.permute.xlu0 %9808
      %9810 = vrot.lane.b32.xlu0 %v9717, 24
      %v9811 = vpop.permute.xlu0 %9810
      %9812 = vrot.lane.b32.xlu0 %v9727, 24
      %v9813 = vpop.permute.xlu0 %9812
      %9814 = vrot.lane.b32.xlu0 %v9724, 24
      %v9815 = vpop.permute.xlu0 %9814
      %9816 = vrot.lane.b32.xlu0 %v9734, 24
      %v9817 = vpop.permute.xlu0 %9816
      %9818 = vrot.lane.b32.xlu0 %v9731, 24
      %v9819 = vpop.permute.xlu0 %9818
      %9820 = vrot.lane.b32.xlu0 %v9741, 24
      %v9821 = vpop.permute.xlu0 %9820
      %9822 = vrot.lane.b32.xlu0 %v9738, 24
      %v9823 = vpop.permute.xlu0 %9822
      %9824 = vrot.lane.b32.xlu0 %v9748, 24
      %v9825 = vpop.permute.xlu0 %9824
      %9826 = vrot.lane.b32.xlu0 %v9745, 24
      %v9827 = vpop.permute.xlu0 %9826
      %9828 = vrot.lane.b32.xlu0 %v9755, 24
      %v9829 = vpop.permute.xlu0 %9828
      %9830 = vrot.lane.b32.xlu0 %v9752, 24
      %v9831 = vpop.permute.xlu0 %9830
      %9832 = vrot.lane.b32.xlu0 %v9762, 24
      %v9833 = vpop.permute.xlu0 %9832
      %9834 = vrot.lane.b32.xlu0 %v9759, 24
      %v9835 = vpop.permute.xlu0 %9834
      %9836 = vrot.lane.b32.xlu0 %v9769, 24
      %v9837 = vpop.permute.xlu0 %9836
      %9838 = vrot.lane.b32.xlu0 %v9766, 24
      %v9839 = vpop.permute.xlu0 %9838
      %9840 = vrot.lane.b32.xlu0 %v9776, 24
      %v9841 = vpop.permute.xlu0 %9840
      %9842 = vrot.lane.b32.xlu0 %v9773, 24
      %v9843 = vpop.permute.xlu0 %9842
      %9844 = vrot.lane.b32.xlu0 %v9783, 24
      %v9845 = vpop.permute.xlu0 %9844
      %9846 = vrot.lane.b32.xlu0 %v9780, 24
      %v9847 = vpop.permute.xlu0 %9846
      %v9864 = vunpack.c.l.b16 %v749
      %v9865 = vunpack.c.l.b16 %v753
      %v9866 = vunpack.c.l.b16 %v757
      %v9867 = vunpack.c.l.b16 %v761
      %v9868 = vunpack.c.l.b16 %v765
      %v9869 = vunpack.c.l.b16 %v769
      %v9870 = vunpack.c.l.b16 %v773
      %v9871 = vunpack.c.l.b16 %v777
      %v9872 = vunpack.c.l.b16 %v781
      %v9873 = vunpack.c.l.b16 %v785
      %v9874 = vunpack.c.l.b16 %v789
      %v9875 = vunpack.c.l.b16 %v793
      %v9876 = vunpack.c.l.b16 %v797
      %v9877 = vunpack.c.l.b16 %v801
      %v9878 = vunpack.c.l.b16 %v805
      %v9879 = vunpack.c.l.b16 %v809
      %v9880 = vpack.c.b16 %v9864, %v9864
      %v9881 = vpack.c.b16 %v9865, %v9865
      %v9882 = vpack.c.b16 %v9866, %v9866
      %v9883 = vpack.c.b16 %v9867, %v9867
      %v9884 = vpack.c.b16 %v9868, %v9868
      %v9885 = vpack.c.b16 %v9869, %v9869
      %v9886 = vpack.c.b16 %v9870, %v9870
      %v9887 = vpack.c.b16 %v9871, %v9871
      %v9888 = vpack.c.b16 %v9872, %v9872
      %v9889 = vpack.c.b16 %v9873, %v9873
      %v9890 = vpack.c.b16 %v9874, %v9874
      %v9891 = vpack.c.b16 %v9875, %v9875
      %v9892 = vpack.c.b16 %v9876, %v9876
      %v9893 = vpack.c.b16 %v9877, %v9877
      %v9894 = vpack.c.b16 %v9878, %v9878
      %v9895 = vpack.c.b16 %v9879, %v9879
      %9896 = vrot.lane.b32.xlu0 %v9656, 28
      %v9897 = vpop.permute.xlu0 %9896
      %9898 = vrot.lane.b32.xlu0 %v9880, 28
      %v9899 = vpop.permute.xlu0 %9898
      %9900 = vrot.lane.b32.xlu0 %v9657, 28
      %v9901 = vpop.permute.xlu0 %9900
      %9902 = vrot.lane.b32.xlu0 %v9881, 28
      %v9903 = vpop.permute.xlu0 %9902
      %9904 = vrot.lane.b32.xlu0 %v9658, 28
      %v9905 = vpop.permute.xlu0 %9904
      %9906 = vrot.lane.b32.xlu0 %v9882, 28
      %v9907 = vpop.permute.xlu0 %9906
      %9908 = vrot.lane.b32.xlu0 %v9659, 28
      %v9909 = vpop.permute.xlu0 %9908
      %9910 = vrot.lane.b32.xlu0 %v9883, 28
      %v9911 = vpop.permute.xlu0 %9910
      %9912 = vrot.lane.b32.xlu0 %v9660, 28
      %v9913 = vpop.permute.xlu0 %9912
      %9914 = vrot.lane.b32.xlu0 %v9884, 28
      %v9915 = vpop.permute.xlu0 %9914
      %9916 = vrot.lane.b32.xlu0 %v9661, 28
      %v9917 = vpop.permute.xlu0 %9916
      %9918 = vrot.lane.b32.xlu0 %v9885, 28
      %v9919 = vpop.permute.xlu0 %9918
      %9920 = vrot.lane.b32.xlu0 %v9662, 28
      %v9921 = vpop.permute.xlu0 %9920
      %9922 = vrot.lane.b32.xlu0 %v9886, 28
      %v9923 = vpop.permute.xlu0 %9922
      %9924 = vrot.lane.b32.xlu0 %v9663, 28
      %v9925 = vpop.permute.xlu0 %9924
      %9926 = vrot.lane.b32.xlu0 %v9887, 28
      %v9927 = vpop.permute.xlu0 %9926
      %9928 = vrot.lane.b32.xlu0 %v9664, 28
      %v9929 = vpop.permute.xlu0 %9928
      %9930 = vrot.lane.b32.xlu0 %v9888, 28
      %v9931 = vpop.permute.xlu0 %9930
      %9932 = vrot.lane.b32.xlu0 %v9665, 28
      %v9933 = vpop.permute.xlu0 %9932
      %9934 = vrot.lane.b32.xlu0 %v9889, 28
      %v9935 = vpop.permute.xlu0 %9934
      %9936 = vrot.lane.b32.xlu0 %v9666, 28
      %v9937 = vpop.permute.xlu0 %9936
      %9938 = vrot.lane.b32.xlu0 %v9890, 28
      %v9939 = vpop.permute.xlu0 %9938
      %9940 = vrot.lane.b32.xlu0 %v9667, 28
      %v9941 = vpop.permute.xlu0 %9940
      %9942 = vrot.lane.b32.xlu0 %v9891, 28
      %v9943 = vpop.permute.xlu0 %9942
      %9944 = vrot.lane.b32.xlu0 %v9668, 28
      %v9945 = vpop.permute.xlu0 %9944
      %9946 = vrot.lane.b32.xlu0 %v9892, 28
      %v9947 = vpop.permute.xlu0 %9946
      %9948 = vrot.lane.b32.xlu0 %v9669, 28
      %v9949 = vpop.permute.xlu0 %9948
      %9950 = vrot.lane.b32.xlu0 %v9893, 28
      %v9951 = vpop.permute.xlu0 %9950
      %9952 = vrot.lane.b32.xlu0 %v9670, 28
      %v9953 = vpop.permute.xlu0 %9952
      %9954 = vrot.lane.b32.xlu0 %v9894, 28
      %v9955 = vpop.permute.xlu0 %9954
      %9956 = vrot.lane.b32.xlu0 %v9671, 28
      %v9957 = vpop.permute.xlu0 %9956
      %9958 = vrot.lane.b32.xlu0 %v9895, 28
      %v9959 = vpop.permute.xlu0 %9958
      %v9960 = vrot.slane %v9676, 1
      %v9961 = vor.u32 %v9673, %v9960
      %v9963 = vshll.u32 %v9880, 16
      %v9965 = vrot.slane %v9963, 1
      %v9966 = vsel %vm1006, %v9961, %v9965
      %v9967 = vshrl.u32 %v9880, 16
      %v9969 = vrot.slane %v9683, 1
      %v9970 = vor.u32 %v9680, %v9969
      %v9972 = vshll.u32 %v9881, 16
      %v9974 = vrot.slane %v9972, 1
      %v9975 = vsel %vm1006, %v9970, %v9974
      %v9976 = vshrl.u32 %v9881, 16
      %v9978 = vrot.slane %v9690, 1
      %v9979 = vor.u32 %v9687, %v9978
      %v9981 = vshll.u32 %v9882, 16
      %v9983 = vrot.slane %v9981, 1
      %v9984 = vsel %vm1006, %v9979, %v9983
      %v9985 = vshrl.u32 %v9882, 16
      %v9987 = vrot.slane %v9697, 1
      %v9988 = vor.u32 %v9694, %v9987
      %v9990 = vshll.u32 %v9883, 16
      %v9992 = vrot.slane %v9990, 1
      %v9993 = vsel %vm1006, %v9988, %v9992
      %v9994 = vshrl.u32 %v9883, 16
      %v9996 = vrot.slane %v9704, 1
      %v9997 = vor.u32 %v9701, %v9996
      %v9999 = vshll.u32 %v9884, 16
      %v10001 = vrot.slane %v9999, 1
      %v10002 = vsel %vm1006, %v9997, %v10001
      %v10003 = vshrl.u32 %v9884, 16
      %v10005 = vrot.slane %v9711, 1
      %v10006 = vor.u32 %v9708, %v10005
      %v10008 = vshll.u32 %v9885, 16
      %v10010 = vrot.slane %v10008, 1
      %v10011 = vsel %vm1006, %v10006, %v10010
      %v10012 = vshrl.u32 %v9885, 16
      %v10014 = vrot.slane %v9718, 1
      %v10015 = vor.u32 %v9715, %v10014
      %v10017 = vshll.u32 %v9886, 16
      %v10019 = vrot.slane %v10017, 1
      %v10020 = vsel %vm1006, %v10015, %v10019
      %v10021 = vshrl.u32 %v9886, 16
      %v10023 = vrot.slane %v9725, 1
      %v10024 = vor.u32 %v9722, %v10023
      %v10026 = vshll.u32 %v9887, 16
      %v10028 = vrot.slane %v10026, 1
      %v10029 = vsel %vm1006, %v10024, %v10028
      %v10030 = vshrl.u32 %v9887, 16
      %v10032 = vrot.slane %v9732, 1
      %v10033 = vor.u32 %v9729, %v10032
      %v10035 = vshll.u32 %v9888, 16
      %v10037 = vrot.slane %v10035, 1
      %v10038 = vsel %vm1006, %v10033, %v10037
      %v10039 = vshrl.u32 %v9888, 16
      %v10041 = vrot.slane %v9739, 1
      %v10042 = vor.u32 %v9736, %v10041
      %v10044 = vshll.u32 %v9889, 16
      %v10046 = vrot.slane %v10044, 1
      %v10047 = vsel %vm1006, %v10042, %v10046
      %v10048 = vshrl.u32 %v9889, 16
      %v10050 = vrot.slane %v9746, 1
      %v10051 = vor.u32 %v9743, %v10050
      %v10053 = vshll.u32 %v9890, 16
      %v10055 = vrot.slane %v10053, 1
      %v10056 = vsel %vm1006, %v10051, %v10055
      %v10057 = vshrl.u32 %v9890, 16
      %v10059 = vrot.slane %v9753, 1
      %v10060 = vor.u32 %v9750, %v10059
      %v10062 = vshll.u32 %v9891, 16
      %v10064 = vrot.slane %v10062, 1
      %v10065 = vsel %vm1006, %v10060, %v10064
      %v10066 = vshrl.u32 %v9891, 16
      %v10068 = vrot.slane %v9760, 1
      %v10069 = vor.u32 %v9757, %v10068
      %v10071 = vshll.u32 %v9892, 16
      %v10073 = vrot.slane %v10071, 1
      %v10074 = vsel %vm1006, %v10069, %v10073
      %v10075 = vshrl.u32 %v9892, 16
      %v10077 = vrot.slane %v9767, 1
      %v10078 = vor.u32 %v9764, %v10077
      %v10080 = vshll.u32 %v9893, 16
      %v10082 = vrot.slane %v10080, 1
      %v10083 = vsel %vm1006, %v10078, %v10082
      %v10084 = vshrl.u32 %v9893, 16
      %v10086 = vrot.slane %v9774, 1
      %v10087 = vor.u32 %v9771, %v10086
      %v10089 = vshll.u32 %v9894, 16
      %v10091 = vrot.slane %v10089, 1
      %v10092 = vsel %vm1006, %v10087, %v10091
      %v10093 = vshrl.u32 %v9894, 16
      %v10095 = vrot.slane %v9781, 1
      %v10096 = vor.u32 %v9778, %v10095
      %v10098 = vshll.u32 %v9895, 16
      %v10100 = vrot.slane %v10098, 1
      %v10101 = vsel %vm1006, %v10096, %v10100
      %v10102 = vshrl.u32 %v9895, 16
      %10104 = vrot.lane.b32.xlu0 %v9966, 32
      %v10105 = vpop.permute.xlu0 %10104
      %10106 = vrot.lane.b32.xlu0 %v9967, 32
      %v10107 = vpop.permute.xlu0 %10106
      %10108 = vrot.lane.b32.xlu0 %v9975, 32
      %v10109 = vpop.permute.xlu0 %10108
      %10110 = vrot.lane.b32.xlu0 %v9976, 32
      %v10111 = vpop.permute.xlu0 %10110
      %10112 = vrot.lane.b32.xlu0 %v9984, 32
      %v10113 = vpop.permute.xlu0 %10112
      %10114 = vrot.lane.b32.xlu0 %v9985, 32
      %v10115 = vpop.permute.xlu0 %10114
      %10116 = vrot.lane.b32.xlu0 %v9993, 32
      %v10117 = vpop.permute.xlu0 %10116
      %10118 = vrot.lane.b32.xlu0 %v9994, 32
      %v10119 = vpop.permute.xlu0 %10118
      %10120 = vrot.lane.b32.xlu0 %v10002, 32
      %v10121 = vpop.permute.xlu0 %10120
      %10122 = vrot.lane.b32.xlu0 %v10003, 32
      %v10123 = vpop.permute.xlu0 %10122
      %10124 = vrot.lane.b32.xlu0 %v10011, 32
      %v10125 = vpop.permute.xlu0 %10124
      %10126 = vrot.lane.b32.xlu0 %v10012, 32
      %v10127 = vpop.permute.xlu0 %10126
      %10128 = vrot.lane.b32.xlu0 %v10020, 32
      %v10129 = vpop.permute.xlu0 %10128
      %10130 = vrot.lane.b32.xlu0 %v10021, 32
      %v10131 = vpop.permute.xlu0 %10130
      %10132 = vrot.lane.b32.xlu0 %v10029, 32
      %v10133 = vpop.permute.xlu0 %10132
      %10134 = vrot.lane.b32.xlu0 %v10030, 32
      %v10135 = vpop.permute.xlu0 %10134
      %10136 = vrot.lane.b32.xlu0 %v10038, 32
      %v10137 = vpop.permute.xlu0 %10136
      %10138 = vrot.lane.b32.xlu0 %v10039, 32
      %v10139 = vpop.permute.xlu0 %10138
      %10140 = vrot.lane.b32.xlu0 %v10047, 32
      %v10141 = vpop.permute.xlu0 %10140
      %10142 = vrot.lane.b32.xlu0 %v10048, 32
      %v10143 = vpop.permute.xlu0 %10142
      %10144 = vrot.lane.b32.xlu0 %v10056, 32
      %v10145 = vpop.permute.xlu0 %10144
      %10146 = vrot.lane.b32.xlu0 %v10057, 32
      %v10147 = vpop.permute.xlu0 %10146
      %10148 = vrot.lane.b32.xlu0 %v10065, 32
      %v10149 = vpop.permute.xlu0 %10148
      %10150 = vrot.lane.b32.xlu0 %v10066, 32
      %v10151 = vpop.permute.xlu0 %10150
      %10152 = vrot.lane.b32.xlu0 %v10074, 32
      %v10153 = vpop.permute.xlu0 %10152
      %10154 = vrot.lane.b32.xlu0 %v10075, 32
      %v10155 = vpop.permute.xlu0 %10154
      %10156 = vrot.lane.b32.xlu0 %v10083, 32
      %v10157 = vpop.permute.xlu0 %10156
      %10158 = vrot.lane.b32.xlu0 %v10084, 32
      %v10159 = vpop.permute.xlu0 %10158
      %10160 = vrot.lane.b32.xlu0 %v10092, 32
      %v10161 = vpop.permute.xlu0 %10160
      %10162 = vrot.lane.b32.xlu0 %v10093, 32
      %v10163 = vpop.permute.xlu0 %10162
      %10164 = vrot.lane.b32.xlu0 %v10101, 32
      %v10165 = vpop.permute.xlu0 %10164
      %10166 = vrot.lane.b32.xlu0 %v10102, 32
      %v10167 = vpop.permute.xlu0 %10166
      %v10168 = vrot.slane %v9656, 1
      %v10169 = vrot.slane %v9880, 1
      %v10170 = vsel %vm1311, %v10168, %v10169
      %v10171 = vrot.slane %v9657, 1
      %v10172 = vrot.slane %v9881, 1
      %v10173 = vsel %vm1311, %v10171, %v10172
      %v10174 = vrot.slane %v9658, 1
      %v10175 = vrot.slane %v9882, 1
      %v10176 = vsel %vm1311, %v10174, %v10175
      %v10177 = vrot.slane %v9659, 1
      %v10178 = vrot.slane %v9883, 1
      %v10179 = vsel %vm1311, %v10177, %v10178
      %v10180 = vrot.slane %v9660, 1
      %v10181 = vrot.slane %v9884, 1
      %v10182 = vsel %vm1311, %v10180, %v10181
      %v10183 = vrot.slane %v9661, 1
      %v10184 = vrot.slane %v9885, 1
      %v10185 = vsel %vm1311, %v10183, %v10184
      %v10186 = vrot.slane %v9662, 1
      %v10187 = vrot.slane %v9886, 1
      %v10188 = vsel %vm1311, %v10186, %v10187
      %v10189 = vrot.slane %v9663, 1
      %v10190 = vrot.slane %v9887, 1
      %v10191 = vsel %vm1311, %v10189, %v10190
      %v10192 = vrot.slane %v9664, 1
      %v10193 = vrot.slane %v9888, 1
      %v10194 = vsel %vm1311, %v10192, %v10193
      %v10195 = vrot.slane %v9665, 1
      %v10196 = vrot.slane %v9889, 1
      %v10197 = vsel %vm1311, %v10195, %v10196
      %v10198 = vrot.slane %v9666, 1
      %v10199 = vrot.slane %v9890, 1
      %v10200 = vsel %vm1311, %v10198, %v10199
      %v10201 = vrot.slane %v9667, 1
      %v10202 = vrot.slane %v9891, 1
      %v10203 = vsel %vm1311, %v10201, %v10202
      %v10204 = vrot.slane %v9668, 1
      %v10205 = vrot.slane %v9892, 1
      %v10206 = vsel %vm1311, %v10204, %v10205
      %v10207 = vrot.slane %v9669, 1
      %v10208 = vrot.slane %v9893, 1
      %v10209 = vsel %vm1311, %v10207, %v10208
      %v10210 = vrot.slane %v9670, 1
      %v10211 = vrot.slane %v9894, 1
      %v10212 = vsel %vm1311, %v10210, %v10211
      %v10213 = vrot.slane %v9671, 1
      %v10214 = vrot.slane %v9895, 1
      %v10215 = vsel %vm1311, %v10213, %v10214
      %10216 = vrot.lane.b32.xlu0 %v10170, 36
      %v10217 = vpop.permute.xlu0 %10216
      %10218 = vrot.lane.b32.xlu0 %v10169, 36
      %v10219 = vpop.permute.xlu0 %10218
      %10220 = vrot.lane.b32.xlu0 %v10173, 36
      %v10221 = vpop.permute.xlu0 %10220
      %10222 = vrot.lane.b32.xlu0 %v10172, 36
      %v10223 = vpop.permute.xlu0 %10222
      %10224 = vrot.lane.b32.xlu0 %v10176, 36
      %v10225 = vpop.permute.xlu0 %10224
      %10226 = vrot.lane.b32.xlu0 %v10175, 36
      %v10227 = vpop.permute.xlu0 %10226
      %10228 = vrot.lane.b32.xlu0 %v10179, 36
      %v10229 = vpop.permute.xlu0 %10228
      %10230 = vrot.lane.b32.xlu0 %v10178, 36
      %v10231 = vpop.permute.xlu0 %10230
      %10232 = vrot.lane.b32.xlu0 %v10182, 36
      %v10233 = vpop.permute.xlu0 %10232
      %10234 = vrot.lane.b32.xlu0 %v10181, 36
      %v10235 = vpop.permute.xlu0 %10234
      %10236 = vrot.lane.b32.xlu0 %v10185, 36
      %v10237 = vpop.permute.xlu0 %10236
      %10238 = vrot.lane.b32.xlu0 %v10184, 36
      %v10239 = vpop.permute.xlu0 %10238
      %10240 = vrot.lane.b32.xlu0 %v10188, 36
      %v10241 = vpop.permute.xlu0 %10240
      %10242 = vrot.lane.b32.xlu0 %v10187, 36
      %v10243 = vpop.permute.xlu0 %10242
      %10244 = vrot.lane.b32.xlu0 %v10191, 36
      %v10245 = vpop.permute.xlu0 %10244
      %10246 = vrot.lane.b32.xlu0 %v10190, 36
      %v10247 = vpop.permute.xlu0 %10246
      %10248 = vrot.lane.b32.xlu0 %v10194, 36
      %v10249 = vpop.permute.xlu0 %10248
      %10250 = vrot.lane.b32.xlu0 %v10193, 36
      %v10251 = vpop.permute.xlu0 %10250
      %10252 = vrot.lane.b32.xlu0 %v10197, 36
      %v10253 = vpop.permute.xlu0 %10252
      %10254 = vrot.lane.b32.xlu0 %v10196, 36
      %v10255 = vpop.permute.xlu0 %10254
      %10256 = vrot.lane.b32.xlu0 %v10200, 36
      %v10257 = vpop.permute.xlu0 %10256
      %10258 = vrot.lane.b32.xlu0 %v10199, 36
      %v10259 = vpop.permute.xlu0 %10258
      %10260 = vrot.lane.b32.xlu0 %v10203, 36
      %v10261 = vpop.permute.xlu0 %10260
      %10262 = vrot.lane.b32.xlu0 %v10202, 36
      %v10263 = vpop.permute.xlu0 %10262
      %10264 = vrot.lane.b32.xlu0 %v10206, 36
      %v10265 = vpop.permute.xlu0 %10264
      %10266 = vrot.lane.b32.xlu0 %v10205, 36
      %v10267 = vpop.permute.xlu0 %10266
      %10268 = vrot.lane.b32.xlu0 %v10209, 36
      %v10269 = vpop.permute.xlu0 %10268
      %10270 = vrot.lane.b32.xlu0 %v10208, 36
      %v10271 = vpop.permute.xlu0 %10270
      %10272 = vrot.lane.b32.xlu0 %v10212, 36
      %v10273 = vpop.permute.xlu0 %10272
      %10274 = vrot.lane.b32.xlu0 %v10211, 36
      %v10275 = vpop.permute.xlu0 %10274
      %10276 = vrot.lane.b32.xlu0 %v10215, 36
      %v10277 = vpop.permute.xlu0 %10276
      %10278 = vrot.lane.b32.xlu0 %v10214, 36
      %v10279 = vpop.permute.xlu0 %10278
      %v10328 = vunpack.c.l.b16 %v814
      %v10329 = vunpack.c.l.b16 %v815
      %v10330 = vunpack.c.l.b16 %v816
      %v10331 = vunpack.c.l.b16 %v818
      %v10332 = vunpack.c.l.b16 %v819
      %v10333 = vunpack.c.l.b16 %v820
      %v10334 = vunpack.c.l.b16 %v822
      %v10335 = vunpack.c.l.b16 %v823
      %v10336 = vunpack.c.l.b16 %v824
      %v10337 = vunpack.c.l.b16 %v826
      %v10338 = vunpack.c.l.b16 %v827
      %v10339 = vunpack.c.l.b16 %v828
      %v10340 = vunpack.c.l.b16 %v830
      %v10341 = vunpack.c.l.b16 %v831
      %v10342 = vunpack.c.l.b16 %v832
      %v10343 = vunpack.c.l.b16 %v834
      %v10344 = vunpack.c.l.b16 %v835
      %v10345 = vunpack.c.l.b16 %v836
      %v10346 = vunpack.c.l.b16 %v838
      %v10347 = vunpack.c.l.b16 %v839
      %v10348 = vunpack.c.l.b16 %v840
      %v10349 = vunpack.c.l.b16 %v842
      %v10350 = vunpack.c.l.b16 %v843
      %v10351 = vunpack.c.l.b16 %v844
      %v10352 = vunpack.c.l.b16 %v846
      %v10353 = vunpack.c.l.b16 %v847
      %v10354 = vunpack.c.l.b16 %v848
      %v10355 = vunpack.c.l.b16 %v850
      %v10356 = vunpack.c.l.b16 %v851
      %v10357 = vunpack.c.l.b16 %v852
      %v10358 = vunpack.c.l.b16 %v854
      %v10359 = vunpack.c.l.b16 %v855
      %v10360 = vunpack.c.l.b16 %v856
      %v10361 = vunpack.c.l.b16 %v858
      %v10362 = vunpack.c.l.b16 %v859
      %v10363 = vunpack.c.l.b16 %v860
      %v10364 = vunpack.c.l.b16 %v862
      %v10365 = vunpack.c.l.b16 %v863
      %v10366 = vunpack.c.l.b16 %v864
      %v10367 = vunpack.c.l.b16 %v866
      %v10368 = vunpack.c.l.b16 %v867
      %v10369 = vunpack.c.l.b16 %v868
      %v10370 = vunpack.c.l.b16 %v870
      %v10371 = vunpack.c.l.b16 %v871
      %v10372 = vunpack.c.l.b16 %v872
      %v10373 = vunpack.c.l.b16 %v874
      %v10374 = vunpack.c.l.b16 %v875
      %v10375 = vunpack.c.l.b16 %v876
      %v10376 = vpack.c.b16 %v10329, %v10328
      %v10377 = vpack.c.b16 %v10330, %v10330
      %v10378 = vpack.c.b16 %v10332, %v10331
      %v10379 = vpack.c.b16 %v10333, %v10333
      %v10380 = vpack.c.b16 %v10335, %v10334
      %v10381 = vpack.c.b16 %v10336, %v10336
      %v10382 = vpack.c.b16 %v10338, %v10337
      %v10383 = vpack.c.b16 %v10339, %v10339
      %v10384 = vpack.c.b16 %v10341, %v10340
      %v10385 = vpack.c.b16 %v10342, %v10342
      %v10386 = vpack.c.b16 %v10344, %v10343
      %v10387 = vpack.c.b16 %v10345, %v10345
      %v10388 = vpack.c.b16 %v10347, %v10346
      %v10389 = vpack.c.b16 %v10348, %v10348
      %v10390 = vpack.c.b16 %v10350, %v10349
      %v10391 = vpack.c.b16 %v10351, %v10351
      %v10392 = vpack.c.b16 %v10353, %v10352
      %v10393 = vpack.c.b16 %v10354, %v10354
      %v10394 = vpack.c.b16 %v10356, %v10355
      %v10395 = vpack.c.b16 %v10357, %v10357
      %v10396 = vpack.c.b16 %v10359, %v10358
      %v10397 = vpack.c.b16 %v10360, %v10360
      %v10398 = vpack.c.b16 %v10362, %v10361
      %v10399 = vpack.c.b16 %v10363, %v10363
      %v10400 = vpack.c.b16 %v10365, %v10364
      %v10401 = vpack.c.b16 %v10366, %v10366
      %v10402 = vpack.c.b16 %v10368, %v10367
      %v10403 = vpack.c.b16 %v10369, %v10369
      %v10404 = vpack.c.b16 %v10371, %v10370
      %v10405 = vpack.c.b16 %v10372, %v10372
      %v10406 = vpack.c.b16 %v10374, %v10373
      %v10407 = vpack.c.b16 %v10375, %v10375
      %v10408 = vrot.slane %v10376, 2
      %v10409 = vrot.slane %v10377, 2
      %v10410 = vsel %vm9093, %v10408, %v10409
      %v10411 = vrot.slane %v10378, 2
      %v10412 = vrot.slane %v10379, 2
      %v10413 = vsel %vm9093, %v10411, %v10412
      %v10414 = vrot.slane %v10380, 2
      %v10415 = vrot.slane %v10381, 2
      %v10416 = vsel %vm9093, %v10414, %v10415
      %v10417 = vrot.slane %v10382, 2
      %v10418 = vrot.slane %v10383, 2
      %v10419 = vsel %vm9093, %v10417, %v10418
      %v10420 = vrot.slane %v10384, 2
      %v10421 = vrot.slane %v10385, 2
      %v10422 = vsel %vm9093, %v10420, %v10421
      %v10423 = vrot.slane %v10386, 2
      %v10424 = vrot.slane %v10387, 2
      %v10425 = vsel %vm9093, %v10423, %v10424
      %v10426 = vrot.slane %v10388, 2
      %v10427 = vrot.slane %v10389, 2
      %v10428 = vsel %vm9093, %v10426, %v10427
      %v10429 = vrot.slane %v10390, 2
      %v10430 = vrot.slane %v10391, 2
      %v10431 = vsel %vm9093, %v10429, %v10430
      %v10432 = vrot.slane %v10392, 2
      %v10433 = vrot.slane %v10393, 2
      %v10434 = vsel %vm9093, %v10432, %v10433
      %v10435 = vrot.slane %v10394, 2
      %v10436 = vrot.slane %v10395, 2
      %v10437 = vsel %vm9093, %v10435, %v10436
      %v10438 = vrot.slane %v10396, 2
      %v10439 = vrot.slane %v10397, 2
      %v10440 = vsel %vm9093, %v10438, %v10439
      %v10441 = vrot.slane %v10398, 2
      %v10442 = vrot.slane %v10399, 2
      %v10443 = vsel %vm9093, %v10441, %v10442
      %v10444 = vrot.slane %v10400, 2
      %v10445 = vrot.slane %v10401, 2
      %v10446 = vsel %vm9093, %v10444, %v10445
      %v10447 = vrot.slane %v10402, 2
      %v10448 = vrot.slane %v10403, 2
      %v10449 = vsel %vm9093, %v10447, %v10448
      %v10450 = vrot.slane %v10404, 2
      %v10451 = vrot.slane %v10405, 2
      %v10452 = vsel %vm9093, %v10450, %v10451
      %v10453 = vrot.slane %v10406, 2
      %v10454 = vrot.slane %v10407, 2
      %v10455 = vsel %vm9093, %v10453, %v10454
      %10456 = vrot.lane.b32.xlu0 %v10410, 40
      %v10457 = vpop.permute.xlu0 %10456
      %10458 = vrot.lane.b32.xlu0 %v10409, 40
      %v10459 = vpop.permute.xlu0 %10458
      %10460 = vrot.lane.b32.xlu0 %v10413, 40
      %v10461 = vpop.permute.xlu0 %10460
      %10462 = vrot.lane.b32.xlu0 %v10412, 40
      %v10463 = vpop.permute.xlu0 %10462
      %10464 = vrot.lane.b32.xlu0 %v10416, 40
      %v10465 = vpop.permute.xlu0 %10464
      %10466 = vrot.lane.b32.xlu0 %v10415, 40
      %v10467 = vpop.permute.xlu0 %10466
      %10468 = vrot.lane.b32.xlu0 %v10419, 40
      %v10469 = vpop.permute.xlu0 %10468
      %10470 = vrot.lane.b32.xlu0 %v10418, 40
      %v10471 = vpop.permute.xlu0 %10470
      %10472 = vrot.lane.b32.xlu0 %v10422, 40
      %v10473 = vpop.permute.xlu0 %10472
      %10474 = vrot.lane.b32.xlu0 %v10421, 40
      %v10475 = vpop.permute.xlu0 %10474
      %10476 = vrot.lane.b32.xlu0 %v10425, 40
      %v10477 = vpop.permute.xlu0 %10476
      %10478 = vrot.lane.b32.xlu0 %v10424, 40
      %v10479 = vpop.permute.xlu0 %10478
      %10480 = vrot.lane.b32.xlu0 %v10428, 40
      %v10481 = vpop.permute.xlu0 %10480
      %10482 = vrot.lane.b32.xlu0 %v10427, 40
      %v10483 = vpop.permute.xlu0 %10482
      %10484 = vrot.lane.b32.xlu0 %v10431, 40
      %v10485 = vpop.permute.xlu0 %10484
      %10486 = vrot.lane.b32.xlu0 %v10430, 40
      %v10487 = vpop.permute.xlu0 %10486
      %10488 = vrot.lane.b32.xlu0 %v10434, 40
      %v10489 = vpop.permute.xlu0 %10488
      %10490 = vrot.lane.b32.xlu0 %v10433, 40
      %v10491 = vpop.permute.xlu0 %10490
      %10492 = vrot.lane.b32.xlu0 %v10437, 40
      %v10493 = vpop.permute.xlu0 %10492
      %10494 = vrot.lane.b32.xlu0 %v10436, 40
      %v10495 = vpop.permute.xlu0 %10494
      %10496 = vrot.lane.b32.xlu0 %v10440, 40
      %v10497 = vpop.permute.xlu0 %10496
      %10498 = vrot.lane.b32.xlu0 %v10439, 40
      %v10499 = vpop.permute.xlu0 %10498
      %10500 = vrot.lane.b32.xlu0 %v10443, 40
      %v10501 = vpop.permute.xlu0 %10500
      %10502 = vrot.lane.b32.xlu0 %v10442, 40
      %v10503 = vpop.permute.xlu0 %10502
      %10504 = vrot.lane.b32.xlu0 %v10446, 40
      %v10505 = vpop.permute.xlu0 %10504
      %10506 = vrot.lane.b32.xlu0 %v10445, 40
      %v10507 = vpop.permute.xlu0 %10506
      %10508 = vrot.lane.b32.xlu0 %v10449, 40
      %v10509 = vpop.permute.xlu0 %10508
      %10510 = vrot.lane.b32.xlu0 %v10448, 40
      %v10511 = vpop.permute.xlu0 %10510
      %10512 = vrot.lane.b32.xlu0 %v10452, 40
      %v10513 = vpop.permute.xlu0 %10512
      %10514 = vrot.lane.b32.xlu0 %v10451, 40
      %v10515 = vpop.permute.xlu0 %10514
      %10516 = vrot.lane.b32.xlu0 %v10455, 40
      %v10517 = vpop.permute.xlu0 %10516
      %10518 = vrot.lane.b32.xlu0 %v10454, 40
      %v10519 = vpop.permute.xlu0 %10518
      %v10521 = vshrl.u32 %v10376, 16
      %v10523 = vrot.slane %v10521, 2
      %v10524 = vshll.u32 %v10376, 16
      %v10526 = vrot.slane %v10524, 3
      %v10527 = vor.u32 %v10523, %v10526
      %v10529 = vshrl.u32 %v10377, 16
      %v10531 = vrot.slane %v10529, 2
      %v10532 = vshll.u32 %v10377, 16
      %v10534 = vrot.slane %v10532, 3
      %v10535 = vor.u32 %v10531, %v10534
      %v10536 = vsel %vm9206, %v10527, %v10535
      %v10538 = vshrl.u32 %v10378, 16
      %v10540 = vrot.slane %v10538, 2
      %v10541 = vshll.u32 %v10378, 16
      %v10543 = vrot.slane %v10541, 3
      %v10544 = vor.u32 %v10540, %v10543
      %v10546 = vshrl.u32 %v10379, 16
      %v10548 = vrot.slane %v10546, 2
      %v10549 = vshll.u32 %v10379, 16
      %v10551 = vrot.slane %v10549, 3
      %v10552 = vor.u32 %v10548, %v10551
      %v10553 = vsel %vm9206, %v10544, %v10552
      %v10555 = vshrl.u32 %v10380, 16
      %v10557 = vrot.slane %v10555, 2
      %v10558 = vshll.u32 %v10380, 16
      %v10560 = vrot.slane %v10558, 3
      %v10561 = vor.u32 %v10557, %v10560
      %v10563 = vshrl.u32 %v10381, 16
      %v10565 = vrot.slane %v10563, 2
      %v10566 = vshll.u32 %v10381, 16
      %v10568 = vrot.slane %v10566, 3
      %v10569 = vor.u32 %v10565, %v10568
      %v10570 = vsel %vm9206, %v10561, %v10569
      %v10572 = vshrl.u32 %v10382, 16
      %v10574 = vrot.slane %v10572, 2
      %v10575 = vshll.u32 %v10382, 16
      %v10577 = vrot.slane %v10575, 3
      %v10578 = vor.u32 %v10574, %v10577
      %v10580 = vshrl.u32 %v10383, 16
      %v10582 = vrot.slane %v10580, 2
      %v10583 = vshll.u32 %v10383, 16
      %v10585 = vrot.slane %v10583, 3
      %v10586 = vor.u32 %v10582, %v10585
      %v10587 = vsel %vm9206, %v10578, %v10586
      %v10589 = vshrl.u32 %v10384, 16
      %v10591 = vrot.slane %v10589, 2
      %v10592 = vshll.u32 %v10384, 16
      %v10594 = vrot.slane %v10592, 3
      %v10595 = vor.u32 %v10591, %v10594
      %v10597 = vshrl.u32 %v10385, 16
      %v10599 = vrot.slane %v10597, 2
      %v10600 = vshll.u32 %v10385, 16
      %v10602 = vrot.slane %v10600, 3
      %v10603 = vor.u32 %v10599, %v10602
      %v10604 = vsel %vm9206, %v10595, %v10603
      %v10606 = vshrl.u32 %v10386, 16
      %v10608 = vrot.slane %v10606, 2
      %v10609 = vshll.u32 %v10386, 16
      %v10611 = vrot.slane %v10609, 3
      %v10612 = vor.u32 %v10608, %v10611
      %v10614 = vshrl.u32 %v10387, 16
      %v10616 = vrot.slane %v10614, 2
      %v10617 = vshll.u32 %v10387, 16
      %v10619 = vrot.slane %v10617, 3
      %v10620 = vor.u32 %v10616, %v10619
      %v10621 = vsel %vm9206, %v10612, %v10620
      %v10623 = vshrl.u32 %v10388, 16
      %v10625 = vrot.slane %v10623, 2
      %v10626 = vshll.u32 %v10388, 16
      %v10628 = vrot.slane %v10626, 3
      %v10629 = vor.u32 %v10625, %v10628
      %v10631 = vshrl.u32 %v10389, 16
      %v10633 = vrot.slane %v10631, 2
      %v10634 = vshll.u32 %v10389, 16
      %v10636 = vrot.slane %v10634, 3
      %v10637 = vor.u32 %v10633, %v10636
      %v10638 = vsel %vm9206, %v10629, %v10637
      %v10640 = vshrl.u32 %v10390, 16
      %v10642 = vrot.slane %v10640, 2
      %v10643 = vshll.u32 %v10390, 16
      %v10645 = vrot.slane %v10643, 3
      %v10646 = vor.u32 %v10642, %v10645
      %v10648 = vshrl.u32 %v10391, 16
      %v10650 = vrot.slane %v10648, 2
      %v10651 = vshll.u32 %v10391, 16
      %v10653 = vrot.slane %v10651, 3
      %v10654 = vor.u32 %v10650, %v10653
      %v10655 = vsel %vm9206, %v10646, %v10654
      %v10657 = vshrl.u32 %v10392, 16
      %v10659 = vrot.slane %v10657, 2
      %v10660 = vshll.u32 %v10392, 16
      %v10662 = vrot.slane %v10660, 3
      %v10663 = vor.u32 %v10659, %v10662
      %v10665 = vshrl.u32 %v10393, 16
      %v10667 = vrot.slane %v10665, 2
      %v10668 = vshll.u32 %v10393, 16
      %v10670 = vrot.slane %v10668, 3
      %v10671 = vor.u32 %v10667, %v10670
      %v10672 = vsel %vm9206, %v10663, %v10671
      %v10674 = vshrl.u32 %v10394, 16
      %v10676 = vrot.slane %v10674, 2
      %v10677 = vshll.u32 %v10394, 16
      %v10679 = vrot.slane %v10677, 3
      %v10680 = vor.u32 %v10676, %v10679
      %v10682 = vshrl.u32 %v10395, 16
      %v10684 = vrot.slane %v10682, 2
      %v10685 = vshll.u32 %v10395, 16
      %v10687 = vrot.slane %v10685, 3
      %v10688 = vor.u32 %v10684, %v10687
      %v10689 = vsel %vm9206, %v10680, %v10688
      %v10691 = vshrl.u32 %v10396, 16
      %v10693 = vrot.slane %v10691, 2
      %v10694 = vshll.u32 %v10396, 16
      %v10696 = vrot.slane %v10694, 3
      %v10697 = vor.u32 %v10693, %v10696
      %v10699 = vshrl.u32 %v10397, 16
      %v10701 = vrot.slane %v10699, 2
      %v10702 = vshll.u32 %v10397, 16
      %v10704 = vrot.slane %v10702, 3
      %v10705 = vor.u32 %v10701, %v10704
      %v10706 = vsel %vm9206, %v10697, %v10705
      %v10708 = vshrl.u32 %v10398, 16
      %v10710 = vrot.slane %v10708, 2
      %v10711 = vshll.u32 %v10398, 16
      %v10713 = vrot.slane %v10711, 3
      %v10714 = vor.u32 %v10710, %v10713
      %v10716 = vshrl.u32 %v10399, 16
      %v10718 = vrot.slane %v10716, 2
      %v10719 = vshll.u32 %v10399, 16
      %v10721 = vrot.slane %v10719, 3
      %v10722 = vor.u32 %v10718, %v10721
      %v10723 = vsel %vm9206, %v10714, %v10722
      %v10725 = vshrl.u32 %v10400, 16
      %v10727 = vrot.slane %v10725, 2
      %v10728 = vshll.u32 %v10400, 16
      %v10730 = vrot.slane %v10728, 3
      %v10731 = vor.u32 %v10727, %v10730
      %v10733 = vshrl.u32 %v10401, 16
      %v10735 = vrot.slane %v10733, 2
      %v10736 = vshll.u32 %v10401, 16
      %v10738 = vrot.slane %v10736, 3
      %v10739 = vor.u32 %v10735, %v10738
      %v10740 = vsel %vm9206, %v10731, %v10739
      %v10742 = vshrl.u32 %v10402, 16
      %v10744 = vrot.slane %v10742, 2
      %v10745 = vshll.u32 %v10402, 16
      %v10747 = vrot.slane %v10745, 3
      %v10748 = vor.u32 %v10744, %v10747
      %v10750 = vshrl.u32 %v10403, 16
      %v10752 = vrot.slane %v10750, 2
      %v10753 = vshll.u32 %v10403, 16
      %v10755 = vrot.slane %v10753, 3
      %v10756 = vor.u32 %v10752, %v10755
      %v10757 = vsel %vm9206, %v10748, %v10756
      %v10759 = vshrl.u32 %v10404, 16
      %v10761 = vrot.slane %v10759, 2
      %v10762 = vshll.u32 %v10404, 16
      %v10764 = vrot.slane %v10762, 3
      %v10765 = vor.u32 %v10761, %v10764
      %v10767 = vshrl.u32 %v10405, 16
      %v10769 = vrot.slane %v10767, 2
      %v10770 = vshll.u32 %v10405, 16
      %v10772 = vrot.slane %v10770, 3
      %v10773 = vor.u32 %v10769, %v10772
      %v10774 = vsel %vm9206, %v10765, %v10773
      %v10776 = vshrl.u32 %v10406, 16
      %v10778 = vrot.slane %v10776, 2
      %v10779 = vshll.u32 %v10406, 16
      %v10781 = vrot.slane %v10779, 3
      %v10782 = vor.u32 %v10778, %v10781
      %v10784 = vshrl.u32 %v10407, 16
      %v10786 = vrot.slane %v10784, 2
      %v10787 = vshll.u32 %v10407, 16
      %v10789 = vrot.slane %v10787, 3
      %v10790 = vor.u32 %v10786, %v10789
      %v10791 = vsel %vm9206, %v10782, %v10790
      %10792 = vrot.lane.b32.xlu0 %v10536, 44
      %v10793 = vpop.permute.xlu0 %10792
      %10794 = vrot.lane.b32.xlu0 %v10531, 44
      %v10795 = vpop.permute.xlu0 %10794
      %10796 = vrot.lane.b32.xlu0 %v10553, 44
      %v10797 = vpop.permute.xlu0 %10796
      %10798 = vrot.lane.b32.xlu0 %v10548, 44
      %v10799 = vpop.permute.xlu0 %10798
      %10800 = vrot.lane.b32.xlu0 %v10570, 44
      %v10801 = vpop.permute.xlu0 %10800
      %10802 = vrot.lane.b32.xlu0 %v10565, 44
      %v10803 = vpop.permute.xlu0 %10802
      %10804 = vrot.lane.b32.xlu0 %v10587, 44
      %v10805 = vpop.permute.xlu0 %10804
      %10806 = vrot.lane.b32.xlu0 %v10582, 44
      %v10807 = vpop.permute.xlu0 %10806
      %10808 = vrot.lane.b32.xlu0 %v10604, 44
      %v10809 = vpop.permute.xlu0 %10808
      %10810 = vrot.lane.b32.xlu0 %v10599, 44
      %v10811 = vpop.permute.xlu0 %10810
      %10812 = vrot.lane.b32.xlu0 %v10621, 44
      %v10813 = vpop.permute.xlu0 %10812
      %10814 = vrot.lane.b32.xlu0 %v10616, 44
      %v10815 = vpop.permute.xlu0 %10814
      %10816 = vrot.lane.b32.xlu0 %v10638, 44
      %v10817 = vpop.permute.xlu0 %10816
      %10818 = vrot.lane.b32.xlu0 %v10633, 44
      %v10819 = vpop.permute.xlu0 %10818
      %10820 = vrot.lane.b32.xlu0 %v10655, 44
      %v10821 = vpop.permute.xlu0 %10820
      %10822 = vrot.lane.b32.xlu0 %v10650, 44
      %v10823 = vpop.permute.xlu0 %10822
      %10824 = vrot.lane.b32.xlu0 %v10672, 44
      %v10825 = vpop.permute.xlu0 %10824
      %10826 = vrot.lane.b32.xlu0 %v10667, 44
      %v10827 = vpop.permute.xlu0 %10826
      %10828 = vrot.lane.b32.xlu0 %v10689, 44
      %v10829 = vpop.permute.xlu0 %10828
      %10830 = vrot.lane.b32.xlu0 %v10684, 44
      %v10831 = vpop.permute.xlu0 %10830
      %10832 = vrot.lane.b32.xlu0 %v10706, 44
      %v10833 = vpop.permute.xlu0 %10832
      %10834 = vrot.lane.b32.xlu0 %v10701, 44
      %v10835 = vpop.permute.xlu0 %10834
      %10836 = vrot.lane.b32.xlu0 %v10723, 44
      %v10837 = vpop.permute.xlu0 %10836
      %10838 = vrot.lane.b32.xlu0 %v10718, 44
      %v10839 = vpop.permute.xlu0 %10838
      %10840 = vrot.lane.b32.xlu0 %v10740, 44
      %v10841 = vpop.permute.xlu0 %10840
      %10842 = vrot.lane.b32.xlu0 %v10735, 44
      %v10843 = vpop.permute.xlu0 %10842
      %10844 = vrot.lane.b32.xlu0 %v10757, 44
      %v10845 = vpop.permute.xlu0 %10844
      %10846 = vrot.lane.b32.xlu0 %v10752, 44
      %v10847 = vpop.permute.xlu0 %10846
      %10848 = vrot.lane.b32.xlu0 %v10774, 44
      %v10849 = vpop.permute.xlu0 %10848
      %10850 = vrot.lane.b32.xlu0 %v10769, 44
      %v10851 = vpop.permute.xlu0 %10850
      %10852 = vrot.lane.b32.xlu0 %v10791, 44
      %v10853 = vpop.permute.xlu0 %10852
      %10854 = vrot.lane.b32.xlu0 %v10786, 44
      %v10855 = vpop.permute.xlu0 %10854
      %v10856 = vrot.slane %v10376, 3
      %v10857 = vrot.slane %v10377, 3
      %v10858 = vsel %vm9543, %v10856, %v10857
      %v10859 = vrot.slane %v10378, 3
      %v10860 = vrot.slane %v10379, 3
      %v10861 = vsel %vm9543, %v10859, %v10860
      %v10862 = vrot.slane %v10380, 3
      %v10863 = vrot.slane %v10381, 3
      %v10864 = vsel %vm9543, %v10862, %v10863
      %v10865 = vrot.slane %v10382, 3
      %v10866 = vrot.slane %v10383, 3
      %v10867 = vsel %vm9543, %v10865, %v10866
      %v10868 = vrot.slane %v10384, 3
      %v10869 = vrot.slane %v10385, 3
      %v10870 = vsel %vm9543, %v10868, %v10869
      %v10871 = vrot.slane %v10386, 3
      %v10872 = vrot.slane %v10387, 3
      %v10873 = vsel %vm9543, %v10871, %v10872
      %v10874 = vrot.slane %v10388, 3
      %v10875 = vrot.slane %v10389, 3
      %v10876 = vsel %vm9543, %v10874, %v10875
      %v10877 = vrot.slane %v10390, 3
      %v10878 = vrot.slane %v10391, 3
      %v10879 = vsel %vm9543, %v10877, %v10878
      %v10880 = vrot.slane %v10392, 3
      %v10881 = vrot.slane %v10393, 3
      %v10882 = vsel %vm9543, %v10880, %v10881
      %v10883 = vrot.slane %v10394, 3
      %v10884 = vrot.slane %v10395, 3
      %v10885 = vsel %vm9543, %v10883, %v10884
      %v10886 = vrot.slane %v10396, 3
      %v10887 = vrot.slane %v10397, 3
      %v10888 = vsel %vm9543, %v10886, %v10887
      %v10889 = vrot.slane %v10398, 3
      %v10890 = vrot.slane %v10399, 3
      %v10891 = vsel %vm9543, %v10889, %v10890
      %v10892 = vrot.slane %v10400, 3
      %v10893 = vrot.slane %v10401, 3
      %v10894 = vsel %vm9543, %v10892, %v10893
      %v10895 = vrot.slane %v10402, 3
      %v10896 = vrot.slane %v10403, 3
      %v10897 = vsel %vm9543, %v10895, %v10896
      %v10898 = vrot.slane %v10404, 3
      %v10899 = vrot.slane %v10405, 3
      %v10900 = vsel %vm9543, %v10898, %v10899
      %v10901 = vrot.slane %v10406, 3
      %v10902 = vrot.slane %v10407, 3
      %v10903 = vsel %vm9543, %v10901, %v10902
      %10904 = vrot.lane.b32.xlu0 %v10858, 48
      %v10905 = vpop.permute.xlu0 %10904
      %10906 = vrot.lane.b32.xlu0 %v10857, 48
      %v10907 = vpop.permute.xlu0 %10906
      %10908 = vrot.lane.b32.xlu0 %v10861, 48
      %v10909 = vpop.permute.xlu0 %10908
      %10910 = vrot.lane.b32.xlu0 %v10860, 48
      %v10911 = vpop.permute.xlu0 %10910
      %10912 = vrot.lane.b32.xlu0 %v10864, 48
      %v10913 = vpop.permute.xlu0 %10912
      %10914 = vrot.lane.b32.xlu0 %v10863, 48
      %v10915 = vpop.permute.xlu0 %10914
      %10916 = vrot.lane.b32.xlu0 %v10867, 48
      %v10917 = vpop.permute.xlu0 %10916
      %10918 = vrot.lane.b32.xlu0 %v10866, 48
      %v10919 = vpop.permute.xlu0 %10918
      %10920 = vrot.lane.b32.xlu0 %v10870, 48
      %v10921 = vpop.permute.xlu0 %10920
      %10922 = vrot.lane.b32.xlu0 %v10869, 48
      %v10923 = vpop.permute.xlu0 %10922
      %10924 = vrot.lane.b32.xlu0 %v10873, 48
      %v10925 = vpop.permute.xlu0 %10924
      %10926 = vrot.lane.b32.xlu0 %v10872, 48
      %v10927 = vpop.permute.xlu0 %10926
      %10928 = vrot.lane.b32.xlu0 %v10876, 48
      %v10929 = vpop.permute.xlu0 %10928
      %10930 = vrot.lane.b32.xlu0 %v10875, 48
      %v10931 = vpop.permute.xlu0 %10930
      %10932 = vrot.lane.b32.xlu0 %v10879, 48
      %v10933 = vpop.permute.xlu0 %10932
      %10934 = vrot.lane.b32.xlu0 %v10878, 48
      %v10935 = vpop.permute.xlu0 %10934
      %10936 = vrot.lane.b32.xlu0 %v10882, 48
      %v10937 = vpop.permute.xlu0 %10936
      %10938 = vrot.lane.b32.xlu0 %v10881, 48
      %v10939 = vpop.permute.xlu0 %10938
      %10940 = vrot.lane.b32.xlu0 %v10885, 48
      %v10941 = vpop.permute.xlu0 %10940
      %10942 = vrot.lane.b32.xlu0 %v10884, 48
      %v10943 = vpop.permute.xlu0 %10942
      %10944 = vrot.lane.b32.xlu0 %v10888, 48
      %v10945 = vpop.permute.xlu0 %10944
      %10946 = vrot.lane.b32.xlu0 %v10887, 48
      %v10947 = vpop.permute.xlu0 %10946
      %10948 = vrot.lane.b32.xlu0 %v10891, 48
      %v10949 = vpop.permute.xlu0 %10948
      %10950 = vrot.lane.b32.xlu0 %v10890, 48
      %v10951 = vpop.permute.xlu0 %10950
      %10952 = vrot.lane.b32.xlu0 %v10894, 48
      %v10953 = vpop.permute.xlu0 %10952
      %10954 = vrot.lane.b32.xlu0 %v10893, 48
      %v10955 = vpop.permute.xlu0 %10954
      %10956 = vrot.lane.b32.xlu0 %v10897, 48
      %v10957 = vpop.permute.xlu0 %10956
      %10958 = vrot.lane.b32.xlu0 %v10896, 48
      %v10959 = vpop.permute.xlu0 %10958
      %10960 = vrot.lane.b32.xlu0 %v10900, 48
      %v10961 = vpop.permute.xlu0 %10960
      %10962 = vrot.lane.b32.xlu0 %v10899, 48
      %v10963 = vpop.permute.xlu0 %10962
      %10964 = vrot.lane.b32.xlu0 %v10903, 48
      %v10965 = vpop.permute.xlu0 %10964
      %10966 = vrot.lane.b32.xlu0 %v10902, 48
      %v10967 = vpop.permute.xlu0 %10966
      %v10968 = vpack.c.b16 %v10330, %v10329
      %v10969 = vpack.c.b16 %v10333, %v10332
      %v10970 = vpack.c.b16 %v10336, %v10335
      %v10971 = vpack.c.b16 %v10339, %v10338
      %v10972 = vpack.c.b16 %v10342, %v10341
      %v10973 = vpack.c.b16 %v10345, %v10344
      %v10974 = vpack.c.b16 %v10348, %v10347
      %v10975 = vpack.c.b16 %v10351, %v10350
      %v10976 = vpack.c.b16 %v10354, %v10353
      %v10977 = vpack.c.b16 %v10357, %v10356
      %v10978 = vpack.c.b16 %v10360, %v10359
      %v10979 = vpack.c.b16 %v10363, %v10362
      %v10980 = vpack.c.b16 %v10366, %v10365
      %v10981 = vpack.c.b16 %v10369, %v10368
      %v10982 = vpack.c.b16 %v10372, %v10371
      %v10983 = vpack.c.b16 %v10375, %v10374
      %v10985 = vshrl.u32 %v10968, 16
      %v10987 = vrot.slane %v10985, 7
      %v10988 = vshll.u32 %v10968, 16
      %v10990 = vor.u32 %v10987, %v10988
      %v10992 = vshrl.u32 %v10969, 16
      %v10994 = vrot.slane %v10992, 7
      %v10995 = vshll.u32 %v10969, 16
      %v10997 = vor.u32 %v10994, %v10995
      %v10999 = vshrl.u32 %v10970, 16
      %v11001 = vrot.slane %v10999, 7
      %v11002 = vshll.u32 %v10970, 16
      %v11004 = vor.u32 %v11001, %v11002
      %v11006 = vshrl.u32 %v10971, 16
      %v11008 = vrot.slane %v11006, 7
      %v11009 = vshll.u32 %v10971, 16
      %v11011 = vor.u32 %v11008, %v11009
      %v11013 = vshrl.u32 %v10972, 16
      %v11015 = vrot.slane %v11013, 7
      %v11016 = vshll.u32 %v10972, 16
      %v11018 = vor.u32 %v11015, %v11016
      %v11020 = vshrl.u32 %v10973, 16
      %v11022 = vrot.slane %v11020, 7
      %v11023 = vshll.u32 %v10973, 16
      %v11025 = vor.u32 %v11022, %v11023
      %v11027 = vshrl.u32 %v10974, 16
      %v11029 = vrot.slane %v11027, 7
      %v11030 = vshll.u32 %v10974, 16
      %v11032 = vor.u32 %v11029, %v11030
      %v11034 = vshrl.u32 %v10975, 16
      %v11036 = vrot.slane %v11034, 7
      %v11037 = vshll.u32 %v10975, 16
      %v11039 = vor.u32 %v11036, %v11037
      %v11041 = vshrl.u32 %v10976, 16
      %v11043 = vrot.slane %v11041, 7
      %v11044 = vshll.u32 %v10976, 16
      %v11046 = vor.u32 %v11043, %v11044
      %v11048 = vshrl.u32 %v10977, 16
      %v11050 = vrot.slane %v11048, 7
      %v11051 = vshll.u32 %v10977, 16
      %v11053 = vor.u32 %v11050, %v11051
      %v11055 = vshrl.u32 %v10978, 16
      %v11057 = vrot.slane %v11055, 7
      %v11058 = vshll.u32 %v10978, 16
      %v11060 = vor.u32 %v11057, %v11058
      %v11062 = vshrl.u32 %v10979, 16
      %v11064 = vrot.slane %v11062, 7
      %v11065 = vshll.u32 %v10979, 16
      %v11067 = vor.u32 %v11064, %v11065
      %v11069 = vshrl.u32 %v10980, 16
      %v11071 = vrot.slane %v11069, 7
      %v11072 = vshll.u32 %v10980, 16
      %v11074 = vor.u32 %v11071, %v11072
      %v11076 = vshrl.u32 %v10981, 16
      %v11078 = vrot.slane %v11076, 7
      %v11079 = vshll.u32 %v10981, 16
      %v11081 = vor.u32 %v11078, %v11079
      %v11083 = vshrl.u32 %v10982, 16
      %v11085 = vrot.slane %v11083, 7
      %v11086 = vshll.u32 %v10982, 16
      %v11088 = vor.u32 %v11085, %v11086
      %v11090 = vshrl.u32 %v10983, 16
      %v11092 = vrot.slane %v11090, 7
      %v11093 = vshll.u32 %v10983, 16
      %v11095 = vor.u32 %v11092, %v11093
      %11096 = vrot.lane.b32.xlu0 %v10990, 52
      %v11097 = vpop.permute.xlu0 %11096
      %11098 = vrot.lane.b32.xlu0 %v10987, 52
      %v11099 = vpop.permute.xlu0 %11098
      %11100 = vrot.lane.b32.xlu0 %v10997, 52
      %v11101 = vpop.permute.xlu0 %11100
      %11102 = vrot.lane.b32.xlu0 %v10994, 52
      %v11103 = vpop.permute.xlu0 %11102
      %11104 = vrot.lane.b32.xlu0 %v11004, 52
      %v11105 = vpop.permute.xlu0 %11104
      %11106 = vrot.lane.b32.xlu0 %v11001, 52
      %v11107 = vpop.permute.xlu0 %11106
      %11108 = vrot.lane.b32.xlu0 %v11011, 52
      %v11109 = vpop.permute.xlu0 %11108
      %11110 = vrot.lane.b32.xlu0 %v11008, 52
      %v11111 = vpop.permute.xlu0 %11110
      %11112 = vrot.lane.b32.xlu0 %v11018, 52
      %v11113 = vpop.permute.xlu0 %11112
      %11114 = vrot.lane.b32.xlu0 %v11015, 52
      %v11115 = vpop.permute.xlu0 %11114
      %11116 = vrot.lane.b32.xlu0 %v11025, 52
      %v11117 = vpop.permute.xlu0 %11116
      %11118 = vrot.lane.b32.xlu0 %v11022, 52
      %v11119 = vpop.permute.xlu0 %11118
      %11120 = vrot.lane.b32.xlu0 %v11032, 52
      %v11121 = vpop.permute.xlu0 %11120
      %11122 = vrot.lane.b32.xlu0 %v11029, 52
      %v11123 = vpop.permute.xlu0 %11122
      %11124 = vrot.lane.b32.xlu0 %v11039, 52
      %v11125 = vpop.permute.xlu0 %11124
      %11126 = vrot.lane.b32.xlu0 %v11036, 52
      %v11127 = vpop.permute.xlu0 %11126
      %11128 = vrot.lane.b32.xlu0 %v11046, 52
      %v11129 = vpop.permute.xlu0 %11128
      %11130 = vrot.lane.b32.xlu0 %v11043, 52
      %v11131 = vpop.permute.xlu0 %11130
      %11132 = vrot.lane.b32.xlu0 %v11053, 52
      %v11133 = vpop.permute.xlu0 %11132
      %11134 = vrot.lane.b32.xlu0 %v11050, 52
      %v11135 = vpop.permute.xlu0 %11134
      %11136 = vrot.lane.b32.xlu0 %v11060, 52
      %v11137 = vpop.permute.xlu0 %11136
      %11138 = vrot.lane.b32.xlu0 %v11057, 52
      %v11139 = vpop.permute.xlu0 %11138
      %11140 = vrot.lane.b32.xlu0 %v11067, 52
      %v11141 = vpop.permute.xlu0 %11140
      %11142 = vrot.lane.b32.xlu0 %v11064, 52
      %v11143 = vpop.permute.xlu0 %11142
      %11144 = vrot.lane.b32.xlu0 %v11074, 52
      %v11145 = vpop.permute.xlu0 %11144
      %11146 = vrot.lane.b32.xlu0 %v11071, 52
      %v11147 = vpop.permute.xlu0 %11146
      %11148 = vrot.lane.b32.xlu0 %v11081, 52
      %v11149 = vpop.permute.xlu0 %11148
      %11150 = vrot.lane.b32.xlu0 %v11078, 52
      %v11151 = vpop.permute.xlu0 %11150
      %11152 = vrot.lane.b32.xlu0 %v11088, 52
      %v11153 = vpop.permute.xlu0 %11152
      %11154 = vrot.lane.b32.xlu0 %v11085, 52
      %v11155 = vpop.permute.xlu0 %11154
      %11156 = vrot.lane.b32.xlu0 %v11095, 52
      %v11157 = vpop.permute.xlu0 %11156
      %11158 = vrot.lane.b32.xlu0 %v11092, 52
      %v11159 = vpop.permute.xlu0 %11158
      %v11176 = vunpack.c.l.b16 %v817
      %v11177 = vunpack.c.l.b16 %v821
      %v11178 = vunpack.c.l.b16 %v825
      %v11179 = vunpack.c.l.b16 %v829
      %v11180 = vunpack.c.l.b16 %v833
      %v11181 = vunpack.c.l.b16 %v837
      %v11182 = vunpack.c.l.b16 %v841
      %v11183 = vunpack.c.l.b16 %v845
      %v11184 = vunpack.c.l.b16 %v849
      %v11185 = vunpack.c.l.b16 %v853
      %v11186 = vunpack.c.l.b16 %v857
      %v11187 = vunpack.c.l.b16 %v861
      %v11188 = vunpack.c.l.b16 %v865
      %v11189 = vunpack.c.l.b16 %v869
      %v11190 = vunpack.c.l.b16 %v873
      %v11191 = vunpack.c.l.b16 %v877
      %v11192 = vpack.c.b16 %v11176, %v11176
      %v11193 = vpack.c.b16 %v11177, %v11177
      %v11194 = vpack.c.b16 %v11178, %v11178
      %v11195 = vpack.c.b16 %v11179, %v11179
      %v11196 = vpack.c.b16 %v11180, %v11180
      %v11197 = vpack.c.b16 %v11181, %v11181
      %v11198 = vpack.c.b16 %v11182, %v11182
      %v11199 = vpack.c.b16 %v11183, %v11183
      %v11200 = vpack.c.b16 %v11184, %v11184
      %v11201 = vpack.c.b16 %v11185, %v11185
      %v11202 = vpack.c.b16 %v11186, %v11186
      %v11203 = vpack.c.b16 %v11187, %v11187
      %v11204 = vpack.c.b16 %v11188, %v11188
      %v11205 = vpack.c.b16 %v11189, %v11189
      %v11206 = vpack.c.b16 %v11190, %v11190
      %v11207 = vpack.c.b16 %v11191, %v11191
      %11208 = vrot.lane.b32.xlu0 %v10968, 56
      %v11209 = vpop.permute.xlu0 %11208
      %11210 = vrot.lane.b32.xlu0 %v11192, 56
      %v11211 = vpop.permute.xlu0 %11210
      %11212 = vrot.lane.b32.xlu0 %v10969, 56
      %v11213 = vpop.permute.xlu0 %11212
      %11214 = vrot.lane.b32.xlu0 %v11193, 56
      %v11215 = vpop.permute.xlu0 %11214
      %11216 = vrot.lane.b32.xlu0 %v10970, 56
      %v11217 = vpop.permute.xlu0 %11216
      %11218 = vrot.lane.b32.xlu0 %v11194, 56
      %v11219 = vpop.permute.xlu0 %11218
      %11220 = vrot.lane.b32.xlu0 %v10971, 56
      %v11221 = vpop.permute.xlu0 %11220
      %11222 = vrot.lane.b32.xlu0 %v11195, 56
      %v11223 = vpop.permute.xlu0 %11222
      %11224 = vrot.lane.b32.xlu0 %v10972, 56
      %v11225 = vpop.permute.xlu0 %11224
      %11226 = vrot.lane.b32.xlu0 %v11196, 56
      %v11227 = vpop.permute.xlu0 %11226
      %11228 = vrot.lane.b32.xlu0 %v10973, 56
      %v11229 = vpop.permute.xlu0 %11228
      %11230 = vrot.lane.b32.xlu0 %v11197, 56
      %v11231 = vpop.permute.xlu0 %11230
      %11232 = vrot.lane.b32.xlu0 %v10974, 56
      %v11233 = vpop.permute.xlu0 %11232
      %11234 = vrot.lane.b32.xlu0 %v11198, 56
      %v11235 = vpop.permute.xlu0 %11234
      %11236 = vrot.lane.b32.xlu0 %v10975, 56
      %v11237 = vpop.permute.xlu0 %11236
      %11238 = vrot.lane.b32.xlu0 %v11199, 56
      %v11239 = vpop.permute.xlu0 %11238
      %11240 = vrot.lane.b32.xlu0 %v10976, 56
      %v11241 = vpop.permute.xlu0 %11240
      %11242 = vrot.lane.b32.xlu0 %v11200, 56
      %v11243 = vpop.permute.xlu0 %11242
      %11244 = vrot.lane.b32.xlu0 %v10977, 56
      %v11245 = vpop.permute.xlu0 %11244
      %11246 = vrot.lane.b32.xlu0 %v11201, 56
      %v11247 = vpop.permute.xlu0 %11246
      %11248 = vrot.lane.b32.xlu0 %v10978, 56
      %v11249 = vpop.permute.xlu0 %11248
      %11250 = vrot.lane.b32.xlu0 %v11202, 56
      %v11251 = vpop.permute.xlu0 %11250
      %11252 = vrot.lane.b32.xlu0 %v10979, 56
      %v11253 = vpop.permute.xlu0 %11252
      %11254 = vrot.lane.b32.xlu0 %v11203, 56
      %v11255 = vpop.permute.xlu0 %11254
      %11256 = vrot.lane.b32.xlu0 %v10980, 56
      %v11257 = vpop.permute.xlu0 %11256
      %11258 = vrot.lane.b32.xlu0 %v11204, 56
      %v11259 = vpop.permute.xlu0 %11258
      %11260 = vrot.lane.b32.xlu0 %v10981, 56
      %v11261 = vpop.permute.xlu0 %11260
      %11262 = vrot.lane.b32.xlu0 %v11205, 56
      %v11263 = vpop.permute.xlu0 %11262
      %11264 = vrot.lane.b32.xlu0 %v10982, 56
      %v11265 = vpop.permute.xlu0 %11264
      %11266 = vrot.lane.b32.xlu0 %v11206, 56
      %v11267 = vpop.permute.xlu0 %11266
      %11268 = vrot.lane.b32.xlu0 %v10983, 56
      %v11269 = vpop.permute.xlu0 %11268
      %11270 = vrot.lane.b32.xlu0 %v11207, 56
      %v11271 = vpop.permute.xlu0 %11270
      %v11272 = vrot.slane %v10988, 1
      %v11273 = vor.u32 %v10985, %v11272
      %v11275 = vshll.u32 %v11192, 16
      %v11277 = vrot.slane %v11275, 1
      %v11278 = vsel %vm1006, %v11273, %v11277
      %v11279 = vshrl.u32 %v11192, 16
      %v11281 = vrot.slane %v10995, 1
      %v11282 = vor.u32 %v10992, %v11281
      %v11284 = vshll.u32 %v11193, 16
      %v11286 = vrot.slane %v11284, 1
      %v11287 = vsel %vm1006, %v11282, %v11286
      %v11288 = vshrl.u32 %v11193, 16
      %v11290 = vrot.slane %v11002, 1
      %v11291 = vor.u32 %v10999, %v11290
      %v11293 = vshll.u32 %v11194, 16
      %v11295 = vrot.slane %v11293, 1
      %v11296 = vsel %vm1006, %v11291, %v11295
      %v11297 = vshrl.u32 %v11194, 16
      %v11299 = vrot.slane %v11009, 1
      %v11300 = vor.u32 %v11006, %v11299
      %v11302 = vshll.u32 %v11195, 16
      %v11304 = vrot.slane %v11302, 1
      %v11305 = vsel %vm1006, %v11300, %v11304
      %v11306 = vshrl.u32 %v11195, 16
      %v11308 = vrot.slane %v11016, 1
      %v11309 = vor.u32 %v11013, %v11308
      %v11311 = vshll.u32 %v11196, 16
      %v11313 = vrot.slane %v11311, 1
      %v11314 = vsel %vm1006, %v11309, %v11313
      %v11315 = vshrl.u32 %v11196, 16
      %v11317 = vrot.slane %v11023, 1
      %v11318 = vor.u32 %v11020, %v11317
      %v11320 = vshll.u32 %v11197, 16
      %v11322 = vrot.slane %v11320, 1
      %v11323 = vsel %vm1006, %v11318, %v11322
      %v11324 = vshrl.u32 %v11197, 16
      %v11326 = vrot.slane %v11030, 1
      %v11327 = vor.u32 %v11027, %v11326
      %v11329 = vshll.u32 %v11198, 16
      %v11331 = vrot.slane %v11329, 1
      %v11332 = vsel %vm1006, %v11327, %v11331
      %v11333 = vshrl.u32 %v11198, 16
      %v11335 = vrot.slane %v11037, 1
      %v11336 = vor.u32 %v11034, %v11335
      %v11338 = vshll.u32 %v11199, 16
      %v11340 = vrot.slane %v11338, 1
      %v11341 = vsel %vm1006, %v11336, %v11340
      %v11342 = vshrl.u32 %v11199, 16
      %v11344 = vrot.slane %v11044, 1
      %v11345 = vor.u32 %v11041, %v11344
      %v11347 = vshll.u32 %v11200, 16
      %v11349 = vrot.slane %v11347, 1
      %v11350 = vsel %vm1006, %v11345, %v11349
      %v11351 = vshrl.u32 %v11200, 16
      %v11353 = vrot.slane %v11051, 1
      %v11354 = vor.u32 %v11048, %v11353
      %v11356 = vshll.u32 %v11201, 16
      %v11358 = vrot.slane %v11356, 1
      %v11359 = vsel %vm1006, %v11354, %v11358
      %v11360 = vshrl.u32 %v11201, 16
      %v11362 = vrot.slane %v11058, 1
      %v11363 = vor.u32 %v11055, %v11362
      %v11365 = vshll.u32 %v11202, 16
      %v11367 = vrot.slane %v11365, 1
      %v11368 = vsel %vm1006, %v11363, %v11367
      %v11369 = vshrl.u32 %v11202, 16
      %v11371 = vrot.slane %v11065, 1
      %v11372 = vor.u32 %v11062, %v11371
      %v11374 = vshll.u32 %v11203, 16
      %v11376 = vrot.slane %v11374, 1
      %v11377 = vsel %vm1006, %v11372, %v11376
      %v11378 = vshrl.u32 %v11203, 16
      %v11380 = vrot.slane %v11072, 1
      %v11381 = vor.u32 %v11069, %v11380
      %v11383 = vshll.u32 %v11204, 16
      %v11385 = vrot.slane %v11383, 1
      %v11386 = vsel %vm1006, %v11381, %v11385
      %v11387 = vshrl.u32 %v11204, 16
      %v11389 = vrot.slane %v11079, 1
      %v11390 = vor.u32 %v11076, %v11389
      %v11392 = vshll.u32 %v11205, 16
      %v11394 = vrot.slane %v11392, 1
      %v11395 = vsel %vm1006, %v11390, %v11394
      %v11396 = vshrl.u32 %v11205, 16
      %v11398 = vrot.slane %v11086, 1
      %v11399 = vor.u32 %v11083, %v11398
      %v11401 = vshll.u32 %v11206, 16
      %v11403 = vrot.slane %v11401, 1
      %v11404 = vsel %vm1006, %v11399, %v11403
      %v11405 = vshrl.u32 %v11206, 16
      %v11407 = vrot.slane %v11093, 1
      %v11408 = vor.u32 %v11090, %v11407
      %v11410 = vshll.u32 %v11207, 16
      %v11412 = vrot.slane %v11410, 1
      %v11413 = vsel %vm1006, %v11408, %v11412
      %v11414 = vshrl.u32 %v11207, 16
      %11416 = vrot.lane.b32.xlu0 %v11278, 60
      %v11417 = vpop.permute.xlu0 %11416
      %11418 = vrot.lane.b32.xlu0 %v11279, 60
      %v11419 = vpop.permute.xlu0 %11418
      %11420 = vrot.lane.b32.xlu0 %v11287, 60
      %v11421 = vpop.permute.xlu0 %11420
      %11422 = vrot.lane.b32.xlu0 %v11288, 60
      %v11423 = vpop.permute.xlu0 %11422
      %11424 = vrot.lane.b32.xlu0 %v11296, 60
      %v11425 = vpop.permute.xlu0 %11424
      %11426 = vrot.lane.b32.xlu0 %v11297, 60
      %v11427 = vpop.permute.xlu0 %11426
      %11428 = vrot.lane.b32.xlu0 %v11305, 60
      %v11429 = vpop.permute.xlu0 %11428
      %11430 = vrot.lane.b32.xlu0 %v11306, 60
      %v11431 = vpop.permute.xlu0 %11430
      %11432 = vrot.lane.b32.xlu0 %v11314, 60
      %v11433 = vpop.permute.xlu0 %11432
      %11434 = vrot.lane.b32.xlu0 %v11315, 60
      %v11435 = vpop.permute.xlu0 %11434
      %11436 = vrot.lane.b32.xlu0 %v11323, 60
      %v11437 = vpop.permute.xlu0 %11436
      %11438 = vrot.lane.b32.xlu0 %v11324, 60
      %v11439 = vpop.permute.xlu0 %11438
      %11440 = vrot.lane.b32.xlu0 %v11332, 60
      %v11441 = vpop.permute.xlu0 %11440
      %11442 = vrot.lane.b32.xlu0 %v11333, 60
      %v11443 = vpop.permute.xlu0 %11442
      %11444 = vrot.lane.b32.xlu0 %v11341, 60
      %v11445 = vpop.permute.xlu0 %11444
      %11446 = vrot.lane.b32.xlu0 %v11342, 60
      %v11447 = vpop.permute.xlu0 %11446
      %11448 = vrot.lane.b32.xlu0 %v11350, 60
      %v11449 = vpop.permute.xlu0 %11448
      %11450 = vrot.lane.b32.xlu0 %v11351, 60
      %v11451 = vpop.permute.xlu0 %11450
      %11452 = vrot.lane.b32.xlu0 %v11359, 60
      %v11453 = vpop.permute.xlu0 %11452
      %11454 = vrot.lane.b32.xlu0 %v11360, 60
      %v11455 = vpop.permute.xlu0 %11454
      %11456 = vrot.lane.b32.xlu0 %v11368, 60
      %v11457 = vpop.permute.xlu0 %11456
      %11458 = vrot.lane.b32.xlu0 %v11369, 60
      %v11459 = vpop.permute.xlu0 %11458
      %11460 = vrot.lane.b32.xlu0 %v11377, 60
      %v11461 = vpop.permute.xlu0 %11460
      %11462 = vrot.lane.b32.xlu0 %v11378, 60
      %v11463 = vpop.permute.xlu0 %11462
      %11464 = vrot.lane.b32.xlu0 %v11386, 60
      %v11465 = vpop.permute.xlu0 %11464
      %11466 = vrot.lane.b32.xlu0 %v11387, 60
      %v11467 = vpop.permute.xlu0 %11466
      %11468 = vrot.lane.b32.xlu0 %v11395, 60
      %v11469 = vpop.permute.xlu0 %11468
      %11470 = vrot.lane.b32.xlu0 %v11396, 60
      %v11471 = vpop.permute.xlu0 %11470
      %11472 = vrot.lane.b32.xlu0 %v11404, 60
      %v11473 = vpop.permute.xlu0 %11472
      %11474 = vrot.lane.b32.xlu0 %v11405, 60
      %v11475 = vpop.permute.xlu0 %11474
      %11476 = vrot.lane.b32.xlu0 %v11413, 60
      %v11477 = vpop.permute.xlu0 %11476
      %11478 = vrot.lane.b32.xlu0 %v11414, 60
      %v11479 = vpop.permute.xlu0 %11478
      %v11481 = vsel %vm3939, %v7509, %v8790
      %v11483 = vsel %vm3939, %v8629, %v8792
      %v11485 = vsel %vm3939, %v7510, %v8794
      %v11487 = vsel %vm3939, %v8630, %v8796
      %v11489 = vsel %vm3939, %v7511, %v8798
      %v11491 = vsel %vm3939, %v8631, %v8800
      %v11493 = vsel %vm3939, %v7512, %v8802
      %v11495 = vsel %vm3939, %v8632, %v8804
      %v11497 = vsel %vm3939, %v7513, %v8806
      %v11499 = vsel %vm3939, %v8633, %v8808
      %v11501 = vsel %vm3939, %v7514, %v8810
      %v11503 = vsel %vm3939, %v8634, %v8812
      %v11505 = vsel %vm3939, %v7515, %v8814
      %v11507 = vsel %vm3939, %v8635, %v8816
      %v11509 = vsel %vm3939, %v7516, %v8818
      %v11511 = vsel %vm3939, %v8636, %v8820
      %v11513 = vsel %vm3939, %v7517, %v8822
      %v11515 = vsel %vm3939, %v8637, %v8824
      %v11517 = vsel %vm3939, %v7518, %v8826
      %v11519 = vsel %vm3939, %v8638, %v8828
      %v11521 = vsel %vm3939, %v7519, %v8830
      %v11523 = vsel %vm3939, %v8639, %v8832
      %v11525 = vsel %vm3939, %v7520, %v8834
      %v11527 = vsel %vm3939, %v8640, %v8836
      %v11529 = vsel %vm3939, %v7521, %v8838
      %v11531 = vsel %vm3939, %v8641, %v8840
      %v11533 = vsel %vm3939, %v7522, %v8842
      %v11535 = vsel %vm3939, %v8642, %v8844
      %v11537 = vsel %vm3939, %v7523, %v8846
      %v11539 = vsel %vm3939, %v8643, %v8848
      %v11541 = vsel %vm3939, %v7524, %v8850
      %v11543 = vsel %vm3939, %v8644, %v8852
      %v11545 = vsel %vm4004, %v11481, %v8902
      %v11547 = vsel %vm4004, %v11483, %v8904
      %v11549 = vsel %vm4004, %v11485, %v8906
      %v11551 = vsel %vm4004, %v11487, %v8908
      %v11553 = vsel %vm4004, %v11489, %v8910
      %v11555 = vsel %vm4004, %v11491, %v8912
      %v11557 = vsel %vm4004, %v11493, %v8914
      %v11559 = vsel %vm4004, %v11495, %v8916
      %v11561 = vsel %vm4004, %v11497, %v8918
      %v11563 = vsel %vm4004, %v11499, %v8920
      %v11565 = vsel %vm4004, %v11501, %v8922
      %v11567 = vsel %vm4004, %v11503, %v8924
      %v11569 = vsel %vm4004, %v11505, %v8926
      %v11571 = vsel %vm4004, %v11507, %v8928
      %v11573 = vsel %vm4004, %v11509, %v8930
      %v11575 = vsel %vm4004, %v11511, %v8932
      %v11577 = vsel %vm4004, %v11513, %v8934
      %v11579 = vsel %vm4004, %v11515, %v8936
      %v11581 = vsel %vm4004, %v11517, %v8938
      %v11583 = vsel %vm4004, %v11519, %v8940
      %v11585 = vsel %vm4004, %v11521, %v8942
      %v11587 = vsel %vm4004, %v11523, %v8944
      %v11589 = vsel %vm4004, %v11525, %v8946
      %v11591 = vsel %vm4004, %v11527, %v8948
      %v11593 = vsel %vm4004, %v11529, %v8950
      %v11595 = vsel %vm4004, %v11531, %v8952
      %v11597 = vsel %vm4004, %v11533, %v8954
      %v11599 = vsel %vm4004, %v11535, %v8956
      %v11601 = vsel %vm4004, %v11537, %v8958
      %v11603 = vsel %vm4004, %v11539, %v8960
      %v11605 = vsel %vm4004, %v11541, %v8962
      %v11607 = vsel %vm4004, %v11543, %v8964
      %v11609 = vsel %vm4069, %v11545, %v9143
      %v11611 = vsel %vm4069, %v11547, %v9145
      %v11613 = vsel %vm4069, %v11549, %v9147
      %v11615 = vsel %vm4069, %v11551, %v9149
      %v11617 = vsel %vm4069, %v11553, %v9151
      %v11619 = vsel %vm4069, %v11555, %v9153
      %v11621 = vsel %vm4069, %v11557, %v9155
      %v11623 = vsel %vm4069, %v11559, %v9157
      %v11625 = vsel %vm4069, %v11561, %v9159
      %v11627 = vsel %vm4069, %v11563, %v9161
      %v11629 = vsel %vm4069, %v11565, %v9163
      %v11631 = vsel %vm4069, %v11567, %v9165
      %v11633 = vsel %vm4069, %v11569, %v9167
      %v11635 = vsel %vm4069, %v11571, %v9169
      %v11637 = vsel %vm4069, %v11573, %v9171
      %v11639 = vsel %vm4069, %v11575, %v9173
      %v11641 = vsel %vm4069, %v11577, %v9175
      %v11643 = vsel %vm4069, %v11579, %v9177
      %v11645 = vsel %vm4069, %v11581, %v9179
      %v11647 = vsel %vm4069, %v11583, %v9181
      %v11649 = vsel %vm4069, %v11585, %v9183
      %v11651 = vsel %vm4069, %v11587, %v9185
      %v11653 = vsel %vm4069, %v11589, %v9187
      %v11655 = vsel %vm4069, %v11591, %v9189
      %v11657 = vsel %vm4069, %v11593, %v9191
      %v11659 = vsel %vm4069, %v11595, %v9193
      %v11661 = vsel %vm4069, %v11597, %v9195
      %v11663 = vsel %vm4069, %v11599, %v9197
      %v11665 = vsel %vm4069, %v11601, %v9199
      %v11667 = vsel %vm4069, %v11603, %v9201
      %v11669 = vsel %vm4069, %v11605, %v9203
      %v11671 = vsel %vm4069, %v11607, %v9205
      %v11673 = vsel %vm4118, %v11609, %v9480
      %v11675 = vsel %vm4118, %v11611, %v9482
      %v11677 = vsel %vm4118, %v11613, %v9484
      %v11679 = vsel %vm4118, %v11615, %v9486
      %v11681 = vsel %vm4118, %v11617, %v9488
      %v11683 = vsel %vm4118, %v11619, %v9490
      %v11685 = vsel %vm4118, %v11621, %v9492
      %v11687 = vsel %vm4118, %v11623, %v9494
      %v11689 = vsel %vm4118, %v11625, %v9496
      %v11691 = vsel %vm4118, %v11627, %v9498
      %v11693 = vsel %vm4118, %v11629, %v9500
      %v11695 = vsel %vm4118, %v11631, %v9502
      %v11697 = vsel %vm4118, %v11633, %v9504
      %v11699 = vsel %vm4118, %v11635, %v9506
      %v11701 = vsel %vm4118, %v11637, %v9508
      %v11703 = vsel %vm4118, %v11639, %v9510
      %v11705 = vsel %vm4118, %v11641, %v9512
      %v11707 = vsel %vm4118, %v11643, %v9514
      %v11709 = vsel %vm4118, %v11645, %v9516
      %v11711 = vsel %vm4118, %v11647, %v9518
      %v11713 = vsel %vm4118, %v11649, %v9520
      %v11715 = vsel %vm4118, %v11651, %v9522
      %v11717 = vsel %vm4118, %v11653, %v9524
      %v11719 = vsel %vm4118, %v11655, %v9526
      %v11721 = vsel %vm4118, %v11657, %v9528
      %v11723 = vsel %vm4118, %v11659, %v9530
      %v11725 = vsel %vm4118, %v11661, %v9532
      %v11727 = vsel %vm4118, %v11663, %v9534
      %v11729 = vsel %vm4118, %v11665, %v9536
      %v11731 = vsel %vm4118, %v11667, %v9538
      %v11733 = vsel %vm4118, %v11669, %v9540
      %v11735 = vsel %vm4118, %v11671, %v9542
      %v11737 = vsel %vm4183, %v11673, %v9593
      %v11739 = vsel %vm4183, %v11675, %v9595
      %v11741 = vsel %vm4183, %v11677, %v9597
      %v11743 = vsel %vm4183, %v11679, %v9599
      %v11745 = vsel %vm4183, %v11681, %v9601
      %v11747 = vsel %vm4183, %v11683, %v9603
      %v11749 = vsel %vm4183, %v11685, %v9605
      %v11751 = vsel %vm4183, %v11687, %v9607
      %v11753 = vsel %vm4183, %v11689, %v9609
      %v11755 = vsel %vm4183, %v11691, %v9611
      %v11757 = vsel %vm4183, %v11693, %v9613
      %v11759 = vsel %vm4183, %v11695, %v9615
      %v11761 = vsel %vm4183, %v11697, %v9617
      %v11763 = vsel %vm4183, %v11699, %v9619
      %v11765 = vsel %vm4183, %v11701, %v9621
      %v11767 = vsel %vm4183, %v11703, %v9623
      %v11769 = vsel %vm4183, %v11705, %v9625
      %v11771 = vsel %vm4183, %v11707, %v9627
      %v11773 = vsel %vm4183, %v11709, %v9629
      %v11775 = vsel %vm4183, %v11711, %v9631
      %v11777 = vsel %vm4183, %v11713, %v9633
      %v11779 = vsel %vm4183, %v11715, %v9635
      %v11781 = vsel %vm4183, %v11717, %v9637
      %v11783 = vsel %vm4183, %v11719, %v9639
      %v11785 = vsel %vm4183, %v11721, %v9641
      %v11787 = vsel %vm4183, %v11723, %v9643
      %v11789 = vsel %vm4183, %v11725, %v9645
      %v11791 = vsel %vm4183, %v11727, %v9647
      %v11793 = vsel %vm4183, %v11729, %v9649
      %v11795 = vsel %vm4183, %v11731, %v9651
      %v11797 = vsel %vm4183, %v11733, %v9653
      %v11799 = vsel %vm4183, %v11735, %v9655
      %v11801 = vsel %vm4248, %v11737, %v9785
      %v11803 = vsel %vm4248, %v11739, %v9787
      %v11805 = vsel %vm4248, %v11741, %v9789
      %v11807 = vsel %vm4248, %v11743, %v9791
      %v11809 = vsel %vm4248, %v11745, %v9793
      %v11811 = vsel %vm4248, %v11747, %v9795
      %v11813 = vsel %vm4248, %v11749, %v9797
      %v11815 = vsel %vm4248, %v11751, %v9799
      %v11817 = vsel %vm4248, %v11753, %v9801
      %v11819 = vsel %vm4248, %v11755, %v9803
      %v11821 = vsel %vm4248, %v11757, %v9805
      %v11823 = vsel %vm4248, %v11759, %v9807
      %v11825 = vsel %vm4248, %v11761, %v9809
      %v11827 = vsel %vm4248, %v11763, %v9811
      %v11829 = vsel %vm4248, %v11765, %v9813
      %v11831 = vsel %vm4248, %v11767, %v9815
      %v11833 = vsel %vm4248, %v11769, %v9817
      %v11835 = vsel %vm4248, %v11771, %v9819
      %v11837 = vsel %vm4248, %v11773, %v9821
      %v11839 = vsel %vm4248, %v11775, %v9823
      %v11841 = vsel %vm4248, %v11777, %v9825
      %v11843 = vsel %vm4248, %v11779, %v9827
      %v11845 = vsel %vm4248, %v11781, %v9829
      %v11847 = vsel %vm4248, %v11783, %v9831
      %v11849 = vsel %vm4248, %v11785, %v9833
      %v11851 = vsel %vm4248, %v11787, %v9835
      %v11853 = vsel %vm4248, %v11789, %v9837
      %v11855 = vsel %vm4248, %v11791, %v9839
      %v11857 = vsel %vm4248, %v11793, %v9841
      %v11859 = vsel %vm4248, %v11795, %v9843
      %v11861 = vsel %vm4248, %v11797, %v9845
      %v11863 = vsel %vm4248, %v11799, %v9847
      %v11865 = vsel %vm4313, %v11801, %v9897
      %v11867 = vsel %vm4313, %v11803, %v9899
      %v11869 = vsel %vm4313, %v11805, %v9901
      %v11871 = vsel %vm4313, %v11807, %v9903
      %v11873 = vsel %vm4313, %v11809, %v9905
      %v11875 = vsel %vm4313, %v11811, %v9907
      %v11877 = vsel %vm4313, %v11813, %v9909
      %v11879 = vsel %vm4313, %v11815, %v9911
      %v11881 = vsel %vm4313, %v11817, %v9913
      %v11883 = vsel %vm4313, %v11819, %v9915
      %v11885 = vsel %vm4313, %v11821, %v9917
      %v11887 = vsel %vm4313, %v11823, %v9919
      %v11889 = vsel %vm4313, %v11825, %v9921
      %v11891 = vsel %vm4313, %v11827, %v9923
      %v11893 = vsel %vm4313, %v11829, %v9925
      %v11895 = vsel %vm4313, %v11831, %v9927
      %v11897 = vsel %vm4313, %v11833, %v9929
      %v11899 = vsel %vm4313, %v11835, %v9931
      %v11901 = vsel %vm4313, %v11837, %v9933
      %v11903 = vsel %vm4313, %v11839, %v9935
      %v11905 = vsel %vm4313, %v11841, %v9937
      %v11907 = vsel %vm4313, %v11843, %v9939
      %v11909 = vsel %vm4313, %v11845, %v9941
      %v11911 = vsel %vm4313, %v11847, %v9943
      %v11913 = vsel %vm4313, %v11849, %v9945
      %v11915 = vsel %vm4313, %v11851, %v9947
      %v11917 = vsel %vm4313, %v11853, %v9949
      %v11919 = vsel %vm4313, %v11855, %v9951
      %v11921 = vsel %vm4313, %v11857, %v9953
      %v11923 = vsel %vm4313, %v11859, %v9955
      %v11925 = vsel %vm4313, %v11861, %v9957
      %v11927 = vsel %vm4313, %v11863, %v9959
      %v11929 = vsel %vm4378, %v11865, %v10105
      %v11931 = vsel %vm4378, %v11867, %v10107
      %v11933 = vsel %vm4378, %v11869, %v10109
      %v11935 = vsel %vm4378, %v11871, %v10111
      %v11937 = vsel %vm4378, %v11873, %v10113
      %v11939 = vsel %vm4378, %v11875, %v10115
      %v11941 = vsel %vm4378, %v11877, %v10117
      %v11943 = vsel %vm4378, %v11879, %v10119
      %v11945 = vsel %vm4378, %v11881, %v10121
      %v11947 = vsel %vm4378, %v11883, %v10123
      %v11949 = vsel %vm4378, %v11885, %v10125
      %v11951 = vsel %vm4378, %v11887, %v10127
      %v11953 = vsel %vm4378, %v11889, %v10129
      %v11955 = vsel %vm4378, %v11891, %v10131
      %v11957 = vsel %vm4378, %v11893, %v10133
      %v11959 = vsel %vm4378, %v11895, %v10135
      %v11961 = vsel %vm4378, %v11897, %v10137
      %v11963 = vsel %vm4378, %v11899, %v10139
      %v11965 = vsel %vm4378, %v11901, %v10141
      %v11967 = vsel %vm4378, %v11903, %v10143
      %v11969 = vsel %vm4378, %v11905, %v10145
      %v11971 = vsel %vm4378, %v11907, %v10147
      %v11973 = vsel %vm4378, %v11909, %v10149
      %v11975 = vsel %vm4378, %v11911, %v10151
      %v11977 = vsel %vm4378, %v11913, %v10153
      %v11979 = vsel %vm4378, %v11915, %v10155
      %v11981 = vsel %vm4378, %v11917, %v10157
      %v11983 = vsel %vm4378, %v11919, %v10159
      %v11985 = vsel %vm4378, %v11921, %v10161
      %v11987 = vsel %vm4378, %v11923, %v10163
      %v11989 = vsel %vm4378, %v11925, %v10165
      %v11991 = vsel %vm4378, %v11927, %v10167
      %v11993 = vsel %vm4443, %v11929, %v10217
      %v11995 = vsel %vm4443, %v11931, %v10219
      %v11997 = vsel %vm4443, %v11933, %v10221
      %v11999 = vsel %vm4443, %v11935, %v10223
      %v12001 = vsel %vm4443, %v11937, %v10225
      %v12003 = vsel %vm4443, %v11939, %v10227
      %v12005 = vsel %vm4443, %v11941, %v10229
      %v12007 = vsel %vm4443, %v11943, %v10231
      %v12009 = vsel %vm4443, %v11945, %v10233
      %v12011 = vsel %vm4443, %v11947, %v10235
      %v12013 = vsel %vm4443, %v11949, %v10237
      %v12015 = vsel %vm4443, %v11951, %v10239
      %v12017 = vsel %vm4443, %v11953, %v10241
      %v12019 = vsel %vm4443, %v11955, %v10243
      %v12021 = vsel %vm4443, %v11957, %v10245
      %v12023 = vsel %vm4443, %v11959, %v10247
      %v12025 = vsel %vm4443, %v11961, %v10249
      %v12027 = vsel %vm4443, %v11963, %v10251
      %v12029 = vsel %vm4443, %v11965, %v10253
      %v12031 = vsel %vm4443, %v11967, %v10255
      %v12033 = vsel %vm4443, %v11969, %v10257
      %v12035 = vsel %vm4443, %v11971, %v10259
      %v12037 = vsel %vm4443, %v11973, %v10261
      %v12039 = vsel %vm4443, %v11975, %v10263
      %v12041 = vsel %vm4443, %v11977, %v10265
      %v12043 = vsel %vm4443, %v11979, %v10267
      %v12045 = vsel %vm4443, %v11981, %v10269
      %v12047 = vsel %vm4443, %v11983, %v10271
      %v12049 = vsel %vm4443, %v11985, %v10273
      %v12051 = vsel %vm4443, %v11987, %v10275
      %v12053 = vsel %vm4443, %v11989, %v10277
      %v12055 = vsel %vm4443, %v11991, %v10279
      %v12057 = vsel %vm4508, %v11993, %v10457
      %v12059 = vsel %vm4508, %v11995, %v10459
      %v12061 = vsel %vm4508, %v11997, %v10461
      %v12063 = vsel %vm4508, %v11999, %v10463
      %v12065 = vsel %vm4508, %v12001, %v10465
      %v12067 = vsel %vm4508, %v12003, %v10467
      %v12069 = vsel %vm4508, %v12005, %v10469
      %v12071 = vsel %vm4508, %v12007, %v10471
      %v12073 = vsel %vm4508, %v12009, %v10473
      %v12075 = vsel %vm4508, %v12011, %v10475
      %v12077 = vsel %vm4508, %v12013, %v10477
      %v12079 = vsel %vm4508, %v12015, %v10479
      %v12081 = vsel %vm4508, %v12017, %v10481
      %v12083 = vsel %vm4508, %v12019, %v10483
      %v12085 = vsel %vm4508, %v12021, %v10485
      %v12087 = vsel %vm4508, %v12023, %v10487
      %v12089 = vsel %vm4508, %v12025, %v10489
      %v12091 = vsel %vm4508, %v12027, %v10491
      %v12093 = vsel %vm4508, %v12029, %v10493
      %v12095 = vsel %vm4508, %v12031, %v10495
      %v12097 = vsel %vm4508, %v12033, %v10497
      %v12099 = vsel %vm4508, %v12035, %v10499
      %v12101 = vsel %vm4508, %v12037, %v10501
      %v12103 = vsel %vm4508, %v12039, %v10503
      %v12105 = vsel %vm4508, %v12041, %v10505
      %v12107 = vsel %vm4508, %v12043, %v10507
      %v12109 = vsel %vm4508, %v12045, %v10509
      %v12111 = vsel %vm4508, %v12047, %v10511
      %v12113 = vsel %vm4508, %v12049, %v10513
      %v12115 = vsel %vm4508, %v12051, %v10515
      %v12117 = vsel %vm4508, %v12053, %v10517
      %v12119 = vsel %vm4508, %v12055, %v10519
      %v12121 = vsel %vm4557, %v12057, %v10793
      %v12123 = vsel %vm4557, %v12059, %v10795
      %v12125 = vsel %vm4557, %v12061, %v10797
      %v12127 = vsel %vm4557, %v12063, %v10799
      %v12129 = vsel %vm4557, %v12065, %v10801
      %v12131 = vsel %vm4557, %v12067, %v10803
      %v12133 = vsel %vm4557, %v12069, %v10805
      %v12135 = vsel %vm4557, %v12071, %v10807
      %v12137 = vsel %vm4557, %v12073, %v10809
      %v12139 = vsel %vm4557, %v12075, %v10811
      %v12141 = vsel %vm4557, %v12077, %v10813
      %v12143 = vsel %vm4557, %v12079, %v10815
      %v12145 = vsel %vm4557, %v12081, %v10817
      %v12147 = vsel %vm4557, %v12083, %v10819
      %v12149 = vsel %vm4557, %v12085, %v10821
      %v12151 = vsel %vm4557, %v12087, %v10823
      %v12153 = vsel %vm4557, %v12089, %v10825
      %v12155 = vsel %vm4557, %v12091, %v10827
      %v12157 = vsel %vm4557, %v12093, %v10829
      %v12159 = vsel %vm4557, %v12095, %v10831
      %v12161 = vsel %vm4557, %v12097, %v10833
      %v12163 = vsel %vm4557, %v12099, %v10835
      %v12165 = vsel %vm4557, %v12101, %v10837
      %v12167 = vsel %vm4557, %v12103, %v10839
      %v12169 = vsel %vm4557, %v12105, %v10841
      %v12171 = vsel %vm4557, %v12107, %v10843
      %v12173 = vsel %vm4557, %v12109, %v10845
      %v12175 = vsel %vm4557, %v12111, %v10847
      %v12177 = vsel %vm4557, %v12113, %v10849
      %v12179 = vsel %vm4557, %v12115, %v10851
      %v12181 = vsel %vm4557, %v12117, %v10853
      %v12183 = vsel %vm4557, %v12119, %v10855
      %v12185 = vsel %vm4622, %v12121, %v10905
      %v12187 = vsel %vm4622, %v12123, %v10907
      %v12189 = vsel %vm4622, %v12125, %v10909
      %v12191 = vsel %vm4622, %v12127, %v10911
      %v12193 = vsel %vm4622, %v12129, %v10913
      %v12195 = vsel %vm4622, %v12131, %v10915
      %v12197 = vsel %vm4622, %v12133, %v10917
      %v12199 = vsel %vm4622, %v12135, %v10919
      %v12201 = vsel %vm4622, %v12137, %v10921
      %v12203 = vsel %vm4622, %v12139, %v10923
      %v12205 = vsel %vm4622, %v12141, %v10925
      %v12207 = vsel %vm4622, %v12143, %v10927
      %v12209 = vsel %vm4622, %v12145, %v10929
      %v12211 = vsel %vm4622, %v12147, %v10931
      %v12213 = vsel %vm4622, %v12149, %v10933
      %v12215 = vsel %vm4622, %v12151, %v10935
      %v12217 = vsel %vm4622, %v12153, %v10937
      %v12219 = vsel %vm4622, %v12155, %v10939
      %v12221 = vsel %vm4622, %v12157, %v10941
      %v12223 = vsel %vm4622, %v12159, %v10943
      %v12225 = vsel %vm4622, %v12161, %v10945
      %v12227 = vsel %vm4622, %v12163, %v10947
      %v12229 = vsel %vm4622, %v12165, %v10949
      %v12231 = vsel %vm4622, %v12167, %v10951
      %v12233 = vsel %vm4622, %v12169, %v10953
      %v12235 = vsel %vm4622, %v12171, %v10955
      %v12237 = vsel %vm4622, %v12173, %v10957
      %v12239 = vsel %vm4622, %v12175, %v10959
      %v12241 = vsel %vm4622, %v12177, %v10961
      %v12243 = vsel %vm4622, %v12179, %v10963
      %v12245 = vsel %vm4622, %v12181, %v10965
      %v12247 = vsel %vm4622, %v12183, %v10967
      %v12249 = vsel %vm4687, %v12185, %v11097
      %v12251 = vsel %vm4687, %v12187, %v11099
      %v12253 = vsel %vm4687, %v12189, %v11101
      %v12255 = vsel %vm4687, %v12191, %v11103
      %v12257 = vsel %vm4687, %v12193, %v11105
      %v12259 = vsel %vm4687, %v12195, %v11107
      %v12261 = vsel %vm4687, %v12197, %v11109
      %v12263 = vsel %vm4687, %v12199, %v11111
      %v12265 = vsel %vm4687, %v12201, %v11113
      %v12267 = vsel %vm4687, %v12203, %v11115
      %v12269 = vsel %vm4687, %v12205, %v11117
      %v12271 = vsel %vm4687, %v12207, %v11119
      %v12273 = vsel %vm4687, %v12209, %v11121
      %v12275 = vsel %vm4687, %v12211, %v11123
      %v12277 = vsel %vm4687, %v12213, %v11125
      %v12279 = vsel %vm4687, %v12215, %v11127
      %v12281 = vsel %vm4687, %v12217, %v11129
      %v12283 = vsel %vm4687, %v12219, %v11131
      %v12285 = vsel %vm4687, %v12221, %v11133
      %v12287 = vsel %vm4687, %v12223, %v11135
      %v12289 = vsel %vm4687, %v12225, %v11137
      %v12291 = vsel %vm4687, %v12227, %v11139
      %v12293 = vsel %vm4687, %v12229, %v11141
      %v12295 = vsel %vm4687, %v12231, %v11143
      %v12297 = vsel %vm4687, %v12233, %v11145
      %v12299 = vsel %vm4687, %v12235, %v11147
      %v12301 = vsel %vm4687, %v12237, %v11149
      %v12303 = vsel %vm4687, %v12239, %v11151
      %v12305 = vsel %vm4687, %v12241, %v11153
      %v12307 = vsel %vm4687, %v12243, %v11155
      %v12309 = vsel %vm4687, %v12245, %v11157
      %v12311 = vsel %vm4687, %v12247, %v11159
      %v12313 = vsel %vm4752, %v12249, %v11209
      %v12315 = vsel %vm4752, %v12251, %v11211
      %v12317 = vsel %vm4752, %v12253, %v11213
      %v12319 = vsel %vm4752, %v12255, %v11215
      %v12321 = vsel %vm4752, %v12257, %v11217
      %v12323 = vsel %vm4752, %v12259, %v11219
      %v12325 = vsel %vm4752, %v12261, %v11221
      %v12327 = vsel %vm4752, %v12263, %v11223
      %v12329 = vsel %vm4752, %v12265, %v11225
      %v12331 = vsel %vm4752, %v12267, %v11227
      %v12333 = vsel %vm4752, %v12269, %v11229
      %v12335 = vsel %vm4752, %v12271, %v11231
      %v12337 = vsel %vm4752, %v12273, %v11233
      %v12339 = vsel %vm4752, %v12275, %v11235
      %v12341 = vsel %vm4752, %v12277, %v11237
      %v12343 = vsel %vm4752, %v12279, %v11239
      %v12345 = vsel %vm4752, %v12281, %v11241
      %v12347 = vsel %vm4752, %v12283, %v11243
      %v12349 = vsel %vm4752, %v12285, %v11245
      %v12351 = vsel %vm4752, %v12287, %v11247
      %v12353 = vsel %vm4752, %v12289, %v11249
      %v12355 = vsel %vm4752, %v12291, %v11251
      %v12357 = vsel %vm4752, %v12293, %v11253
      %v12359 = vsel %vm4752, %v12295, %v11255
      %v12361 = vsel %vm4752, %v12297, %v11257
      %v12363 = vsel %vm4752, %v12299, %v11259
      %v12365 = vsel %vm4752, %v12301, %v11261
      %v12367 = vsel %vm4752, %v12303, %v11263
      %v12369 = vsel %vm4752, %v12305, %v11265
      %v12371 = vsel %vm4752, %v12307, %v11267
      %v12373 = vsel %vm4752, %v12309, %v11269
      %v12375 = vsel %vm4752, %v12311, %v11271
      %v12377 = vsel %vm4817, %v12313, %v11417
      %v12379 = vsel %vm4817, %v12315, %v11419
      %v12381 = vsel %vm4817, %v12317, %v11421
      %v12383 = vsel %vm4817, %v12319, %v11423
      %v12385 = vsel %vm4817, %v12321, %v11425
      %v12387 = vsel %vm4817, %v12323, %v11427
      %v12389 = vsel %vm4817, %v12325, %v11429
      %v12391 = vsel %vm4817, %v12327, %v11431
      %v12393 = vsel %vm4817, %v12329, %v11433
      %v12395 = vsel %vm4817, %v12331, %v11435
      %v12397 = vsel %vm4817, %v12333, %v11437
      %v12399 = vsel %vm4817, %v12335, %v11439
      %v12401 = vsel %vm4817, %v12337, %v11441
      %v12403 = vsel %vm4817, %v12339, %v11443
      %v12405 = vsel %vm4817, %v12341, %v11445
      %v12407 = vsel %vm4817, %v12343, %v11447
      %v12409 = vsel %vm4817, %v12345, %v11449
      %v12411 = vsel %vm4817, %v12347, %v11451
      %v12413 = vsel %vm4817, %v12349, %v11453
      %v12415 = vsel %vm4817, %v12351, %v11455
      %v12417 = vsel %vm4817, %v12353, %v11457
      %v12419 = vsel %vm4817, %v12355, %v11459
      %v12421 = vsel %vm4817, %v12357, %v11461
      %v12423 = vsel %vm4817, %v12359, %v11463
      %v12425 = vsel %vm4817, %v12361, %v11465
      %v12427 = vsel %vm4817, %v12363, %v11467
      %v12429 = vsel %vm4817, %v12365, %v11469
      %v12431 = vsel %vm4817, %v12367, %v11471
      %v12433 = vsel %vm4817, %v12369, %v11473
      %v12435 = vsel %vm4817, %v12371, %v11475
      %v12437 = vsel %vm4817, %v12373, %v11477
      %v12439 = vsel %vm4817, %v12375, %v11479
      %v12472 = vrot.slane %v8550, 1
      %v12473 = vrot.slane %v8551, 1
      %v12474 = vsel %vm1311, %v12472, %v12473
      %v12475 = vrot.slane %v8553, 1
      %v12476 = vrot.slane %v8554, 1
      %v12477 = vsel %vm1311, %v12475, %v12476
      %v12478 = vrot.slane %v8556, 1
      %v12479 = vrot.slane %v8557, 1
      %v12480 = vsel %vm1311, %v12478, %v12479
      %v12481 = vrot.slane %v8559, 1
      %v12482 = vrot.slane %v8560, 1
      %v12483 = vsel %vm1311, %v12481, %v12482
      %v12484 = vrot.slane %v8562, 1
      %v12485 = vrot.slane %v8563, 1
      %v12486 = vsel %vm1311, %v12484, %v12485
      %v12487 = vrot.slane %v8565, 1
      %v12488 = vrot.slane %v8566, 1
      %v12489 = vsel %vm1311, %v12487, %v12488
      %v12490 = vrot.slane %v8568, 1
      %v12491 = vrot.slane %v8569, 1
      %v12492 = vsel %vm1311, %v12490, %v12491
      %v12493 = vrot.slane %v8571, 1
      %v12494 = vrot.slane %v8572, 1
      %v12495 = vsel %vm1311, %v12493, %v12494
      %v12496 = vrot.slane %v8574, 1
      %v12497 = vrot.slane %v8575, 1
      %v12498 = vsel %vm1311, %v12496, %v12497
      %v12499 = vrot.slane %v8577, 1
      %v12500 = vrot.slane %v8578, 1
      %v12501 = vsel %vm1311, %v12499, %v12500
      %v12502 = vrot.slane %v8580, 1
      %v12503 = vrot.slane %v8581, 1
      %v12504 = vsel %vm1311, %v12502, %v12503
      %v12505 = vrot.slane %v8583, 1
      %v12506 = vrot.slane %v8584, 1
      %v12507 = vsel %vm1311, %v12505, %v12506
      %v12508 = vrot.slane %v8586, 1
      %v12509 = vrot.slane %v8587, 1
      %v12510 = vsel %vm1311, %v12508, %v12509
      %v12511 = vrot.slane %v8589, 1
      %v12512 = vrot.slane %v8590, 1
      %v12513 = vsel %vm1311, %v12511, %v12512
      %v12514 = vrot.slane %v8592, 1
      %v12515 = vrot.slane %v8593, 1
      %v12516 = vsel %vm1311, %v12514, %v12515
      %v12517 = vrot.slane %v8595, 1
      %v12518 = vrot.slane %v8596, 1
      %v12519 = vsel %vm1311, %v12517, %v12518
      %12520 = vrot.lane.b32.xlu0 %v12474, 64
      %v12521 = vpop.permute.xlu0 %12520
      %12522 = vrot.lane.b32.xlu0 %v12473, 64
      %v12523 = vpop.permute.xlu0 %12522
      %12524 = vrot.lane.b32.xlu0 %v12477, 64
      %v12525 = vpop.permute.xlu0 %12524
      %12526 = vrot.lane.b32.xlu0 %v12476, 64
      %v12527 = vpop.permute.xlu0 %12526
      %12528 = vrot.lane.b32.xlu0 %v12480, 64
      %v12529 = vpop.permute.xlu0 %12528
      %12530 = vrot.lane.b32.xlu0 %v12479, 64
      %v12531 = vpop.permute.xlu0 %12530
      %12532 = vrot.lane.b32.xlu0 %v12483, 64
      %v12533 = vpop.permute.xlu0 %12532
      %12534 = vrot.lane.b32.xlu0 %v12482, 64
      %v12535 = vpop.permute.xlu0 %12534
      %12536 = vrot.lane.b32.xlu0 %v12486, 64
      %v12537 = vpop.permute.xlu0 %12536
      %12538 = vrot.lane.b32.xlu0 %v12485, 64
      %v12539 = vpop.permute.xlu0 %12538
      %12540 = vrot.lane.b32.xlu0 %v12489, 64
      %v12541 = vpop.permute.xlu0 %12540
      %12542 = vrot.lane.b32.xlu0 %v12488, 64
      %v12543 = vpop.permute.xlu0 %12542
      %12544 = vrot.lane.b32.xlu0 %v12492, 64
      %v12545 = vpop.permute.xlu0 %12544
      %12546 = vrot.lane.b32.xlu0 %v12491, 64
      %v12547 = vpop.permute.xlu0 %12546
      %12548 = vrot.lane.b32.xlu0 %v12495, 64
      %v12549 = vpop.permute.xlu0 %12548
      %12550 = vrot.lane.b32.xlu0 %v12494, 64
      %v12551 = vpop.permute.xlu0 %12550
      %12552 = vrot.lane.b32.xlu0 %v12498, 64
      %v12553 = vpop.permute.xlu0 %12552
      %12554 = vrot.lane.b32.xlu0 %v12497, 64
      %v12555 = vpop.permute.xlu0 %12554
      %12556 = vrot.lane.b32.xlu0 %v12501, 64
      %v12557 = vpop.permute.xlu0 %12556
      %12558 = vrot.lane.b32.xlu0 %v12500, 64
      %v12559 = vpop.permute.xlu0 %12558
      %12560 = vrot.lane.b32.xlu0 %v12504, 64
      %v12561 = vpop.permute.xlu0 %12560
      %12562 = vrot.lane.b32.xlu0 %v12503, 64
      %v12563 = vpop.permute.xlu0 %12562
      %12564 = vrot.lane.b32.xlu0 %v12507, 64
      %v12565 = vpop.permute.xlu0 %12564
      %12566 = vrot.lane.b32.xlu0 %v12506, 64
      %v12567 = vpop.permute.xlu0 %12566
      %12568 = vrot.lane.b32.xlu0 %v12510, 64
      %v12569 = vpop.permute.xlu0 %12568
      %12570 = vrot.lane.b32.xlu0 %v12509, 64
      %v12571 = vpop.permute.xlu0 %12570
      %12572 = vrot.lane.b32.xlu0 %v12513, 64
      %v12573 = vpop.permute.xlu0 %12572
      %12574 = vrot.lane.b32.xlu0 %v12512, 64
      %v12575 = vpop.permute.xlu0 %12574
      %12576 = vrot.lane.b32.xlu0 %v12516, 64
      %v12577 = vpop.permute.xlu0 %12576
      %12578 = vrot.lane.b32.xlu0 %v12515, 64
      %v12579 = vpop.permute.xlu0 %12578
      %12580 = vrot.lane.b32.xlu0 %v12519, 64
      %v12581 = vpop.permute.xlu0 %12580
      %12582 = vrot.lane.b32.xlu0 %v12518, 64
      %v12583 = vpop.permute.xlu0 %12582
      %v12616 = vrot.slane %v12377, 6
      %v12617 = vrot.slane %v12379, 6
      %v12618 = vsel %vm1648, %v12616, %v12617
      %v12619 = vrot.slane %v12381, 6
      %v12620 = vrot.slane %v12383, 6
      %v12621 = vsel %vm1648, %v12619, %v12620
      %v12622 = vrot.slane %v12385, 6
      %v12623 = vrot.slane %v12387, 6
      %v12624 = vsel %vm1648, %v12622, %v12623
      %v12625 = vrot.slane %v12389, 6
      %v12626 = vrot.slane %v12391, 6
      %v12627 = vsel %vm1648, %v12625, %v12626
      %v12628 = vrot.slane %v12393, 6
      %v12629 = vrot.slane %v12395, 6
      %v12630 = vsel %vm1648, %v12628, %v12629
      %v12631 = vrot.slane %v12397, 6
      %v12632 = vrot.slane %v12399, 6
      %v12633 = vsel %vm1648, %v12631, %v12632
      %v12634 = vrot.slane %v12401, 6
      %v12635 = vrot.slane %v12403, 6
      %v12636 = vsel %vm1648, %v12634, %v12635
      %v12637 = vrot.slane %v12405, 6
      %v12638 = vrot.slane %v12407, 6
      %v12639 = vsel %vm1648, %v12637, %v12638
      %v12640 = vrot.slane %v12409, 6
      %v12641 = vrot.slane %v12411, 6
      %v12642 = vsel %vm1648, %v12640, %v12641
      %v12643 = vrot.slane %v12413, 6
      %v12644 = vrot.slane %v12415, 6
      %v12645 = vsel %vm1648, %v12643, %v12644
      %v12646 = vrot.slane %v12417, 6
      %v12647 = vrot.slane %v12419, 6
      %v12648 = vsel %vm1648, %v12646, %v12647
      %v12649 = vrot.slane %v12421, 6
      %v12650 = vrot.slane %v12423, 6
      %v12651 = vsel %vm1648, %v12649, %v12650
      %v12652 = vrot.slane %v12425, 6
      %v12653 = vrot.slane %v12427, 6
      %v12654 = vsel %vm1648, %v12652, %v12653
      %v12655 = vrot.slane %v12429, 6
      %v12656 = vrot.slane %v12431, 6
      %v12657 = vsel %vm1648, %v12655, %v12656
      %v12658 = vrot.slane %v12433, 6
      %v12659 = vrot.slane %v12435, 6
      %v12660 = vsel %vm1648, %v12658, %v12659
      %v12661 = vrot.slane %v12437, 6
      %v12662 = vrot.slane %v12439, 6
      %v12663 = vsel %vm1648, %v12661, %v12662
      %v12664 = vrot.slane %v10968, 7
      %v12665 = vrot.slane %v11192, 7
      %v12666 = vsel %vm2018, %v12664, %v12665
      %v12667 = vrot.slane %v10969, 7
      %v12668 = vrot.slane %v11193, 7
      %v12669 = vsel %vm2018, %v12667, %v12668
      %v12670 = vrot.slane %v10970, 7
      %v12671 = vrot.slane %v11194, 7
      %v12672 = vsel %vm2018, %v12670, %v12671
      %v12673 = vrot.slane %v10971, 7
      %v12674 = vrot.slane %v11195, 7
      %v12675 = vsel %vm2018, %v12673, %v12674
      %v12676 = vrot.slane %v10972, 7
      %v12677 = vrot.slane %v11196, 7
      %v12678 = vsel %vm2018, %v12676, %v12677
      %v12679 = vrot.slane %v10973, 7
      %v12680 = vrot.slane %v11197, 7
      %v12681 = vsel %vm2018, %v12679, %v12680
      %v12682 = vrot.slane %v10974, 7
      %v12683 = vrot.slane %v11198, 7
      %v12684 = vsel %vm2018, %v12682, %v12683
      %v12685 = vrot.slane %v10975, 7
      %v12686 = vrot.slane %v11199, 7
      %v12687 = vsel %vm2018, %v12685, %v12686
      %v12688 = vrot.slane %v10976, 7
      %v12689 = vrot.slane %v11200, 7
      %v12690 = vsel %vm2018, %v12688, %v12689
      %v12691 = vrot.slane %v10977, 7
      %v12692 = vrot.slane %v11201, 7
      %v12693 = vsel %vm2018, %v12691, %v12692
      %v12694 = vrot.slane %v10978, 7
      %v12695 = vrot.slane %v11202, 7
      %v12696 = vsel %vm2018, %v12694, %v12695
      %v12697 = vrot.slane %v10979, 7
      %v12698 = vrot.slane %v11203, 7
      %v12699 = vsel %vm2018, %v12697, %v12698
      %v12700 = vrot.slane %v10980, 7
      %v12701 = vrot.slane %v11204, 7
      %v12702 = vsel %vm2018, %v12700, %v12701
      %v12703 = vrot.slane %v10981, 7
      %v12704 = vrot.slane %v11205, 7
      %v12705 = vsel %vm2018, %v12703, %v12704
      %v12706 = vrot.slane %v10982, 7
      %v12707 = vrot.slane %v11206, 7
      %v12708 = vsel %vm2018, %v12706, %v12707
      %v12709 = vrot.slane %v10983, 7
      %v12710 = vrot.slane %v11207, 7
      %v12711 = vsel %vm2018, %v12709, %v12710
      %12712 = vrot.lane.b32.xlu0 %v12664, 64
      %v12713 = vpop.permute.xlu0 %12712
      %12714 = vrot.lane.b32.xlu0 %v12666, 64
      %v12715 = vpop.permute.xlu0 %12714
      %12716 = vrot.lane.b32.xlu0 %v12667, 64
      %v12717 = vpop.permute.xlu0 %12716
      %12718 = vrot.lane.b32.xlu0 %v12669, 64
      %v12719 = vpop.permute.xlu0 %12718
      %12720 = vrot.lane.b32.xlu0 %v12670, 64
      %v12721 = vpop.permute.xlu0 %12720
      %12722 = vrot.lane.b32.xlu0 %v12672, 64
      %v12723 = vpop.permute.xlu0 %12722
      %12724 = vrot.lane.b32.xlu0 %v12673, 64
      %v12725 = vpop.permute.xlu0 %12724
      %12726 = vrot.lane.b32.xlu0 %v12675, 64
      %v12727 = vpop.permute.xlu0 %12726
      %12728 = vrot.lane.b32.xlu0 %v12676, 64
      %v12729 = vpop.permute.xlu0 %12728
      %12730 = vrot.lane.b32.xlu0 %v12678, 64
      %v12731 = vpop.permute.xlu0 %12730
      %12732 = vrot.lane.b32.xlu0 %v12679, 64
      %v12733 = vpop.permute.xlu0 %12732
      %12734 = vrot.lane.b32.xlu0 %v12681, 64
      %v12735 = vpop.permute.xlu0 %12734
      %12736 = vrot.lane.b32.xlu0 %v12682, 64
      %v12737 = vpop.permute.xlu0 %12736
      %12738 = vrot.lane.b32.xlu0 %v12684, 64
      %v12739 = vpop.permute.xlu0 %12738
      %12740 = vrot.lane.b32.xlu0 %v12685, 64
      %v12741 = vpop.permute.xlu0 %12740
      %12742 = vrot.lane.b32.xlu0 %v12687, 64
      %v12743 = vpop.permute.xlu0 %12742
      %12744 = vrot.lane.b32.xlu0 %v12688, 64
      %v12745 = vpop.permute.xlu0 %12744
      %12746 = vrot.lane.b32.xlu0 %v12690, 64
      %v12747 = vpop.permute.xlu0 %12746
      %12748 = vrot.lane.b32.xlu0 %v12691, 64
      %v12749 = vpop.permute.xlu0 %12748
      %12750 = vrot.lane.b32.xlu0 %v12693, 64
      %v12751 = vpop.permute.xlu0 %12750
      %12752 = vrot.lane.b32.xlu0 %v12694, 64
      %v12753 = vpop.permute.xlu0 %12752
      %12754 = vrot.lane.b32.xlu0 %v12696, 64
      %v12755 = vpop.permute.xlu0 %12754
      %12756 = vrot.lane.b32.xlu0 %v12697, 64
      %v12757 = vpop.permute.xlu0 %12756
      %12758 = vrot.lane.b32.xlu0 %v12699, 64
      %v12759 = vpop.permute.xlu0 %12758
      %12760 = vrot.lane.b32.xlu0 %v12700, 64
      %v12761 = vpop.permute.xlu0 %12760
      %12762 = vrot.lane.b32.xlu0 %v12702, 64
      %v12763 = vpop.permute.xlu0 %12762
      %12764 = vrot.lane.b32.xlu0 %v12703, 64
      %v12765 = vpop.permute.xlu0 %12764
      %12766 = vrot.lane.b32.xlu0 %v12705, 64
      %v12767 = vpop.permute.xlu0 %12766
      %12768 = vrot.lane.b32.xlu0 %v12706, 64
      %v12769 = vpop.permute.xlu0 %12768
      %12770 = vrot.lane.b32.xlu0 %v12708, 64
      %v12771 = vpop.permute.xlu0 %12770
      %12772 = vrot.lane.b32.xlu0 %v12709, 64
      %v12773 = vpop.permute.xlu0 %12772
      %12774 = vrot.lane.b32.xlu0 %v12711, 64
      %v12775 = vpop.permute.xlu0 %12774
      %vm12776 = vcmask 523264
      %v12778 = vsel %vm12776, %v4819, %v12521
      %v12780 = vsel %vm12776, %v4821, %v12523
      %v12782 = vsel %vm12776, %v4823, %v12525
      %v12784 = vsel %vm12776, %v4825, %v12527
      %v12786 = vsel %vm12776, %v4827, %v12529
      %v12788 = vsel %vm12776, %v4829, %v12531
      %v12790 = vsel %vm12776, %v4831, %v12533
      %v12792 = vsel %vm12776, %v4833, %v12535
      %v12794 = vsel %vm12776, %v4835, %v12537
      %v12796 = vsel %vm12776, %v4837, %v12539
      %v12798 = vsel %vm12776, %v4839, %v12541
      %v12800 = vsel %vm12776, %v4841, %v12543
      %v12802 = vsel %vm12776, %v4843, %v12545
      %v12804 = vsel %vm12776, %v4845, %v12547
      %v12806 = vsel %vm12776, %v4847, %v12549
      %v12808 = vsel %vm12776, %v4849, %v12551
      %v12810 = vsel %vm12776, %v4851, %v12553
      %v12812 = vsel %vm12776, %v4853, %v12555
      %v12814 = vsel %vm12776, %v4855, %v12557
      %v12816 = vsel %vm12776, %v4857, %v12559
      %v12818 = vsel %vm12776, %v4859, %v12561
      %v12820 = vsel %vm12776, %v4861, %v12563
      %v12822 = vsel %vm12776, %v4863, %v12565
      %v12824 = vsel %vm12776, %v4865, %v12567
      %v12826 = vsel %vm12776, %v4867, %v12569
      %v12828 = vsel %vm12776, %v4869, %v12571
      %v12830 = vsel %vm12776, %v4871, %v12573
      %v12832 = vsel %vm12776, %v4873, %v12575
      %v12834 = vsel %vm12776, %v4875, %v12577
      %v12836 = vsel %vm12776, %v4877, %v12579
      %v12838 = vsel %vm12776, %v4879, %v12581
      %v12840 = vsel %vm12776, %v4881, %v12583
      %v12843 = vsel %vm12776, %v12616, %v12713
      %v12846 = vsel %vm12776, %v12618, %v12715
      %v12849 = vsel %vm12776, %v12619, %v12717
      %v12852 = vsel %vm12776, %v12621, %v12719
      %v12855 = vsel %vm12776, %v12622, %v12721
      %v12858 = vsel %vm12776, %v12624, %v12723
      %v12861 = vsel %vm12776, %v12625, %v12725
      %v12864 = vsel %vm12776, %v12627, %v12727
      %v12867 = vsel %vm12776, %v12628, %v12729
      %v12870 = vsel %vm12776, %v12630, %v12731
      %v12873 = vsel %vm12776, %v12631, %v12733
      %v12876 = vsel %vm12776, %v12633, %v12735
      %v12879 = vsel %vm12776, %v12634, %v12737
      %v12882 = vsel %vm12776, %v12636, %v12739
      %v12885 = vsel %vm12776, %v12637, %v12741
      %v12888 = vsel %vm12776, %v12639, %v12743
      %v12891 = vsel %vm12776, %v12640, %v12745
      %v12894 = vsel %vm12776, %v12642, %v12747
      %v12897 = vsel %vm12776, %v12643, %v12749
      %v12900 = vsel %vm12776, %v12645, %v12751
      %v12903 = vsel %vm12776, %v12646, %v12753
      %v12906 = vsel %vm12776, %v12648, %v12755
      %v12909 = vsel %vm12776, %v12649, %v12757
      %v12912 = vsel %vm12776, %v12651, %v12759
      %v12915 = vsel %vm12776, %v12652, %v12761
      %v12918 = vsel %vm12776, %v12654, %v12763
      %v12921 = vsel %vm12776, %v12655, %v12765
      %v12924 = vsel %vm12776, %v12657, %v12767
      %v12927 = vsel %vm12776, %v12658, %v12769
      %v12930 = vsel %vm12776, %v12660, %v12771
      %v12933 = vsel %vm12776, %v12661, %v12773
      %v12936 = vsel %vm12776, %v12663, %v12775
      %v12937 = vshrl.u32 %v12778, 16
      %v12939 = vrot.slane %v12937, 2
      %v12940 = vshll.u32 %v12778, 16
      %v12942 = vrot.slane %v12940, 3
      %v12943 = vor.u32 %v12939, %v12942
      %v12944 = vshrl.u32 %v12780, 16
      %v12946 = vrot.slane %v12944, 2
      %v12947 = vshll.u32 %v12780, 16
      %v12949 = vrot.slane %v12947, 3
      %v12950 = vor.u32 %v12946, %v12949
      %v12951 = vsel %vm9206, %v12943, %v12950
      %v12952 = vshrl.u32 %v12843, 16
      %v12954 = vrot.slane %v12952, 2
      %v12955 = vshll.u32 %v12843, 16
      %v12957 = vrot.slane %v12955, 3
      %v12958 = vor.u32 %v12954, %v12957
      %v12959 = vshrl.u32 %v12846, 16
      %v12961 = vrot.slane %v12959, 2
      %v12962 = vshll.u32 %v12846, 16
      %v12964 = vrot.slane %v12962, 3
      %v12965 = vor.u32 %v12961, %v12964
      %v12966 = vsel %vm9206, %v12958, %v12965
      %v12967 = vshrl.u32 %v12782, 16
      %v12969 = vrot.slane %v12967, 2
      %v12970 = vshll.u32 %v12782, 16
      %v12972 = vrot.slane %v12970, 3
      %v12973 = vor.u32 %v12969, %v12972
      %v12974 = vshrl.u32 %v12784, 16
      %v12976 = vrot.slane %v12974, 2
      %v12977 = vshll.u32 %v12784, 16
      %v12979 = vrot.slane %v12977, 3
      %v12980 = vor.u32 %v12976, %v12979
      %v12981 = vsel %vm9206, %v12973, %v12980
      %v12982 = vshrl.u32 %v12849, 16
      %v12984 = vrot.slane %v12982, 2
      %v12985 = vshll.u32 %v12849, 16
      %v12987 = vrot.slane %v12985, 3
      %v12988 = vor.u32 %v12984, %v12987
      %v12989 = vshrl.u32 %v12852, 16
      %v12991 = vrot.slane %v12989, 2
      %v12992 = vshll.u32 %v12852, 16
      %v12994 = vrot.slane %v12992, 3
      %v12995 = vor.u32 %v12991, %v12994
      %v12996 = vsel %vm9206, %v12988, %v12995
      %v12997 = vshrl.u32 %v12786, 16
      %v12999 = vrot.slane %v12997, 2
      %v13000 = vshll.u32 %v12786, 16
      %v13002 = vrot.slane %v13000, 3
      %v13003 = vor.u32 %v12999, %v13002
      %v13004 = vshrl.u32 %v12788, 16
      %v13006 = vrot.slane %v13004, 2
      %v13007 = vshll.u32 %v12788, 16
      %v13009 = vrot.slane %v13007, 3
      %v13010 = vor.u32 %v13006, %v13009
      %v13011 = vsel %vm9206, %v13003, %v13010
      %v13012 = vshrl.u32 %v12855, 16
      %v13014 = vrot.slane %v13012, 2
      %v13015 = vshll.u32 %v12855, 16
      %v13017 = vrot.slane %v13015, 3
      %v13018 = vor.u32 %v13014, %v13017
      %v13019 = vshrl.u32 %v12858, 16
      %v13021 = vrot.slane %v13019, 2
      %v13022 = vshll.u32 %v12858, 16
      %v13024 = vrot.slane %v13022, 3
      %v13025 = vor.u32 %v13021, %v13024
      %v13026 = vsel %vm9206, %v13018, %v13025
      %v13027 = vshrl.u32 %v12790, 16
      %v13029 = vrot.slane %v13027, 2
      %v13030 = vshll.u32 %v12790, 16
      %v13032 = vrot.slane %v13030, 3
      %v13033 = vor.u32 %v13029, %v13032
      %v13034 = vshrl.u32 %v12792, 16
      %v13036 = vrot.slane %v13034, 2
      %v13037 = vshll.u32 %v12792, 16
      %v13039 = vrot.slane %v13037, 3
      %v13040 = vor.u32 %v13036, %v13039
      %v13041 = vsel %vm9206, %v13033, %v13040
      %v13042 = vshrl.u32 %v12861, 16
      %v13044 = vrot.slane %v13042, 2
      %v13045 = vshll.u32 %v12861, 16
      %v13047 = vrot.slane %v13045, 3
      %v13048 = vor.u32 %v13044, %v13047
      %v13049 = vshrl.u32 %v12864, 16
      %v13051 = vrot.slane %v13049, 2
      %v13052 = vshll.u32 %v12864, 16
      %v13054 = vrot.slane %v13052, 3
      %v13055 = vor.u32 %v13051, %v13054
      %v13056 = vsel %vm9206, %v13048, %v13055
      %v13057 = vshrl.u32 %v12794, 16
      %v13059 = vrot.slane %v13057, 2
      %v13060 = vshll.u32 %v12794, 16
      %v13062 = vrot.slane %v13060, 3
      %v13063 = vor.u32 %v13059, %v13062
      %v13064 = vshrl.u32 %v12796, 16
      %v13066 = vrot.slane %v13064, 2
      %v13067 = vshll.u32 %v12796, 16
      %v13069 = vrot.slane %v13067, 3
      %v13070 = vor.u32 %v13066, %v13069
      %v13071 = vsel %vm9206, %v13063, %v13070
      %v13072 = vshrl.u32 %v12867, 16
      %v13074 = vrot.slane %v13072, 2
      %v13075 = vshll.u32 %v12867, 16
      %v13077 = vrot.slane %v13075, 3
      %v13078 = vor.u32 %v13074, %v13077
      %v13079 = vshrl.u32 %v12870, 16
      %v13081 = vrot.slane %v13079, 2
      %v13082 = vshll.u32 %v12870, 16
      %v13084 = vrot.slane %v13082, 3
      %v13085 = vor.u32 %v13081, %v13084
      %v13086 = vsel %vm9206, %v13078, %v13085
      %v13087 = vshrl.u32 %v12798, 16
      %v13089 = vrot.slane %v13087, 2
      %v13090 = vshll.u32 %v12798, 16
      %v13092 = vrot.slane %v13090, 3
      %v13093 = vor.u32 %v13089, %v13092
      %v13094 = vshrl.u32 %v12800, 16
      %v13096 = vrot.slane %v13094, 2
      %v13097 = vshll.u32 %v12800, 16
      %v13099 = vrot.slane %v13097, 3
      %v13100 = vor.u32 %v13096, %v13099
      %v13101 = vsel %vm9206, %v13093, %v13100
      %v13102 = vshrl.u32 %v12873, 16
      %v13104 = vrot.slane %v13102, 2
      %v13105 = vshll.u32 %v12873, 16
      %v13107 = vrot.slane %v13105, 3
      %v13108 = vor.u32 %v13104, %v13107
      %v13109 = vshrl.u32 %v12876, 16
      %v13111 = vrot.slane %v13109, 2
      %v13112 = vshll.u32 %v12876, 16
      %v13114 = vrot.slane %v13112, 3
      %v13115 = vor.u32 %v13111, %v13114
      %v13116 = vsel %vm9206, %v13108, %v13115
      %v13117 = vshrl.u32 %v12802, 16
      %v13119 = vrot.slane %v13117, 2
      %v13120 = vshll.u32 %v12802, 16
      %v13122 = vrot.slane %v13120, 3
      %v13123 = vor.u32 %v13119, %v13122
      %v13124 = vshrl.u32 %v12804, 16
      %v13126 = vrot.slane %v13124, 2
      %v13127 = vshll.u32 %v12804, 16
      %v13129 = vrot.slane %v13127, 3
      %v13130 = vor.u32 %v13126, %v13129
      %v13131 = vsel %vm9206, %v13123, %v13130
      %v13132 = vshrl.u32 %v12879, 16
      %v13134 = vrot.slane %v13132, 2
      %v13135 = vshll.u32 %v12879, 16
      %v13137 = vrot.slane %v13135, 3
      %v13138 = vor.u32 %v13134, %v13137
      %v13139 = vshrl.u32 %v12882, 16
      %v13141 = vrot.slane %v13139, 2
      %v13142 = vshll.u32 %v12882, 16
      %v13144 = vrot.slane %v13142, 3
      %v13145 = vor.u32 %v13141, %v13144
      %v13146 = vsel %vm9206, %v13138, %v13145
      %v13147 = vshrl.u32 %v12806, 16
      %v13149 = vrot.slane %v13147, 2
      %v13150 = vshll.u32 %v12806, 16
      %v13152 = vrot.slane %v13150, 3
      %v13153 = vor.u32 %v13149, %v13152
      %v13154 = vshrl.u32 %v12808, 16
      %v13156 = vrot.slane %v13154, 2
      %v13157 = vshll.u32 %v12808, 16
      %v13159 = vrot.slane %v13157, 3
      %v13160 = vor.u32 %v13156, %v13159
      %v13161 = vsel %vm9206, %v13153, %v13160
      %v13162 = vshrl.u32 %v12885, 16
      %v13164 = vrot.slane %v13162, 2
      %v13165 = vshll.u32 %v12885, 16
      %v13167 = vrot.slane %v13165, 3
      %v13168 = vor.u32 %v13164, %v13167
      %v13169 = vshrl.u32 %v12888, 16
      %v13171 = vrot.slane %v13169, 2
      %v13172 = vshll.u32 %v12888, 16
      %v13174 = vrot.slane %v13172, 3
      %v13175 = vor.u32 %v13171, %v13174
      %v13176 = vsel %vm9206, %v13168, %v13175
      %v13177 = vshrl.u32 %v12810, 16
      %v13179 = vrot.slane %v13177, 2
      %v13180 = vshll.u32 %v12810, 16
      %v13182 = vrot.slane %v13180, 3
      %v13183 = vor.u32 %v13179, %v13182
      %v13184 = vshrl.u32 %v12812, 16
      %v13186 = vrot.slane %v13184, 2
      %v13187 = vshll.u32 %v12812, 16
      %v13189 = vrot.slane %v13187, 3
      %v13190 = vor.u32 %v13186, %v13189
      %v13191 = vsel %vm9206, %v13183, %v13190
      %v13192 = vshrl.u32 %v12891, 16
      %v13194 = vrot.slane %v13192, 2
      %v13195 = vshll.u32 %v12891, 16
      %v13197 = vrot.slane %v13195, 3
      %v13198 = vor.u32 %v13194, %v13197
      %v13199 = vshrl.u32 %v12894, 16
      %v13201 = vrot.slane %v13199, 2
      %v13202 = vshll.u32 %v12894, 16
      %v13204 = vrot.slane %v13202, 3
      %v13205 = vor.u32 %v13201, %v13204
      %v13206 = vsel %vm9206, %v13198, %v13205
      %v13207 = vshrl.u32 %v12814, 16
      %v13209 = vrot.slane %v13207, 2
      %v13210 = vshll.u32 %v12814, 16
      %v13212 = vrot.slane %v13210, 3
      %v13213 = vor.u32 %v13209, %v13212
      %v13214 = vshrl.u32 %v12816, 16
      %v13216 = vrot.slane %v13214, 2
      %v13217 = vshll.u32 %v12816, 16
      %v13219 = vrot.slane %v13217, 3
      %v13220 = vor.u32 %v13216, %v13219
      %v13221 = vsel %vm9206, %v13213, %v13220
      %v13222 = vshrl.u32 %v12897, 16
      %v13224 = vrot.slane %v13222, 2
      %v13225 = vshll.u32 %v12897, 16
      %v13227 = vrot.slane %v13225, 3
      %v13228 = vor.u32 %v13224, %v13227
      %v13229 = vshrl.u32 %v12900, 16
      %v13231 = vrot.slane %v13229, 2
      %v13232 = vshll.u32 %v12900, 16
      %v13234 = vrot.slane %v13232, 3
      %v13235 = vor.u32 %v13231, %v13234
      %v13236 = vsel %vm9206, %v13228, %v13235
      %v13237 = vshrl.u32 %v12818, 16
      %v13239 = vrot.slane %v13237, 2
      %v13240 = vshll.u32 %v12818, 16
      %v13242 = vrot.slane %v13240, 3
      %v13243 = vor.u32 %v13239, %v13242
      %v13244 = vshrl.u32 %v12820, 16
      %v13246 = vrot.slane %v13244, 2
      %v13247 = vshll.u32 %v12820, 16
      %v13249 = vrot.slane %v13247, 3
      %v13250 = vor.u32 %v13246, %v13249
      %v13251 = vsel %vm9206, %v13243, %v13250
      %v13252 = vshrl.u32 %v12903, 16
      %v13254 = vrot.slane %v13252, 2
      %v13255 = vshll.u32 %v12903, 16
      %v13257 = vrot.slane %v13255, 3
      %v13258 = vor.u32 %v13254, %v13257
      %v13259 = vshrl.u32 %v12906, 16
      %v13261 = vrot.slane %v13259, 2
      %v13262 = vshll.u32 %v12906, 16
      %v13264 = vrot.slane %v13262, 3
      %v13265 = vor.u32 %v13261, %v13264
      %v13266 = vsel %vm9206, %v13258, %v13265
      %v13267 = vshrl.u32 %v12822, 16
      %v13269 = vrot.slane %v13267, 2
      %v13270 = vshll.u32 %v12822, 16
      %v13272 = vrot.slane %v13270, 3
      %v13273 = vor.u32 %v13269, %v13272
      %v13274 = vshrl.u32 %v12824, 16
      %v13276 = vrot.slane %v13274, 2
      %v13277 = vshll.u32 %v12824, 16
      %v13279 = vrot.slane %v13277, 3
      %v13280 = vor.u32 %v13276, %v13279
      %v13281 = vsel %vm9206, %v13273, %v13280
      %v13282 = vshrl.u32 %v12909, 16
      %v13284 = vrot.slane %v13282, 2
      %v13285 = vshll.u32 %v12909, 16
      %v13287 = vrot.slane %v13285, 3
      %v13288 = vor.u32 %v13284, %v13287
      %v13289 = vshrl.u32 %v12912, 16
      %v13291 = vrot.slane %v13289, 2
      %v13292 = vshll.u32 %v12912, 16
      %v13294 = vrot.slane %v13292, 3
      %v13295 = vor.u32 %v13291, %v13294
      %v13296 = vsel %vm9206, %v13288, %v13295
      %v13297 = vshrl.u32 %v12826, 16
      %v13299 = vrot.slane %v13297, 2
      %v13300 = vshll.u32 %v12826, 16
      %v13302 = vrot.slane %v13300, 3
      %v13303 = vor.u32 %v13299, %v13302
      %v13304 = vshrl.u32 %v12828, 16
      %v13306 = vrot.slane %v13304, 2
      %v13307 = vshll.u32 %v12828, 16
      %v13309 = vrot.slane %v13307, 3
      %v13310 = vor.u32 %v13306, %v13309
      %v13311 = vsel %vm9206, %v13303, %v13310
      %v13312 = vshrl.u32 %v12915, 16
      %v13314 = vrot.slane %v13312, 2
      %v13315 = vshll.u32 %v12915, 16
      %v13317 = vrot.slane %v13315, 3
      %v13318 = vor.u32 %v13314, %v13317
      %v13319 = vshrl.u32 %v12918, 16
      %v13321 = vrot.slane %v13319, 2
      %v13322 = vshll.u32 %v12918, 16
      %v13324 = vrot.slane %v13322, 3
      %v13325 = vor.u32 %v13321, %v13324
      %v13326 = vsel %vm9206, %v13318, %v13325
      %v13327 = vshrl.u32 %v12830, 16
      %v13329 = vrot.slane %v13327, 2
      %v13330 = vshll.u32 %v12830, 16
      %v13332 = vrot.slane %v13330, 3
      %v13333 = vor.u32 %v13329, %v13332
      %v13334 = vshrl.u32 %v12832, 16
      %v13336 = vrot.slane %v13334, 2
      %v13337 = vshll.u32 %v12832, 16
      %v13339 = vrot.slane %v13337, 3
      %v13340 = vor.u32 %v13336, %v13339
      %v13341 = vsel %vm9206, %v13333, %v13340
      %v13342 = vshrl.u32 %v12921, 16
      %v13344 = vrot.slane %v13342, 2
      %v13345 = vshll.u32 %v12921, 16
      %v13347 = vrot.slane %v13345, 3
      %v13348 = vor.u32 %v13344, %v13347
      %v13349 = vshrl.u32 %v12924, 16
      %v13351 = vrot.slane %v13349, 2
      %v13352 = vshll.u32 %v12924, 16
      %v13354 = vrot.slane %v13352, 3
      %v13355 = vor.u32 %v13351, %v13354
      %v13356 = vsel %vm9206, %v13348, %v13355
      %v13357 = vshrl.u32 %v12834, 16
      %v13359 = vrot.slane %v13357, 2
      %v13360 = vshll.u32 %v12834, 16
      %v13362 = vrot.slane %v13360, 3
      %v13363 = vor.u32 %v13359, %v13362
      %v13364 = vshrl.u32 %v12836, 16
      %v13366 = vrot.slane %v13364, 2
      %v13367 = vshll.u32 %v12836, 16
      %v13369 = vrot.slane %v13367, 3
      %v13370 = vor.u32 %v13366, %v13369
      %v13371 = vsel %vm9206, %v13363, %v13370
      %v13372 = vshrl.u32 %v12927, 16
      %v13374 = vrot.slane %v13372, 2
      %v13375 = vshll.u32 %v12927, 16
      %v13377 = vrot.slane %v13375, 3
      %v13378 = vor.u32 %v13374, %v13377
      %v13379 = vshrl.u32 %v12930, 16
      %v13381 = vrot.slane %v13379, 2
      %v13382 = vshll.u32 %v12930, 16
      %v13384 = vrot.slane %v13382, 3
      %v13385 = vor.u32 %v13381, %v13384
      %v13386 = vsel %vm9206, %v13378, %v13385
      %v13387 = vshrl.u32 %v12838, 16
      %v13389 = vrot.slane %v13387, 2
      %v13390 = vshll.u32 %v12838, 16
      %v13392 = vrot.slane %v13390, 3
      %v13393 = vor.u32 %v13389, %v13392
      %v13394 = vshrl.u32 %v12840, 16
      %v13396 = vrot.slane %v13394, 2
      %v13397 = vshll.u32 %v12840, 16
      %v13399 = vrot.slane %v13397, 3
      %v13400 = vor.u32 %v13396, %v13399
      %v13401 = vsel %vm9206, %v13393, %v13400
      %v13402 = vshrl.u32 %v12933, 16
      %v13404 = vrot.slane %v13402, 2
      %v13405 = vshll.u32 %v12933, 16
      %v13407 = vrot.slane %v13405, 3
      %v13408 = vor.u32 %v13404, %v13407
      %v13409 = vshrl.u32 %v12936, 16
      %v13411 = vrot.slane %v13409, 2
      %v13412 = vshll.u32 %v12936, 16
      %v13414 = vrot.slane %v13412, 3
      %v13415 = vor.u32 %v13411, %v13414
      %v13416 = vsel %vm9206, %v13408, %v13415
      %v13433 = vld [vmem:[%s1] sm:$0xf]
      %v13434 = vld [vmem:[%s1 + $0x4] sm:$0xf]
      %v13435 = vld [vmem:[%s1 + $0x8] sm:$0xf]
      %v13436 = vld [vmem:[%s1 + $0xc] sm:$0xf]
      %v13437 = vld [vmem:[%s1 + $0x10] sm:$0xf]
      %v13438 = vld [vmem:[%s1 + $0x14] sm:$0xf]
      %v13439 = vld [vmem:[%s1 + $0x18] sm:$0xf]
      %v13440 = vld [vmem:[%s1 + $0x1c] sm:$0xf]
      %v13441 = vld [vmem:[%s1 + $0x20] sm:$0xf]
      %v13442 = vld [vmem:[%s1 + $0x24] sm:$0xf]
      %v13443 = vld [vmem:[%s1 + $0x28] sm:$0xf]
      %v13444 = vld [vmem:[%s1 + $0x2c] sm:$0xf]
      %v13445 = vld [vmem:[%s1 + $0x30] sm:$0xf]
      %v13446 = vld [vmem:[%s1 + $0x34] sm:$0xf]
      %v13447 = vld [vmem:[%s1 + $0x38] sm:$0xf]
      %v13448 = vld [vmem:[%s1 + $0x3c] sm:$0xf]
      %v13449 = vld [vmem:[%s1 + $0x40] sm:$0xf]
      %v13450 = vld [vmem:[%s1 + $0x44] sm:$0xf]
      %v13451 = vld [vmem:[%s1 + $0x48] sm:$0xf]
      %v13452 = vld [vmem:[%s1 + $0x4c] sm:$0xf]
      %v13453 = vld [vmem:[%s1 + $0x50] sm:$0xf]
      %v13454 = vld [vmem:[%s1 + $0x54] sm:$0xf]
      %v13455 = vld [vmem:[%s1 + $0x58] sm:$0xf]
      %v13456 = vld [vmem:[%s1 + $0x5c] sm:$0xf]
      %v13457 = vld [vmem:[%s1 + $0x60] sm:$0x3]
      %v13458 = vld [vmem:[%s2] sm:$0x1]
      %v13460 = vlaneseq
      %v13461 = vshrl.u32 %v13460, 7
      %v13462 = vsub.s32 0, %v13461
      %v13463 = vrot.slane %v13458, %v13462
      %v13490 = vunpack.c.l.b16 %v13433
      %v13491 = vunpack.c.l.b16 %v13434
      %v13492 = vunpack.c.l.b16 %v13435
      %v13493 = vunpack.c.l.b16 %v13436
      %v13494 = vunpack.c.l.b16 %v13437
      %v13495 = vunpack.c.l.b16 %v13438
      %v13496 = vunpack.c.l.b16 %v13439
      %v13497 = vunpack.c.l.b16 %v13440
      %v13498 = vunpack.c.l.b16 %v13441
      %v13499 = vunpack.c.l.b16 %v13442
      %v13500 = vunpack.c.l.b16 %v13443
      %v13501 = vunpack.c.l.b16 %v13444
      %v13502 = vunpack.c.l.b16 %v13445
      %v13503 = vunpack.c.l.b16 %v13446
      %v13504 = vunpack.c.l.b16 %v13447
      %v13505 = vunpack.c.l.b16 %v13448
      %v13506 = vunpack.c.l.b16 %v13449
      %v13507 = vunpack.c.l.b16 %v13450
      %v13508 = vunpack.c.l.b16 %v13451
      %v13509 = vunpack.c.l.b16 %v13452
      %v13510 = vunpack.c.l.b16 %v13453
      %v13511 = vunpack.c.l.b16 %v13454
      %v13512 = vunpack.c.l.b16 %v13455
      %v13513 = vunpack.c.l.b16 %v13456
      %v13514 = vunpack.c.l.b16 %v13457
      %v13515 = vpack.c.b16 %v13491, %v13490
      %v13516 = vpack.c.b16 %v13493, %v13492
      %v13517 = vpack.c.b16 %v13495, %v13494
      %v13518 = vpack.c.b16 %v13497, %v13496
      %v13519 = vpack.c.b16 %v13499, %v13498
      %v13520 = vpack.c.b16 %v13501, %v13500
      %v13521 = vpack.c.b16 %v13503, %v13502
      %v13522 = vpack.c.b16 %v13505, %v13504
      %v13523 = vpack.c.b16 %v13507, %v13506
      %v13524 = vpack.c.b16 %v13509, %v13508
      %v13525 = vpack.c.b16 %v13511, %v13510
      %v13526 = vpack.c.b16 %v13513, %v13512
      %v13527 = vpack.c.b16 %v13514, %v13514
      %vm13540 = vcmask 556032
      %v13542 = vsel %vm13540, %v12966, 0
      %v13545 = vsel %vm13540, %v12996, 0
      %v13548 = vsel %vm13540, %v13026, 0
      %v13551 = vsel %vm13540, %v13056, 0
      %v13554 = vsel %vm13540, %v13086, 0
      %v13557 = vsel %vm13540, %v13116, 0
      %v13560 = vsel %vm13540, %v13146, 0
      %v13563 = vsel %vm13540, %v13176, 0
      %v13566 = vsel %vm13540, %v13206, 0
      %v13569 = vsel %vm13540, %v13236, 0
      %v13572 = vsel %vm13540, %v13266, 0
      %v13575 = vsel %vm13540, %v13296, 0
      %v13578 = vsel %vm13540, %v13326, 0
      %v13581 = vsel %vm13540, %v13356, 0
      %v13584 = vsel %vm13540, %v13386, 0
      %v13587 = vsel %vm13540, %v13416, 0
      %vm13589 = vcmask 1041408
      %v13591 = vsel %vm13589, %v13527, 0
      %13593 = vmatprep.subr.bf16.mxu0 0
      %13594 = vmatpush1.bf16.msra.mxu0 %v13515
      %13595 = vmatprep.subr.bf16.mxu0 0
      %13596 = vmatpush1.bf16.msra.mxu0 %v13516
      %13597 = vmatprep.subr.bf16.mxu0 0
      %13598 = vmatpush1.bf16.msra.mxu0 %v13517
      %13599 = vmatprep.subr.bf16.mxu0 0
      %13600 = vmatpush1.bf16.msra.mxu0 %v13518
      %13601 = vmatprep.subr.bf16.mxu0 0
      %13602 = vmatpush1.bf16.msra.mxu0 %v13519
      %13603 = vmatprep.subr.bf16.mxu0 0
      %13604 = vmatpush1.bf16.msra.mxu0 %v13520
      %13605 = vmatprep.subr.bf16.mxu0 0
      %13606 = vmatpush1.bf16.msra.mxu0 %v13521
      %13607 = vmatprep.subr.bf16.mxu0 0
      %13608 = vmatpush1.bf16.msra.mxu0 %v13522
      %13609 = vmatprep.subr.bf16.mxu0 0
      %13610 = vmatpush1.bf16.msra.mxu0 %v13523
      %13611 = vmatprep.subr.bf16.mxu0 0
      %13612 = vmatpush1.bf16.msra.mxu0 %v13524
      %13613 = vmatprep.subr.bf16.mxu0 0
      %13614 = vmatpush1.bf16.msra.mxu0 %v13525
      %13615 = vmatprep.subr.bf16.mxu0 0
      %13616 = vmatpush1.bf16.msra.mxu0 %v13526
      %13617 = vmatprep.subr.bf16.mxu0 0
      %13618 = vmatpush1.bf16.msra.mxu0 %v13591
      %13619 = vmatprep.subr.bf16.mxu0 0
      %13620 = vmatpush1.bf16.msra.mxu0 0
      %13621 = vmatprep.subr.bf16.mxu0 0
      %13622 = vmatpush1.bf16.msra.mxu0 0
      %13623 = vmatprep.subr.bf16.mxu0 0
      %13624 = vmatpush1.bf16.msra.mxu0 0
      %13625 = vmatprep.mubr.bf16.mxu0 %v13542
      %13626 = vmatmul.mubr.bf16.gmra.mrb[0].mxu0 %v12951
      %v13627 = vpop.f32.mrb[0].mxu0
      %v13628 = vadd.f32 %v13463, %v13627
      %v13629 = vpop.f32.mrb[0].mxu0
      %v13630 = vpop.f32.mrb[0].mxu0
      %v13631 = vadd.f32 %v13463, %v13630
      %v13632 = vpop.f32.mrb[0].mxu0
      %13633 = vmatprep.mubr.bf16.mxu0 %v13545
      %13634 = vmatmul.mubr.bf16.gmra.mrb[0].mxu0 %v12981
      %v13635 = vpop.f32.mrb[0].mxu0
      %v13636 = vadd.f32 %v13463, %v13635
      %v13637 = vpop.f32.mrb[0].mxu0
      %v13638 = vpop.f32.mrb[0].mxu0
      %v13639 = vadd.f32 %v13463, %v13638
      %v13640 = vpop.f32.mrb[0].mxu0
      %13641 = vmatprep.mubr.bf16.mxu0 %v13548
      %13642 = vmatmul.mubr.bf16.gmra.mrb[0].mxu0 %v13011
      %v13643 = vpop.f32.mrb[0].mxu0
      %v13644 = vadd.f32 %v13463, %v13643
      %v13645 = vpop.f32.mrb[0].mxu0
      %v13646 = vpop.f32.mrb[0].mxu0
      %v13647 = vadd.f32 %v13463, %v13646
      %v13648 = vpop.f32.mrb[0].mxu0
      %13649 = vmatprep.mubr.bf16.mxu0 %v13551
      %13650 = vmatmul.mubr.bf16.gmra.mrb[0].mxu0 %v13041
      %v13651 = vpop.f32.mrb[0].mxu0
      %v13652 = vadd.f32 %v13463, %v13651
      %v13653 = vpop.f32.mrb[0].mxu0
      %v13654 = vpop.f32.mrb[0].mxu0
      %v13655 = vadd.f32 %v13463, %v13654
      %v13656 = vpop.f32.mrb[0].mxu0
      %13657 = vmatprep.mubr.bf16.mxu0 %v13554
      %13658 = vmatmul.mubr.bf16.gmra.mrb[0].mxu0 %v13071
      %v13659 = vpop.f32.mrb[0].mxu0
      %v13660 = vadd.f32 %v13463, %v13659
      %v13661 = vpop.f32.mrb[0].mxu0
      %v13662 = vpop.f32.mrb[0].mxu0
      %v13663 = vadd.f32 %v13463, %v13662
      %v13664 = vpop.f32.mrb[0].mxu0
      %13665 = vmatprep.mubr.bf16.mxu0 %v13557
      %13666 = vmatmul.mubr.bf16.gmra.mrb[0].mxu0 %v13101
      %v13667 = vpop.f32.mrb[0].mxu0
      %v13668 = vadd.f32 %v13463, %v13667
      %v13669 = vpop.f32.mrb[0].mxu0
      %v13670 = vpop.f32.mrb[0].mxu0
      %v13671 = vadd.f32 %v13463, %v13670
      %v13672 = vpop.f32.mrb[0].mxu0
      %13673 = vmatprep.mubr.bf16.mxu0 %v13560
      %13674 = vmatmul.mubr.bf16.gmra.mrb[0].mxu0 %v13131
      %v13675 = vpop.f32.mrb[0].mxu0
      %v13676 = vadd.f32 %v13463, %v13675
      %v13677 = vpop.f32.mrb[0].mxu0
      %v13678 = vpop.f32.mrb[0].mxu0
      %v13679 = vadd.f32 %v13463, %v13678
      %v13680 = vpop.f32.mrb[0].mxu0
      %13681 = vmatprep.mubr.bf16.mxu0 %v13563
      %13682 = vmatmul.mubr.bf16.gmra.mrb[0].mxu0 %v13161
      %v13683 = vpop.f32.mrb[0].mxu0
      %v13684 = vadd.f32 %v13463, %v13683
      %v13685 = vpop.f32.mrb[0].mxu0
      %v13686 = vpop.f32.mrb[0].mxu0
      %v13687 = vadd.f32 %v13463, %v13686
      %v13688 = vpop.f32.mrb[0].mxu0
      %13689 = vmatprep.mubr.bf16.mxu0 %v13566
      %13690 = vmatmul.mubr.bf16.gmra.mrb[0].mxu0 %v13191
      %v13691 = vpop.f32.mrb[0].mxu0
      %v13692 = vadd.f32 %v13463, %v13691
      %v13693 = vpop.f32.mrb[0].mxu0
      %v13694 = vpop.f32.mrb[0].mxu0
      %v13695 = vadd.f32 %v13463, %v13694
      %v13696 = vpop.f32.mrb[0].mxu0
      %13697 = vmatprep.mubr.bf16.mxu0 %v13569
      %13698 = vmatmul.mubr.bf16.gmra.mrb[0].mxu0 %v13221
      %v13699 = vpop.f32.mrb[0].mxu0
      %v13700 = vadd.f32 %v13463, %v13699
      %v13701 = vpop.f32.mrb[0].mxu0
      %v13702 = vpop.f32.mrb[0].mxu0
      %v13703 = vadd.f32 %v13463, %v13702
      %v13704 = vpop.f32.mrb[0].mxu0
      %13705 = vmatprep.mubr.bf16.mxu0 %v13572
      %13706 = vmatmul.mubr.bf16.gmra.mrb[0].mxu0 %v13251
      %v13707 = vpop.f32.mrb[0].mxu0
      %v13708 = vadd.f32 %v13463, %v13707
      %v13709 = vpop.f32.mrb[0].mxu0
      %v13710 = vpop.f32.mrb[0].mxu0
      %v13711 = vadd.f32 %v13463, %v13710
      %v13712 = vpop.f32.mrb[0].mxu0
      %13713 = vmatprep.mubr.bf16.mxu0 %v13575
      %13714 = vmatmul.mubr.bf16.gmra.mrb[0].mxu0 %v13281
      %v13715 = vpop.f32.mrb[0].mxu0
      %v13716 = vadd.f32 %v13463, %v13715
      %v13717 = vpop.f32.mrb[0].mxu0
      %v13718 = vpop.f32.mrb[0].mxu0
      %v13719 = vadd.f32 %v13463, %v13718
      %v13720 = vpop.f32.mrb[0].mxu0
      %13721 = vmatprep.mubr.bf16.mxu0 %v13578
      %13722 = vmatmul.mubr.bf16.gmra.mrb[0].mxu0 %v13311
      %v13723 = vpop.f32.mrb[0].mxu0
      %v13724 = vadd.f32 %v13463, %v13723
      %v13725 = vpop.f32.mrb[0].mxu0
      %v13726 = vpop.f32.mrb[0].mxu0
      %v13727 = vadd.f32 %v13463, %v13726
      %v13728 = vpop.f32.mrb[0].mxu0
      %13729 = vmatprep.mubr.bf16.mxu0 %v13581
      %13730 = vmatmul.mubr.bf16.gmra.mrb[0].mxu0 %v13341
      %v13731 = vpop.f32.mrb[0].mxu0
      %v13732 = vadd.f32 %v13463, %v13731
      %v13733 = vpop.f32.mrb[0].mxu0
      %v13734 = vpop.f32.mrb[0].mxu0
      %v13735 = vadd.f32 %v13463, %v13734
      %v13736 = vpop.f32.mrb[0].mxu0
      %13737 = vmatprep.mubr.bf16.mxu0 %v13584
      %13738 = vmatmul.mubr.bf16.gmra.mrb[0].mxu0 %v13371
      %v13739 = vpop.f32.mrb[0].mxu0
      %v13740 = vadd.f32 %v13463, %v13739
      %v13741 = vpop.f32.mrb[0].mxu0
      %v13742 = vpop.f32.mrb[0].mxu0
      %v13743 = vadd.f32 %v13463, %v13742
      %v13744 = vpop.f32.mrb[0].mxu0
      %13745 = vmatprep.mubr.bf16.mxu0 %v13587
      %13746 = vmatmul.mubr.bf16.gmra.mrb[0].mxu0 %v13401
      %v13747 = vpop.f32.mrb[0].mxu0
      %v13748 = vadd.f32 %v13463, %v13747
      %v13749 = vpop.f32.mrb[0].mxu0
      %v13750 = vpop.f32.mrb[0].mxu0
      %v13751 = vadd.f32 %v13463, %v13750
      %v13752 = vpop.f32.mrb[0].mxu0
      %13753 = vdwg.mxu0
      %v13754 = vmax.f32 %v13628, 0.0
      %v13755 = vmax.f32 %v13631, 0.0
      %v13756 = vmax.f32 %v13636, 0.0
      %v13757 = vmax.f32 %v13639, 0.0
      %v13758 = vmax.f32 %v13644, 0.0
      %v13759 = vmax.f32 %v13647, 0.0
      %v13760 = vmax.f32 %v13652, 0.0
      %v13761 = vmax.f32 %v13655, 0.0
      %v13762 = vmax.f32 %v13660, 0.0
      %v13763 = vmax.f32 %v13663, 0.0
      %v13764 = vmax.f32 %v13668, 0.0
      %v13765 = vmax.f32 %v13671, 0.0
      %v13766 = vmax.f32 %v13676, 0.0
      %v13767 = vmax.f32 %v13679, 0.0
      %v13768 = vmax.f32 %v13684, 0.0
      %v13769 = vmax.f32 %v13687, 0.0
      %v13770 = vmax.f32 %v13692, 0.0
      %v13771 = vmax.f32 %v13695, 0.0
      %v13772 = vmax.f32 %v13700, 0.0
      %v13773 = vmax.f32 %v13703, 0.0
      %v13774 = vmax.f32 %v13708, 0.0
      %v13775 = vmax.f32 %v13711, 0.0
      %v13776 = vmax.f32 %v13716, 0.0
      %v13777 = vmax.f32 %v13719, 0.0
      %v13778 = vmax.f32 %v13724, 0.0
      %v13779 = vmax.f32 %v13727, 0.0
      %v13780 = vmax.f32 %v13732, 0.0
      %v13781 = vmax.f32 %v13735, 0.0
      %v13782 = vmax.f32 %v13740, 0.0
      %v13783 = vmax.f32 %v13743, 0.0
      %v13784 = vmax.f32 %v13748, 0.0
      %v13785 = vmax.f32 %v13751, 0.0
      %13786 = vst.msk [vmem:[%s194] sm:$0xff] %vm4069, %v13754
      %13787 = vst.msk [vmem:[%s194 + $0x8] sm:$0xff] %vm4069, %v13755
      %13788 = vst.msk [vmem:[%s194 + $0x10] sm:$0xff] %vm4069, %v13756
      %13789 = vst.msk [vmem:[%s194 + $0x18] sm:$0xff] %vm4069, %v13757
      %13790 = vst.msk [vmem:[%s194 + $0x20] sm:$0xff] %vm4069, %v13758
      %13791 = vst.msk [vmem:[%s194 + $0x28] sm:$0xff] %vm4069, %v13759
      %13792 = vst.msk [vmem:[%s194 + $0x30] sm:$0xff] %vm4069, %v13760
      %13793 = vst.msk [vmem:[%s194 + $0x38] sm:$0xff] %vm4069, %v13761
      %13794 = vst.msk [vmem:[%s194 + $0x40] sm:$0xff] %vm4069, %v13762
      %13795 = vst.msk [vmem:[%s194 + $0x48] sm:$0xff] %vm4069, %v13763
      %13796 = vst.msk [vmem:[%s194 + $0x50] sm:$0xff] %vm4069, %v13764
      %13797 = vst.msk [vmem:[%s194 + $0x58] sm:$0xff] %vm4069, %v13765
      %13798 = vst.msk [vmem:[%s194 + $0x60] sm:$0xff] %vm4069, %v13766
      %13799 = vst.msk [vmem:[%s194 + $0x68] sm:$0xff] %vm4069, %v13767
      %13800 = vst.msk [vmem:[%s194 + $0x70] sm:$0xff] %vm4069, %v13768
      %13801 = vst.msk [vmem:[%s194 + $0x78] sm:$0xff] %vm4069, %v13769
      %13802 = vst.msk [vmem:[%s194 + $0x80] sm:$0xff] %vm4069, %v13770
      %13803 = vst.msk [vmem:[%s194 + $0x88] sm:$0xff] %vm4069, %v13771
      %13804 = vst.msk [vmem:[%s194 + $0x90] sm:$0xff] %vm4069, %v13772
      %13805 = vst.msk [vmem:[%s194 + $0x98] sm:$0xff] %vm4069, %v13773
      %13806 = vst.msk [vmem:[%s194 + $0xa0] sm:$0xff] %vm4069, %v13774
      %13807 = vst.msk [vmem:[%s194 + $0xa8] sm:$0xff] %vm4069, %v13775
      %13808 = vst.msk [vmem:[%s194 + $0xb0] sm:$0xff] %vm4069, %v13776
      %13809 = vst.msk [vmem:[%s194 + $0xb8] sm:$0xff] %vm4069, %v13777
      %13810 = vst.msk [vmem:[%s194 + $0xc0] sm:$0xff] %vm4069, %v13778
      %13811 = vst.msk [vmem:[%s194 + $0xc8] sm:$0xff] %vm4069, %v13779
      %13812 = vst.msk [vmem:[%s194 + $0xd0] sm:$0xff] %vm4069, %v13780
      %13813 = vst.msk [vmem:[%s194 + $0xd8] sm:$0xff] %vm4069, %v13781
      %13814 = vst.msk [vmem:[%s194 + $0xe0] sm:$0xff] %vm4069, %v13782
      %13815 = vst.msk [vmem:[%s194 + $0xe8] sm:$0xff] %vm4069, %v13783
      %13816 = vst.msk [vmem:[%s194 + $0xf0] sm:$0xff] %vm4069, %v13784
      %13817 = vst.msk [vmem:[%s194 + $0xf8] sm:$0xff] %vm4069, %v13785
      %s13818 = smul.u32 16, %s19
      %p13819 = scmp.lt.s32.totalorder %s18, 1
      %s13820 = scalar_select %p13819, %s18, 1
      %p13821 = scmp.lt.s32.totalorder %s13818, 15
      %s13822 = scalar_select %p13821, %s13818, 15
      %s13823 = smul.addr %s13822, 2
      %s13824 = smul.addr %s13820, 32
      %s13825 = sadd.s32 %s13823, %s13824
      %s13826 = smul.addr %s13825, 8
      %s13827 = scalar_lea.vmem %s3, %s13826
      // Predicated region
      $region37: #{tpu_custom_call.1} parent=31 // pred_check
        %p13828 = pneg %p114
      $region38: #{tpu_custom_call.1} parent=31 // pred_check_branch
        %13830 = sbr.rel (%p13828) target = $region40
      $region39: #{tpu_custom_call.1} parent=31 // pred_region
        %s13831 = smul.u32 16, %s19
      $region40: #{tpu_custom_call.1} parent=31 // pred_fallthru
        _
    $region32: #{tpu_custom_call.1} parent=5 // pred_fallthru
      _
    %p13832 = scmp.le.s32.totalorder 2, %s9
    // Predicated region
    $region41: #{tpu_custom_call.1} parent=5 // pred_check
      %p13833 = pneg %p13832
    $region42: #{tpu_custom_call.1} parent=5 // pred_check_branch
      %13835 = sbr.rel (%p13833) target = $region44
    $region43: #{tpu_custom_call.1} parent=5 // pred_region
      %s13836 = ssub.s32 %s9, 2
      // Predicated region
      $region45: #{tpu_custom_call.1} parent=43 // pred_check
        %p13837 = pneg %p120
      $region46: #{tpu_custom_call.1} parent=43 // pred_check_branch
        %13839 = sbr.rel (%p13837) target = $region48
      $region47: #{tpu_custom_call.1} parent=43 // pred_region
        %s13840 = smul.u32 16, %s21
        %p13841 = scmp.lt.s32.totalorder %s20, 1
        %s13842 = scalar_select %p13841, %s20, 1
        %p13843 = scmp.lt.s32.totalorder %s13840, 15
        %s13844 = scalar_select %p13843, %s13840, 15
        %s13845 = smul.addr %s13844, 2
        %s13846 = smul.addr %s13842, 32
        %s13847 = sadd.s32 %s13845, %s13846
        %s13848 = smul.addr %s13847, 8
        %s13849 = scalar_lea.vmem %s3, %s13848
      $region48: #{tpu_custom_call.1} parent=43 // pred_fallthru
        _
    $region44: #{tpu_custom_call.1} parent=5 // pred_fallthru
      _
  $region6: #{tpu_custom_call.1} parent=0 // loop_footer
    %s13 = sadd.s32 1, %s9
  $region7: #{tpu_custom_call.1} parent=0 // loop_footer_branch
    %8 = sbr.rel target = $region3
  $region8: #{tpu_custom_call.1} parent=0 // loop_exit
    _

</llo_original>
